<compile_context>
chip_gen: v7x
topology: tpu7x:2x2x1
jax: 0.10.0
libtpu: 0.0.40
codegen_flags: <defaults>
</compile_context>

<pallas_src>
import jax
import jax.numpy as jnp
from jax.experimental import pallas as pl
from jax.experimental.pallas import tpu as pltpu

LANE = 128      # max Cout tile width per grid step (MXU N tile)
CH_ALIGN = 16   # channel dims are padded to a multiple of this (not 128)


def _round_up(x, m):
    return ((x + m - 1) // m) * m


def _cpad(c):
    """Padded channel count: smallest multiple of 16 that is >= c."""
    return _round_up(max(c, CH_ALIGN), CH_ALIGN)


def _pad_channels(x, cp):
    c = x.shape[-1]
    if c == cp:
        return x
    pad = [(0, 0)] * (x.ndim - 1) + [(0, cp - c)]
    return jnp.pad(x, pad)


def _largest_divisor_leq(n, cap):
    cap = max(1, min(n, cap))
    best = 1
    for d in range(1, cap + 1):
        if n % d == 0:
            best = d
    return best


def _pick_nb(n, h, w, target_rows=2048):
    """Images folded into one conv grid step (matmul M = nb*h*w)."""
    return _largest_divisor_leq(n, max(1, target_rows // (h * w)))


def _pick_tm(m, cap=1024):
    """Row tile for the 1x1-conv matmul: big, sublane-friendly, divides M."""
    if m <= cap:
        return m
    best = 1
    for d in range(1, cap + 1):
        if m % d == 0 and d % 8 == 0:
            best = d
    if best == 1:
        best = _largest_divisor_leq(m, cap)
    return best


# ----------------------------------------------------------------------------
# Fused 3x3 convolution kernel (padding=1)
#   optional prologue : bn1 scale/shift + LeakyReLU(0.1) on the input
#   9-tap MXU accumulation (bf16 operands, f32 *local* accumulator)
#   optional epilogue : bn2 scale/shift + LeakyReLU(0.1)
#   optional residual : f32 add of a bf16 residual
# Grid = (batch_blocks, cout_tiles); the zero-padded input slab (and prologue)
# is built only at cout_tile == 0 and reused for the remaining tiles.
# ----------------------------------------------------------------------------
def _make_conv3x3_kernel(nb, H, W, cin, tc, prologue, bn_act, has_res):
    M = nb * H * W

    def kernel(*refs):
        i = 0
        x_ref = refs[i]; i += 1
        w_ref = refs[i]; i += 1
        if prologue:
            s1_ref, b1_ref = refs[i], refs[i + 1]; i += 2
        if bn_act:
            s2_ref, b2_ref = refs[i], refs[i + 1]; i += 2
        if has_res:
            res_ref = refs[i]; i += 1
        o_ref = refs[i]; i += 1
        xpad_ref = refs[i]

        # Build the zero-padded (optionally bn1+LeakyReLU-activated) input slab
        # once per image block: zero only the 1-pixel halo, activate only the
        # real pixels (matches the reference, which activates x and lets the
        # conv zero-pad it).  Skipped for Cout tiles > 0 (scratch persists
        # across the inner "arbitrary" grid axis).
        @pl.when(pl.program_id(1) == 0)
        def _build_slab():
            zrow = jnp.zeros((nb, 1, W + 2, cin), jnp.bfloat16)
            zcol = jnp.zeros((nb, H, 1, cin), jnp.bfloat16)
            xpad_ref[:, 0:1, :, :] = zrow
            xpad_ref[:, H + 1:H + 2, :, :] = zrow
            xpad_ref[:, 1:H + 1, 0:1, :] = zcol
            xpad_ref[:, 1:H + 1, W + 1:W + 2, :] = zcol
            xin = x_ref[...]                               # (nb, H, W, cin) bf16
            if prologue:
                a = xin.astype(jnp.float32) * s1_ref[...] + b1_ref[...]
                a = jnp.where(a > 0, a, 0.1 * a)
                xin = a.astype(jnp.bfloat16)
            xpad_ref[:, 1:H + 1, 1:W + 1, :] = xin

        # 9-tap accumulation on the MXU, accumulating in a local f32 value
        # (no accumulator-scratch round trips).
        acc = None
        for t in range(9):
            dy, dx = divmod(t, 3)
            xt = xpad_ref[:, dy:dy + H, dx:dx + W, :].reshape(M, cin)
            part = jnp.dot(xt, w_ref[t], preferred_element_type=jnp.float32)
            acc = part if acc is None else acc + part

        y = acc                                            # (M, tc) f32
        if bn_act:
            y = y * s2_ref[...] + b2_ref[...]
            y = jnp.where(y > 0, y, 0.1 * y)
        if has_res:
            y = y + res_ref[...].reshape(M, tc).astype(jnp.float32)
        o_ref[...] = y.reshape(nb, H, W, tc).astype(o_ref.dtype)

    return kernel


def conv3x3_fused(x, w9, pre=None, post=None, residual=None, out_stride=1):
    """Fused 3x3 conv (padding=1).  Stride>1 is handled by output decimation.

    x:        (N, H, W, Cin_p)   bf16
    w9:       (9, Cin_p, Cout_p) bf16, tap-major order (dy*3 + dx)
    pre:      optional (scale, shift), each (1, Cin_p) f32  -> bn1+leaky prologue
    post:     optional (scale, shift), each (1, Cout_p) f32 -> bn2+leaky epilogue
    residual: optional (N, H, W, Cout_p) bf16, added in f32
    """
    n, h, w, cin = x.shape
    cout = w9.shape[2]
    tc = LANE if cout % LANE == 0 else cout
    nct = cout // tc
    nb = _pick_nb(n, h, w)

    prologue, bn_act, has_res = pre is not None, post is not None, residual is not None

    in_specs = [
        pl.BlockSpec((nb, h, w, cin), lambda b, c: (b, 0, 0, 0)),
        pl.BlockSpec((9, cin, tc), lambda b, c: (0, 0, c)),
    ]
    args = [x, w9]
    if prologue:
        in_specs += [pl.BlockSpec((1, cin), lambda b, c: (0, 0))] * 2
        args += [pre[0], pre[1]]
    if bn_act:
        in_specs += [pl.BlockSpec((1, tc), lambda b, c: (0, c))] * 2
        args += [post[0], post[1]]
    if has_res:
        in_specs.append(pl.BlockSpec((nb, h, w, tc), lambda b, c: (b, 0, 0, c)))
        args.append(residual)

    out = pl.pallas_call(
        _make_conv3x3_kernel(nb, h, w, cin, tc, prologue, bn_act, has_res),
        out_shape=jax.ShapeDtypeStruct((n, h, w, cout), jnp.bfloat16),
        grid=(n // nb, nct),
        in_specs=in_specs,
        out_specs=pl.BlockSpec((nb, h, w, tc), lambda b, c: (b, 0, 0, c)),
        scratch_shapes=[pltpu.VMEM((nb, h + 2, w + 2, cin), jnp.bfloat16)],
        compiler_params=pltpu.CompilerParams(
            dimension_semantics=("parallel", "arbitrary")),
    )(*args)

    if out_stride > 1:
        # Exact: a stride-s, pad-1 conv equals the stride-1 conv decimated.
        out = out[:, ::out_stride, ::out_stride, :]
    return out


# ----------------------------------------------------------------------------
# Fused 1x1 convolution (shortcut projection): bf16 matmul, optional prologue.
# ----------------------------------------------------------------------------
def _make_matmul_kernel(prologue):
    def kernel(*refs):
        i = 0
        x_ref = refs[i]; i += 1
        w_ref = refs[i]; i += 1
        if prologue:
            s_ref, b_ref = refs[i], refs[i + 1]; i += 2
        o_ref = refs[i]

        x = x_ref[...]                                     # (tm, cin) bf16
        if prologue:
            a = x.astype(jnp.float32) * s_ref[...] + b_ref[...]
            a = jnp.where(a > 0, a, 0.1 * a)
            x = a.astype(jnp.bfloat16)
        o_ref[...] = jnp.dot(x, w_ref[...],
                             preferred_element_type=jnp.float32).astype(o_ref.dtype)

    return kernel


def conv1x1_fused(x, w, pre=None):
    """1x1 conv as a fused bf16 matmul.  x: (N, H, W, Cin_p), w: (Cin_p, Cout_p)."""
    n, h, ww, cin = x.shape
    cout = w.shape[1]
    m = n * h * ww
    xm = x.reshape(m, cin)
    tm = _pick_tm(m)
    tc = LANE if cout % LANE == 0 else cout
    prologue = pre is not None

    in_specs = [
        pl.BlockSpec((tm, cin), lambda i, j: (i, 0)),
        pl.BlockSpec((cin, tc), lambda i, j: (0, j)),
    ]
    args = [xm, w]
    if prologue:
        in_specs += [pl.BlockSpec((1, cin), lambda i, j: (0, 0))] * 2
        args += [pre[0], pre[1]]

    out = pl.pallas_call(
        _make_matmul_kernel(prologue),
        out_shape=jax.ShapeDtypeStruct((m, cout), jnp.bfloat16),
        grid=(m // tm, cout // tc),
        in_specs=in_specs,
        out_specs=pl.BlockSpec((tm, tc), lambda i, j: (i, j)),
        compiler_params=pltpu.CompilerParams(
            dimension_semantics=("parallel", "arbitrary")),
    )(*args)
    return out.reshape(n, h, ww, cout)


# ----------------------------------------------------------------------------
# Global average pool with the final BatchNorm + LeakyReLU fused in
# (whole batch block per grid step).
# ----------------------------------------------------------------------------
def _pool_kernel(x_ref, s_ref, b_ref, o_ref):
    x = x_ref[...].astype(jnp.float32)                     # (nbp, HW, C)
    y = x * s_ref[...] + b_ref[...]
    y = jnp.where(y > 0, y, 0.1 * y)
    o_ref[...] = jnp.mean(y, axis=1, keepdims=True)


def pool_bn_leaky(x, scale, shift):
    """x: (N, HW, Cp) bf16 -> (N, Cp) f32, fusing bn + LeakyReLU + spatial mean."""
    n, hw, c = x.shape
    nbp = _largest_divisor_leq(n, max(1, 4096 // hw))
    out = pl.pallas_call(
        _pool_kernel,
        out_shape=jax.ShapeDtypeStruct((n, 1, c), jnp.float32),
        grid=(n // nbp,),
        in_specs=[
            pl.BlockSpec((nbp, hw, c), lambda b: (b, 0, 0)),
            pl.BlockSpec((1, c), lambda b: (0, 0)),
            pl.BlockSpec((1, c), lambda b: (0, 0)),
        ],
        out_specs=pl.BlockSpec((nbp, 1, c), lambda b: (b, 0, 0)),
        compiler_params=pltpu.CompilerParams(dimension_semantics=("parallel",)),
    )(x, scale, shift)
    return out.reshape(n, c)


# ----------------------------------------------------------------------------
# WideResNet building blocks
# ----------------------------------------------------------------------------
def basic_block(x, p, stride, equal, abr):
    bn1 = p["bn1"]
    bn2 = p["bn2"]

    if equal:
        assert stride == 1, "equalInOut blocks must have stride 1"
        # conv1 consumes relu1(bn1(x)) (fused prologue); residual is raw x.
        out = conv3x3_fused(x, p["conv1_w"], pre=bn1, post=bn2, out_stride=stride)
        residual = x
    elif abr:
        # relu1(bn1(x)) feeds BOTH conv1 and the 1x1 shortcut -> fuse the
        # activation as a prologue into both kernels.
        out = conv3x3_fused(x, p["conv1_w"], pre=bn1, post=bn2, out_stride=stride)
        xs = x if stride == 1 else x[:, ::stride, ::stride, :]
        residual = conv1x1_fused(xs, p["sc_w"], pre=bn1)
    else:
        # Reference computes relu1(bn1(x)) and then discards it: conv1 and the
        # shortcut both consume the raw x.
        out = conv3x3_fused(x, p["conv1_w"], post=bn2, out_stride=stride)
        xs = x if stride == 1 else x[:, ::stride, ::stride, :]
        residual = conv1x1_fused(xs, p["sc_w"])

    # conv2 with the residual add fused into its epilogue (add in f32).
    return conv3x3_fused(out, p["conv2_w"], residual=residual)


def forward(x_nchw, params, cfg, feat_dim):
    x = jnp.transpose(x_nchw, (0, 2, 3, 1))                # NCHW -> NHWC
    cin_p = params["conv1_w"].shape[1]
    x = _pad_channels(x, cin_p).astype(jnp.bfloat16)

    out = conv3x3_fused(x, params["conv1_w"])              # plain conv, no epilogue
    for stage_params, stage_cfg in zip(params["stages"], cfg):
        for bp, (stride, equal, abr) in zip(stage_params, stage_cfg):
            out = basic_block(out, bp, stride, equal, abr)

    n, h, w, c = out.shape
    fs, fb = params["bn_final"]
    feats = pool_bn_leaky(out.reshape(n, h * w, c), fs, fb)  # (N, Cp) f32
    return feats[:, :feat_dim]


# ----------------------------------------------------------------------------
# Deterministic parameter init (synthetic, matching the PyTorch init recipe),
# stored channel-padded (to a multiple of 16) + bf16 for the Pallas kernels.
# ----------------------------------------------------------------------------
def make_bn(c, c_p):
    gamma = jnp.ones((c,), jnp.float32)
    beta = jnp.zeros((c,), jnp.float32)
    running_mean = jnp.zeros((c,), jnp.float32)
    running_var = jnp.ones((c,), jnp.float32)
    eps = 1e-5
    scale = gamma / jnp.sqrt(running_var + eps)
    shift = beta - running_mean * scale
    scale = _pad_channels(scale.reshape(1, c), c_p).astype(jnp.float32)
    shift = _pad_channels(shift.reshape(1, c), c_p).astype(jnp.float32)
    return scale, shift


def _kaiming_std(kh, kw, cout):
    # kaiming_normal_, mode='fan_out', nonlinearity='leaky_relu'
    fan_out = cout * kh * kw
    gain = (2.0 / (1.0 + 0.01 ** 2)) ** 0.5
    return gain / (fan_out ** 0.5)


def kaiming_conv3x3(key, cin, cout, cin_p, cout_p):
    w = jax.random.normal(key, (3, 3, cin, cout), jnp.float32) * _kaiming_std(3, 3, cout)
    w = jnp.pad(w, ((0, 0), (0, 0), (0, cin_p - cin), (0, cout_p - cout)))
    return w.reshape(9, cin_p, cout_p).astype(jnp.bfloat16)


def kaiming_conv1x1(key, cin, cout, cin_p, cout_p):
    w = jax.random.normal(key, (cin, cout), jnp.float32) * _kaiming_std(1, 1, cout)
    w = jnp.pad(w, ((0, cin_p - cin), (0, cout_p - cout)))
    return w.astype(jnp.bfloat16)


def init_params(key, depth=10, widen_factor=2, in_channels=3):
    assert (depth - 4) % 6 == 0
    n_layers = (depth - 4) // 6
    channels = [16, 16 * widen_factor, 32 * widen_factor, 64 * widen_factor]

    keys = iter(jax.random.split(key, 256))
    params = {"conv1_w": kaiming_conv3x3(next(keys), in_channels, channels[0],
                                         _cpad(in_channels), _cpad(channels[0]))}

    stage_defs = [
        (channels[0], channels[1], 1, True),
        (channels[1], channels[2], 2, False),
        (channels[2], channels[3], 2, False),
    ]
    stages, cfg = [], []
    for cin, cout, stride, abr in stage_defs:
        blocks, block_cfg = [], []
        for j in range(n_layers):
            bin_ = cin if j == 0 else cout
            bstride = stride if j == 0 else 1
            equal = bin_ == cout
            bp = {
                "bn1": make_bn(bin_, _cpad(bin_)),
                "conv1_w": kaiming_conv3x3(next(keys), bin_, cout, _cpad(bin_), _cpad(cout)),
                "bn2": make_bn(cout, _cpad(cout)),
                "conv2_w": kaiming_conv3x3(next(keys), cout, cout, _cpad(cout), _cpad(cout)),
            }
            if not equal:
                bp["sc_w"] = kaiming_conv1x1(next(keys), bin_, cout, _cpad(bin_), _cpad(cout))
            blocks.append(bp)
            block_cfg.append((bstride, equal, abr))
        stages.append(blocks)
        cfg.append(block_cfg)

    params["stages"] = stages
    params["bn_final"] = make_bn(channels[3], _cpad(channels[3]))
    return params, cfg, channels[3]


# ----------------------------------------------------------------------------
if __name__ == "__main__":
    key = jax.random.PRNGKey(0)
    pkey, xkey = jax.random.split(key)

    # Small but structurally faithful config: WRN depth=10, widen_factor=2.
    params, cfg, feat_dim = init_params(pkey, depth=10, widen_factor=2, in_channels=3)

    # PyTorch-style NCHW input: batch=2, channels=3, 16x16 spatial.
    x = jax.random.normal(xkey, (2, 3, 16, 16), jnp.float32)

    out = forward(x, params, cfg, feat_dim)
    out = jax.block_until_ready(out)

    assert out.shape == (2, feat_dim), out.shape
    assert bool(jnp.all(jnp.isfinite(out)))
    print("KERNEL_OK")
</pallas_src>

<mosaic_0001>
module attributes {stable_mosaic.version = 11 : i64} {
  func.func @kernel(%arg0: i32, %arg1: i32, %arg2: memref<2x16x16x16xbf16, #tpu.memory_space<vmem>>, %arg3: memref<9x16x16xbf16, #tpu.memory_space<vmem>>, %arg4: memref<2x16x16x16xbf16, #tpu.memory_space<vmem>>, %arg5: memref<2x18x18x16xbf16, #tpu.memory_space<vmem>>) attributes {dimension_semantics = [#tpu.dimension_semantics<parallel>, #tpu.dimension_semantics<arbitrary>], iteration_bounds = array<i64: 1, 1>, scalar_prefetch = 0 : i64, scratch_operands = 1 : i64, tpu.core_type = #tpu.core_type<tc>, window_params = [{transform_indices = @transform_0, window_bounds = array<i64: 2, 16, 16, 16>}, {transform_indices = @transform_1, window_bounds = array<i64: 9, 16, 16>}, {transform_indices = @transform_2, window_bounds = array<i64: 2, 16, 16, 16>}]} {
    %c0_i32 = arith.constant 0 : i32
    %0 = arith.cmpi eq, %arg1, %c0_i32 : i32
    %1 = arith.extui %0 : i1 to i32
    %c0_i32_0 = arith.constant 0 : i32
    %2 = arith.cmpi ne, %1, %c0_i32_0 : i32
    scf.if %2 {
      %cst_67 = arith.constant 0.000000e+00 : bf16
      %59 = vector.broadcast %cst_67 : bf16 to vector<2x1x18x16xbf16>
      %cst_68 = arith.constant 0.000000e+00 : bf16
      %60 = vector.broadcast %cst_68 : bf16 to vector<2x16x1x16xbf16>
      %c0_69 = arith.constant 0 : index
      %c0_70 = arith.constant 0 : index
      %c0_71 = arith.constant 0 : index
      %c0_72 = arith.constant 0 : index
      %61 = vector.load %arg5[%c0_69, %c0_70, %c0_71, %c0_72] : memref<2x18x18x16xbf16, #tpu.memory_space<vmem>>, vector<2x1x18x16xbf16>
      tpu.vector_store %arg5[%c0_69, %c0_70, %c0_71, %c0_72], %59 {strides = array<i32>} : memref<2x18x18x16xbf16, #tpu.memory_space<vmem>>, vector<2x1x18x16xbf16>,
      %c0_73 = arith.constant 0 : index
      %c17 = arith.constant 17 : index
      %c0_74 = arith.constant 0 : index
      %c0_75 = arith.constant 0 : index
      %62 = vector.load %arg5[%c0_73, %c17, %c0_74, %c0_75] : memref<2x18x18x16xbf16, #tpu.memory_space<vmem>>, vector<2x1x18x16xbf16>
      tpu.vector_store %arg5[%c0_73, %c17, %c0_74, %c0_75], %59 {strides = array<i32>} : memref<2x18x18x16xbf16, #tpu.memory_space<vmem>>, vector<2x1x18x16xbf16>,
      %c0_76 = arith.constant 0 : index
      %c1_77 = arith.constant 1 : index
      %c0_78 = arith.constant 0 : index
      %c0_79 = arith.constant 0 : index
      %63 = vector.load %arg5[%c0_76, %c1_77, %c0_78, %c0_79] : memref<2x18x18x16xbf16, #tpu.memory_space<vmem>>, vector<2x16x1x16xbf16>
      tpu.vector_store %arg5[%c0_76, %c1_77, %c0_78, %c0_79], %60 {strides = array<i32>} : memref<2x18x18x16xbf16, #tpu.memory_space<vmem>>, vector<2x16x1x16xbf16>,
      %c0_80 = arith.constant 0 : index
      %c1_81 = arith.constant 1 : index
      %c17_82 = arith.constant 17 : index
      %c0_83 = arith.constant 0 : index
      %64 = vector.load %arg5[%c0_80, %c1_81, %c17_82, %c0_83] : memref<2x18x18x16xbf16, #tpu.memory_space<vmem>>, vector<2x16x1x16xbf16>
      tpu.vector_store %arg5[%c0_80, %c1_81, %c17_82, %c0_83], %60 {strides = array<i32>} : memref<2x18x18x16xbf16, #tpu.memory_space<vmem>>, vector<2x16x1x16xbf16>,
      %c0_84 = arith.constant 0 : index
      %c0_85 = arith.constant 0 : index
      %c0_86 = arith.constant 0 : index
      %c0_87 = arith.constant 0 : index
      %65 = vector.load %arg2[%c0_84, %c0_85, %c0_86, %c0_87] : memref<2x16x16x16xbf16, #tpu.memory_space<vmem>>, vector<2x16x16x16xbf16>
      %c0_88 = arith.constant 0 : index
      %c1_89 = arith.constant 1 : index
      %c1_90 = arith.constant 1 : index
      %c0_91 = arith.constant 0 : index
      %66 = vector.load %arg5[%c0_88, %c1_89, %c1_90, %c0_91] : memref<2x18x18x16xbf16, #tpu.memory_space<vmem>>, vector<2x16x16x16xbf16>
      tpu.vector_store %arg5[%c0_88, %c1_89, %c1_90, %c0_91], %65 {strides = array<i32>} : memref<2x18x18x16xbf16, #tpu.memory_space<vmem>>, vector<2x16x16x16xbf16>,
    } else {
    }
    %c0 = arith.constant 0 : index
    %c0_1 = arith.constant 0 : index
    %c0_2 = arith.constant 0 : index
    %c0_3 = arith.constant 0 : index
    %3 = vector.load %arg5[%c0, %c0_1, %c0_2, %c0_3] : memref<2x18x18x16xbf16, #tpu.memory_space<vmem>>, vector<2x16x16x16xbf16>
    %4 = vector.shape_cast %3 : vector<2x16x16x16xbf16> to vector<512x16xbf16>
    %c0_4 = arith.constant 0 : index
    %c0_5 = arith.constant 0 : index
    %c0_6 = arith.constant 0 : index
    %5 = vector.load %arg3[%c0_4, %c0_5, %c0_6] : memref<9x16x16xbf16, #tpu.memory_space<vmem>>, vector<1x16x16xbf16>
    %6 = vector.shape_cast %5 : vector<1x16x16xbf16> to vector<16x16xbf16>
    %cst = arith.constant dense<0.000000e+00> : vector<512x16xf32>
    %7 = tpu.matmul %4, %6, %cst {dimension_numbers = #tpu.dot_dimension_numbers<[1], [0], [0], [1], [0, 0, 1, 1], [], []>} : vector<512x16xbf16>, vector<16x16xbf16>, vector<512x16xf32> -> vector<512x16xf32>
    %c0_7 = arith.constant 0 : index
    %c0_8 = arith.constant 0 : index
    %c1 = arith.constant 1 : index
    %c0_9 = arith.constant 0 : index
    %8 = vector.load %arg5[%c0_7, %c0_8, %c1, %c0_9] : memref<2x18x18x16xbf16, #tpu.memory_space<vmem>>, vector<2x16x16x16xbf16>
    %9 = vector.shape_cast %8 : vector<2x16x16x16xbf16> to vector<512x16xbf16>
    %c1_10 = arith.constant 1 : index
    %c0_11 = arith.constant 0 : index
    %c0_12 = arith.constant 0 : index
    %10 = vector.load %arg3[%c1_10, %c0_11, %c0_12] : memref<9x16x16xbf16, #tpu.memory_space<vmem>>, vector<1x16x16xbf16>
    %11 = vector.shape_cast %10 : vector<1x16x16xbf16> to vector<16x16xbf16>
    %cst_13 = arith.constant dense<0.000000e+00> : vector<512x16xf32>
    %12 = tpu.matmul %9, %11, %cst_13 {dimension_numbers = #tpu.dot_dimension_numbers<[1], [0], [0], [1], [0, 0, 1, 1], [], []>} : vector<512x16xbf16>, vector<16x16xbf16>, vector<512x16xf32> -> vector<512x16xf32>
    %13 = arith.addf %7, %12 : vector<512x16xf32>
    %c0_14 = arith.constant 0 : index
    %c0_15 = arith.constant 0 : index
    %c2 = arith.constant 2 : index
    %c0_16 = arith.constant 0 : index
    %14 = vector.load %arg5[%c0_14, %c0_15, %c2, %c0_16] : memref<2x18x18x16xbf16, #tpu.memory_space<vmem>>, vector<2x16x16x16xbf16>
    %15 = vector.shape_cast %14 : vector<2x16x16x16xbf16> to vector<512x16xbf16>
    %c2_17 = arith.constant 2 : index
    %c0_18 = arith.constant 0 : index
    %c0_19 = arith.constant 0 : index
    %16 = vector.load %arg3[%c2_17, %c0_18, %c0_19] : memref<9x16x16xbf16, #tpu.memory_space<vmem>>, vector<1x16x16xbf16>
    %17 = vector.shape_cast %16 : vector<1x16x16xbf16> to vector<16x16xbf16>
    %cst_20 = arith.constant dense<0.000000e+00> : vector<512x16xf32>
    %18 = tpu.matmul %15, %17, %cst_20 {dimension_numbers = #tpu.dot_dimension_numbers<[1], [0], [0], [1], [0, 0, 1, 1], [], []>} : vector<512x16xbf16>, vector<16x16xbf16>, vector<512x16xf32> -> vector<512x16xf32>
    %19 = arith.addf %13, %18 : vector<512x16xf32>
    %c0_21 = arith.constant 0 : index
    %c1_22 = arith.constant 1 : index
    %c0_23 = arith.constant 0 : index
    %c0_24 = arith.constant 0 : index
    %20 = vector.load %arg5[%c0_21, %c1_22, %c0_23, %c0_24] : memref<2x18x18x16xbf16, #tpu.memory_space<vmem>>, vector<2x16x16x16xbf16>
    %21 = vector.shape_cast %20 : vector<2x16x16x16xbf16> to vector<512x16xbf16>
    %c3 = arith.constant 3 : index
    %c0_25 = arith.constant 0 : index
    %c0_26 = arith.constant 0 : index
    %22 = vector.load %arg3[%c3, %c0_25, %c0_26] : memref<9x16x16xbf16, #tpu.memory_space<vmem>>, vector<1x16x16xbf16>
    %23 = vector.shape_cast %22 : vector<1x16x16xbf16> to vector<16x16xbf16>
    %cst_27 = arith.constant dense<0.000000e+00> : vector<512x16xf32>
    %24 = tpu.matmul %21, %23, %cst_27 {dimension_numbers = #tpu.dot_dimension_numbers<[1], [0], [0], [1], [0, 0, 1, 1], [], []>} : vector<512x16xbf16>, vector<16x16xbf16>, vector<512x16xf32> -> vector<512x16xf32>
    %25 = arith.addf %19, %24 : vector<512x16xf32>
    %c0_28 = arith.constant 0 : index
    %c1_29 = arith.constant 1 : index
    %c1_30 = arith.constant 1 : index
    %c0_31 = arith.constant 0 : index
    %26 = vector.load %arg5[%c0_28, %c1_29, %c1_30, %c0_31] : memref<2x18x18x16xbf16, #tpu.memory_space<vmem>>, vector<2x16x16x16xbf16>
    %27 = vector.shape_cast %26 : vector<2x16x16x16xbf16> to vector<512x16xbf16>
    %c4 = arith.constant 4 : index
    %c0_32 = arith.constant 0 : index
    %c0_33 = arith.constant 0 : index
    %28 = vector.load %arg3[%c4, %c0_32, %c0_33] : memref<9x16x16xbf16, #tpu.memory_space<vmem>>, vector<1x16x16xbf16>
    %29 = vector.shape_cast %28 : vector<1x16x16xbf16> to vector<16x16xbf16>
    %cst_34 = arith.constant dense<0.000000e+00> : vector<512x16xf32>
    %30 = tpu.matmul %27, %29, %cst_34 {dimension_numbers = #tpu.dot_dimension_numbers<[1], [0], [0], [1], [0, 0, 1, 1], [], []>} : vector<512x16xbf16>, vector<16x16xbf16>, vector<512x16xf32> -> vector<512x16xf32>
    %31 = arith.addf %25, %30 : vector<512x16xf32>
    %c0_35 = arith.constant 0 : index
    %c1_36 = arith.constant 1 : index
    %c2_37 = arith.constant 2 : index
    %c0_38 = arith.constant 0 : index
    %32 = vector.load %arg5[%c0_35, %c1_36, %c2_37, %c0_38] : memref<2x18x18x16xbf16, #tpu.memory_space<vmem>>, vector<2x16x16x16xbf16>
    %33 = vector.shape_cast %32 : vector<2x16x16x16xbf16> to vector<512x16xbf16>
    %c5 = arith.constant 5 : index
    %c0_39 = arith.constant 0 : index
    %c0_40 = arith.constant 0 : index
    %34 = vector.load %arg3[%c5, %c0_39, %c0_40] : memref<9x16x16xbf16, #tpu.memory_space<vmem>>, vector<1x16x16xbf16>
    %35 = vector.shape_cast %34 : vector<1x16x16xbf16> to vector<16x16xbf16>
    %cst_41 = arith.constant dense<0.000000e+00> : vector<512x16xf32>
    %36 = tpu.matmul %33, %35, %cst_41 {dimension_numbers = #tpu.dot_dimension_numbers<[1], [0], [0], [1], [0, 0, 1, 1], [], []>} : vector<512x16xbf16>, vector<16x16xbf16>, vector<512x16xf32> -> vector<512x16xf32>
    %37 = arith.addf %31, %36 : vector<512x16xf32>
    %c0_42 = arith.constant 0 : index
    %c2_43 = arith.constant 2 : index
    %c0_44 = arith.constant 0 : index
    %c0_45 = arith.constant 0 : index
    %38 = vector.load %arg5[%c0_42, %c2_43, %c0_44, %c0_45] : memref<2x18x18x16xbf16, #tpu.memory_space<vmem>>, vector<2x16x16x16xbf16>
    %39 = vector.shape_cast %38 : vector<2x16x16x16xbf16> to vector<512x16xbf16>
    %c6 = arith.constant 6 : index
    %c0_46 = arith.constant 0 : index
    %c0_47 = arith.constant 0 : index
    %40 = vector.load %arg3[%c6, %c0_46, %c0_47] : memref<9x16x16xbf16, #tpu.memory_space<vmem>>, vector<1x16x16xbf16>
    %41 = vector.shape_cast %40 : vector<1x16x16xbf16> to vector<16x16xbf16>
    %cst_48 = arith.constant dense<0.000000e+00> : vector<512x16xf32>
    %42 = tpu.matmul %39, %41, %cst_48 {dimension_numbers = #tpu.dot_dimension_numbers<[1], [0], [0], [1], [0, 0, 1, 1], [], []>} : vector<512x16xbf16>, vector<16x16xbf16>, vector<512x16xf32> -> vector<512x16xf32>
    %43 = arith.addf %37, %42 : vector<512x16xf32>
    %c0_49 = arith.constant 0 : index
    %c2_50 = arith.constant 2 : index
    %c1_51 = arith.constant 1 : index
    %c0_52 = arith.constant 0 : index
    %44 = vector.load %arg5[%c0_49, %c2_50, %c1_51, %c0_52] : memref<2x18x18x16xbf16, #tpu.memory_space<vmem>>, vector<2x16x16x16xbf16>
    %45 = vector.shape_cast %44 : vector<2x16x16x16xbf16> to vector<512x16xbf16>
    %c7 = arith.constant 7 : index
    %c0_53 = arith.constant 0 : index
    %c0_54 = arith.constant 0 : index
    %46 = vector.load %arg3[%c7, %c0_53, %c0_54] : memref<9x16x16xbf16, #tpu.memory_space<vmem>>, vector<1x16x16xbf16>
    %47 = vector.shape_cast %46 : vector<1x16x16xbf16> to vector<16x16xbf16>
    %cst_55 = arith.constant dense<0.000000e+00> : vector<512x16xf32>
    %48 = tpu.matmul %45, %47, %cst_55 {dimension_numbers = #tpu.dot_dimension_numbers<[1], [0], [0], [1], [0, 0, 1, 1], [], []>} : vector<512x16xbf16>, vector<16x16xbf16>, vector<512x16xf32> -> vector<512x16xf32>
    %49 = arith.addf %43, %48 : vector<512x16xf32>
    %c0_56 = arith.constant 0 : index
    %c2_57 = arith.constant 2 : index
    %c2_58 = arith.constant 2 : index
    %c0_59 = arith.constant 0 : index
    %50 = vector.load %arg5[%c0_56, %c2_57, %c2_58, %c0_59] : memref<2x18x18x16xbf16, #tpu.memory_space<vmem>>, vector<2x16x16x16xbf16>
    %51 = vector.shape_cast %50 : vector<2x16x16x16xbf16> to vector<512x16xbf16>
    %c8 = arith.constant 8 : index
    %c0_60 = arith.constant 0 : index
    %c0_61 = arith.constant 0 : index
    %52 = vector.load %arg3[%c8, %c0_60, %c0_61] : memref<9x16x16xbf16, #tpu.memory_space<vmem>>, vector<1x16x16xbf16>
    %53 = vector.shape_cast %52 : vector<1x16x16xbf16> to vector<16x16xbf16>
    %cst_62 = arith.constant dense<0.000000e+00> : vector<512x16xf32>
    %54 = tpu.matmul %51, %53, %cst_62 {dimension_numbers = #tpu.dot_dimension_numbers<[1], [0], [0], [1], [0, 0, 1, 1], [], []>} : vector<512x16xbf16>, vector<16x16xbf16>, vector<512x16xf32> -> vector<512x16xf32>
    %55 = arith.addf %49, %54 : vector<512x16xf32>
    %56 = vector.shape_cast %55 : vector<512x16xf32> to vector<2x16x16x16xf32>
    %57 = arith.truncf %56 : vector<2x16x16x16xf32> to vector<2x16x16x16xbf16>
    %c0_63 = arith.constant 0 : index
    %c0_64 = arith.constant 0 : index
    %c0_65 = arith.constant 0 : index
    %c0_66 = arith.constant 0 : index
    %58 = vector.load %arg4[%c0_63, %c0_64, %c0_65, %c0_66] : memref<2x16x16x16xbf16, #tpu.memory_space<vmem>>, vector<2x16x16x16xbf16>
    tpu.vector_store %arg4[%c0_63, %c0_64, %c0_65, %c0_66], %57 {strides = array<i32>} : memref<2x16x16x16xbf16, #tpu.memory_space<vmem>>, vector<2x16x16x16xbf16>,
    return
  }
  func.func @transform_0(%arg0: i32, %arg1: i32) -> (i32, i32, i32, i32) {
    %c0_i32 = arith.constant 0 : i32
    %c0_i32_0 = arith.constant 0 : i32
    %c0_i32_1 = arith.constant 0 : i32
    %c0_i32_2 = arith.constant 0 : i32
    return %arg0, %c0_i32, %c0_i32_0, %c0_i32_1 : i32, i32, i32, i32
  }
  func.func @transform_1(%arg0: i32, %arg1: i32) -> (i32, i32, i32) {
    %c0_i32 = arith.constant 0 : i32
    %c0_i32_0 = arith.constant 0 : i32
    %c0_i32_1 = arith.constant 0 : i32
    return %c0_i32, %c0_i32_0, %arg1 : i32, i32, i32
  }
  func.func @transform_2(%arg0: i32, %arg1: i32) -> (i32, i32, i32, i32) {
    %c0_i32 = arith.constant 0 : i32
    %c0_i32_0 = arith.constant 0 : i32
    %c0_i32_1 = arith.constant 0 : i32
    return %arg0, %c0_i32, %c0_i32_0, %arg1 : i32, i32, i32, i32
  }
}

</mosaic_0001>

<llo_original>
// kernel: tpu_custom_call.1
$region0: #{tpu_custom_call.1}
  #allocation0 [shape = 'u32[]', space=smem, size = 0x4, offset = 0x4, fixed_abs, tag = 'smem constant byte address 0x4 - core index']
  #allocation1 [shape = 'u32[144,128]{1,0:T(1,128)}', space=vmem, size = 0x12000, scoped, tag = 'internal scratch']
  #allocation2 [shape = 'bf16[2,18,18,16]{3,2,1,0:T(8,128)(2,1)}', space=vmem, size = 0x36000, scoped, tag = 'scratch operand']
  %s0 = inlined_call_operand.hbm [shape: bf16[2,16,16,16], index: 0, kind: input, shape index: {}]
  %s1 = inlined_call_operand.hbm [shape: bf16[9,16,16], index: 1, kind: input, shape index: {}]
  %s2 = inlined_call_operand.hbm [shape: bf16[2,16,16,16], index: 2, kind: output, shape index: {}]
  %s3 = sld [smem:[#allocation0]]
  $region30: #{tpu_custom_call.1} parent=0
    _
  %s5 = ssub.s32 1, %s3
  %s6 = scalar_select 0, %s5, %s3
  $region1: #{tpu_custom_call.1} parent=0
    #allocation3 [shape = 'u8[131072]{0}', space=vmem, size = 0x20000, scoped, tag = 'input window, operand 0, single buffered']
    #allocation4 [shape = 's32[1]{0}', space=sflag, size = 0x4, scoped, tag = 'scoped memory for tpu_custom_call.1']
    #allocation5 [shape = 's32[1]{0}', space=sflag, size = 0x4, scoped, tag = 'scoped memory for tpu_custom_call.1']
    #allocation6 [shape = 'u8[36864]{0}', space=vmem, size = 0x9000, scoped, tag = 'input window, operand 1, single buffered']
    #allocation7 [shape = 's32[1]{0}', space=sflag, size = 0x4, scoped, tag = 'scoped memory for tpu_custom_call.1']
    #allocation8 [shape = 'u8[131072]{0}', space=vmem, size = 0x20000, scoped, tag = 'output window, operand 0, single buffered']
    %7 = vsyncpa [#allocation4], 0
    %8 = vsyncpa [#allocation7], 0
    %9 = vsyncpa [#allocation5], 0
    // Predicated region
    $region2: #{tpu_custom_call.1} parent=1 // pred_check
      _
    $region3: #{tpu_custom_call.1} parent=1 // pred_check_branch
      %11 = sbr.rel (0) target = $region5
    $region4: #{tpu_custom_call.1} parent=1 // pred_region
      %s13 = ssub.s32 4096, 4096
      %14 = vsyncadd [#allocation4], %s13
      %s15 = sshll.u32 [#allocation3], 4
      %s16 = int_to_ptr.vmem [resolvable:$true] %s15
      %21 = dma.hbm_to_vmem [thread:$0]  %s0, 4096, %s16, [#allocation4], 64, 64, 4
    $region5: #{tpu_custom_call.1} parent=1 // pred_fallthru
      _
    // Predicated region
    $region6: #{tpu_custom_call.1} parent=1 // pred_check
      _
    $region7: #{tpu_custom_call.1} parent=1 // pred_check_branch
      %23 = sbr.rel (0) target = $region9
    $region8: #{tpu_custom_call.1} parent=1 // pred_region
      %s25 = ssub.s32 1152, 1152
      %26 = vsyncadd [#allocation7], %s25
      %s27 = sshll.u32 [#allocation6], 4
      %s28 = int_to_ptr.vmem [resolvable:$true] %s27
      %33 = dma.hbm_to_vmem [thread:$0]  %s1, 1152, %s28, [#allocation7], 64, 64, 4
    $region9: #{tpu_custom_call.1} parent=1 // pred_fallthru
      _
    // Predicated region
    $region10: #{tpu_custom_call.1} parent=1 // pred_check
      _
    $region11: #{tpu_custom_call.1} parent=1 // pred_check_branch
      %35 = sbr.rel (0) target = $region13
    $region12: #{tpu_custom_call.1} parent=1 // pred_region
      %36 = dma.done [#allocation4], 4096
    $region13: #{tpu_custom_call.1} parent=1 // pred_fallthru
      _
    // Predicated region
    $region14: #{tpu_custom_call.1} parent=1 // pred_check
      _
    $region15: #{tpu_custom_call.1} parent=1 // pred_check_branch
      %38 = sbr.rel (0) target = $region17
    $region16: #{tpu_custom_call.1} parent=1 // pred_region
      %39 = dma.done [#allocation7], 1152
    $region17: #{tpu_custom_call.1} parent=1 // pred_fallthru
      _
    %p41 = scmp.eq.s32.totalorder 0, 0
    // Predicated region
    $region18: #{tpu_custom_call.1} parent=1 // pred_check
      %p42 = pneg %p41
    $region19: #{tpu_custom_call.1} parent=1 // pred_check_branch
      %44 = sbr.rel (%p42) target = $region21
    $region20: #{tpu_custom_call.1} parent=1 // pred_region
      %vm45 = vcmask 125952
      %46 = vst.msk [vmem:[#allocation2] sm:$0xf] %vm45, 0
      %47 = vst.msk [vmem:[#allocation2 + $0x4] sm:$0xf] %vm45, 0
      %vm48 = vcmask 122880
      %49 = vst.msk [vmem:[#allocation2 + $0x8] sm:$0x1] %vm48, 0
      %50 = vst.msk [vmem:[#allocation2 + $0xd8] sm:$0xf] %vm45, 0
      %51 = vst.msk [vmem:[#allocation2 + $0xdc] sm:$0xf] %vm45, 0
      %52 = vst.msk [vmem:[#allocation2 + $0xe0] sm:$0x1] %vm48, 0
      %s53 = scalar_lea.vmem [#allocation2], 204
      %54 = vst.msk [vmem:[%s53] sm:$0xf] %vm45, 0
      %55 = vst.msk [vmem:[%s53 + $0x4] sm:$0xf] %vm45, 0
      %56 = vst.msk [vmem:[%s53 + $0x8] sm:$0x1] %vm48, 0
      %57 = vst.msk [vmem:[%s53 + $0xd8] sm:$0xf] %vm45, 0
      %58 = vst.msk [vmem:[%s53 + $0xdc] sm:$0xf] %vm45, 0
      %59 = vst.msk [vmem:[%s53 + $0xe0] sm:$0x1] %vm48, 0
      %s60 = scalar_lea.vmem [#allocation2], 12
      %vm61 = vcmask 122880
      %vm62 = vsmask.f32 256
      %vm63 = vmand %vm61, %vm62
      %v64 = vld [vmem:[%s60] sm:$0x1]
      %v65 = vsel %vm63, 0, %v64
      %66 = vst [vmem:[%s60] sm:$0x1] %v65
      %v67 = vld [vmem:[%s60 + $0xc] sm:$0x1]
      %v68 = vsel %vm63, 0, %v67
      %69 = vst [vmem:[%s60 + $0xc] sm:$0x1] %v68
      %v70 = vld [vmem:[%s60 + $0x18] sm:$0x1]
      %v71 = vsel %vm63, 0, %v70
      %72 = vst [vmem:[%s60 + $0x18] sm:$0x1] %v71
      %v73 = vld [vmem:[%s60 + $0x24] sm:$0x1]
      %v74 = vsel %vm63, 0, %v73
      %75 = vst [vmem:[%s60 + $0x24] sm:$0x1] %v74
      %v76 = vld [vmem:[%s60 + $0x30] sm:$0x1]
      %v77 = vsel %vm63, 0, %v76
      %78 = vst [vmem:[%s60 + $0x30] sm:$0x1] %v77
      %v79 = vld [vmem:[%s60 + $0x3c] sm:$0x1]
      %v80 = vsel %vm63, 0, %v79
      %81 = vst [vmem:[%s60 + $0x3c] sm:$0x1] %v80
      %v82 = vld [vmem:[%s60 + $0x48] sm:$0x1]
      %v83 = vsel %vm63, 0, %v82
      %84 = vst [vmem:[%s60 + $0x48] sm:$0x1] %v83
      %v85 = vld [vmem:[%s60 + $0x54] sm:$0x1]
      %v86 = vsel %vm63, 0, %v85
      %87 = vst [vmem:[%s60 + $0x54] sm:$0x1] %v86
      %v88 = vld [vmem:[%s60 + $0x60] sm:$0x1]
      %v89 = vsel %vm63, 0, %v88
      %90 = vst [vmem:[%s60 + $0x60] sm:$0x1] %v89
      %v91 = vld [vmem:[%s60 + $0x6c] sm:$0x1]
      %v92 = vsel %vm63, 0, %v91
      %93 = vst [vmem:[%s60 + $0x6c] sm:$0x1] %v92
      %v94 = vld [vmem:[%s60 + $0x78] sm:$0x1]
      %v95 = vsel %vm63, 0, %v94
      %96 = vst [vmem:[%s60 + $0x78] sm:$0x1] %v95
      %v97 = vld [vmem:[%s60 + $0x84] sm:$0x1]
      %v98 = vsel %vm63, 0, %v97
      %99 = vst [vmem:[%s60 + $0x84] sm:$0x1] %v98
      %v100 = vld [vmem:[%s60 + $0x90] sm:$0x1]
      %v101 = vsel %vm63, 0, %v100
      %102 = vst [vmem:[%s60 + $0x90] sm:$0x1] %v101
      %v103 = vld [vmem:[%s60 + $0x9c] sm:$0x1]
      %v104 = vsel %vm63, 0, %v103
      %105 = vst [vmem:[%s60 + $0x9c] sm:$0x1] %v104
      %v106 = vld [vmem:[%s60 + $0xa8] sm:$0x1]
      %v107 = vsel %vm63, 0, %v106
      %108 = vst [vmem:[%s60 + $0xa8] sm:$0x1] %v107
      %v109 = vld [vmem:[%s60 + $0xb4] sm:$0x1]
      %v110 = vsel %vm63, 0, %v109
      %111 = vst [vmem:[%s60 + $0xb4] sm:$0x1] %v110
      %v112 = vld [vmem:[%s60 + $0xd8] sm:$0x1]
      %v113 = vsel %vm63, 0, %v112
      %114 = vst [vmem:[%s60 + $0xd8] sm:$0x1] %v113
      %v115 = vld [vmem:[%s60 + $0xe4] sm:$0x1]
      %v116 = vsel %vm63, 0, %v115
      %117 = vst [vmem:[%s60 + $0xe4] sm:$0x1] %v116
      %v118 = vld [vmem:[%s60 + $0xf0] sm:$0x1]
      %v119 = vsel %vm63, 0, %v118
      %120 = vst [vmem:[%s60 + $0xf0] sm:$0x1] %v119
      %v121 = vld [vmem:[%s60 + $0xfc] sm:$0x1]
      %v122 = vsel %vm63, 0, %v121
      %123 = vst [vmem:[%s60 + $0xfc] sm:$0x1] %v122
      %v124 = vld [vmem:[%s60 + $0x108] sm:$0x1]
      %v125 = vsel %vm63, 0, %v124
      %126 = vst [vmem:[%s60 + $0x108] sm:$0x1] %v125
      %v127 = vld [vmem:[%s60 + $0x114] sm:$0x1]
      %v128 = vsel %vm63, 0, %v127
      %129 = vst [vmem:[%s60 + $0x114] sm:$0x1] %v128
      %v130 = vld [vmem:[%s60 + $0x120] sm:$0x1]
      %v131 = vsel %vm63, 0, %v130
      %132 = vst [vmem:[%s60 + $0x120] sm:$0x1] %v131
      %v133 = vld [vmem:[%s60 + $0x12c] sm:$0x1]
      %v134 = vsel %vm63, 0, %v133
      %135 = vst [vmem:[%s60 + $0x12c] sm:$0x1] %v134
      %v136 = vld [vmem:[%s60 + $0x138] sm:$0x1]
      %v137 = vsel %vm63, 0, %v136
      %138 = vst [vmem:[%s60 + $0x138] sm:$0x1] %v137
      %v139 = vld [vmem:[%s60 + $0x144] sm:$0x1]
      %v140 = vsel %vm63, 0, %v139
      %141 = vst [vmem:[%s60 + $0x144] sm:$0x1] %v140
      %v142 = vld [vmem:[%s60 + $0x150] sm:$0x1]
      %v143 = vsel %vm63, 0, %v142
      %144 = vst [vmem:[%s60 + $0x150] sm:$0x1] %v143
      %v145 = vld [vmem:[%s60 + $0x15c] sm:$0x1]
      %v146 = vsel %vm63, 0, %v145
      %147 = vst [vmem:[%s60 + $0x15c] sm:$0x1] %v146
      %v148 = vld [vmem:[%s60 + $0x168] sm:$0x1]
      %v149 = vsel %vm63, 0, %v148
      %150 = vst [vmem:[%s60 + $0x168] sm:$0x1] %v149
      %v151 = vld [vmem:[%s60 + $0x174] sm:$0x1]
      %v152 = vsel %vm63, 0, %v151
      %153 = vst [vmem:[%s60 + $0x174] sm:$0x1] %v152
      %v154 = vld [vmem:[%s60 + $0x180] sm:$0x1]
      %v155 = vsel %vm63, 0, %v154
      %156 = vst [vmem:[%s60 + $0x180] sm:$0x1] %v155
      %v157 = vld [vmem:[%s60 + $0x18c] sm:$0x1]
      %v158 = vsel %vm63, 0, %v157
      %159 = vst [vmem:[%s60 + $0x18c] sm:$0x1] %v158
      %vm160 = vsmask.f32 7938
      %vm161 = vmand %vm61, %vm160
      %v162 = vld [vmem:[%s60 + $0x8] sm:$0x1]
      %v163 = vsel %vm161, 0, %v162
      %164 = vst [vmem:[%s60 + $0x8] sm:$0x1] %v163
      %v165 = vld [vmem:[%s60 + $0x14] sm:$0x1]
      %v166 = vsel %vm161, 0, %v165
      %167 = vst [vmem:[%s60 + $0x14] sm:$0x1] %v166
      %v168 = vld [vmem:[%s60 + $0x20] sm:$0x1]
      %v169 = vsel %vm161, 0, %v168
      %170 = vst [vmem:[%s60 + $0x20] sm:$0x1] %v169
      %v171 = vld [vmem:[%s60 + $0x2c] sm:$0x1]
      %v172 = vsel %vm161, 0, %v171
      %173 = vst [vmem:[%s60 + $0x2c] sm:$0x1] %v172
      %v174 = vld [vmem:[%s60 + $0x38] sm:$0x1]
      %v175 = vsel %vm161, 0, %v174
      %176 = vst [vmem:[%s60 + $0x38] sm:$0x1] %v175
      %v177 = vld [vmem:[%s60 + $0x44] sm:$0x1]
      %v178 = vsel %vm161, 0, %v177
      %179 = vst [vmem:[%s60 + $0x44] sm:$0x1] %v178
      %v180 = vld [vmem:[%s60 + $0x50] sm:$0x1]
      %v181 = vsel %vm161, 0, %v180
      %182 = vst [vmem:[%s60 + $0x50] sm:$0x1] %v181
      %v183 = vld [vmem:[%s60 + $0x5c] sm:$0x1]
      %v184 = vsel %vm161, 0, %v183
      %185 = vst [vmem:[%s60 + $0x5c] sm:$0x1] %v184
      %v186 = vld [vmem:[%s60 + $0x68] sm:$0x1]
      %v187 = vsel %vm161, 0, %v186
      %188 = vst [vmem:[%s60 + $0x68] sm:$0x1] %v187
      %v189 = vld [vmem:[%s60 + $0x74] sm:$0x1]
      %v190 = vsel %vm161, 0, %v189
      %191 = vst [vmem:[%s60 + $0x74] sm:$0x1] %v190
      %v192 = vld [vmem:[%s60 + $0x80] sm:$0x1]
      %v193 = vsel %vm161, 0, %v192
      %194 = vst [vmem:[%s60 + $0x80] sm:$0x1] %v193
      %v195 = vld [vmem:[%s60 + $0x8c] sm:$0x1]
      %v196 = vsel %vm161, 0, %v195
      %197 = vst [vmem:[%s60 + $0x8c] sm:$0x1] %v196
      %v198 = vld [vmem:[%s60 + $0x98] sm:$0x1]
      %v199 = vsel %vm161, 0, %v198
      %200 = vst [vmem:[%s60 + $0x98] sm:$0x1] %v199
      %v201 = vld [vmem:[%s60 + $0xa4] sm:$0x1]
      %v202 = vsel %vm161, 0, %v201
      %203 = vst [vmem:[%s60 + $0xa4] sm:$0x1] %v202
      %v204 = vld [vmem:[%s60 + $0xb0] sm:$0x1]
      %v205 = vsel %vm161, 0, %v204
      %206 = vst [vmem:[%s60 + $0xb0] sm:$0x1] %v205
      %v207 = vld [vmem:[%s60 + $0xbc] sm:$0x1]
      %v208 = vsel %vm161, 0, %v207
      %209 = vst [vmem:[%s60 + $0xbc] sm:$0x1] %v208
      %v210 = vld [vmem:[%s60 + $0xe0] sm:$0x1]
      %v211 = vsel %vm161, 0, %v210
      %212 = vst [vmem:[%s60 + $0xe0] sm:$0x1] %v211
      %v213 = vld [vmem:[%s60 + $0xec] sm:$0x1]
      %v214 = vsel %vm161, 0, %v213
      %215 = vst [vmem:[%s60 + $0xec] sm:$0x1] %v214
      %v216 = vld [vmem:[%s60 + $0xf8] sm:$0x1]
      %v217 = vsel %vm161, 0, %v216
      %218 = vst [vmem:[%s60 + $0xf8] sm:$0x1] %v217
      %v219 = vld [vmem:[%s60 + $0x104] sm:$0x1]
      %v220 = vsel %vm161, 0, %v219
      %221 = vst [vmem:[%s60 + $0x104] sm:$0x1] %v220
      %v222 = vld [vmem:[%s60 + $0x110] sm:$0x1]
      %v223 = vsel %vm161, 0, %v222
      %224 = vst [vmem:[%s60 + $0x110] sm:$0x1] %v223
      %v225 = vld [vmem:[%s60 + $0x11c] sm:$0x1]
      %v226 = vsel %vm161, 0, %v225
      %227 = vst [vmem:[%s60 + $0x11c] sm:$0x1] %v226
      %v228 = vld [vmem:[%s60 + $0x128] sm:$0x1]
      %v229 = vsel %vm161, 0, %v228
      %230 = vst [vmem:[%s60 + $0x128] sm:$0x1] %v229
      %v231 = vld [vmem:[%s60 + $0x134] sm:$0x1]
      %v232 = vsel %vm161, 0, %v231
      %233 = vst [vmem:[%s60 + $0x134] sm:$0x1] %v232
      %v234 = vld [vmem:[%s60 + $0x140] sm:$0x1]
      %v235 = vsel %vm161, 0, %v234
      %236 = vst [vmem:[%s60 + $0x140] sm:$0x1] %v235
      %v237 = vld [vmem:[%s60 + $0x14c] sm:$0x1]
      %v238 = vsel %vm161, 0, %v237
      %239 = vst [vmem:[%s60 + $0x14c] sm:$0x1] %v238
      %v240 = vld [vmem:[%s60 + $0x158] sm:$0x1]
      %v241 = vsel %vm161, 0, %v240
      %242 = vst [vmem:[%s60 + $0x158] sm:$0x1] %v241
      %v243 = vld [vmem:[%s60 + $0x164] sm:$0x1]
      %v244 = vsel %vm161, 0, %v243
      %245 = vst [vmem:[%s60 + $0x164] sm:$0x1] %v244
      %v246 = vld [vmem:[%s60 + $0x170] sm:$0x1]
      %v247 = vsel %vm161, 0, %v246
      %248 = vst [vmem:[%s60 + $0x170] sm:$0x1] %v247
      %v249 = vld [vmem:[%s60 + $0x17c] sm:$0x1]
      %v250 = vsel %vm161, 0, %v249
      %251 = vst [vmem:[%s60 + $0x17c] sm:$0x1] %v250
      %v252 = vld [vmem:[%s60 + $0x188] sm:$0x1]
      %v253 = vsel %vm161, 0, %v252
      %254 = vst [vmem:[%s60 + $0x188] sm:$0x1] %v253
      %v255 = vld [vmem:[%s60 + $0x194] sm:$0x1]
      %v256 = vsel %vm161, 0, %v255
      %257 = vst [vmem:[%s60 + $0x194] sm:$0x1] %v256
      %v258 = vld [vmem:[#allocation3] sm:$0xf]
      %v259 = vld [vmem:[#allocation3 + $0x4] sm:$0xf]
      %v260 = vld [vmem:[#allocation3 + $0x8] sm:$0xf]
      %v261 = vld [vmem:[#allocation3 + $0xc] sm:$0xf]
      %v262 = vld [vmem:[#allocation3 + $0x10] sm:$0xf]
      %v263 = vld [vmem:[#allocation3 + $0x14] sm:$0xf]
      %v264 = vld [vmem:[#allocation3 + $0x18] sm:$0xf]
      %v265 = vld [vmem:[#allocation3 + $0x1c] sm:$0xf]
      %v266 = vld [vmem:[#allocation3 + $0x20] sm:$0xf]
      %v267 = vld [vmem:[#allocation3 + $0x24] sm:$0xf]
      %v268 = vld [vmem:[#allocation3 + $0x28] sm:$0xf]
      %v269 = vld [vmem:[#allocation3 + $0x2c] sm:$0xf]
      %v270 = vld [vmem:[#allocation3 + $0x30] sm:$0xf]
      %v271 = vld [vmem:[#allocation3 + $0x34] sm:$0xf]
      %v272 = vld [vmem:[#allocation3 + $0x38] sm:$0xf]
      %v273 = vld [vmem:[#allocation3 + $0x3c] sm:$0xf]
      %v274 = vld [vmem:[#allocation3 + $0x40] sm:$0xf]
      %v275 = vld [vmem:[#allocation3 + $0x44] sm:$0xf]
      %v276 = vld [vmem:[#allocation3 + $0x48] sm:$0xf]
      %v277 = vld [vmem:[#allocation3 + $0x4c] sm:$0xf]
      %v278 = vld [vmem:[#allocation3 + $0x50] sm:$0xf]
      %v279 = vld [vmem:[#allocation3 + $0x54] sm:$0xf]
      %v280 = vld [vmem:[#allocation3 + $0x58] sm:$0xf]
      %v281 = vld [vmem:[#allocation3 + $0x5c] sm:$0xf]
      %v282 = vld [vmem:[#allocation3 + $0x60] sm:$0xf]
      %v283 = vld [vmem:[#allocation3 + $0x64] sm:$0xf]
      %v284 = vld [vmem:[#allocation3 + $0x68] sm:$0xf]
      %v285 = vld [vmem:[#allocation3 + $0x6c] sm:$0xf]
      %v286 = vld [vmem:[#allocation3 + $0x70] sm:$0xf]
      %v287 = vld [vmem:[#allocation3 + $0x74] sm:$0xf]
      %v288 = vld [vmem:[#allocation3 + $0x78] sm:$0xf]
      %v289 = vld [vmem:[#allocation3 + $0x7c] sm:$0xf]
      %v290 = vld [vmem:[#allocation3 + $0x80] sm:$0xf]
      %v291 = vld [vmem:[#allocation3 + $0x84] sm:$0xf]
      %v292 = vld [vmem:[#allocation3 + $0x88] sm:$0xf]
      %v293 = vld [vmem:[#allocation3 + $0x8c] sm:$0xf]
      %v294 = vld [vmem:[#allocation3 + $0x90] sm:$0xf]
      %v295 = vld [vmem:[#allocation3 + $0x94] sm:$0xf]
      %v296 = vld [vmem:[#allocation3 + $0x98] sm:$0xf]
      %v297 = vld [vmem:[#allocation3 + $0x9c] sm:$0xf]
      %v298 = vld [vmem:[#allocation3 + $0xa0] sm:$0xf]
      %v299 = vld [vmem:[#allocation3 + $0xa4] sm:$0xf]
      %v300 = vld [vmem:[#allocation3 + $0xa8] sm:$0xf]
      %v301 = vld [vmem:[#allocation3 + $0xac] sm:$0xf]
      %v302 = vld [vmem:[#allocation3 + $0xb0] sm:$0xf]
      %v303 = vld [vmem:[#allocation3 + $0xb4] sm:$0xf]
      %v304 = vld [vmem:[#allocation3 + $0xb8] sm:$0xf]
      %v305 = vld [vmem:[#allocation3 + $0xbc] sm:$0xf]
      %v306 = vld [vmem:[#allocation3 + $0xc0] sm:$0xf]
      %v307 = vld [vmem:[#allocation3 + $0xc4] sm:$0xf]
      %v308 = vld [vmem:[#allocation3 + $0xc8] sm:$0xf]
      %v309 = vld [vmem:[#allocation3 + $0xcc] sm:$0xf]
      %v310 = vld [vmem:[#allocation3 + $0xd0] sm:$0xf]
      %v311 = vld [vmem:[#allocation3 + $0xd4] sm:$0xf]
      %v312 = vld [vmem:[#allocation3 + $0xd8] sm:$0xf]
      %v313 = vld [vmem:[#allocation3 + $0xdc] sm:$0xf]
      %v314 = vld [vmem:[#allocation3 + $0xe0] sm:$0xf]
      %v315 = vld [vmem:[#allocation3 + $0xe4] sm:$0xf]
      %v316 = vld [vmem:[#allocation3 + $0xe8] sm:$0xf]
      %v317 = vld [vmem:[#allocation3 + $0xec] sm:$0xf]
      %v318 = vld [vmem:[#allocation3 + $0xf0] sm:$0xf]
      %v319 = vld [vmem:[#allocation3 + $0xf4] sm:$0xf]
      %v320 = vld [vmem:[#allocation3 + $0xf8] sm:$0xf]
      %v321 = vld [vmem:[#allocation3 + $0xfc] sm:$0xf]
      %vm322 = vsmask.f32 4368
      %vm323 = vmor %vm62, %vm322
      %v325 = vshrl.u32 %v258, 16
      %v327 = vrot.slane %v325, 7
      %v328 = vshll.u32 %v258, 16
      %v330 = vor.u32 %v327, %v328
      %v331 = vrot.slane %v327, 4
      %v333 = vshrl.u32 %v259, 16
      %v335 = vrot.slane %v333, 7
      %v336 = vshll.u32 %v259, 16
      %v338 = vor.u32 %v335, %v336
      %v339 = vsel %vm323, %v331, %v338
      %v340 = vrot.slane %v335, 4
      %v342 = vshrl.u32 %v260, 16
      %v344 = vrot.slane %v342, 7
      %v345 = vshll.u32 %v260, 16
      %v347 = vor.u32 %v344, %v345
      %v348 = vrot.slane %v344, 4
      %v350 = vshrl.u32 %v261, 16
      %v352 = vrot.slane %v350, 7
      %v353 = vshll.u32 %v261, 16
      %v355 = vor.u32 %v352, %v353
      %v356 = vsel %vm323, %v348, %v355
      %v357 = vrot.slane %v352, 4
      %v359 = vshrl.u32 %v262, 16
      %v361 = vrot.slane %v359, 7
      %v362 = vshll.u32 %v262, 16
      %v364 = vor.u32 %v361, %v362
      %v365 = vrot.slane %v361, 4
      %v367 = vshrl.u32 %v263, 16
      %v369 = vrot.slane %v367, 7
      %v370 = vshll.u32 %v263, 16
      %v372 = vor.u32 %v369, %v370
      %v373 = vsel %vm323, %v365, %v372
      %v374 = vrot.slane %v369, 4
      %v376 = vshrl.u32 %v264, 16
      %v378 = vrot.slane %v376, 7
      %v379 = vshll.u32 %v264, 16
      %v381 = vor.u32 %v378, %v379
      %v382 = vrot.slane %v378, 4
      %v384 = vshrl.u32 %v265, 16
      %v386 = vrot.slane %v384, 7
      %v387 = vshll.u32 %v265, 16
      %v389 = vor.u32 %v386, %v387
      %v390 = vsel %vm323, %v382, %v389
      %v391 = vrot.slane %v386, 4
      %v393 = vshrl.u32 %v266, 16
      %v395 = vrot.slane %v393, 7
      %v396 = vshll.u32 %v266, 16
      %v398 = vor.u32 %v395, %v396
      %v399 = vrot.slane %v395, 4
      %v401 = vshrl.u32 %v267, 16
      %v403 = vrot.slane %v401, 7
      %v404 = vshll.u32 %v267, 16
      %v406 = vor.u32 %v403, %v404
      %v407 = vsel %vm323, %v399, %v406
      %v408 = vrot.slane %v403, 4
      %v410 = vshrl.u32 %v268, 16
      %v412 = vrot.slane %v410, 7
      %v413 = vshll.u32 %v268, 16
      %v415 = vor.u32 %v412, %v413
      %v416 = vrot.slane %v412, 4
      %v418 = vshrl.u32 %v269, 16
      %v420 = vrot.slane %v418, 7
      %v421 = vshll.u32 %v269, 16
      %v423 = vor.u32 %v420, %v421
      %v424 = vsel %vm323, %v416, %v423
      %v425 = vrot.slane %v420, 4
      %v427 = vshrl.u32 %v270, 16
      %v429 = vrot.slane %v427, 7
      %v430 = vshll.u32 %v270, 16
      %v432 = vor.u32 %v429, %v430
      %v433 = vrot.slane %v429, 4
      %v435 = vshrl.u32 %v271, 16
      %v437 = vrot.slane %v435, 7
      %v438 = vshll.u32 %v271, 16
      %v440 = vor.u32 %v437, %v438
      %v441 = vsel %vm323, %v433, %v440
      %v442 = vrot.slane %v437, 4
      %v444 = vshrl.u32 %v272, 16
      %v446 = vrot.slane %v444, 7
      %v447 = vshll.u32 %v272, 16
      %v449 = vor.u32 %v446, %v447
      %v450 = vrot.slane %v446, 4
      %v452 = vshrl.u32 %v273, 16
      %v454 = vrot.slane %v452, 7
      %v455 = vshll.u32 %v273, 16
      %v457 = vor.u32 %v454, %v455
      %v458 = vsel %vm323, %v450, %v457
      %v459 = vrot.slane %v454, 4
      %v461 = vshrl.u32 %v274, 16
      %v463 = vrot.slane %v461, 7
      %v464 = vshll.u32 %v274, 16
      %v466 = vor.u32 %v463, %v464
      %v467 = vrot.slane %v463, 4
      %v469 = vshrl.u32 %v275, 16
      %v471 = vrot.slane %v469, 7
      %v472 = vshll.u32 %v275, 16
      %v474 = vor.u32 %v471, %v472
      %v475 = vsel %vm323, %v467, %v474
      %v476 = vrot.slane %v471, 4
      %v478 = vshrl.u32 %v276, 16
      %v480 = vrot.slane %v478, 7
      %v481 = vshll.u32 %v276, 16
      %v483 = vor.u32 %v480, %v481
      %v484 = vrot.slane %v480, 4
      %v486 = vshrl.u32 %v277, 16
      %v488 = vrot.slane %v486, 7
      %v489 = vshll.u32 %v277, 16
      %v491 = vor.u32 %v488, %v489
      %v492 = vsel %vm323, %v484, %v491
      %v493 = vrot.slane %v488, 4
      %v495 = vshrl.u32 %v278, 16
      %v497 = vrot.slane %v495, 7
      %v498 = vshll.u32 %v278, 16
      %v500 = vor.u32 %v497, %v498
      %v501 = vrot.slane %v497, 4
      %v503 = vshrl.u32 %v279, 16
      %v505 = vrot.slane %v503, 7
      %v506 = vshll.u32 %v279, 16
      %v508 = vor.u32 %v505, %v506
      %v509 = vsel %vm323, %v501, %v508
      %v510 = vrot.slane %v505, 4
      %v512 = vshrl.u32 %v280, 16
      %v514 = vrot.slane %v512, 7
      %v515 = vshll.u32 %v280, 16
      %v517 = vor.u32 %v514, %v515
      %v518 = vrot.slane %v514, 4
      %v520 = vshrl.u32 %v281, 16
      %v522 = vrot.slane %v520, 7
      %v523 = vshll.u32 %v281, 16
      %v525 = vor.u32 %v522, %v523
      %v526 = vsel %vm323, %v518, %v525
      %v527 = vrot.slane %v522, 4
      %v529 = vshrl.u32 %v282, 16
      %v531 = vrot.slane %v529, 7
      %v532 = vshll.u32 %v282, 16
      %v534 = vor.u32 %v531, %v532
      %v535 = vrot.slane %v531, 4
      %v537 = vshrl.u32 %v283, 16
      %v539 = vrot.slane %v537, 7
      %v540 = vshll.u32 %v283, 16
      %v542 = vor.u32 %v539, %v540
      %v543 = vsel %vm323, %v535, %v542
      %v544 = vrot.slane %v539, 4
      %v546 = vshrl.u32 %v284, 16
      %v548 = vrot.slane %v546, 7
      %v549 = vshll.u32 %v284, 16
      %v551 = vor.u32 %v548, %v549
      %v552 = vrot.slane %v548, 4
      %v554 = vshrl.u32 %v285, 16
      %v556 = vrot.slane %v554, 7
      %v557 = vshll.u32 %v285, 16
      %v559 = vor.u32 %v556, %v557
      %v560 = vsel %vm323, %v552, %v559
      %v561 = vrot.slane %v556, 4
      %v563 = vshrl.u32 %v286, 16
      %v565 = vrot.slane %v563, 7
      %v566 = vshll.u32 %v286, 16
      %v568 = vor.u32 %v565, %v566
      %v569 = vrot.slane %v565, 4
      %v571 = vshrl.u32 %v287, 16
      %v573 = vrot.slane %v571, 7
      %v574 = vshll.u32 %v287, 16
      %v576 = vor.u32 %v573, %v574
      %v577 = vsel %vm323, %v569, %v576
      %v578 = vrot.slane %v573, 4
      %v580 = vshrl.u32 %v288, 16
      %v582 = vrot.slane %v580, 7
      %v583 = vshll.u32 %v288, 16
      %v585 = vor.u32 %v582, %v583
      %v586 = vrot.slane %v582, 4
      %v588 = vshrl.u32 %v289, 16
      %v590 = vrot.slane %v588, 7
      %v591 = vshll.u32 %v289, 16
      %v593 = vor.u32 %v590, %v591
      %v594 = vsel %vm323, %v586, %v593
      %v595 = vrot.slane %v590, 4
      %v597 = vshrl.u32 %v290, 16
      %v599 = vrot.slane %v597, 7
      %v600 = vshll.u32 %v290, 16
      %v602 = vor.u32 %v599, %v600
      %v603 = vrot.slane %v599, 4
      %v605 = vshrl.u32 %v291, 16
      %v607 = vrot.slane %v605, 7
      %v608 = vshll.u32 %v291, 16
      %v610 = vor.u32 %v607, %v608
      %v611 = vsel %vm323, %v603, %v610
      %v612 = vrot.slane %v607, 4
      %v614 = vshrl.u32 %v292, 16
      %v616 = vrot.slane %v614, 7
      %v617 = vshll.u32 %v292, 16
      %v619 = vor.u32 %v616, %v617
      %v620 = vrot.slane %v616, 4
      %v622 = vshrl.u32 %v293, 16
      %v624 = vrot.slane %v622, 7
      %v625 = vshll.u32 %v293, 16
      %v627 = vor.u32 %v624, %v625
      %v628 = vsel %vm323, %v620, %v627
      %v629 = vrot.slane %v624, 4
      %v631 = vshrl.u32 %v294, 16
      %v633 = vrot.slane %v631, 7
      %v634 = vshll.u32 %v294, 16
      %v636 = vor.u32 %v633, %v634
      %v637 = vrot.slane %v633, 4
      %v639 = vshrl.u32 %v295, 16
      %v641 = vrot.slane %v639, 7
      %v642 = vshll.u32 %v295, 16
      %v644 = vor.u32 %v641, %v642
      %v645 = vsel %vm323, %v637, %v644
      %v646 = vrot.slane %v641, 4
      %v648 = vshrl.u32 %v296, 16
      %v650 = vrot.slane %v648, 7
      %v651 = vshll.u32 %v296, 16
      %v653 = vor.u32 %v650, %v651
      %v654 = vrot.slane %v650, 4
      %v656 = vshrl.u32 %v297, 16
      %v658 = vrot.slane %v656, 7
      %v659 = vshll.u32 %v297, 16
      %v661 = vor.u32 %v658, %v659
      %v662 = vsel %vm323, %v654, %v661
      %v663 = vrot.slane %v658, 4
      %v665 = vshrl.u32 %v298, 16
      %v667 = vrot.slane %v665, 7
      %v668 = vshll.u32 %v298, 16
      %v670 = vor.u32 %v667, %v668
      %v671 = vrot.slane %v667, 4
      %v673 = vshrl.u32 %v299, 16
      %v675 = vrot.slane %v673, 7
      %v676 = vshll.u32 %v299, 16
      %v678 = vor.u32 %v675, %v676
      %v679 = vsel %vm323, %v671, %v678
      %v680 = vrot.slane %v675, 4
      %v682 = vshrl.u32 %v300, 16
      %v684 = vrot.slane %v682, 7
      %v685 = vshll.u32 %v300, 16
      %v687 = vor.u32 %v684, %v685
      %v688 = vrot.slane %v684, 4
      %v690 = vshrl.u32 %v301, 16
      %v692 = vrot.slane %v690, 7
      %v693 = vshll.u32 %v301, 16
      %v695 = vor.u32 %v692, %v693
      %v696 = vsel %vm323, %v688, %v695
      %v697 = vrot.slane %v692, 4
      %v699 = vshrl.u32 %v302, 16
      %v701 = vrot.slane %v699, 7
      %v702 = vshll.u32 %v302, 16
      %v704 = vor.u32 %v701, %v702
      %v705 = vrot.slane %v701, 4
      %v707 = vshrl.u32 %v303, 16
      %v709 = vrot.slane %v707, 7
      %v710 = vshll.u32 %v303, 16
      %v712 = vor.u32 %v709, %v710
      %v713 = vsel %vm323, %v705, %v712
      %v714 = vrot.slane %v709, 4
      %v716 = vshrl.u32 %v304, 16
      %v718 = vrot.slane %v716, 7
      %v719 = vshll.u32 %v304, 16
      %v721 = vor.u32 %v718, %v719
      %v722 = vrot.slane %v718, 4
      %v724 = vshrl.u32 %v305, 16
      %v726 = vrot.slane %v724, 7
      %v727 = vshll.u32 %v305, 16
      %v729 = vor.u32 %v726, %v727
      %v730 = vsel %vm323, %v722, %v729
      %v731 = vrot.slane %v726, 4
      %v733 = vshrl.u32 %v306, 16
      %v735 = vrot.slane %v733, 7
      %v736 = vshll.u32 %v306, 16
      %v738 = vor.u32 %v735, %v736
      %v739 = vrot.slane %v735, 4
      %v741 = vshrl.u32 %v307, 16
      %v743 = vrot.slane %v741, 7
      %v744 = vshll.u32 %v307, 16
      %v746 = vor.u32 %v743, %v744
      %v747 = vsel %vm323, %v739, %v746
      %v748 = vrot.slane %v743, 4
      %v750 = vshrl.u32 %v308, 16
      %v752 = vrot.slane %v750, 7
      %v753 = vshll.u32 %v308, 16
      %v755 = vor.u32 %v752, %v753
      %v756 = vrot.slane %v752, 4
      %v758 = vshrl.u32 %v309, 16
      %v760 = vrot.slane %v758, 7
      %v761 = vshll.u32 %v309, 16
      %v763 = vor.u32 %v760, %v761
      %v764 = vsel %vm323, %v756, %v763
      %v765 = vrot.slane %v760, 4
      %v767 = vshrl.u32 %v310, 16
      %v769 = vrot.slane %v767, 7
      %v770 = vshll.u32 %v310, 16
      %v772 = vor.u32 %v769, %v770
      %v773 = vrot.slane %v769, 4
      %v775 = vshrl.u32 %v311, 16
      %v777 = vrot.slane %v775, 7
      %v778 = vshll.u32 %v311, 16
      %v780 = vor.u32 %v777, %v778
      %v781 = vsel %vm323, %v773, %v780
      %v782 = vrot.slane %v777, 4
      %v784 = vshrl.u32 %v312, 16
      %v786 = vrot.slane %v784, 7
      %v787 = vshll.u32 %v312, 16
      %v789 = vor.u32 %v786, %v787
      %v790 = vrot.slane %v786, 4
      %v792 = vshrl.u32 %v313, 16
      %v794 = vrot.slane %v792, 7
      %v795 = vshll.u32 %v313, 16
      %v797 = vor.u32 %v794, %v795
      %v798 = vsel %vm323, %v790, %v797
      %v799 = vrot.slane %v794, 4
      %v801 = vshrl.u32 %v314, 16
      %v803 = vrot.slane %v801, 7
      %v804 = vshll.u32 %v314, 16
      %v806 = vor.u32 %v803, %v804
      %v807 = vrot.slane %v803, 4
      %v809 = vshrl.u32 %v315, 16
      %v811 = vrot.slane %v809, 7
      %v812 = vshll.u32 %v315, 16
      %v814 = vor.u32 %v811, %v812
      %v815 = vsel %vm323, %v807, %v814
      %v816 = vrot.slane %v811, 4
      %v818 = vshrl.u32 %v316, 16
      %v820 = vrot.slane %v818, 7
      %v821 = vshll.u32 %v316, 16
      %v823 = vor.u32 %v820, %v821
      %v824 = vrot.slane %v820, 4
      %v826 = vshrl.u32 %v317, 16
      %v828 = vrot.slane %v826, 7
      %v829 = vshll.u32 %v317, 16
      %v831 = vor.u32 %v828, %v829
      %v832 = vsel %vm323, %v824, %v831
      %v833 = vrot.slane %v828, 4
      %v835 = vshrl.u32 %v318, 16
      %v837 = vrot.slane %v835, 7
      %v838 = vshll.u32 %v318, 16
      %v840 = vor.u32 %v837, %v838
      %v841 = vrot.slane %v837, 4
      %v843 = vshrl.u32 %v319, 16
      %v845 = vrot.slane %v843, 7
      %v846 = vshll.u32 %v319, 16
      %v848 = vor.u32 %v845, %v846
      %v849 = vsel %vm323, %v841, %v848
      %v850 = vrot.slane %v845, 4
      %v852 = vshrl.u32 %v320, 16
      %v854 = vrot.slane %v852, 7
      %v855 = vshll.u32 %v320, 16
      %v857 = vor.u32 %v854, %v855
      %v858 = vrot.slane %v854, 4
      %v860 = vshrl.u32 %v321, 16
      %v862 = vrot.slane %v860, 7
      %v863 = vshll.u32 %v321, 16
      %v865 = vor.u32 %v862, %v863
      %v866 = vsel %vm323, %v858, %v865
      %v867 = vrot.slane %v862, 4
      %vm964 = vcmask 125952
      %vm965 = vmand %vm964, %vm160
      %v966 = vld [vmem:[%s60] sm:$0xf]
      %v967 = vsel %vm965, %v330, %v966
      %968 = vst [vmem:[%s60] sm:$0xf] %v967
      %969 = vst.msk [vmem:[%s60 + $0x4] sm:$0xf] %vm45, %v339
      %v970 = vld [vmem:[%s60 + $0x8] sm:$0x1]
      %v971 = vsel %vm63, %v340, %v970
      %972 = vst [vmem:[%s60 + $0x8] sm:$0x1] %v971
      %v973 = vld [vmem:[%s60 + $0xc] sm:$0xf]
      %v974 = vsel %vm965, %v347, %v973
      %975 = vst [vmem:[%s60 + $0xc] sm:$0xf] %v974
      %976 = vst.msk [vmem:[%s60 + $0x10] sm:$0xf] %vm45, %v356
      %v977 = vld [vmem:[%s60 + $0x14] sm:$0x1]
      %v978 = vsel %vm63, %v357, %v977
      %979 = vst [vmem:[%s60 + $0x14] sm:$0x1] %v978
      %v980 = vld [vmem:[%s60 + $0x18] sm:$0xf]
      %v981 = vsel %vm965, %v364, %v980
      %982 = vst [vmem:[%s60 + $0x18] sm:$0xf] %v981
      %983 = vst.msk [vmem:[%s60 + $0x1c] sm:$0xf] %vm45, %v373
      %v984 = vld [vmem:[%s60 + $0x20] sm:$0x1]
      %v985 = vsel %vm63, %v374, %v984
      %986 = vst [vmem:[%s60 + $0x20] sm:$0x1] %v985
      %v987 = vld [vmem:[%s60 + $0x24] sm:$0xf]
      %v988 = vsel %vm965, %v381, %v987
      %989 = vst [vmem:[%s60 + $0x24] sm:$0xf] %v988
      %990 = vst.msk [vmem:[%s60 + $0x28] sm:$0xf] %vm45, %v390
      %v991 = vld [vmem:[%s60 + $0x2c] sm:$0x1]
      %v992 = vsel %vm63, %v391, %v991
      %993 = vst [vmem:[%s60 + $0x2c] sm:$0x1] %v992
      %v994 = vld [vmem:[%s60 + $0x30] sm:$0xf]
      %v995 = vsel %vm965, %v398, %v994
      %996 = vst [vmem:[%s60 + $0x30] sm:$0xf] %v995
      %997 = vst.msk [vmem:[%s60 + $0x34] sm:$0xf] %vm45, %v407
      %v998 = vld [vmem:[%s60 + $0x38] sm:$0x1]
      %v999 = vsel %vm63, %v408, %v998
      %1000 = vst [vmem:[%s60 + $0x38] sm:$0x1] %v999
      %v1001 = vld [vmem:[%s60 + $0x3c] sm:$0xf]
      %v1002 = vsel %vm965, %v415, %v1001
      %1003 = vst [vmem:[%s60 + $0x3c] sm:$0xf] %v1002
      %1004 = vst.msk [vmem:[%s60 + $0x40] sm:$0xf] %vm45, %v424
      %v1005 = vld [vmem:[%s60 + $0x44] sm:$0x1]
      %v1006 = vsel %vm63, %v425, %v1005
      %1007 = vst [vmem:[%s60 + $0x44] sm:$0x1] %v1006
      %v1008 = vld [vmem:[%s60 + $0x48] sm:$0xf]
      %v1009 = vsel %vm965, %v432, %v1008
      %1010 = vst [vmem:[%s60 + $0x48] sm:$0xf] %v1009
      %1011 = vst.msk [vmem:[%s60 + $0x4c] sm:$0xf] %vm45, %v441
      %v1012 = vld [vmem:[%s60 + $0x50] sm:$0x1]
      %v1013 = vsel %vm63, %v442, %v1012
      %1014 = vst [vmem:[%s60 + $0x50] sm:$0x1] %v1013
      %v1015 = vld [vmem:[%s60 + $0x54] sm:$0xf]
      %v1016 = vsel %vm965, %v449, %v1015
      %1017 = vst [vmem:[%s60 + $0x54] sm:$0xf] %v1016
      %1018 = vst.msk [vmem:[%s60 + $0x58] sm:$0xf] %vm45, %v458
      %v1019 = vld [vmem:[%s60 + $0x5c] sm:$0x1]
      %v1020 = vsel %vm63, %v459, %v1019
      %1021 = vst [vmem:[%s60 + $0x5c] sm:$0x1] %v1020
      %v1022 = vld [vmem:[%s60 + $0x60] sm:$0xf]
      %v1023 = vsel %vm965, %v466, %v1022
      %1024 = vst [vmem:[%s60 + $0x60] sm:$0xf] %v1023
      %1025 = vst.msk [vmem:[%s60 + $0x64] sm:$0xf] %vm45, %v475
      %v1026 = vld [vmem:[%s60 + $0x68] sm:$0x1]
      %v1027 = vsel %vm63, %v476, %v1026
      %1028 = vst [vmem:[%s60 + $0x68] sm:$0x1] %v1027
      %v1029 = vld [vmem:[%s60 + $0x6c] sm:$0xf]
      %v1030 = vsel %vm965, %v483, %v1029
      %1031 = vst [vmem:[%s60 + $0x6c] sm:$0xf] %v1030
      %1032 = vst.msk [vmem:[%s60 + $0x70] sm:$0xf] %vm45, %v492
      %v1033 = vld [vmem:[%s60 + $0x74] sm:$0x1]
      %v1034 = vsel %vm63, %v493, %v1033
      %1035 = vst [vmem:[%s60 + $0x74] sm:$0x1] %v1034
      %v1036 = vld [vmem:[%s60 + $0x78] sm:$0xf]
      %v1037 = vsel %vm965, %v500, %v1036
      %1038 = vst [vmem:[%s60 + $0x78] sm:$0xf] %v1037
      %1039 = vst.msk [vmem:[%s60 + $0x7c] sm:$0xf] %vm45, %v509
      %v1040 = vld [vmem:[%s60 + $0x80] sm:$0x1]
      %v1041 = vsel %vm63, %v510, %v1040
      %1042 = vst [vmem:[%s60 + $0x80] sm:$0x1] %v1041
      %v1043 = vld [vmem:[%s60 + $0x84] sm:$0xf]
      %v1044 = vsel %vm965, %v517, %v1043
      %1045 = vst [vmem:[%s60 + $0x84] sm:$0xf] %v1044
      %1046 = vst.msk [vmem:[%s60 + $0x88] sm:$0xf] %vm45, %v526
      %v1047 = vld [vmem:[%s60 + $0x8c] sm:$0x1]
      %v1048 = vsel %vm63, %v527, %v1047
      %1049 = vst [vmem:[%s60 + $0x8c] sm:$0x1] %v1048
      %v1050 = vld [vmem:[%s60 + $0x90] sm:$0xf]
      %v1051 = vsel %vm965, %v534, %v1050
      %1052 = vst [vmem:[%s60 + $0x90] sm:$0xf] %v1051
      %1053 = vst.msk [vmem:[%s60 + $0x94] sm:$0xf] %vm45, %v543
      %v1054 = vld [vmem:[%s60 + $0x98] sm:$0x1]
      %v1055 = vsel %vm63, %v544, %v1054
      %1056 = vst [vmem:[%s60 + $0x98] sm:$0x1] %v1055
      %v1057 = vld [vmem:[%s60 + $0x9c] sm:$0xf]
      %v1058 = vsel %vm965, %v551, %v1057
      %1059 = vst [vmem:[%s60 + $0x9c] sm:$0xf] %v1058
      %1060 = vst.msk [vmem:[%s60 + $0xa0] sm:$0xf] %vm45, %v560
      %v1061 = vld [vmem:[%s60 + $0xa4] sm:$0x1]
      %v1062 = vsel %vm63, %v561, %v1061
      %1063 = vst [vmem:[%s60 + $0xa4] sm:$0x1] %v1062
      %v1064 = vld [vmem:[%s60 + $0xa8] sm:$0xf]
      %v1065 = vsel %vm965, %v568, %v1064
      %1066 = vst [vmem:[%s60 + $0xa8] sm:$0xf] %v1065
      %1067 = vst.msk [vmem:[%s60 + $0xac] sm:$0xf] %vm45, %v577
      %v1068 = vld [vmem:[%s60 + $0xb0] sm:$0x1]
      %v1069 = vsel %vm63, %v578, %v1068
      %1070 = vst [vmem:[%s60 + $0xb0] sm:$0x1] %v1069
      %v1071 = vld [vmem:[%s60 + $0xb4] sm:$0xf]
      %v1072 = vsel %vm965, %v585, %v1071
      %1073 = vst [vmem:[%s60 + $0xb4] sm:$0xf] %v1072
      %1074 = vst.msk [vmem:[%s60 + $0xb8] sm:$0xf] %vm45, %v594
      %v1075 = vld [vmem:[%s60 + $0xbc] sm:$0x1]
      %v1076 = vsel %vm63, %v595, %v1075
      %1077 = vst [vmem:[%s60 + $0xbc] sm:$0x1] %v1076
      %v1078 = vld [vmem:[%s60 + $0xd8] sm:$0xf]
      %v1079 = vsel %vm965, %v602, %v1078
      %1080 = vst [vmem:[%s60 + $0xd8] sm:$0xf] %v1079
      %1081 = vst.msk [vmem:[%s60 + $0xdc] sm:$0xf] %vm45, %v611
      %v1082 = vld [vmem:[%s60 + $0xe0] sm:$0x1]
      %v1083 = vsel %vm63, %v612, %v1082
      %1084 = vst [vmem:[%s60 + $0xe0] sm:$0x1] %v1083
      %v1085 = vld [vmem:[%s60 + $0xe4] sm:$0xf]
      %v1086 = vsel %vm965, %v619, %v1085
      %1087 = vst [vmem:[%s60 + $0xe4] sm:$0xf] %v1086
      %1088 = vst.msk [vmem:[%s60 + $0xe8] sm:$0xf] %vm45, %v628
      %v1089 = vld [vmem:[%s60 + $0xec] sm:$0x1]
      %v1090 = vsel %vm63, %v629, %v1089
      %1091 = vst [vmem:[%s60 + $0xec] sm:$0x1] %v1090
      %v1092 = vld [vmem:[%s60 + $0xf0] sm:$0xf]
      %v1093 = vsel %vm965, %v636, %v1092
      %1094 = vst [vmem:[%s60 + $0xf0] sm:$0xf] %v1093
      %1095 = vst.msk [vmem:[%s60 + $0xf4] sm:$0xf] %vm45, %v645
      %v1096 = vld [vmem:[%s60 + $0xf8] sm:$0x1]
      %v1097 = vsel %vm63, %v646, %v1096
      %1098 = vst [vmem:[%s60 + $0xf8] sm:$0x1] %v1097
      %v1099 = vld [vmem:[%s60 + $0xfc] sm:$0xf]
      %v1100 = vsel %vm965, %v653, %v1099
      %1101 = vst [vmem:[%s60 + $0xfc] sm:$0xf] %v1100
      %1102 = vst.msk [vmem:[%s60 + $0x100] sm:$0xf] %vm45, %v662
      %v1103 = vld [vmem:[%s60 + $0x104] sm:$0x1]
      %v1104 = vsel %vm63, %v663, %v1103
      %1105 = vst [vmem:[%s60 + $0x104] sm:$0x1] %v1104
      %v1106 = vld [vmem:[%s60 + $0x108] sm:$0xf]
      %v1107 = vsel %vm965, %v670, %v1106
      %1108 = vst [vmem:[%s60 + $0x108] sm:$0xf] %v1107
      %1109 = vst.msk [vmem:[%s60 + $0x10c] sm:$0xf] %vm45, %v679
      %v1110 = vld [vmem:[%s60 + $0x110] sm:$0x1]
      %v1111 = vsel %vm63, %v680, %v1110
      %1112 = vst [vmem:[%s60 + $0x110] sm:$0x1] %v1111
      %v1113 = vld [vmem:[%s60 + $0x114] sm:$0xf]
      %v1114 = vsel %vm965, %v687, %v1113
      %1115 = vst [vmem:[%s60 + $0x114] sm:$0xf] %v1114
      %1116 = vst.msk [vmem:[%s60 + $0x118] sm:$0xf] %vm45, %v696
      %v1117 = vld [vmem:[%s60 + $0x11c] sm:$0x1]
      %v1118 = vsel %vm63, %v697, %v1117
      %1119 = vst [vmem:[%s60 + $0x11c] sm:$0x1] %v1118
      %v1120 = vld [vmem:[%s60 + $0x120] sm:$0xf]
      %v1121 = vsel %vm965, %v704, %v1120
      %1122 = vst [vmem:[%s60 + $0x120] sm:$0xf] %v1121
      %1123 = vst.msk [vmem:[%s60 + $0x124] sm:$0xf] %vm45, %v713
      %v1124 = vld [vmem:[%s60 + $0x128] sm:$0x1]
      %v1125 = vsel %vm63, %v714, %v1124
      %1126 = vst [vmem:[%s60 + $0x128] sm:$0x1] %v1125
      %v1127 = vld [vmem:[%s60 + $0x12c] sm:$0xf]
      %v1128 = vsel %vm965, %v721, %v1127
      %1129 = vst [vmem:[%s60 + $0x12c] sm:$0xf] %v1128
      %1130 = vst.msk [vmem:[%s60 + $0x130] sm:$0xf] %vm45, %v730
      %v1131 = vld [vmem:[%s60 + $0x134] sm:$0x1]
      %v1132 = vsel %vm63, %v731, %v1131
      %1133 = vst [vmem:[%s60 + $0x134] sm:$0x1] %v1132
      %v1134 = vld [vmem:[%s60 + $0x138] sm:$0xf]
      %v1135 = vsel %vm965, %v738, %v1134
      %1136 = vst [vmem:[%s60 + $0x138] sm:$0xf] %v1135
      %1137 = vst.msk [vmem:[%s60 + $0x13c] sm:$0xf] %vm45, %v747
      %v1138 = vld [vmem:[%s60 + $0x140] sm:$0x1]
      %v1139 = vsel %vm63, %v748, %v1138
      %1140 = vst [vmem:[%s60 + $0x140] sm:$0x1] %v1139
      %v1141 = vld [vmem:[%s60 + $0x144] sm:$0xf]
      %v1142 = vsel %vm965, %v755, %v1141
      %1143 = vst [vmem:[%s60 + $0x144] sm:$0xf] %v1142
      %1144 = vst.msk [vmem:[%s60 + $0x148] sm:$0xf] %vm45, %v764
      %v1145 = vld [vmem:[%s60 + $0x14c] sm:$0x1]
      %v1146 = vsel %vm63, %v765, %v1145
      %1147 = vst [vmem:[%s60 + $0x14c] sm:$0x1] %v1146
      %v1148 = vld [vmem:[%s60 + $0x150] sm:$0xf]
      %v1149 = vsel %vm965, %v772, %v1148
      %1150 = vst [vmem:[%s60 + $0x150] sm:$0xf] %v1149
      %1151 = vst.msk [vmem:[%s60 + $0x154] sm:$0xf] %vm45, %v781
      %v1152 = vld [vmem:[%s60 + $0x158] sm:$0x1]
      %v1153 = vsel %vm63, %v782, %v1152
      %1154 = vst [vmem:[%s60 + $0x158] sm:$0x1] %v1153
      %v1155 = vld [vmem:[%s60 + $0x15c] sm:$0xf]
      %v1156 = vsel %vm965, %v789, %v1155
      %1157 = vst [vmem:[%s60 + $0x15c] sm:$0xf] %v1156
      %1158 = vst.msk [vmem:[%s60 + $0x160] sm:$0xf] %vm45, %v798
      %v1159 = vld [vmem:[%s60 + $0x164] sm:$0x1]
      %v1160 = vsel %vm63, %v799, %v1159
      %1161 = vst [vmem:[%s60 + $0x164] sm:$0x1] %v1160
      %v1162 = vld [vmem:[%s60 + $0x168] sm:$0xf]
      %v1163 = vsel %vm965, %v806, %v1162
      %1164 = vst [vmem:[%s60 + $0x168] sm:$0xf] %v1163
      %1165 = vst.msk [vmem:[%s60 + $0x16c] sm:$0xf] %vm45, %v815
      %v1166 = vld [vmem:[%s60 + $0x170] sm:$0x1]
      %v1167 = vsel %vm63, %v816, %v1166
      %1168 = vst [vmem:[%s60 + $0x170] sm:$0x1] %v1167
      %v1169 = vld [vmem:[%s60 + $0x174] sm:$0xf]
      %v1170 = vsel %vm965, %v823, %v1169
      %1171 = vst [vmem:[%s60 + $0x174] sm:$0xf] %v1170
      %1172 = vst.msk [vmem:[%s60 + $0x178] sm:$0xf] %vm45, %v832
      %v1173 = vld [vmem:[%s60 + $0x17c] sm:$0x1]
      %v1174 = vsel %vm63, %v833, %v1173
      %1175 = vst [vmem:[%s60 + $0x17c] sm:$0x1] %v1174
      %v1176 = vld [vmem:[%s60 + $0x180] sm:$0xf]
      %v1177 = vsel %vm965, %v840, %v1176
      %1178 = vst [vmem:[%s60 + $0x180] sm:$0xf] %v1177
      %1179 = vst.msk [vmem:[%s60 + $0x184] sm:$0xf] %vm45, %v849
      %v1180 = vld [vmem:[%s60 + $0x188] sm:$0x1]
      %v1181 = vsel %vm63, %v850, %v1180
      %1182 = vst [vmem:[%s60 + $0x188] sm:$0x1] %v1181
      %v1183 = vld [vmem:[%s60 + $0x18c] sm:$0xf]
      %v1184 = vsel %vm965, %v857, %v1183
      %1185 = vst [vmem:[%s60 + $0x18c] sm:$0xf] %v1184
      %1186 = vst.msk [vmem:[%s60 + $0x190] sm:$0xf] %vm45, %v866
      %v1187 = vld [vmem:[%s60 + $0x194] sm:$0x1]
      %v1188 = vsel %vm63, %v867, %v1187
      %1189 = vst [vmem:[%s60 + $0x194] sm:$0x1] %v1188
    $region21: #{tpu_custom_call.1} parent=1 // pred_fallthru
      _
    %v1190 = vld [vmem:[#allocation2] sm:$0xf]
    %v1191 = vld [vmem:[#allocation2 + $0x4] sm:$0xf]
    %v1192 = vld [vmem:[#allocation2 + $0xc] sm:$0xf]
    %v1193 = vld [vmem:[#allocation2 + $0x10] sm:$0xf]
    %v1194 = vld [vmem:[#allocation2 + $0x18] sm:$0xf]
    %v1195 = vld [vmem:[#allocation2 + $0x1c] sm:$0xf]
    %v1196 = vld [vmem:[#allocation2 + $0x24] sm:$0xf]
    %v1197 = vld [vmem:[#allocation2 + $0x28] sm:$0xf]
    %v1198 = vld [vmem:[#allocation2 + $0x30] sm:$0xf]
    %v1199 = vld [vmem:[#allocation2 + $0x34] sm:$0xf]
    %v1200 = vld [vmem:[#allocation2 + $0x3c] sm:$0xf]
    %v1201 = vld [vmem:[#allocation2 + $0x40] sm:$0xf]
    %v1202 = vld [vmem:[#allocation2 + $0x48] sm:$0xf]
    %v1203 = vld [vmem:[#allocation2 + $0x4c] sm:$0xf]
    %v1204 = vld [vmem:[#allocation2 + $0x54] sm:$0xf]
    %v1205 = vld [vmem:[#allocation2 + $0x58] sm:$0xf]
    %v1206 = vld [vmem:[#allocation2 + $0x60] sm:$0xf]
    %v1207 = vld [vmem:[#allocation2 + $0x64] sm:$0xf]
    %v1208 = vld [vmem:[#allocation2 + $0x6c] sm:$0xf]
    %v1209 = vld [vmem:[#allocation2 + $0x70] sm:$0xf]
    %v1210 = vld [vmem:[#allocation2 + $0x78] sm:$0xf]
    %v1211 = vld [vmem:[#allocation2 + $0x7c] sm:$0xf]
    %v1212 = vld [vmem:[#allocation2 + $0x84] sm:$0xf]
    %v1213 = vld [vmem:[#allocation2 + $0x88] sm:$0xf]
    %v1214 = vld [vmem:[#allocation2 + $0x90] sm:$0xf]
    %v1215 = vld [vmem:[#allocation2 + $0x94] sm:$0xf]
    %v1216 = vld [vmem:[#allocation2 + $0x9c] sm:$0xf]
    %v1217 = vld [vmem:[#allocation2 + $0xa0] sm:$0xf]
    %v1218 = vld [vmem:[#allocation2 + $0xa8] sm:$0xf]
    %v1219 = vld [vmem:[#allocation2 + $0xac] sm:$0xf]
    %v1220 = vld [vmem:[#allocation2 + $0xb4] sm:$0xf]
    %v1221 = vld [vmem:[#allocation2 + $0xb8] sm:$0xf]
    %v1222 = vld [vmem:[#allocation2 + $0xd8] sm:$0xf]
    %v1223 = vld [vmem:[#allocation2 + $0xdc] sm:$0xf]
    %v1224 = vld [vmem:[#allocation2 + $0xe4] sm:$0xf]
    %v1225 = vld [vmem:[#allocation2 + $0xe8] sm:$0xf]
    %v1226 = vld [vmem:[#allocation2 + $0xf0] sm:$0xf]
    %v1227 = vld [vmem:[#allocation2 + $0xf4] sm:$0xf]
    %v1228 = vld [vmem:[#allocation2 + $0xfc] sm:$0xf]
    %v1229 = vld [vmem:[#allocation2 + $0x100] sm:$0xf]
    %v1230 = vld [vmem:[#allocation2 + $0x108] sm:$0xf]
    %v1231 = vld [vmem:[#allocation2 + $0x10c] sm:$0xf]
    %v1232 = vld [vmem:[#allocation2 + $0x114] sm:$0xf]
    %v1233 = vld [vmem:[#allocation2 + $0x118] sm:$0xf]
    %v1234 = vld [vmem:[#allocation2 + $0x120] sm:$0xf]
    %v1235 = vld [vmem:[#allocation2 + $0x124] sm:$0xf]
    %v1236 = vld [vmem:[#allocation2 + $0x12c] sm:$0xf]
    %v1237 = vld [vmem:[#allocation2 + $0x130] sm:$0xf]
    %v1238 = vld [vmem:[#allocation2 + $0x138] sm:$0xf]
    %v1239 = vld [vmem:[#allocation2 + $0x13c] sm:$0xf]
    %v1240 = vld [vmem:[#allocation2 + $0x144] sm:$0xf]
    %v1241 = vld [vmem:[#allocation2 + $0x148] sm:$0xf]
    %v1242 = vld [vmem:[#allocation2 + $0x150] sm:$0xf]
    %v1243 = vld [vmem:[#allocation2 + $0x154] sm:$0xf]
    %v1244 = vld [vmem:[#allocation2 + $0x15c] sm:$0xf]
    %v1245 = vld [vmem:[#allocation2 + $0x160] sm:$0xf]
    %v1246 = vld [vmem:[#allocation2 + $0x168] sm:$0xf]
    %v1247 = vld [vmem:[#allocation2 + $0x16c] sm:$0xf]
    %v1248 = vld [vmem:[#allocation2 + $0x174] sm:$0xf]
    %v1249 = vld [vmem:[#allocation2 + $0x178] sm:$0xf]
    %v1250 = vld [vmem:[#allocation2 + $0x180] sm:$0xf]
    %v1251 = vld [vmem:[#allocation2 + $0x184] sm:$0xf]
    %v1252 = vld [vmem:[#allocation2 + $0x18c] sm:$0xf]
    %v1253 = vld [vmem:[#allocation2 + $0x190] sm:$0xf]
    %v1254 = vld [vmem:[#allocation6] sm:$0xf]
    %v1255 = vld [vmem:[#allocation6 + $0x4] sm:$0xf]
    %v1256 = vld [vmem:[#allocation2 + $0x8] sm:$0x1]
    %v1257 = vld [vmem:[#allocation2 + $0x14] sm:$0x1]
    %v1258 = vld [vmem:[#allocation2 + $0x20] sm:$0x1]
    %v1259 = vld [vmem:[#allocation2 + $0x2c] sm:$0x1]
    %v1260 = vld [vmem:[#allocation2 + $0x38] sm:$0x1]
    %v1261 = vld [vmem:[#allocation2 + $0x44] sm:$0x1]
    %v1262 = vld [vmem:[#allocation2 + $0x50] sm:$0x1]
    %v1263 = vld [vmem:[#allocation2 + $0x5c] sm:$0x1]
    %v1264 = vld [vmem:[#allocation2 + $0x68] sm:$0x1]
    %v1265 = vld [vmem:[#allocation2 + $0x74] sm:$0x1]
    %v1266 = vld [vmem:[#allocation2 + $0x80] sm:$0x1]
    %v1267 = vld [vmem:[#allocation2 + $0x8c] sm:$0x1]
    %v1268 = vld [vmem:[#allocation2 + $0x98] sm:$0x1]
    %v1269 = vld [vmem:[#allocation2 + $0xa4] sm:$0x1]
    %v1270 = vld [vmem:[#allocation2 + $0xb0] sm:$0x1]
    %v1271 = vld [vmem:[#allocation2 + $0xbc] sm:$0x1]
    %v1272 = vld [vmem:[#allocation2 + $0xe0] sm:$0x1]
    %v1273 = vld [vmem:[#allocation2 + $0xec] sm:$0x1]
    %v1274 = vld [vmem:[#allocation2 + $0xf8] sm:$0x1]
    %v1275 = vld [vmem:[#allocation2 + $0x104] sm:$0x1]
    %v1276 = vld [vmem:[#allocation2 + $0x110] sm:$0x1]
    %v1277 = vld [vmem:[#allocation2 + $0x11c] sm:$0x1]
    %v1278 = vld [vmem:[#allocation2 + $0x128] sm:$0x1]
    %v1279 = vld [vmem:[#allocation2 + $0x134] sm:$0x1]
    %v1280 = vld [vmem:[#allocation2 + $0x140] sm:$0x1]
    %v1281 = vld [vmem:[#allocation2 + $0x14c] sm:$0x1]
    %v1282 = vld [vmem:[#allocation2 + $0x158] sm:$0x1]
    %v1283 = vld [vmem:[#allocation2 + $0x164] sm:$0x1]
    %v1284 = vld [vmem:[#allocation2 + $0x170] sm:$0x1]
    %v1285 = vld [vmem:[#allocation2 + $0x17c] sm:$0x1]
    %v1286 = vld [vmem:[#allocation2 + $0x188] sm:$0x1]
    %v1287 = vld [vmem:[#allocation2 + $0x194] sm:$0x1]
    %vm1288 = vsmask.f32 3328
    %vm1289 = vsmask.f32 7440
    %vm1290 = vmor %vm1288, %vm1289
    %v1292 = vshrl.u32 %v1190, 16
    %v1294 = vrot.slane %v1292, 4
    %v1295 = vshll.u32 %v1190, 16
    %v1297 = vrot.slane %v1295, 5
    %v1298 = vor.u32 %v1294, %v1297
    %v1299 = vrot.slane %v1298, 4
    %v1301 = vshll.u32 %v1191, 16
    %v1303 = vrot.slane %v1301, 5
    %v1304 = vsel %vm1290, %v1299, %v1303
    %v1305 = vshrl.u32 %v1191, 16
    %v1307 = vrot.slane %v1305, 4
    %v1308 = vor.u32 %v1307, %v1303
    %v1309 = vrot.slane %v1308, 4
    %v1311 = vshll.u32 %v1256, 16
    %v1313 = vrot.slane %v1311, 5
    %v1314 = vsel %vm1290, %v1309, %v1313
    %v1316 = vshrl.u32 %v1192, 16
    %v1318 = vrot.slane %v1316, 4
    %v1319 = vshll.u32 %v1192, 16
    %v1321 = vrot.slane %v1319, 5
    %v1322 = vor.u32 %v1318, %v1321
    %v1323 = vrot.slane %v1322, 4
    %v1325 = vshll.u32 %v1193, 16
    %v1327 = vrot.slane %v1325, 5
    %v1328 = vsel %vm1290, %v1323, %v1327
    %v1329 = vshrl.u32 %v1193, 16
    %v1331 = vrot.slane %v1329, 4
    %v1332 = vor.u32 %v1331, %v1327
    %v1333 = vrot.slane %v1332, 4
    %v1335 = vshll.u32 %v1257, 16
    %v1337 = vrot.slane %v1335, 5
    %v1338 = vsel %vm1290, %v1333, %v1337
    %v1340 = vshrl.u32 %v1194, 16
    %v1342 = vrot.slane %v1340, 4
    %v1343 = vshll.u32 %v1194, 16
    %v1345 = vrot.slane %v1343, 5
    %v1346 = vor.u32 %v1342, %v1345
    %v1347 = vrot.slane %v1346, 4
    %v1349 = vshll.u32 %v1195, 16
    %v1351 = vrot.slane %v1349, 5
    %v1352 = vsel %vm1290, %v1347, %v1351
    %v1353 = vshrl.u32 %v1195, 16
    %v1355 = vrot.slane %v1353, 4
    %v1356 = vor.u32 %v1355, %v1351
    %v1357 = vrot.slane %v1356, 4
    %v1359 = vshll.u32 %v1258, 16
    %v1361 = vrot.slane %v1359, 5
    %v1362 = vsel %vm1290, %v1357, %v1361
    %v1364 = vshrl.u32 %v1196, 16
    %v1366 = vrot.slane %v1364, 4
    %v1367 = vshll.u32 %v1196, 16
    %v1369 = vrot.slane %v1367, 5
    %v1370 = vor.u32 %v1366, %v1369
    %v1371 = vrot.slane %v1370, 4
    %v1373 = vshll.u32 %v1197, 16
    %v1375 = vrot.slane %v1373, 5
    %v1376 = vsel %vm1290, %v1371, %v1375
    %v1377 = vshrl.u32 %v1197, 16
    %v1379 = vrot.slane %v1377, 4
    %v1380 = vor.u32 %v1379, %v1375
    %v1381 = vrot.slane %v1380, 4
    %v1383 = vshll.u32 %v1259, 16
    %v1385 = vrot.slane %v1383, 5
    %v1386 = vsel %vm1290, %v1381, %v1385
    %v1388 = vshrl.u32 %v1198, 16
    %v1390 = vrot.slane %v1388, 4
    %v1391 = vshll.u32 %v1198, 16
    %v1393 = vrot.slane %v1391, 5
    %v1394 = vor.u32 %v1390, %v1393
    %v1395 = vrot.slane %v1394, 4
    %v1397 = vshll.u32 %v1199, 16
    %v1399 = vrot.slane %v1397, 5
    %v1400 = vsel %vm1290, %v1395, %v1399
    %v1401 = vshrl.u32 %v1199, 16
    %v1403 = vrot.slane %v1401, 4
    %v1404 = vor.u32 %v1403, %v1399
    %v1405 = vrot.slane %v1404, 4
    %v1407 = vshll.u32 %v1260, 16
    %v1409 = vrot.slane %v1407, 5
    %v1410 = vsel %vm1290, %v1405, %v1409
    %v1412 = vshrl.u32 %v1200, 16
    %v1414 = vrot.slane %v1412, 4
    %v1415 = vshll.u32 %v1200, 16
    %v1417 = vrot.slane %v1415, 5
    %v1418 = vor.u32 %v1414, %v1417
    %v1419 = vrot.slane %v1418, 4
    %v1421 = vshll.u32 %v1201, 16
    %v1423 = vrot.slane %v1421, 5
    %v1424 = vsel %vm1290, %v1419, %v1423
    %v1425 = vshrl.u32 %v1201, 16
    %v1427 = vrot.slane %v1425, 4
    %v1428 = vor.u32 %v1427, %v1423
    %v1429 = vrot.slane %v1428, 4
    %v1431 = vshll.u32 %v1261, 16
    %v1433 = vrot.slane %v1431, 5
    %v1434 = vsel %vm1290, %v1429, %v1433
    %v1436 = vshrl.u32 %v1202, 16
    %v1438 = vrot.slane %v1436, 4
    %v1439 = vshll.u32 %v1202, 16
    %v1441 = vrot.slane %v1439, 5
    %v1442 = vor.u32 %v1438, %v1441
    %v1443 = vrot.slane %v1442, 4
    %v1445 = vshll.u32 %v1203, 16
    %v1447 = vrot.slane %v1445, 5
    %v1448 = vsel %vm1290, %v1443, %v1447
    %v1449 = vshrl.u32 %v1203, 16
    %v1451 = vrot.slane %v1449, 4
    %v1452 = vor.u32 %v1451, %v1447
    %v1453 = vrot.slane %v1452, 4
    %v1455 = vshll.u32 %v1262, 16
    %v1457 = vrot.slane %v1455, 5
    %v1458 = vsel %vm1290, %v1453, %v1457
    %v1460 = vshrl.u32 %v1204, 16
    %v1462 = vrot.slane %v1460, 4
    %v1463 = vshll.u32 %v1204, 16
    %v1465 = vrot.slane %v1463, 5
    %v1466 = vor.u32 %v1462, %v1465
    %v1467 = vrot.slane %v1466, 4
    %v1469 = vshll.u32 %v1205, 16
    %v1471 = vrot.slane %v1469, 5
    %v1472 = vsel %vm1290, %v1467, %v1471
    %v1473 = vshrl.u32 %v1205, 16
    %v1475 = vrot.slane %v1473, 4
    %v1476 = vor.u32 %v1475, %v1471
    %v1477 = vrot.slane %v1476, 4
    %v1479 = vshll.u32 %v1263, 16
    %v1481 = vrot.slane %v1479, 5
    %v1482 = vsel %vm1290, %v1477, %v1481
    %v1484 = vshrl.u32 %v1206, 16
    %v1486 = vrot.slane %v1484, 4
    %v1487 = vshll.u32 %v1206, 16
    %v1489 = vrot.slane %v1487, 5
    %v1490 = vor.u32 %v1486, %v1489
    %v1491 = vrot.slane %v1490, 4
    %v1493 = vshll.u32 %v1207, 16
    %v1495 = vrot.slane %v1493, 5
    %v1496 = vsel %vm1290, %v1491, %v1495
    %v1497 = vshrl.u32 %v1207, 16
    %v1499 = vrot.slane %v1497, 4
    %v1500 = vor.u32 %v1499, %v1495
    %v1501 = vrot.slane %v1500, 4
    %v1503 = vshll.u32 %v1264, 16
    %v1505 = vrot.slane %v1503, 5
    %v1506 = vsel %vm1290, %v1501, %v1505
    %v1508 = vshrl.u32 %v1208, 16
    %v1510 = vrot.slane %v1508, 4
    %v1511 = vshll.u32 %v1208, 16
    %v1513 = vrot.slane %v1511, 5
    %v1514 = vor.u32 %v1510, %v1513
    %v1515 = vrot.slane %v1514, 4
    %v1517 = vshll.u32 %v1209, 16
    %v1519 = vrot.slane %v1517, 5
    %v1520 = vsel %vm1290, %v1515, %v1519
    %v1521 = vshrl.u32 %v1209, 16
    %v1523 = vrot.slane %v1521, 4
    %v1524 = vor.u32 %v1523, %v1519
    %v1525 = vrot.slane %v1524, 4
    %v1527 = vshll.u32 %v1265, 16
    %v1529 = vrot.slane %v1527, 5
    %v1530 = vsel %vm1290, %v1525, %v1529
    %v1532 = vshrl.u32 %v1210, 16
    %v1534 = vrot.slane %v1532, 4
    %v1535 = vshll.u32 %v1210, 16
    %v1537 = vrot.slane %v1535, 5
    %v1538 = vor.u32 %v1534, %v1537
    %v1539 = vrot.slane %v1538, 4
    %v1541 = vshll.u32 %v1211, 16
    %v1543 = vrot.slane %v1541, 5
    %v1544 = vsel %vm1290, %v1539, %v1543
    %v1545 = vshrl.u32 %v1211, 16
    %v1547 = vrot.slane %v1545, 4
    %v1548 = vor.u32 %v1547, %v1543
    %v1549 = vrot.slane %v1548, 4
    %v1551 = vshll.u32 %v1266, 16
    %v1553 = vrot.slane %v1551, 5
    %v1554 = vsel %vm1290, %v1549, %v1553
    %v1556 = vshrl.u32 %v1212, 16
    %v1558 = vrot.slane %v1556, 4
    %v1559 = vshll.u32 %v1212, 16
    %v1561 = vrot.slane %v1559, 5
    %v1562 = vor.u32 %v1558, %v1561
    %v1563 = vrot.slane %v1562, 4
    %v1565 = vshll.u32 %v1213, 16
    %v1567 = vrot.slane %v1565, 5
    %v1568 = vsel %vm1290, %v1563, %v1567
    %v1569 = vshrl.u32 %v1213, 16
    %v1571 = vrot.slane %v1569, 4
    %v1572 = vor.u32 %v1571, %v1567
    %v1573 = vrot.slane %v1572, 4
    %v1575 = vshll.u32 %v1267, 16
    %v1577 = vrot.slane %v1575, 5
    %v1578 = vsel %vm1290, %v1573, %v1577
    %v1580 = vshrl.u32 %v1214, 16
    %v1582 = vrot.slane %v1580, 4
    %v1583 = vshll.u32 %v1214, 16
    %v1585 = vrot.slane %v1583, 5
    %v1586 = vor.u32 %v1582, %v1585
    %v1587 = vrot.slane %v1586, 4
    %v1589 = vshll.u32 %v1215, 16
    %v1591 = vrot.slane %v1589, 5
    %v1592 = vsel %vm1290, %v1587, %v1591
    %v1593 = vshrl.u32 %v1215, 16
    %v1595 = vrot.slane %v1593, 4
    %v1596 = vor.u32 %v1595, %v1591
    %v1597 = vrot.slane %v1596, 4
    %v1599 = vshll.u32 %v1268, 16
    %v1601 = vrot.slane %v1599, 5
    %v1602 = vsel %vm1290, %v1597, %v1601
    %v1604 = vshrl.u32 %v1216, 16
    %v1606 = vrot.slane %v1604, 4
    %v1607 = vshll.u32 %v1216, 16
    %v1609 = vrot.slane %v1607, 5
    %v1610 = vor.u32 %v1606, %v1609
    %v1611 = vrot.slane %v1610, 4
    %v1613 = vshll.u32 %v1217, 16
    %v1615 = vrot.slane %v1613, 5
    %v1616 = vsel %vm1290, %v1611, %v1615
    %v1617 = vshrl.u32 %v1217, 16
    %v1619 = vrot.slane %v1617, 4
    %v1620 = vor.u32 %v1619, %v1615
    %v1621 = vrot.slane %v1620, 4
    %v1623 = vshll.u32 %v1269, 16
    %v1625 = vrot.slane %v1623, 5
    %v1626 = vsel %vm1290, %v1621, %v1625
    %v1628 = vshrl.u32 %v1218, 16
    %v1630 = vrot.slane %v1628, 4
    %v1631 = vshll.u32 %v1218, 16
    %v1633 = vrot.slane %v1631, 5
    %v1634 = vor.u32 %v1630, %v1633
    %v1635 = vrot.slane %v1634, 4
    %v1637 = vshll.u32 %v1219, 16
    %v1639 = vrot.slane %v1637, 5
    %v1640 = vsel %vm1290, %v1635, %v1639
    %v1641 = vshrl.u32 %v1219, 16
    %v1643 = vrot.slane %v1641, 4
    %v1644 = vor.u32 %v1643, %v1639
    %v1645 = vrot.slane %v1644, 4
    %v1647 = vshll.u32 %v1270, 16
    %v1649 = vrot.slane %v1647, 5
    %v1650 = vsel %vm1290, %v1645, %v1649
    %v1652 = vshrl.u32 %v1220, 16
    %v1654 = vrot.slane %v1652, 4
    %v1655 = vshll.u32 %v1220, 16
    %v1657 = vrot.slane %v1655, 5
    %v1658 = vor.u32 %v1654, %v1657
    %v1659 = vrot.slane %v1658, 4
    %v1661 = vshll.u32 %v1221, 16
    %v1663 = vrot.slane %v1661, 5
    %v1664 = vsel %vm1290, %v1659, %v1663
    %v1665 = vshrl.u32 %v1221, 16
    %v1667 = vrot.slane %v1665, 4
    %v1668 = vor.u32 %v1667, %v1663
    %v1669 = vrot.slane %v1668, 4
    %v1671 = vshll.u32 %v1271, 16
    %v1673 = vrot.slane %v1671, 5
    %v1674 = vsel %vm1290, %v1669, %v1673
    %v1676 = vshrl.u32 %v1222, 16
    %v1678 = vrot.slane %v1676, 4
    %v1679 = vshll.u32 %v1222, 16
    %v1681 = vrot.slane %v1679, 5
    %v1682 = vor.u32 %v1678, %v1681
    %v1683 = vrot.slane %v1682, 4
    %v1685 = vshll.u32 %v1223, 16
    %v1687 = vrot.slane %v1685, 5
    %v1688 = vsel %vm1290, %v1683, %v1687
    %v1689 = vshrl.u32 %v1223, 16
    %v1691 = vrot.slane %v1689, 4
    %v1692 = vor.u32 %v1691, %v1687
    %v1693 = vrot.slane %v1692, 4
    %v1695 = vshll.u32 %v1272, 16
    %v1697 = vrot.slane %v1695, 5
    %v1698 = vsel %vm1290, %v1693, %v1697
    %v1700 = vshrl.u32 %v1224, 16
    %v1702 = vrot.slane %v1700, 4
    %v1703 = vshll.u32 %v1224, 16
    %v1705 = vrot.slane %v1703, 5
    %v1706 = vor.u32 %v1702, %v1705
    %v1707 = vrot.slane %v1706, 4
    %v1709 = vshll.u32 %v1225, 16
    %v1711 = vrot.slane %v1709, 5
    %v1712 = vsel %vm1290, %v1707, %v1711
    %v1713 = vshrl.u32 %v1225, 16
    %v1715 = vrot.slane %v1713, 4
    %v1716 = vor.u32 %v1715, %v1711
    %v1717 = vrot.slane %v1716, 4
    %v1719 = vshll.u32 %v1273, 16
    %v1721 = vrot.slane %v1719, 5
    %v1722 = vsel %vm1290, %v1717, %v1721
    %v1724 = vshrl.u32 %v1226, 16
    %v1726 = vrot.slane %v1724, 4
    %v1727 = vshll.u32 %v1226, 16
    %v1729 = vrot.slane %v1727, 5
    %v1730 = vor.u32 %v1726, %v1729
    %v1731 = vrot.slane %v1730, 4
    %v1733 = vshll.u32 %v1227, 16
    %v1735 = vrot.slane %v1733, 5
    %v1736 = vsel %vm1290, %v1731, %v1735
    %v1737 = vshrl.u32 %v1227, 16
    %v1739 = vrot.slane %v1737, 4
    %v1740 = vor.u32 %v1739, %v1735
    %v1741 = vrot.slane %v1740, 4
    %v1743 = vshll.u32 %v1274, 16
    %v1745 = vrot.slane %v1743, 5
    %v1746 = vsel %vm1290, %v1741, %v1745
    %v1748 = vshrl.u32 %v1228, 16
    %v1750 = vrot.slane %v1748, 4
    %v1751 = vshll.u32 %v1228, 16
    %v1753 = vrot.slane %v1751, 5
    %v1754 = vor.u32 %v1750, %v1753
    %v1755 = vrot.slane %v1754, 4
    %v1757 = vshll.u32 %v1229, 16
    %v1759 = vrot.slane %v1757, 5
    %v1760 = vsel %vm1290, %v1755, %v1759
    %v1761 = vshrl.u32 %v1229, 16
    %v1763 = vrot.slane %v1761, 4
    %v1764 = vor.u32 %v1763, %v1759
    %v1765 = vrot.slane %v1764, 4
    %v1767 = vshll.u32 %v1275, 16
    %v1769 = vrot.slane %v1767, 5
    %v1770 = vsel %vm1290, %v1765, %v1769
    %v1772 = vshrl.u32 %v1230, 16
    %v1774 = vrot.slane %v1772, 4
    %v1775 = vshll.u32 %v1230, 16
    %v1777 = vrot.slane %v1775, 5
    %v1778 = vor.u32 %v1774, %v1777
    %v1779 = vrot.slane %v1778, 4
    %v1781 = vshll.u32 %v1231, 16
    %v1783 = vrot.slane %v1781, 5
    %v1784 = vsel %vm1290, %v1779, %v1783
    %v1785 = vshrl.u32 %v1231, 16
    %v1787 = vrot.slane %v1785, 4
    %v1788 = vor.u32 %v1787, %v1783
    %v1789 = vrot.slane %v1788, 4
    %v1791 = vshll.u32 %v1276, 16
    %v1793 = vrot.slane %v1791, 5
    %v1794 = vsel %vm1290, %v1789, %v1793
    %v1796 = vshrl.u32 %v1232, 16
    %v1798 = vrot.slane %v1796, 4
    %v1799 = vshll.u32 %v1232, 16
    %v1801 = vrot.slane %v1799, 5
    %v1802 = vor.u32 %v1798, %v1801
    %v1803 = vrot.slane %v1802, 4
    %v1805 = vshll.u32 %v1233, 16
    %v1807 = vrot.slane %v1805, 5
    %v1808 = vsel %vm1290, %v1803, %v1807
    %v1809 = vshrl.u32 %v1233, 16
    %v1811 = vrot.slane %v1809, 4
    %v1812 = vor.u32 %v1811, %v1807
    %v1813 = vrot.slane %v1812, 4
    %v1815 = vshll.u32 %v1277, 16
    %v1817 = vrot.slane %v1815, 5
    %v1818 = vsel %vm1290, %v1813, %v1817
    %v1820 = vshrl.u32 %v1234, 16
    %v1822 = vrot.slane %v1820, 4
    %v1823 = vshll.u32 %v1234, 16
    %v1825 = vrot.slane %v1823, 5
    %v1826 = vor.u32 %v1822, %v1825
    %v1827 = vrot.slane %v1826, 4
    %v1829 = vshll.u32 %v1235, 16
    %v1831 = vrot.slane %v1829, 5
    %v1832 = vsel %vm1290, %v1827, %v1831
    %v1833 = vshrl.u32 %v1235, 16
    %v1835 = vrot.slane %v1833, 4
    %v1836 = vor.u32 %v1835, %v1831
    %v1837 = vrot.slane %v1836, 4
    %v1839 = vshll.u32 %v1278, 16
    %v1841 = vrot.slane %v1839, 5
    %v1842 = vsel %vm1290, %v1837, %v1841
    %v1844 = vshrl.u32 %v1236, 16
    %v1846 = vrot.slane %v1844, 4
    %v1847 = vshll.u32 %v1236, 16
    %v1849 = vrot.slane %v1847, 5
    %v1850 = vor.u32 %v1846, %v1849
    %v1851 = vrot.slane %v1850, 4
    %v1853 = vshll.u32 %v1237, 16
    %v1855 = vrot.slane %v1853, 5
    %v1856 = vsel %vm1290, %v1851, %v1855
    %v1857 = vshrl.u32 %v1237, 16
    %v1859 = vrot.slane %v1857, 4
    %v1860 = vor.u32 %v1859, %v1855
    %v1861 = vrot.slane %v1860, 4
    %v1863 = vshll.u32 %v1279, 16
    %v1865 = vrot.slane %v1863, 5
    %v1866 = vsel %vm1290, %v1861, %v1865
    %v1868 = vshrl.u32 %v1238, 16
    %v1870 = vrot.slane %v1868, 4
    %v1871 = vshll.u32 %v1238, 16
    %v1873 = vrot.slane %v1871, 5
    %v1874 = vor.u32 %v1870, %v1873
    %v1875 = vrot.slane %v1874, 4
    %v1877 = vshll.u32 %v1239, 16
    %v1879 = vrot.slane %v1877, 5
    %v1880 = vsel %vm1290, %v1875, %v1879
    %v1881 = vshrl.u32 %v1239, 16
    %v1883 = vrot.slane %v1881, 4
    %v1884 = vor.u32 %v1883, %v1879
    %v1885 = vrot.slane %v1884, 4
    %v1887 = vshll.u32 %v1280, 16
    %v1889 = vrot.slane %v1887, 5
    %v1890 = vsel %vm1290, %v1885, %v1889
    %v1892 = vshrl.u32 %v1240, 16
    %v1894 = vrot.slane %v1892, 4
    %v1895 = vshll.u32 %v1240, 16
    %v1897 = vrot.slane %v1895, 5
    %v1898 = vor.u32 %v1894, %v1897
    %v1899 = vrot.slane %v1898, 4
    %v1901 = vshll.u32 %v1241, 16
    %v1903 = vrot.slane %v1901, 5
    %v1904 = vsel %vm1290, %v1899, %v1903
    %v1905 = vshrl.u32 %v1241, 16
    %v1907 = vrot.slane %v1905, 4
    %v1908 = vor.u32 %v1907, %v1903
    %v1909 = vrot.slane %v1908, 4
    %v1911 = vshll.u32 %v1281, 16
    %v1913 = vrot.slane %v1911, 5
    %v1914 = vsel %vm1290, %v1909, %v1913
    %v1916 = vshrl.u32 %v1242, 16
    %v1918 = vrot.slane %v1916, 4
    %v1919 = vshll.u32 %v1242, 16
    %v1921 = vrot.slane %v1919, 5
    %v1922 = vor.u32 %v1918, %v1921
    %v1923 = vrot.slane %v1922, 4
    %v1925 = vshll.u32 %v1243, 16
    %v1927 = vrot.slane %v1925, 5
    %v1928 = vsel %vm1290, %v1923, %v1927
    %v1929 = vshrl.u32 %v1243, 16
    %v1931 = vrot.slane %v1929, 4
    %v1932 = vor.u32 %v1931, %v1927
    %v1933 = vrot.slane %v1932, 4
    %v1935 = vshll.u32 %v1282, 16
    %v1937 = vrot.slane %v1935, 5
    %v1938 = vsel %vm1290, %v1933, %v1937
    %v1940 = vshrl.u32 %v1244, 16
    %v1942 = vrot.slane %v1940, 4
    %v1943 = vshll.u32 %v1244, 16
    %v1945 = vrot.slane %v1943, 5
    %v1946 = vor.u32 %v1942, %v1945
    %v1947 = vrot.slane %v1946, 4
    %v1949 = vshll.u32 %v1245, 16
    %v1951 = vrot.slane %v1949, 5
    %v1952 = vsel %vm1290, %v1947, %v1951
    %v1953 = vshrl.u32 %v1245, 16
    %v1955 = vrot.slane %v1953, 4
    %v1956 = vor.u32 %v1955, %v1951
    %v1957 = vrot.slane %v1956, 4
    %v1959 = vshll.u32 %v1283, 16
    %v1961 = vrot.slane %v1959, 5
    %v1962 = vsel %vm1290, %v1957, %v1961
    %v1964 = vshrl.u32 %v1246, 16
    %v1966 = vrot.slane %v1964, 4
    %v1967 = vshll.u32 %v1246, 16
    %v1969 = vrot.slane %v1967, 5
    %v1970 = vor.u32 %v1966, %v1969
    %v1971 = vrot.slane %v1970, 4
    %v1973 = vshll.u32 %v1247, 16
    %v1975 = vrot.slane %v1973, 5
    %v1976 = vsel %vm1290, %v1971, %v1975
    %v1977 = vshrl.u32 %v1247, 16
    %v1979 = vrot.slane %v1977, 4
    %v1980 = vor.u32 %v1979, %v1975
    %v1981 = vrot.slane %v1980, 4
    %v1983 = vshll.u32 %v1284, 16
    %v1985 = vrot.slane %v1983, 5
    %v1986 = vsel %vm1290, %v1981, %v1985
    %v1988 = vshrl.u32 %v1248, 16
    %v1990 = vrot.slane %v1988, 4
    %v1991 = vshll.u32 %v1248, 16
    %v1993 = vrot.slane %v1991, 5
    %v1994 = vor.u32 %v1990, %v1993
    %v1995 = vrot.slane %v1994, 4
    %v1997 = vshll.u32 %v1249, 16
    %v1999 = vrot.slane %v1997, 5
    %v2000 = vsel %vm1290, %v1995, %v1999
    %v2001 = vshrl.u32 %v1249, 16
    %v2003 = vrot.slane %v2001, 4
    %v2004 = vor.u32 %v2003, %v1999
    %v2005 = vrot.slane %v2004, 4
    %v2007 = vshll.u32 %v1285, 16
    %v2009 = vrot.slane %v2007, 5
    %v2010 = vsel %vm1290, %v2005, %v2009
    %v2012 = vshrl.u32 %v1250, 16
    %v2014 = vrot.slane %v2012, 4
    %v2015 = vshll.u32 %v1250, 16
    %v2017 = vrot.slane %v2015, 5
    %v2018 = vor.u32 %v2014, %v2017
    %v2019 = vrot.slane %v2018, 4
    %v2021 = vshll.u32 %v1251, 16
    %v2023 = vrot.slane %v2021, 5
    %v2024 = vsel %vm1290, %v2019, %v2023
    %v2025 = vshrl.u32 %v1251, 16
    %v2027 = vrot.slane %v2025, 4
    %v2028 = vor.u32 %v2027, %v2023
    %v2029 = vrot.slane %v2028, 4
    %v2031 = vshll.u32 %v1286, 16
    %v2033 = vrot.slane %v2031, 5
    %v2034 = vsel %vm1290, %v2029, %v2033
    %v2036 = vshrl.u32 %v1252, 16
    %v2038 = vrot.slane %v2036, 4
    %v2039 = vshll.u32 %v1252, 16
    %v2041 = vrot.slane %v2039, 5
    %v2042 = vor.u32 %v2038, %v2041
    %v2043 = vrot.slane %v2042, 4
    %v2045 = vshll.u32 %v1253, 16
    %v2047 = vrot.slane %v2045, 5
    %v2048 = vsel %vm1290, %v2043, %v2047
    %v2049 = vshrl.u32 %v1253, 16
    %v2051 = vrot.slane %v2049, 4
    %v2052 = vor.u32 %v2051, %v2047
    %v2053 = vrot.slane %v2052, 4
    %v2055 = vshll.u32 %v1287, 16
    %v2057 = vrot.slane %v2055, 5
    %v2058 = vsel %vm1290, %v2053, %v2057
    %s2059 = scalar_lea.vmem [#allocation6], 8
    %v2060 = vld [vmem:[%s2059] sm:$0xf]
    %v2061 = vld [vmem:[%s2059 + $0x4] sm:$0xf]
    %v2062 = vunpack.c.l.b16 %v1304
    %v2063 = vunpack.c.l.b16 %v1314
    %v2064 = vunpack.c.l.b16 %v1328
    %v2065 = vunpack.c.l.b16 %v1338
    %v2066 = vunpack.c.l.b16 %v1352
    %v2067 = vunpack.c.l.b16 %v1362
    %v2068 = vunpack.c.l.b16 %v1376
    %v2069 = vunpack.c.l.b16 %v1386
    %v2070 = vunpack.c.l.b16 %v1400
    %v2071 = vunpack.c.l.b16 %v1410
    %v2072 = vunpack.c.l.b16 %v1424
    %v2073 = vunpack.c.l.b16 %v1434
    %v2074 = vunpack.c.l.b16 %v1448
    %v2075 = vunpack.c.l.b16 %v1458
    %v2076 = vunpack.c.l.b16 %v1472
    %v2077 = vunpack.c.l.b16 %v1482
    %v2078 = vunpack.c.l.b16 %v1496
    %v2079 = vunpack.c.l.b16 %v1506
    %v2080 = vunpack.c.l.b16 %v1520
    %v2081 = vunpack.c.l.b16 %v1530
    %v2082 = vunpack.c.l.b16 %v1544
    %v2083 = vunpack.c.l.b16 %v1554
    %v2084 = vunpack.c.l.b16 %v1568
    %v2085 = vunpack.c.l.b16 %v1578
    %v2086 = vunpack.c.l.b16 %v1592
    %v2087 = vunpack.c.l.b16 %v1602
    %v2088 = vunpack.c.l.b16 %v1616
    %v2089 = vunpack.c.l.b16 %v1626
    %v2090 = vunpack.c.l.b16 %v1640
    %v2091 = vunpack.c.l.b16 %v1650
    %v2092 = vunpack.c.l.b16 %v1664
    %v2093 = vunpack.c.l.b16 %v1674
    %v2094 = vunpack.c.l.b16 %v1688
    %v2095 = vunpack.c.l.b16 %v1698
    %v2096 = vunpack.c.l.b16 %v1712
    %v2097 = vunpack.c.l.b16 %v1722
    %v2098 = vunpack.c.l.b16 %v1736
    %v2099 = vunpack.c.l.b16 %v1746
    %v2100 = vunpack.c.l.b16 %v1760
    %v2101 = vunpack.c.l.b16 %v1770
    %v2102 = vunpack.c.l.b16 %v1784
    %v2103 = vunpack.c.l.b16 %v1794
    %v2104 = vunpack.c.l.b16 %v1808
    %v2105 = vunpack.c.l.b16 %v1818
    %v2106 = vunpack.c.l.b16 %v1832
    %v2107 = vunpack.c.l.b16 %v1842
    %v2108 = vunpack.c.l.b16 %v1856
    %v2109 = vunpack.c.l.b16 %v1866
    %v2110 = vunpack.c.l.b16 %v1880
    %v2111 = vunpack.c.l.b16 %v1890
    %v2112 = vunpack.c.l.b16 %v1904
    %v2113 = vunpack.c.l.b16 %v1914
    %v2114 = vunpack.c.l.b16 %v1928
    %v2115 = vunpack.c.l.b16 %v1938
    %v2116 = vunpack.c.l.b16 %v1952
    %v2117 = vunpack.c.l.b16 %v1962
    %v2118 = vunpack.c.l.b16 %v1976
    %v2119 = vunpack.c.l.b16 %v1986
    %v2120 = vunpack.c.l.b16 %v2000
    %v2121 = vunpack.c.l.b16 %v2010
    %v2122 = vunpack.c.l.b16 %v2024
    %v2123 = vunpack.c.l.b16 %v2034
    %v2124 = vunpack.c.l.b16 %v2048
    %v2125 = vunpack.c.l.b16 %v2058
    %v2126 = vpack.c.b16 %v2063, %v2062
    %v2127 = vpack.c.b16 %v2065, %v2064
    %v2128 = vpack.c.b16 %v2067, %v2066
    %v2129 = vpack.c.b16 %v2069, %v2068
    %v2130 = vpack.c.b16 %v2071, %v2070
    %v2131 = vpack.c.b16 %v2073, %v2072
    %v2132 = vpack.c.b16 %v2075, %v2074
    %v2133 = vpack.c.b16 %v2077, %v2076
    %v2134 = vpack.c.b16 %v2079, %v2078
    %v2135 = vpack.c.b16 %v2081, %v2080
    %v2136 = vpack.c.b16 %v2083, %v2082
    %v2137 = vpack.c.b16 %v2085, %v2084
    %v2138 = vpack.c.b16 %v2087, %v2086
    %v2139 = vpack.c.b16 %v2089, %v2088
    %v2140 = vpack.c.b16 %v2091, %v2090
    %v2141 = vpack.c.b16 %v2093, %v2092
    %v2142 = vpack.c.b16 %v2095, %v2094
    %v2143 = vpack.c.b16 %v2097, %v2096
    %v2144 = vpack.c.b16 %v2099, %v2098
    %v2145 = vpack.c.b16 %v2101, %v2100
    %v2146 = vpack.c.b16 %v2103, %v2102
    %v2147 = vpack.c.b16 %v2105, %v2104
    %v2148 = vpack.c.b16 %v2107, %v2106
    %v2149 = vpack.c.b16 %v2109, %v2108
    %v2150 = vpack.c.b16 %v2111, %v2110
    %v2151 = vpack.c.b16 %v2113, %v2112
    %v2152 = vpack.c.b16 %v2115, %v2114
    %v2153 = vpack.c.b16 %v2117, %v2116
    %v2154 = vpack.c.b16 %v2119, %v2118
    %v2155 = vpack.c.b16 %v2121, %v2120
    %v2156 = vpack.c.b16 %v2123, %v2122
    %v2157 = vpack.c.b16 %v2125, %v2124
    %v2160 = vunpack.c.l.b16 %v2060
    %v2161 = vunpack.c.l.b16 %v2061
    %v2162 = vpack.c.b16 %v2161, %v2160
    %vm2164 = vcmask 130048
    %v2166 = vsel %vm2164, %v2126, 0
    %v2169 = vsel %vm2164, %v2127, 0
    %v2172 = vsel %vm2164, %v2128, 0
    %v2175 = vsel %vm2164, %v2129, 0
    %v2178 = vsel %vm2164, %v2130, 0
    %v2181 = vsel %vm2164, %v2131, 0
    %v2184 = vsel %vm2164, %v2132, 0
    %v2187 = vsel %vm2164, %v2133, 0
    %v2190 = vsel %vm2164, %v2134, 0
    %v2193 = vsel %vm2164, %v2135, 0
    %v2196 = vsel %vm2164, %v2136, 0
    %v2199 = vsel %vm2164, %v2137, 0
    %v2202 = vsel %vm2164, %v2138, 0
    %v2205 = vsel %vm2164, %v2139, 0
    %v2208 = vsel %vm2164, %v2140, 0
    %v2211 = vsel %vm2164, %v2141, 0
    %v2214 = vsel %vm2164, %v2142, 0
    %v2217 = vsel %vm2164, %v2143, 0
    %v2220 = vsel %vm2164, %v2144, 0
    %v2223 = vsel %vm2164, %v2145, 0
    %v2226 = vsel %vm2164, %v2146, 0
    %v2229 = vsel %vm2164, %v2147, 0
    %v2232 = vsel %vm2164, %v2148, 0
    %v2235 = vsel %vm2164, %v2149, 0
    %v2238 = vsel %vm2164, %v2150, 0
    %v2241 = vsel %vm2164, %v2151, 0
    %v2244 = vsel %vm2164, %v2152, 0
    %v2247 = vsel %vm2164, %v2153, 0
    %v2250 = vsel %vm2164, %v2154, 0
    %v2253 = vsel %vm2164, %v2155, 0
    %v2256 = vsel %vm2164, %v2156, 0
    %v2259 = vsel %vm2164, %v2157, 0
    %2261 = vmatprep.subr.bf16.mxu0 0
    %2262 = vmatpush1.bf16.msra.mxu0 %v2162
    %2263 = vmatprep.subr.bf16.mxu0 0
    %2264 = vmatpush1.bf16.msra.mxu0 0
    %2265 = vmatprep.subr.bf16.mxu0 0
    %2266 = vmatpush1.bf16.msra.mxu0 0
    %2267 = vmatprep.subr.bf16.mxu0 0
    %2268 = vmatpush1.bf16.msra.mxu0 0
    %2269 = vmatprep.subr.bf16.mxu0 0
    %2270 = vmatpush1.bf16.msra.mxu0 0
    %2271 = vmatprep.subr.bf16.mxu0 0
    %2272 = vmatpush1.bf16.msra.mxu0 0
    %2273 = vmatprep.subr.bf16.mxu0 0
    %2274 = vmatpush1.bf16.msra.mxu0 0
    %2275 = vmatprep.subr.bf16.mxu0 0
    %2276 = vmatpush1.bf16.msra.mxu0 0
    %2277 = vmatprep.subr.bf16.mxu0 0
    %2278 = vmatpush1.bf16.msra.mxu0 0
    %2279 = vmatprep.subr.bf16.mxu0 0
    %2280 = vmatpush1.bf16.msra.mxu0 0
    %2281 = vmatprep.subr.bf16.mxu0 0
    %2282 = vmatpush1.bf16.msra.mxu0 0
    %2283 = vmatprep.subr.bf16.mxu0 0
    %2284 = vmatpush1.bf16.msra.mxu0 0
    %2285 = vmatprep.subr.bf16.mxu0 0
    %2286 = vmatpush1.bf16.msra.mxu0 0
    %2287 = vmatprep.subr.bf16.mxu0 0
    %2288 = vmatpush1.bf16.msra.mxu0 0
    %2289 = vmatprep.subr.bf16.mxu0 0
    %2290 = vmatpush1.bf16.msra.mxu0 0
    %2291 = vmatprep.subr.bf16.mxu0 0
    %2292 = vmatpush1.bf16.msra.mxu0 0
    %2293 = vmatprep.mubr.bf16.mxu0 0
    %2294 = vmatmul.mubr.bf16.gmra.mrb[0].mxu0 %v2166
    %v2295 = vpop.f32.mrb[0].mxu0
    %v2296 = vadd.f32 0.0, %v2295
    %v2297 = vpop.f32.mrb[0].mxu0
    %v2298 = vpop.f32.mrb[0].mxu0
    %v2299 = vadd.f32 0.0, %v2298
    %v2300 = vpop.f32.mrb[0].mxu0
    %2301 = vmatprep.mubr.bf16.mxu0 0
    %2302 = vmatmul.mubr.bf16.gmra.mrb[0].mxu0 %v2169
    %v2303 = vpop.f32.mrb[0].mxu0
    %v2304 = vadd.f32 0.0, %v2303
    %v2305 = vpop.f32.mrb[0].mxu0
    %v2306 = vpop.f32.mrb[0].mxu0
    %v2307 = vadd.f32 0.0, %v2306
    %v2308 = vpop.f32.mrb[0].mxu0
    %2309 = vmatprep.mubr.bf16.mxu0 0
    %2310 = vmatmul.mubr.bf16.gmra.mrb[0].mxu0 %v2172
    %v2311 = vpop.f32.mrb[0].mxu0
    %v2312 = vadd.f32 0.0, %v2311
    %v2313 = vpop.f32.mrb[0].mxu0
    %v2314 = vpop.f32.mrb[0].mxu0
    %v2315 = vadd.f32 0.0, %v2314
    %v2316 = vpop.f32.mrb[0].mxu0
    %2317 = vmatprep.mubr.bf16.mxu0 0
    %2318 = vmatmul.mubr.bf16.gmra.mrb[0].mxu0 %v2175
    %v2319 = vpop.f32.mrb[0].mxu0
    %v2320 = vadd.f32 0.0, %v2319
    %v2321 = vpop.f32.mrb[0].mxu0
    %v2322 = vpop.f32.mrb[0].mxu0
    %v2323 = vadd.f32 0.0, %v2322
    %v2324 = vpop.f32.mrb[0].mxu0
    %2325 = vmatprep.mubr.bf16.mxu0 0
    %2326 = vmatmul.mubr.bf16.gmra.mrb[0].mxu0 %v2178
    %v2327 = vpop.f32.mrb[0].mxu0
    %v2328 = vadd.f32 0.0, %v2327
    %v2329 = vpop.f32.mrb[0].mxu0
    %v2330 = vpop.f32.mrb[0].mxu0
    %v2331 = vadd.f32 0.0, %v2330
    %v2332 = vpop.f32.mrb[0].mxu0
    %2333 = vmatprep.mubr.bf16.mxu0 0
    %2334 = vmatmul.mubr.bf16.gmra.mrb[0].mxu0 %v2181
    %v2335 = vpop.f32.mrb[0].mxu0
    %v2336 = vadd.f32 0.0, %v2335
    %v2337 = vpop.f32.mrb[0].mxu0
    %v2338 = vpop.f32.mrb[0].mxu0
    %v2339 = vadd.f32 0.0, %v2338
    %v2340 = vpop.f32.mrb[0].mxu0
    %2341 = vmatprep.mubr.bf16.mxu0 0
    %2342 = vmatmul.mubr.bf16.gmra.mrb[0].mxu0 %v2184
    %v2343 = vpop.f32.mrb[0].mxu0
    %v2344 = vadd.f32 0.0, %v2343
    %v2345 = vpop.f32.mrb[0].mxu0
    %v2346 = vpop.f32.mrb[0].mxu0
    %v2347 = vadd.f32 0.0, %v2346
    %v2348 = vpop.f32.mrb[0].mxu0
    %2349 = vmatprep.mubr.bf16.mxu0 0
    %2350 = vmatmul.mubr.bf16.gmra.mrb[0].mxu0 %v2187
    %v2351 = vpop.f32.mrb[0].mxu0
    %v2352 = vadd.f32 0.0, %v2351
    %v2353 = vpop.f32.mrb[0].mxu0
    %v2354 = vpop.f32.mrb[0].mxu0
    %v2355 = vadd.f32 0.0, %v2354
    %v2356 = vpop.f32.mrb[0].mxu0
    %2357 = vmatprep.mubr.bf16.mxu0 0
    %2358 = vmatmul.mubr.bf16.gmra.mrb[0].mxu0 %v2190
    %v2359 = vpop.f32.mrb[0].mxu0
    %v2360 = vadd.f32 0.0, %v2359
    %v2361 = vpop.f32.mrb[0].mxu0
    %v2362 = vpop.f32.mrb[0].mxu0
    %v2363 = vadd.f32 0.0, %v2362
    %v2364 = vpop.f32.mrb[0].mxu0
    %2365 = vmatprep.mubr.bf16.mxu0 0
    %2366 = vmatmul.mubr.bf16.gmra.mrb[0].mxu0 %v2193
    %v2367 = vpop.f32.mrb[0].mxu0
    %v2368 = vadd.f32 0.0, %v2367
    %v2369 = vpop.f32.mrb[0].mxu0
    %v2370 = vpop.f32.mrb[0].mxu0
    %v2371 = vadd.f32 0.0, %v2370
    %v2372 = vpop.f32.mrb[0].mxu0
    %2373 = vmatprep.mubr.bf16.mxu0 0
    %2374 = vmatmul.mubr.bf16.gmra.mrb[0].mxu0 %v2196
    %v2375 = vpop.f32.mrb[0].mxu0
    %v2376 = vadd.f32 0.0, %v2375
    %v2377 = vpop.f32.mrb[0].mxu0
    %v2378 = vpop.f32.mrb[0].mxu0
    %v2379 = vadd.f32 0.0, %v2378
    %v2380 = vpop.f32.mrb[0].mxu0
    %2381 = vmatprep.mubr.bf16.mxu0 0
    %2382 = vmatmul.mubr.bf16.gmra.mrb[0].mxu0 %v2199
    %v2383 = vpop.f32.mrb[0].mxu0
    %v2384 = vadd.f32 0.0, %v2383
    %v2385 = vpop.f32.mrb[0].mxu0
    %v2386 = vpop.f32.mrb[0].mxu0
    %v2387 = vadd.f32 0.0, %v2386
    %v2388 = vpop.f32.mrb[0].mxu0
    %2389 = vmatprep.mubr.bf16.mxu0 0
    %2390 = vmatmul.mubr.bf16.gmra.mrb[0].mxu0 %v2202
    %v2391 = vpop.f32.mrb[0].mxu0
    %v2392 = vadd.f32 0.0, %v2391
    %v2393 = vpop.f32.mrb[0].mxu0
    %v2394 = vpop.f32.mrb[0].mxu0
    %v2395 = vadd.f32 0.0, %v2394
    %v2396 = vpop.f32.mrb[0].mxu0
    %2397 = vmatprep.mubr.bf16.mxu0 0
    %2398 = vmatmul.mubr.bf16.gmra.mrb[0].mxu0 %v2205
    %v2399 = vpop.f32.mrb[0].mxu0
    %v2400 = vadd.f32 0.0, %v2399
    %v2401 = vpop.f32.mrb[0].mxu0
    %v2402 = vpop.f32.mrb[0].mxu0
    %v2403 = vadd.f32 0.0, %v2402
    %v2404 = vpop.f32.mrb[0].mxu0
    %2405 = vmatprep.mubr.bf16.mxu0 0
    %2406 = vmatmul.mubr.bf16.gmra.mrb[0].mxu0 %v2208
    %v2407 = vpop.f32.mrb[0].mxu0
    %v2408 = vadd.f32 0.0, %v2407
    %v2409 = vpop.f32.mrb[0].mxu0
    %v2410 = vpop.f32.mrb[0].mxu0
    %v2411 = vadd.f32 0.0, %v2410
    %v2412 = vpop.f32.mrb[0].mxu0
    %2413 = vmatprep.mubr.bf16.mxu0 0
    %2414 = vmatmul.mubr.bf16.gmra.mrb[0].mxu0 %v2211
    %v2415 = vpop.f32.mrb[0].mxu0
    %v2416 = vadd.f32 0.0, %v2415
    %v2417 = vpop.f32.mrb[0].mxu0
    %v2418 = vpop.f32.mrb[0].mxu0
    %v2419 = vadd.f32 0.0, %v2418
    %v2420 = vpop.f32.mrb[0].mxu0
    %2421 = vmatprep.mubr.bf16.mxu0 0
    %2422 = vmatmul.mubr.bf16.gmra.mrb[0].mxu0 %v2214
    %v2423 = vpop.f32.mrb[0].mxu0
    %v2424 = vadd.f32 0.0, %v2423
    %v2425 = vpop.f32.mrb[0].mxu0
    %v2426 = vpop.f32.mrb[0].mxu0
    %v2427 = vadd.f32 0.0, %v2426
    %v2428 = vpop.f32.mrb[0].mxu0
    %2429 = vmatprep.mubr.bf16.mxu0 0
    %2430 = vmatmul.mubr.bf16.gmra.mrb[0].mxu0 %v2217
    %v2431 = vpop.f32.mrb[0].mxu0
    %v2432 = vadd.f32 0.0, %v2431
    %v2433 = vpop.f32.mrb[0].mxu0
    %v2434 = vpop.f32.mrb[0].mxu0
    %v2435 = vadd.f32 0.0, %v2434
    %v2436 = vpop.f32.mrb[0].mxu0
    %2437 = vmatprep.mubr.bf16.mxu0 0
    %2438 = vmatmul.mubr.bf16.gmra.mrb[0].mxu0 %v2220
    %v2439 = vpop.f32.mrb[0].mxu0
    %v2440 = vadd.f32 0.0, %v2439
    %v2441 = vpop.f32.mrb[0].mxu0
    %v2442 = vpop.f32.mrb[0].mxu0
    %v2443 = vadd.f32 0.0, %v2442
    %v2444 = vpop.f32.mrb[0].mxu0
    %2445 = vmatprep.mubr.bf16.mxu0 0
    %2446 = vmatmul.mubr.bf16.gmra.mrb[0].mxu0 %v2223
    %v2447 = vpop.f32.mrb[0].mxu0
    %v2448 = vadd.f32 0.0, %v2447
    %v2449 = vpop.f32.mrb[0].mxu0
    %v2450 = vpop.f32.mrb[0].mxu0
    %v2451 = vadd.f32 0.0, %v2450
    %v2452 = vpop.f32.mrb[0].mxu0
    %2453 = vmatprep.mubr.bf16.mxu0 0
    %2454 = vmatmul.mubr.bf16.gmra.mrb[0].mxu0 %v2226
    %v2455 = vpop.f32.mrb[0].mxu0
    %v2456 = vadd.f32 0.0, %v2455
    %v2457 = vpop.f32.mrb[0].mxu0
    %v2458 = vpop.f32.mrb[0].mxu0
    %v2459 = vadd.f32 0.0, %v2458
    %v2460 = vpop.f32.mrb[0].mxu0
    %2461 = vmatprep.mubr.bf16.mxu0 0
    %2462 = vmatmul.mubr.bf16.gmra.mrb[0].mxu0 %v2229
    %v2463 = vpop.f32.mrb[0].mxu0
    %v2464 = vadd.f32 0.0, %v2463
    %v2465 = vpop.f32.mrb[0].mxu0
    %v2466 = vpop.f32.mrb[0].mxu0
    %v2467 = vadd.f32 0.0, %v2466
    %v2468 = vpop.f32.mrb[0].mxu0
    %2469 = vmatprep.mubr.bf16.mxu0 0
    %2470 = vmatmul.mubr.bf16.gmra.mrb[0].mxu0 %v2232
    %v2471 = vpop.f32.mrb[0].mxu0
    %v2472 = vadd.f32 0.0, %v2471
    %v2473 = vpop.f32.mrb[0].mxu0
    %v2474 = vpop.f32.mrb[0].mxu0
    %v2475 = vadd.f32 0.0, %v2474
    %v2476 = vpop.f32.mrb[0].mxu0
    %2477 = vmatprep.mubr.bf16.mxu0 0
    %2478 = vmatmul.mubr.bf16.gmra.mrb[0].mxu0 %v2235
    %v2479 = vpop.f32.mrb[0].mxu0
    %v2480 = vadd.f32 0.0, %v2479
    %v2481 = vpop.f32.mrb[0].mxu0
    %v2482 = vpop.f32.mrb[0].mxu0
    %v2483 = vadd.f32 0.0, %v2482
    %v2484 = vpop.f32.mrb[0].mxu0
    %2485 = vmatprep.mubr.bf16.mxu0 0
    %2486 = vmatmul.mubr.bf16.gmra.mrb[0].mxu0 %v2238
    %v2487 = vpop.f32.mrb[0].mxu0
    %v2488 = vadd.f32 0.0, %v2487
    %v2489 = vpop.f32.mrb[0].mxu0
    %v2490 = vpop.f32.mrb[0].mxu0
    %v2491 = vadd.f32 0.0, %v2490
    %v2492 = vpop.f32.mrb[0].mxu0
    %2493 = vmatprep.mubr.bf16.mxu0 0
    %2494 = vmatmul.mubr.bf16.gmra.mrb[0].mxu0 %v2241
    %v2495 = vpop.f32.mrb[0].mxu0
    %v2496 = vadd.f32 0.0, %v2495
    %v2497 = vpop.f32.mrb[0].mxu0
    %v2498 = vpop.f32.mrb[0].mxu0
    %v2499 = vadd.f32 0.0, %v2498
    %v2500 = vpop.f32.mrb[0].mxu0
    %2501 = vmatprep.mubr.bf16.mxu0 0
    %2502 = vmatmul.mubr.bf16.gmra.mrb[0].mxu0 %v2244
    %v2503 = vpop.f32.mrb[0].mxu0
    %v2504 = vadd.f32 0.0, %v2503
    %v2505 = vpop.f32.mrb[0].mxu0
    %v2506 = vpop.f32.mrb[0].mxu0
    %v2507 = vadd.f32 0.0, %v2506
    %v2508 = vpop.f32.mrb[0].mxu0
    %2509 = vmatprep.mubr.bf16.mxu0 0
    %2510 = vmatmul.mubr.bf16.gmra.mrb[0].mxu0 %v2247
    %v2511 = vpop.f32.mrb[0].mxu0
    %v2512 = vadd.f32 0.0, %v2511
    %v2513 = vpop.f32.mrb[0].mxu0
    %v2514 = vpop.f32.mrb[0].mxu0
    %v2515 = vadd.f32 0.0, %v2514
    %v2516 = vpop.f32.mrb[0].mxu0
    %2517 = vmatprep.mubr.bf16.mxu0 0
    %2518 = vmatmul.mubr.bf16.gmra.mrb[0].mxu0 %v2250
    %v2519 = vpop.f32.mrb[0].mxu0
    %v2520 = vadd.f32 0.0, %v2519
    %v2521 = vpop.f32.mrb[0].mxu0
    %v2522 = vpop.f32.mrb[0].mxu0
    %v2523 = vadd.f32 0.0, %v2522
    %v2524 = vpop.f32.mrb[0].mxu0
    %2525 = vmatprep.mubr.bf16.mxu0 0
    %2526 = vmatmul.mubr.bf16.gmra.mrb[0].mxu0 %v2253
    %v2527 = vpop.f32.mrb[0].mxu0
    %v2528 = vadd.f32 0.0, %v2527
    %v2529 = vpop.f32.mrb[0].mxu0
    %v2530 = vpop.f32.mrb[0].mxu0
    %v2531 = vadd.f32 0.0, %v2530
    %v2532 = vpop.f32.mrb[0].mxu0
    %2533 = vmatprep.mubr.bf16.mxu0 0
    %2534 = vmatmul.mubr.bf16.gmra.mrb[0].mxu0 %v2256
    %v2535 = vpop.f32.mrb[0].mxu0
    %v2536 = vadd.f32 0.0, %v2535
    %v2537 = vpop.f32.mrb[0].mxu0
    %v2538 = vpop.f32.mrb[0].mxu0
    %v2539 = vadd.f32 0.0, %v2538
    %v2540 = vpop.f32.mrb[0].mxu0
    %2541 = vmatprep.mubr.bf16.mxu0 0
    %2542 = vmatmul.mubr.bf16.gmra.mrb[0].mxu0 %v2259
    %v2543 = vpop.f32.mrb[0].mxu0
    %v2544 = vadd.f32 0.0, %v2543
    %v2545 = vpop.f32.mrb[0].mxu0
    %v2546 = vpop.f32.mrb[0].mxu0
    %v2547 = vadd.f32 0.0, %v2546
    %v2548 = vpop.f32.mrb[0].mxu0
    %2549 = vdwg.mxu0
    %v2614 = vunpack.c.l.b16 %v1190
    %v2615 = vunpack.c.l.b16 %v1191
    %v2616 = vunpack.c.l.b16 %v1192
    %v2617 = vunpack.c.l.b16 %v1193
    %v2618 = vunpack.c.l.b16 %v1194
    %v2619 = vunpack.c.l.b16 %v1195
    %v2620 = vunpack.c.l.b16 %v1196
    %v2621 = vunpack.c.l.b16 %v1197
    %v2622 = vunpack.c.l.b16 %v1198
    %v2623 = vunpack.c.l.b16 %v1199
    %v2624 = vunpack.c.l.b16 %v1200
    %v2625 = vunpack.c.l.b16 %v1201
    %v2626 = vunpack.c.l.b16 %v1202
    %v2627 = vunpack.c.l.b16 %v1203
    %v2628 = vunpack.c.l.b16 %v1204
    %v2629 = vunpack.c.l.b16 %v1205
    %v2630 = vunpack.c.l.b16 %v1206
    %v2631 = vunpack.c.l.b16 %v1207
    %v2632 = vunpack.c.l.b16 %v1208
    %v2633 = vunpack.c.l.b16 %v1209
    %v2634 = vunpack.c.l.b16 %v1210
    %v2635 = vunpack.c.l.b16 %v1211
    %v2636 = vunpack.c.l.b16 %v1212
    %v2637 = vunpack.c.l.b16 %v1213
    %v2638 = vunpack.c.l.b16 %v1214
    %v2639 = vunpack.c.l.b16 %v1215
    %v2640 = vunpack.c.l.b16 %v1216
    %v2641 = vunpack.c.l.b16 %v1217
    %v2642 = vunpack.c.l.b16 %v1218
    %v2643 = vunpack.c.l.b16 %v1219
    %v2644 = vunpack.c.l.b16 %v1220
    %v2645 = vunpack.c.l.b16 %v1221
    %v2646 = vunpack.c.l.b16 %v1222
    %v2647 = vunpack.c.l.b16 %v1223
    %v2648 = vunpack.c.l.b16 %v1224
    %v2649 = vunpack.c.l.b16 %v1225
    %v2650 = vunpack.c.l.b16 %v1226
    %v2651 = vunpack.c.l.b16 %v1227
    %v2652 = vunpack.c.l.b16 %v1228
    %v2653 = vunpack.c.l.b16 %v1229
    %v2654 = vunpack.c.l.b16 %v1230
    %v2655 = vunpack.c.l.b16 %v1231
    %v2656 = vunpack.c.l.b16 %v1232
    %v2657 = vunpack.c.l.b16 %v1233
    %v2658 = vunpack.c.l.b16 %v1234
    %v2659 = vunpack.c.l.b16 %v1235
    %v2660 = vunpack.c.l.b16 %v1236
    %v2661 = vunpack.c.l.b16 %v1237
    %v2662 = vunpack.c.l.b16 %v1238
    %v2663 = vunpack.c.l.b16 %v1239
    %v2664 = vunpack.c.l.b16 %v1240
    %v2665 = vunpack.c.l.b16 %v1241
    %v2666 = vunpack.c.l.b16 %v1242
    %v2667 = vunpack.c.l.b16 %v1243
    %v2668 = vunpack.c.l.b16 %v1244
    %v2669 = vunpack.c.l.b16 %v1245
    %v2670 = vunpack.c.l.b16 %v1246
    %v2671 = vunpack.c.l.b16 %v1247
    %v2672 = vunpack.c.l.b16 %v1248
    %v2673 = vunpack.c.l.b16 %v1249
    %v2674 = vunpack.c.l.b16 %v1250
    %v2675 = vunpack.c.l.b16 %v1251
    %v2676 = vunpack.c.l.b16 %v1252
    %v2677 = vunpack.c.l.b16 %v1253
    %v2678 = vpack.c.b16 %v2615, %v2614
    %v2679 = vpack.c.b16 %v2617, %v2616
    %v2680 = vpack.c.b16 %v2619, %v2618
    %v2681 = vpack.c.b16 %v2621, %v2620
    %v2682 = vpack.c.b16 %v2623, %v2622
    %v2683 = vpack.c.b16 %v2625, %v2624
    %v2684 = vpack.c.b16 %v2627, %v2626
    %v2685 = vpack.c.b16 %v2629, %v2628
    %v2686 = vpack.c.b16 %v2631, %v2630
    %v2687 = vpack.c.b16 %v2633, %v2632
    %v2688 = vpack.c.b16 %v2635, %v2634
    %v2689 = vpack.c.b16 %v2637, %v2636
    %v2690 = vpack.c.b16 %v2639, %v2638
    %v2691 = vpack.c.b16 %v2641, %v2640
    %v2692 = vpack.c.b16 %v2643, %v2642
    %v2693 = vpack.c.b16 %v2645, %v2644
    %v2694 = vpack.c.b16 %v2647, %v2646
    %v2695 = vpack.c.b16 %v2649, %v2648
    %v2696 = vpack.c.b16 %v2651, %v2650
    %v2697 = vpack.c.b16 %v2653, %v2652
    %v2698 = vpack.c.b16 %v2655, %v2654
    %v2699 = vpack.c.b16 %v2657, %v2656
    %v2700 = vpack.c.b16 %v2659, %v2658
    %v2701 = vpack.c.b16 %v2661, %v2660
    %v2702 = vpack.c.b16 %v2663, %v2662
    %v2703 = vpack.c.b16 %v2665, %v2664
    %v2704 = vpack.c.b16 %v2667, %v2666
    %v2705 = vpack.c.b16 %v2669, %v2668
    %v2706 = vpack.c.b16 %v2671, %v2670
    %v2707 = vpack.c.b16 %v2673, %v2672
    %v2708 = vpack.c.b16 %v2675, %v2674
    %v2709 = vpack.c.b16 %v2677, %v2676
    %v2712 = vunpack.c.l.b16 %v1254
    %v2713 = vunpack.c.l.b16 %v1255
    %v2714 = vpack.c.b16 %v2713, %v2712
    %v2717 = vsel %vm2164, %v2678, 0
    %v2720 = vsel %vm2164, %v2679, 0
    %v2723 = vsel %vm2164, %v2680, 0
    %v2726 = vsel %vm2164, %v2681, 0
    %v2729 = vsel %vm2164, %v2682, 0
    %v2732 = vsel %vm2164, %v2683, 0
    %v2735 = vsel %vm2164, %v2684, 0
    %v2738 = vsel %vm2164, %v2685, 0
    %v2741 = vsel %vm2164, %v2686, 0
    %v2744 = vsel %vm2164, %v2687, 0
    %v2747 = vsel %vm2164, %v2688, 0
    %v2750 = vsel %vm2164, %v2689, 0
    %v2753 = vsel %vm2164, %v2690, 0
    %v2756 = vsel %vm2164, %v2691, 0
    %v2759 = vsel %vm2164, %v2692, 0
    %v2762 = vsel %vm2164, %v2693, 0
    %v2765 = vsel %vm2164, %v2694, 0
    %v2768 = vsel %vm2164, %v2695, 0
    %v2771 = vsel %vm2164, %v2696, 0
    %v2774 = vsel %vm2164, %v2697, 0
    %v2777 = vsel %vm2164, %v2698, 0
    %v2780 = vsel %vm2164, %v2699, 0
    %v2783 = vsel %vm2164, %v2700, 0
    %v2786 = vsel %vm2164, %v2701, 0
    %v2789 = vsel %vm2164, %v2702, 0
    %v2792 = vsel %vm2164, %v2703, 0
    %v2795 = vsel %vm2164, %v2704, 0
    %v2798 = vsel %vm2164, %v2705, 0
    %v2801 = vsel %vm2164, %v2706, 0
    %v2804 = vsel %vm2164, %v2707, 0
    %v2807 = vsel %vm2164, %v2708, 0
    %v2810 = vsel %vm2164, %v2709, 0
    %2812 = vmatprep.subr.bf16.mxu0 0
    %2813 = vmatpush1.bf16.msra.mxu0 %v2714
    %2814 = vmatprep.subr.bf16.mxu0 0
    %2815 = vmatpush1.bf16.msra.mxu0 0
    %2816 = vmatprep.subr.bf16.mxu0 0
    %2817 = vmatpush1.bf16.msra.mxu0 0
    %2818 = vmatprep.subr.bf16.mxu0 0
    %2819 = vmatpush1.bf16.msra.mxu0 0
    %2820 = vmatprep.subr.bf16.mxu0 0
    %2821 = vmatpush1.bf16.msra.mxu0 0
    %2822 = vmatprep.subr.bf16.mxu0 0
    %2823 = vmatpush1.bf16.msra.mxu0 0
    %2824 = vmatprep.subr.bf16.mxu0 0
    %2825 = vmatpush1.bf16.msra.mxu0 0
    %2826 = vmatprep.subr.bf16.mxu0 0
    %2827 = vmatpush1.bf16.msra.mxu0 0
    %2828 = vmatprep.subr.bf16.mxu0 0
    %2829 = vmatpush1.bf16.msra.mxu0 0
    %2830 = vmatprep.subr.bf16.mxu0 0
    %2831 = vmatpush1.bf16.msra.mxu0 0
    %2832 = vmatprep.subr.bf16.mxu0 0
    %2833 = vmatpush1.bf16.msra.mxu0 0
    %2834 = vmatprep.subr.bf16.mxu0 0
    %2835 = vmatpush1.bf16.msra.mxu0 0
    %2836 = vmatprep.subr.bf16.mxu0 0
    %2837 = vmatpush1.bf16.msra.mxu0 0
    %2838 = vmatprep.subr.bf16.mxu0 0
    %2839 = vmatpush1.bf16.msra.mxu0 0
    %2840 = vmatprep.subr.bf16.mxu0 0
    %2841 = vmatpush1.bf16.msra.mxu0 0
    %2842 = vmatprep.subr.bf16.mxu0 0
    %2843 = vmatpush1.bf16.msra.mxu0 0
    %2844 = vmatprep.mubr.bf16.mxu0 0
    %2845 = vmatmul.mubr.bf16.gmra.mrb[0].mxu0 %v2717
    %v2846 = vpop.f32.mrb[0].mxu0
    %v2847 = vadd.f32 %v2296, %v2846
    %v2848 = vpop.f32.mrb[0].mxu0
    %v2849 = vpop.f32.mrb[0].mxu0
    %v2850 = vadd.f32 %v2299, %v2849
    %v2851 = vpop.f32.mrb[0].mxu0
    %2852 = vmatprep.mubr.bf16.mxu0 0
    %2853 = vmatmul.mubr.bf16.gmra.mrb[0].mxu0 %v2720
    %v2854 = vpop.f32.mrb[0].mxu0
    %v2855 = vadd.f32 %v2304, %v2854
    %v2856 = vpop.f32.mrb[0].mxu0
    %v2857 = vpop.f32.mrb[0].mxu0
    %v2858 = vadd.f32 %v2307, %v2857
    %v2859 = vpop.f32.mrb[0].mxu0
    %2860 = vmatprep.mubr.bf16.mxu0 0
    %2861 = vmatmul.mubr.bf16.gmra.mrb[0].mxu0 %v2723
    %v2862 = vpop.f32.mrb[0].mxu0
    %v2863 = vadd.f32 %v2312, %v2862
    %v2864 = vpop.f32.mrb[0].mxu0
    %v2865 = vpop.f32.mrb[0].mxu0
    %v2866 = vadd.f32 %v2315, %v2865
    %v2867 = vpop.f32.mrb[0].mxu0
    %2868 = vmatprep.mubr.bf16.mxu0 0
    %2869 = vmatmul.mubr.bf16.gmra.mrb[0].mxu0 %v2726
    %v2870 = vpop.f32.mrb[0].mxu0
    %v2871 = vadd.f32 %v2320, %v2870
    %v2872 = vpop.f32.mrb[0].mxu0
    %v2873 = vpop.f32.mrb[0].mxu0
    %v2874 = vadd.f32 %v2323, %v2873
    %v2875 = vpop.f32.mrb[0].mxu0
    %2876 = vmatprep.mubr.bf16.mxu0 0
    %2877 = vmatmul.mubr.bf16.gmra.mrb[0].mxu0 %v2729
    %v2878 = vpop.f32.mrb[0].mxu0
    %v2879 = vadd.f32 %v2328, %v2878
    %v2880 = vpop.f32.mrb[0].mxu0
    %v2881 = vpop.f32.mrb[0].mxu0
    %v2882 = vadd.f32 %v2331, %v2881
    %v2883 = vpop.f32.mrb[0].mxu0
    %2884 = vmatprep.mubr.bf16.mxu0 0
    %2885 = vmatmul.mubr.bf16.gmra.mrb[0].mxu0 %v2732
    %v2886 = vpop.f32.mrb[0].mxu0
    %v2887 = vadd.f32 %v2336, %v2886
    %v2888 = vpop.f32.mrb[0].mxu0
    %v2889 = vpop.f32.mrb[0].mxu0
    %v2890 = vadd.f32 %v2339, %v2889
    %v2891 = vpop.f32.mrb[0].mxu0
    %2892 = vmatprep.mubr.bf16.mxu0 0
    %2893 = vmatmul.mubr.bf16.gmra.mrb[0].mxu0 %v2735
    %v2894 = vpop.f32.mrb[0].mxu0
    %v2895 = vadd.f32 %v2344, %v2894
    %v2896 = vpop.f32.mrb[0].mxu0
    %v2897 = vpop.f32.mrb[0].mxu0
    %v2898 = vadd.f32 %v2347, %v2897
    %v2899 = vpop.f32.mrb[0].mxu0
    %2900 = vmatprep.mubr.bf16.mxu0 0
    %2901 = vmatmul.mubr.bf16.gmra.mrb[0].mxu0 %v2738
    %v2902 = vpop.f32.mrb[0].mxu0
    %v2903 = vadd.f32 %v2352, %v2902
    %v2904 = vpop.f32.mrb[0].mxu0
    %v2905 = vpop.f32.mrb[0].mxu0
    %v2906 = vadd.f32 %v2355, %v2905
    %v2907 = vpop.f32.mrb[0].mxu0
    %2908 = vmatprep.mubr.bf16.mxu0 0
    %2909 = vmatmul.mubr.bf16.gmra.mrb[0].mxu0 %v2741
    %v2910 = vpop.f32.mrb[0].mxu0
    %v2911 = vadd.f32 %v2360, %v2910
    %v2912 = vpop.f32.mrb[0].mxu0
    %v2913 = vpop.f32.mrb[0].mxu0
    %v2914 = vadd.f32 %v2363, %v2913
    %v2915 = vpop.f32.mrb[0].mxu0
    %2916 = vmatprep.mubr.bf16.mxu0 0
    %2917 = vmatmul.mubr.bf16.gmra.mrb[0].mxu0 %v2744
    %v2918 = vpop.f32.mrb[0].mxu0
    %v2919 = vadd.f32 %v2368, %v2918
    %v2920 = vpop.f32.mrb[0].mxu0
    %v2921 = vpop.f32.mrb[0].mxu0
    %v2922 = vadd.f32 %v2371, %v2921
    %v2923 = vpop.f32.mrb[0].mxu0
    %2924 = vmatprep.mubr.bf16.mxu0 0
    %2925 = vmatmul.mubr.bf16.gmra.mrb[0].mxu0 %v2747
    %v2926 = vpop.f32.mrb[0].mxu0
    %v2927 = vadd.f32 %v2376, %v2926
    %v2928 = vpop.f32.mrb[0].mxu0
    %v2929 = vpop.f32.mrb[0].mxu0
    %v2930 = vadd.f32 %v2379, %v2929
    %v2931 = vpop.f32.mrb[0].mxu0
    %2932 = vmatprep.mubr.bf16.mxu0 0
    %2933 = vmatmul.mubr.bf16.gmra.mrb[0].mxu0 %v2750
    %v2934 = vpop.f32.mrb[0].mxu0
    %v2935 = vadd.f32 %v2384, %v2934
    %v2936 = vpop.f32.mrb[0].mxu0
    %v2937 = vpop.f32.mrb[0].mxu0
    %v2938 = vadd.f32 %v2387, %v2937
    %v2939 = vpop.f32.mrb[0].mxu0
    %2940 = vmatprep.mubr.bf16.mxu0 0
    %2941 = vmatmul.mubr.bf16.gmra.mrb[0].mxu0 %v2753
    %v2942 = vpop.f32.mrb[0].mxu0
    %v2943 = vadd.f32 %v2392, %v2942
    %v2944 = vpop.f32.mrb[0].mxu0
    %v2945 = vpop.f32.mrb[0].mxu0
    %v2946 = vadd.f32 %v2395, %v2945
    %v2947 = vpop.f32.mrb[0].mxu0
    %2948 = vmatprep.mubr.bf16.mxu0 0
    %2949 = vmatmul.mubr.bf16.gmra.mrb[0].mxu0 %v2756
    %v2950 = vpop.f32.mrb[0].mxu0
    %v2951 = vadd.f32 %v2400, %v2950
    %v2952 = vpop.f32.mrb[0].mxu0
    %v2953 = vpop.f32.mrb[0].mxu0
    %v2954 = vadd.f32 %v2403, %v2953
    %v2955 = vpop.f32.mrb[0].mxu0
    %2956 = vmatprep.mubr.bf16.mxu0 0
    %2957 = vmatmul.mubr.bf16.gmra.mrb[0].mxu0 %v2759
    %v2958 = vpop.f32.mrb[0].mxu0
    %v2959 = vadd.f32 %v2408, %v2958
    %v2960 = vpop.f32.mrb[0].mxu0
    %v2961 = vpop.f32.mrb[0].mxu0
    %v2962 = vadd.f32 %v2411, %v2961
    %v2963 = vpop.f32.mrb[0].mxu0
    %2964 = vmatprep.mubr.bf16.mxu0 0
    %2965 = vmatmul.mubr.bf16.gmra.mrb[0].mxu0 %v2762
    %v2966 = vpop.f32.mrb[0].mxu0
    %v2967 = vadd.f32 %v2416, %v2966
    %v2968 = vpop.f32.mrb[0].mxu0
    %v2969 = vpop.f32.mrb[0].mxu0
    %v2970 = vadd.f32 %v2419, %v2969
    %v2971 = vpop.f32.mrb[0].mxu0
    %2972 = vmatprep.mubr.bf16.mxu0 0
    %2973 = vmatmul.mubr.bf16.gmra.mrb[0].mxu0 %v2765
    %v2974 = vpop.f32.mrb[0].mxu0
    %v2975 = vadd.f32 %v2424, %v2974
    %v2976 = vpop.f32.mrb[0].mxu0
    %v2977 = vpop.f32.mrb[0].mxu0
    %v2978 = vadd.f32 %v2427, %v2977
    %v2979 = vpop.f32.mrb[0].mxu0
    %2980 = vmatprep.mubr.bf16.mxu0 0
    %2981 = vmatmul.mubr.bf16.gmra.mrb[0].mxu0 %v2768
    %v2982 = vpop.f32.mrb[0].mxu0
    %v2983 = vadd.f32 %v2432, %v2982
    %v2984 = vpop.f32.mrb[0].mxu0
    %v2985 = vpop.f32.mrb[0].mxu0
    %v2986 = vadd.f32 %v2435, %v2985
    %v2987 = vpop.f32.mrb[0].mxu0
    %2988 = vmatprep.mubr.bf16.mxu0 0
    %2989 = vmatmul.mubr.bf16.gmra.mrb[0].mxu0 %v2771
    %v2990 = vpop.f32.mrb[0].mxu0
    %v2991 = vadd.f32 %v2440, %v2990
    %v2992 = vpop.f32.mrb[0].mxu0
    %v2993 = vpop.f32.mrb[0].mxu0
    %v2994 = vadd.f32 %v2443, %v2993
    %v2995 = vpop.f32.mrb[0].mxu0
    %2996 = vmatprep.mubr.bf16.mxu0 0
    %2997 = vmatmul.mubr.bf16.gmra.mrb[0].mxu0 %v2774
    %v2998 = vpop.f32.mrb[0].mxu0
    %v2999 = vadd.f32 %v2448, %v2998
    %v3000 = vpop.f32.mrb[0].mxu0
    %v3001 = vpop.f32.mrb[0].mxu0
    %v3002 = vadd.f32 %v2451, %v3001
    %v3003 = vpop.f32.mrb[0].mxu0
    %3004 = vmatprep.mubr.bf16.mxu0 0
    %3005 = vmatmul.mubr.bf16.gmra.mrb[0].mxu0 %v2777
    %v3006 = vpop.f32.mrb[0].mxu0
    %v3007 = vadd.f32 %v2456, %v3006
    %v3008 = vpop.f32.mrb[0].mxu0
    %v3009 = vpop.f32.mrb[0].mxu0
    %v3010 = vadd.f32 %v2459, %v3009
    %v3011 = vpop.f32.mrb[0].mxu0
    %3012 = vmatprep.mubr.bf16.mxu0 0
    %3013 = vmatmul.mubr.bf16.gmra.mrb[0].mxu0 %v2780
    %v3014 = vpop.f32.mrb[0].mxu0
    %v3015 = vadd.f32 %v2464, %v3014
    %v3016 = vpop.f32.mrb[0].mxu0
    %v3017 = vpop.f32.mrb[0].mxu0
    %v3018 = vadd.f32 %v2467, %v3017
    %v3019 = vpop.f32.mrb[0].mxu0
    %3020 = vmatprep.mubr.bf16.mxu0 0
    %3021 = vmatmul.mubr.bf16.gmra.mrb[0].mxu0 %v2783
    %v3022 = vpop.f32.mrb[0].mxu0
    %v3023 = vadd.f32 %v2472, %v3022
    %v3024 = vpop.f32.mrb[0].mxu0
    %v3025 = vpop.f32.mrb[0].mxu0
    %v3026 = vadd.f32 %v2475, %v3025
    %v3027 = vpop.f32.mrb[0].mxu0
    %3028 = vmatprep.mubr.bf16.mxu0 0
    %3029 = vmatmul.mubr.bf16.gmra.mrb[0].mxu0 %v2786
    %v3030 = vpop.f32.mrb[0].mxu0
    %v3031 = vadd.f32 %v2480, %v3030
    %v3032 = vpop.f32.mrb[0].mxu0
    %v3033 = vpop.f32.mrb[0].mxu0
    %v3034 = vadd.f32 %v2483, %v3033
    %v3035 = vpop.f32.mrb[0].mxu0
    %3036 = vmatprep.mubr.bf16.mxu0 0
    %3037 = vmatmul.mubr.bf16.gmra.mrb[0].mxu0 %v2789
    %v3038 = vpop.f32.mrb[0].mxu0
    %v3039 = vadd.f32 %v2488, %v3038
    %v3040 = vpop.f32.mrb[0].mxu0
    %v3041 = vpop.f32.mrb[0].mxu0
    %v3042 = vadd.f32 %v2491, %v3041
    %v3043 = vpop.f32.mrb[0].mxu0
    %3044 = vmatprep.mubr.bf16.mxu0 0
    %3045 = vmatmul.mubr.bf16.gmra.mrb[0].mxu0 %v2792
    %v3046 = vpop.f32.mrb[0].mxu0
    %v3047 = vadd.f32 %v2496, %v3046
    %v3048 = vpop.f32.mrb[0].mxu0
    %v3049 = vpop.f32.mrb[0].mxu0
    %v3050 = vadd.f32 %v2499, %v3049
    %v3051 = vpop.f32.mrb[0].mxu0
    %3052 = vmatprep.mubr.bf16.mxu0 0
    %3053 = vmatmul.mubr.bf16.gmra.mrb[0].mxu0 %v2795
    %v3054 = vpop.f32.mrb[0].mxu0
    %v3055 = vadd.f32 %v2504, %v3054
    %v3056 = vpop.f32.mrb[0].mxu0
    %v3057 = vpop.f32.mrb[0].mxu0
    %v3058 = vadd.f32 %v2507, %v3057
    %v3059 = vpop.f32.mrb[0].mxu0
    %3060 = vmatprep.mubr.bf16.mxu0 0
    %3061 = vmatmul.mubr.bf16.gmra.mrb[0].mxu0 %v2798
    %v3062 = vpop.f32.mrb[0].mxu0
    %v3063 = vadd.f32 %v2512, %v3062
    %v3064 = vpop.f32.mrb[0].mxu0
    %v3065 = vpop.f32.mrb[0].mxu0
    %v3066 = vadd.f32 %v2515, %v3065
    %v3067 = vpop.f32.mrb[0].mxu0
    %3068 = vmatprep.mubr.bf16.mxu0 0
    %3069 = vmatmul.mubr.bf16.gmra.mrb[0].mxu0 %v2801
    %v3070 = vpop.f32.mrb[0].mxu0
    %v3071 = vadd.f32 %v2520, %v3070
    %v3072 = vpop.f32.mrb[0].mxu0
    %v3073 = vpop.f32.mrb[0].mxu0
    %v3074 = vadd.f32 %v2523, %v3073
    %v3075 = vpop.f32.mrb[0].mxu0
    %3076 = vmatprep.mubr.bf16.mxu0 0
    %3077 = vmatmul.mubr.bf16.gmra.mrb[0].mxu0 %v2804
    %v3078 = vpop.f32.mrb[0].mxu0
    %v3079 = vadd.f32 %v2528, %v3078
    %v3080 = vpop.f32.mrb[0].mxu0
    %v3081 = vpop.f32.mrb[0].mxu0
    %v3082 = vadd.f32 %v2531, %v3081
    %v3083 = vpop.f32.mrb[0].mxu0
    %3084 = vmatprep.mubr.bf16.mxu0 0
    %3085 = vmatmul.mubr.bf16.gmra.mrb[0].mxu0 %v2807
    %v3086 = vpop.f32.mrb[0].mxu0
    %v3087 = vadd.f32 %v2536, %v3086
    %v3088 = vpop.f32.mrb[0].mxu0
    %v3089 = vpop.f32.mrb[0].mxu0
    %v3090 = vadd.f32 %v2539, %v3089
    %v3091 = vpop.f32.mrb[0].mxu0
    %3092 = vmatprep.mubr.bf16.mxu0 0
    %3093 = vmatmul.mubr.bf16.gmra.mrb[0].mxu0 %v2810
    %v3094 = vpop.f32.mrb[0].mxu0
    %v3095 = vadd.f32 %v2544, %v3094
    %v3096 = vpop.f32.mrb[0].mxu0
    %v3097 = vpop.f32.mrb[0].mxu0
    %v3098 = vadd.f32 %v2547, %v3097
    %v3099 = vpop.f32.mrb[0].mxu0
    %3100 = vdwg.mxu0
    %v3101 = vld [vmem:[#allocation2] sm:$0xe]
    %v3102 = vld [vmem:[#allocation2 + $0xc] sm:$0xe]
    %v3103 = vld [vmem:[#allocation2 + $0x18] sm:$0xe]
    %v3104 = vld [vmem:[#allocation2 + $0x24] sm:$0xe]
    %v3105 = vld [vmem:[#allocation2 + $0x30] sm:$0xe]
    %v3106 = vld [vmem:[#allocation2 + $0x3c] sm:$0xe]
    %v3107 = vld [vmem:[#allocation2 + $0x48] sm:$0xe]
    %v3108 = vld [vmem:[#allocation2 + $0x54] sm:$0xe]
    %v3109 = vld [vmem:[#allocation2 + $0x60] sm:$0xe]
    %v3110 = vld [vmem:[#allocation2 + $0x6c] sm:$0xe]
    %v3111 = vld [vmem:[#allocation2 + $0x78] sm:$0xe]
    %v3112 = vld [vmem:[#allocation2 + $0x84] sm:$0xe]
    %v3113 = vld [vmem:[#allocation2 + $0x90] sm:$0xe]
    %v3114 = vld [vmem:[#allocation2 + $0x9c] sm:$0xe]
    %v3115 = vld [vmem:[#allocation2 + $0xa8] sm:$0xe]
    %v3116 = vld [vmem:[#allocation2 + $0xb4] sm:$0xe]
    %v3117 = vld [vmem:[#allocation2 + $0xd8] sm:$0xe]
    %v3118 = vld [vmem:[#allocation2 + $0xe4] sm:$0xe]
    %v3119 = vld [vmem:[#allocation2 + $0xf0] sm:$0xe]
    %v3120 = vld [vmem:[#allocation2 + $0xfc] sm:$0xe]
    %v3121 = vld [vmem:[#allocation2 + $0x108] sm:$0xe]
    %v3122 = vld [vmem:[#allocation2 + $0x114] sm:$0xe]
    %v3123 = vld [vmem:[#allocation2 + $0x120] sm:$0xe]
    %v3124 = vld [vmem:[#allocation2 + $0x12c] sm:$0xe]
    %v3125 = vld [vmem:[#allocation2 + $0x138] sm:$0xe]
    %v3126 = vld [vmem:[#allocation2 + $0x144] sm:$0xe]
    %v3127 = vld [vmem:[#allocation2 + $0x150] sm:$0xe]
    %v3128 = vld [vmem:[#allocation2 + $0x15c] sm:$0xe]
    %v3129 = vld [vmem:[#allocation2 + $0x168] sm:$0xe]
    %v3130 = vld [vmem:[#allocation2 + $0x174] sm:$0xe]
    %v3131 = vld [vmem:[#allocation2 + $0x180] sm:$0xe]
    %v3132 = vld [vmem:[#allocation2 + $0x18c] sm:$0xe]
    %vm3197 = vcmask 1042432
    %vm3198 = vcmask 1046532
    %vm3199 = vmor %vm3197, %vm3198
    %v3200 = vrot.slane %v3101, 5
    %v3201 = vrot.slane %v3200, 4
    %v3202 = vrot.slane %v1191, 5
    %v3203 = vsel %vm3199, %v3201, %v3202
    %v3204 = vrot.slane %v3202, 4
    %v3205 = vrot.slane %v1256, 5
    %v3206 = vsel %vm3199, %v3204, %v3205
    %v3207 = vrot.slane %v3102, 5
    %v3208 = vrot.slane %v3207, 4
    %v3209 = vrot.slane %v1193, 5
    %v3210 = vsel %vm3199, %v3208, %v3209
    %v3211 = vrot.slane %v3209, 4
    %v3212 = vrot.slane %v1257, 5
    %v3213 = vsel %vm3199, %v3211, %v3212
    %v3214 = vrot.slane %v3103, 5
    %v3215 = vrot.slane %v3214, 4
    %v3216 = vrot.slane %v1195, 5
    %v3217 = vsel %vm3199, %v3215, %v3216
    %v3218 = vrot.slane %v3216, 4
    %v3219 = vrot.slane %v1258, 5
    %v3220 = vsel %vm3199, %v3218, %v3219
    %v3221 = vrot.slane %v3104, 5
    %v3222 = vrot.slane %v3221, 4
    %v3223 = vrot.slane %v1197, 5
    %v3224 = vsel %vm3199, %v3222, %v3223
    %v3225 = vrot.slane %v3223, 4
    %v3226 = vrot.slane %v1259, 5
    %v3227 = vsel %vm3199, %v3225, %v3226
    %v3228 = vrot.slane %v3105, 5
    %v3229 = vrot.slane %v3228, 4
    %v3230 = vrot.slane %v1199, 5
    %v3231 = vsel %vm3199, %v3229, %v3230
    %v3232 = vrot.slane %v3230, 4
    %v3233 = vrot.slane %v1260, 5
    %v3234 = vsel %vm3199, %v3232, %v3233
    %v3235 = vrot.slane %v3106, 5
    %v3236 = vrot.slane %v3235, 4
    %v3237 = vrot.slane %v1201, 5
    %v3238 = vsel %vm3199, %v3236, %v3237
    %v3239 = vrot.slane %v3237, 4
    %v3240 = vrot.slane %v1261, 5
    %v3241 = vsel %vm3199, %v3239, %v3240
    %v3242 = vrot.slane %v3107, 5
    %v3243 = vrot.slane %v3242, 4
    %v3244 = vrot.slane %v1203, 5
    %v3245 = vsel %vm3199, %v3243, %v3244
    %v3246 = vrot.slane %v3244, 4
    %v3247 = vrot.slane %v1262, 5
    %v3248 = vsel %vm3199, %v3246, %v3247
    %v3249 = vrot.slane %v3108, 5
    %v3250 = vrot.slane %v3249, 4
    %v3251 = vrot.slane %v1205, 5
    %v3252 = vsel %vm3199, %v3250, %v3251
    %v3253 = vrot.slane %v3251, 4
    %v3254 = vrot.slane %v1263, 5
    %v3255 = vsel %vm3199, %v3253, %v3254
    %v3256 = vrot.slane %v3109, 5
    %v3257 = vrot.slane %v3256, 4
    %v3258 = vrot.slane %v1207, 5
    %v3259 = vsel %vm3199, %v3257, %v3258
    %v3260 = vrot.slane %v3258, 4
    %v3261 = vrot.slane %v1264, 5
    %v3262 = vsel %vm3199, %v3260, %v3261
    %v3263 = vrot.slane %v3110, 5
    %v3264 = vrot.slane %v3263, 4
    %v3265 = vrot.slane %v1209, 5
    %v3266 = vsel %vm3199, %v3264, %v3265
    %v3267 = vrot.slane %v3265, 4
    %v3268 = vrot.slane %v1265, 5
    %v3269 = vsel %vm3199, %v3267, %v3268
    %v3270 = vrot.slane %v3111, 5
    %v3271 = vrot.slane %v3270, 4
    %v3272 = vrot.slane %v1211, 5
    %v3273 = vsel %vm3199, %v3271, %v3272
    %v3274 = vrot.slane %v3272, 4
    %v3275 = vrot.slane %v1266, 5
    %v3276 = vsel %vm3199, %v3274, %v3275
    %v3277 = vrot.slane %v3112, 5
    %v3278 = vrot.slane %v3277, 4
    %v3279 = vrot.slane %v1213, 5
    %v3280 = vsel %vm3199, %v3278, %v3279
    %v3281 = vrot.slane %v3279, 4
    %v3282 = vrot.slane %v1267, 5
    %v3283 = vsel %vm3199, %v3281, %v3282
    %v3284 = vrot.slane %v3113, 5
    %v3285 = vrot.slane %v3284, 4
    %v3286 = vrot.slane %v1215, 5
    %v3287 = vsel %vm3199, %v3285, %v3286
    %v3288 = vrot.slane %v3286, 4
    %v3289 = vrot.slane %v1268, 5
    %v3290 = vsel %vm3199, %v3288, %v3289
    %v3291 = vrot.slane %v3114, 5
    %v3292 = vrot.slane %v3291, 4
    %v3293 = vrot.slane %v1217, 5
    %v3294 = vsel %vm3199, %v3292, %v3293
    %v3295 = vrot.slane %v3293, 4
    %v3296 = vrot.slane %v1269, 5
    %v3297 = vsel %vm3199, %v3295, %v3296
    %v3298 = vrot.slane %v3115, 5
    %v3299 = vrot.slane %v3298, 4
    %v3300 = vrot.slane %v1219, 5
    %v3301 = vsel %vm3199, %v3299, %v3300
    %v3302 = vrot.slane %v3300, 4
    %v3303 = vrot.slane %v1270, 5
    %v3304 = vsel %vm3199, %v3302, %v3303
    %v3305 = vrot.slane %v3116, 5
    %v3306 = vrot.slane %v3305, 4
    %v3307 = vrot.slane %v1221, 5
    %v3308 = vsel %vm3199, %v3306, %v3307
    %v3309 = vrot.slane %v3307, 4
    %v3310 = vrot.slane %v1271, 5
    %v3311 = vsel %vm3199, %v3309, %v3310
    %v3312 = vrot.slane %v3117, 5
    %v3313 = vrot.slane %v3312, 4
    %v3314 = vrot.slane %v1223, 5
    %v3315 = vsel %vm3199, %v3313, %v3314
    %v3316 = vrot.slane %v3314, 4
    %v3317 = vrot.slane %v1272, 5
    %v3318 = vsel %vm3199, %v3316, %v3317
    %v3319 = vrot.slane %v3118, 5
    %v3320 = vrot.slane %v3319, 4
    %v3321 = vrot.slane %v1225, 5
    %v3322 = vsel %vm3199, %v3320, %v3321
    %v3323 = vrot.slane %v3321, 4
    %v3324 = vrot.slane %v1273, 5
    %v3325 = vsel %vm3199, %v3323, %v3324
    %v3326 = vrot.slane %v3119, 5
    %v3327 = vrot.slane %v3326, 4
    %v3328 = vrot.slane %v1227, 5
    %v3329 = vsel %vm3199, %v3327, %v3328
    %v3330 = vrot.slane %v3328, 4
    %v3331 = vrot.slane %v1274, 5
    %v3332 = vsel %vm3199, %v3330, %v3331
    %v3333 = vrot.slane %v3120, 5
    %v3334 = vrot.slane %v3333, 4
    %v3335 = vrot.slane %v1229, 5
    %v3336 = vsel %vm3199, %v3334, %v3335
    %v3337 = vrot.slane %v3335, 4
    %v3338 = vrot.slane %v1275, 5
    %v3339 = vsel %vm3199, %v3337, %v3338
    %v3340 = vrot.slane %v3121, 5
    %v3341 = vrot.slane %v3340, 4
    %v3342 = vrot.slane %v1231, 5
    %v3343 = vsel %vm3199, %v3341, %v3342
    %v3344 = vrot.slane %v3342, 4
    %v3345 = vrot.slane %v1276, 5
    %v3346 = vsel %vm3199, %v3344, %v3345
    %v3347 = vrot.slane %v3122, 5
    %v3348 = vrot.slane %v3347, 4
    %v3349 = vrot.slane %v1233, 5
    %v3350 = vsel %vm3199, %v3348, %v3349
    %v3351 = vrot.slane %v3349, 4
    %v3352 = vrot.slane %v1277, 5
    %v3353 = vsel %vm3199, %v3351, %v3352
    %v3354 = vrot.slane %v3123, 5
    %v3355 = vrot.slane %v3354, 4
    %v3356 = vrot.slane %v1235, 5
    %v3357 = vsel %vm3199, %v3355, %v3356
    %v3358 = vrot.slane %v3356, 4
    %v3359 = vrot.slane %v1278, 5
    %v3360 = vsel %vm3199, %v3358, %v3359
    %v3361 = vrot.slane %v3124, 5
    %v3362 = vrot.slane %v3361, 4
    %v3363 = vrot.slane %v1237, 5
    %v3364 = vsel %vm3199, %v3362, %v3363
    %v3365 = vrot.slane %v3363, 4
    %v3366 = vrot.slane %v1279, 5
    %v3367 = vsel %vm3199, %v3365, %v3366
    %v3368 = vrot.slane %v3125, 5
    %v3369 = vrot.slane %v3368, 4
    %v3370 = vrot.slane %v1239, 5
    %v3371 = vsel %vm3199, %v3369, %v3370
    %v3372 = vrot.slane %v3370, 4
    %v3373 = vrot.slane %v1280, 5
    %v3374 = vsel %vm3199, %v3372, %v3373
    %v3375 = vrot.slane %v3126, 5
    %v3376 = vrot.slane %v3375, 4
    %v3377 = vrot.slane %v1241, 5
    %v3378 = vsel %vm3199, %v3376, %v3377
    %v3379 = vrot.slane %v3377, 4
    %v3380 = vrot.slane %v1281, 5
    %v3381 = vsel %vm3199, %v3379, %v3380
    %v3382 = vrot.slane %v3127, 5
    %v3383 = vrot.slane %v3382, 4
    %v3384 = vrot.slane %v1243, 5
    %v3385 = vsel %vm3199, %v3383, %v3384
    %v3386 = vrot.slane %v3384, 4
    %v3387 = vrot.slane %v1282, 5
    %v3388 = vsel %vm3199, %v3386, %v3387
    %v3389 = vrot.slane %v3128, 5
    %v3390 = vrot.slane %v3389, 4
    %v3391 = vrot.slane %v1245, 5
    %v3392 = vsel %vm3199, %v3390, %v3391
    %v3393 = vrot.slane %v3391, 4
    %v3394 = vrot.slane %v1283, 5
    %v3395 = vsel %vm3199, %v3393, %v3394
    %v3396 = vrot.slane %v3129, 5
    %v3397 = vrot.slane %v3396, 4
    %v3398 = vrot.slane %v1247, 5
    %v3399 = vsel %vm3199, %v3397, %v3398
    %v3400 = vrot.slane %v3398, 4
    %v3401 = vrot.slane %v1284, 5
    %v3402 = vsel %vm3199, %v3400, %v3401
    %v3403 = vrot.slane %v3130, 5
    %v3404 = vrot.slane %v3403, 4
    %v3405 = vrot.slane %v1249, 5
    %v3406 = vsel %vm3199, %v3404, %v3405
    %v3407 = vrot.slane %v3405, 4
    %v3408 = vrot.slane %v1285, 5
    %v3409 = vsel %vm3199, %v3407, %v3408
    %v3410 = vrot.slane %v3131, 5
    %v3411 = vrot.slane %v3410, 4
    %v3412 = vrot.slane %v1251, 5
    %v3413 = vsel %vm3199, %v3411, %v3412
    %v3414 = vrot.slane %v3412, 4
    %v3415 = vrot.slane %v1286, 5
    %v3416 = vsel %vm3199, %v3414, %v3415
    %v3417 = vrot.slane %v3132, 5
    %v3418 = vrot.slane %v3417, 4
    %v3419 = vrot.slane %v1253, 5
    %v3420 = vsel %vm3199, %v3418, %v3419
    %v3421 = vrot.slane %v3419, 4
    %v3422 = vrot.slane %v1287, 5
    %v3423 = vsel %vm3199, %v3421, %v3422
    %s3424 = scalar_lea.vmem [#allocation6], 16
    %v3425 = vld [vmem:[%s3424] sm:$0xf]
    %v3426 = vld [vmem:[%s3424 + $0x4] sm:$0xf]
    %v3427 = vunpack.c.l.b16 %v3203
    %v3428 = vunpack.c.l.b16 %v3206
    %v3429 = vunpack.c.l.b16 %v3210
    %v3430 = vunpack.c.l.b16 %v3213
    %v3431 = vunpack.c.l.b16 %v3217
    %v3432 = vunpack.c.l.b16 %v3220
    %v3433 = vunpack.c.l.b16 %v3224
    %v3434 = vunpack.c.l.b16 %v3227
    %v3435 = vunpack.c.l.b16 %v3231
    %v3436 = vunpack.c.l.b16 %v3234
    %v3437 = vunpack.c.l.b16 %v3238
    %v3438 = vunpack.c.l.b16 %v3241
    %v3439 = vunpack.c.l.b16 %v3245
    %v3440 = vunpack.c.l.b16 %v3248
    %v3441 = vunpack.c.l.b16 %v3252
    %v3442 = vunpack.c.l.b16 %v3255
    %v3443 = vunpack.c.l.b16 %v3259
    %v3444 = vunpack.c.l.b16 %v3262
    %v3445 = vunpack.c.l.b16 %v3266
    %v3446 = vunpack.c.l.b16 %v3269
    %v3447 = vunpack.c.l.b16 %v3273
    %v3448 = vunpack.c.l.b16 %v3276
    %v3449 = vunpack.c.l.b16 %v3280
    %v3450 = vunpack.c.l.b16 %v3283
    %v3451 = vunpack.c.l.b16 %v3287
    %v3452 = vunpack.c.l.b16 %v3290
    %v3453 = vunpack.c.l.b16 %v3294
    %v3454 = vunpack.c.l.b16 %v3297
    %v3455 = vunpack.c.l.b16 %v3301
    %v3456 = vunpack.c.l.b16 %v3304
    %v3457 = vunpack.c.l.b16 %v3308
    %v3458 = vunpack.c.l.b16 %v3311
    %v3459 = vunpack.c.l.b16 %v3315
    %v3460 = vunpack.c.l.b16 %v3318
    %v3461 = vunpack.c.l.b16 %v3322
    %v3462 = vunpack.c.l.b16 %v3325
    %v3463 = vunpack.c.l.b16 %v3329
    %v3464 = vunpack.c.l.b16 %v3332
    %v3465 = vunpack.c.l.b16 %v3336
    %v3466 = vunpack.c.l.b16 %v3339
    %v3467 = vunpack.c.l.b16 %v3343
    %v3468 = vunpack.c.l.b16 %v3346
    %v3469 = vunpack.c.l.b16 %v3350
    %v3470 = vunpack.c.l.b16 %v3353
    %v3471 = vunpack.c.l.b16 %v3357
    %v3472 = vunpack.c.l.b16 %v3360
    %v3473 = vunpack.c.l.b16 %v3364
    %v3474 = vunpack.c.l.b16 %v3367
    %v3475 = vunpack.c.l.b16 %v3371
    %v3476 = vunpack.c.l.b16 %v3374
    %v3477 = vunpack.c.l.b16 %v3378
    %v3478 = vunpack.c.l.b16 %v3381
    %v3479 = vunpack.c.l.b16 %v3385
    %v3480 = vunpack.c.l.b16 %v3388
    %v3481 = vunpack.c.l.b16 %v3392
    %v3482 = vunpack.c.l.b16 %v3395
    %v3483 = vunpack.c.l.b16 %v3399
    %v3484 = vunpack.c.l.b16 %v3402
    %v3485 = vunpack.c.l.b16 %v3406
    %v3486 = vunpack.c.l.b16 %v3409
    %v3487 = vunpack.c.l.b16 %v3413
    %v3488 = vunpack.c.l.b16 %v3416
    %v3489 = vunpack.c.l.b16 %v3420
    %v3490 = vunpack.c.l.b16 %v3423
    %v3491 = vpack.c.b16 %v3428, %v3427
    %v3492 = vpack.c.b16 %v3430, %v3429
    %v3493 = vpack.c.b16 %v3432, %v3431
    %v3494 = vpack.c.b16 %v3434, %v3433
    %v3495 = vpack.c.b16 %v3436, %v3435
    %v3496 = vpack.c.b16 %v3438, %v3437
    %v3497 = vpack.c.b16 %v3440, %v3439
    %v3498 = vpack.c.b16 %v3442, %v3441
    %v3499 = vpack.c.b16 %v3444, %v3443
    %v3500 = vpack.c.b16 %v3446, %v3445
    %v3501 = vpack.c.b16 %v3448, %v3447
    %v3502 = vpack.c.b16 %v3450, %v3449
    %v3503 = vpack.c.b16 %v3452, %v3451
    %v3504 = vpack.c.b16 %v3454, %v3453
    %v3505 = vpack.c.b16 %v3456, %v3455
    %v3506 = vpack.c.b16 %v3458, %v3457
    %v3507 = vpack.c.b16 %v3460, %v3459
    %v3508 = vpack.c.b16 %v3462, %v3461
    %v3509 = vpack.c.b16 %v3464, %v3463
    %v3510 = vpack.c.b16 %v3466, %v3465
    %v3511 = vpack.c.b16 %v3468, %v3467
    %v3512 = vpack.c.b16 %v3470, %v3469
    %v3513 = vpack.c.b16 %v3472, %v3471
    %v3514 = vpack.c.b16 %v3474, %v3473
    %v3515 = vpack.c.b16 %v3476, %v3475
    %v3516 = vpack.c.b16 %v3478, %v3477
    %v3517 = vpack.c.b16 %v3480, %v3479
    %v3518 = vpack.c.b16 %v3482, %v3481
    %v3519 = vpack.c.b16 %v3484, %v3483
    %v3520 = vpack.c.b16 %v3486, %v3485
    %v3521 = vpack.c.b16 %v3488, %v3487
    %v3522 = vpack.c.b16 %v3490, %v3489
    %v3525 = vunpack.c.l.b16 %v3425
    %v3526 = vunpack.c.l.b16 %v3426
    %v3527 = vpack.c.b16 %v3526, %v3525
    %v3530 = vsel %vm2164, %v3491, 0
    %v3533 = vsel %vm2164, %v3492, 0
    %v3536 = vsel %vm2164, %v3493, 0
    %v3539 = vsel %vm2164, %v3494, 0
    %v3542 = vsel %vm2164, %v3495, 0
    %v3545 = vsel %vm2164, %v3496, 0
    %v3548 = vsel %vm2164, %v3497, 0
    %v3551 = vsel %vm2164, %v3498, 0
    %v3554 = vsel %vm2164, %v3499, 0
    %v3557 = vsel %vm2164, %v3500, 0
    %v3560 = vsel %vm2164, %v3501, 0
    %v3563 = vsel %vm2164, %v3502, 0
    %v3566 = vsel %vm2164, %v3503, 0
    %v3569 = vsel %vm2164, %v3504, 0
    %v3572 = vsel %vm2164, %v3505, 0
    %v3575 = vsel %vm2164, %v3506, 0
    %v3578 = vsel %vm2164, %v3507, 0
    %v3581 = vsel %vm2164, %v3508, 0
    %v3584 = vsel %vm2164, %v3509, 0
    %v3587 = vsel %vm2164, %v3510, 0
    %v3590 = vsel %vm2164, %v3511, 0
    %v3593 = vsel %vm2164, %v3512, 0
    %v3596 = vsel %vm2164, %v3513, 0
    %v3599 = vsel %vm2164, %v3514, 0
    %v3602 = vsel %vm2164, %v3515, 0
    %v3605 = vsel %vm2164, %v3516, 0
    %v3608 = vsel %vm2164, %v3517, 0
    %v3611 = vsel %vm2164, %v3518, 0
    %v3614 = vsel %vm2164, %v3519, 0
    %v3617 = vsel %vm2164, %v3520, 0
    %v3620 = vsel %vm2164, %v3521, 0
    %v3623 = vsel %vm2164, %v3522, 0
    %3625 = vmatprep.subr.bf16.mxu0 0
    %3626 = vmatpush1.bf16.msra.mxu0 %v3527
    %3627 = vmatprep.subr.bf16.mxu0 0
    %3628 = vmatpush1.bf16.msra.mxu0 0
    %3629 = vmatprep.subr.bf16.mxu0 0
    %3630 = vmatpush1.bf16.msra.mxu0 0
    %3631 = vmatprep.subr.bf16.mxu0 0
    %3632 = vmatpush1.bf16.msra.mxu0 0
    %3633 = vmatprep.subr.bf16.mxu0 0
    %3634 = vmatpush1.bf16.msra.mxu0 0
    %3635 = vmatprep.subr.bf16.mxu0 0
    %3636 = vmatpush1.bf16.msra.mxu0 0
    %3637 = vmatprep.subr.bf16.mxu0 0
    %3638 = vmatpush1.bf16.msra.mxu0 0
    %3639 = vmatprep.subr.bf16.mxu0 0
    %3640 = vmatpush1.bf16.msra.mxu0 0
    %3641 = vmatprep.subr.bf16.mxu0 0
    %3642 = vmatpush1.bf16.msra.mxu0 0
    %3643 = vmatprep.subr.bf16.mxu0 0
    %3644 = vmatpush1.bf16.msra.mxu0 0
    %3645 = vmatprep.subr.bf16.mxu0 0
    %3646 = vmatpush1.bf16.msra.mxu0 0
    %3647 = vmatprep.subr.bf16.mxu0 0
    %3648 = vmatpush1.bf16.msra.mxu0 0
    %3649 = vmatprep.subr.bf16.mxu0 0
    %3650 = vmatpush1.bf16.msra.mxu0 0
    %3651 = vmatprep.subr.bf16.mxu0 0
    %3652 = vmatpush1.bf16.msra.mxu0 0
    %3653 = vmatprep.subr.bf16.mxu0 0
    %3654 = vmatpush1.bf16.msra.mxu0 0
    %3655 = vmatprep.subr.bf16.mxu0 0
    %3656 = vmatpush1.bf16.msra.mxu0 0
    %3657 = vmatprep.mubr.bf16.mxu0 0
    %3658 = vmatmul.mubr.bf16.gmra.mrb[0].mxu0 %v3530
    %v3659 = vpop.f32.mrb[0].mxu0
    %v3660 = vadd.f32 0.0, %v3659
    %v3661 = vpop.f32.mrb[0].mxu0
    %v3662 = vpop.f32.mrb[0].mxu0
    %v3663 = vadd.f32 0.0, %v3662
    %v3664 = vpop.f32.mrb[0].mxu0
    %3665 = vmatprep.mubr.bf16.mxu0 0
    %3666 = vmatmul.mubr.bf16.gmra.mrb[0].mxu0 %v3533
    %v3667 = vpop.f32.mrb[0].mxu0
    %v3668 = vadd.f32 0.0, %v3667
    %v3669 = vpop.f32.mrb[0].mxu0
    %v3670 = vpop.f32.mrb[0].mxu0
    %v3671 = vadd.f32 0.0, %v3670
    %v3672 = vpop.f32.mrb[0].mxu0
    %3673 = vmatprep.mubr.bf16.mxu0 0
    %3674 = vmatmul.mubr.bf16.gmra.mrb[0].mxu0 %v3536
    %v3675 = vpop.f32.mrb[0].mxu0
    %v3676 = vadd.f32 0.0, %v3675
    %v3677 = vpop.f32.mrb[0].mxu0
    %v3678 = vpop.f32.mrb[0].mxu0
    %v3679 = vadd.f32 0.0, %v3678
    %v3680 = vpop.f32.mrb[0].mxu0
    %3681 = vmatprep.mubr.bf16.mxu0 0
    %3682 = vmatmul.mubr.bf16.gmra.mrb[0].mxu0 %v3539
    %v3683 = vpop.f32.mrb[0].mxu0
    %v3684 = vadd.f32 0.0, %v3683
    %v3685 = vpop.f32.mrb[0].mxu0
    %v3686 = vpop.f32.mrb[0].mxu0
    %v3687 = vadd.f32 0.0, %v3686
    %v3688 = vpop.f32.mrb[0].mxu0
    %3689 = vmatprep.mubr.bf16.mxu0 0
    %3690 = vmatmul.mubr.bf16.gmra.mrb[0].mxu0 %v3542
    %v3691 = vpop.f32.mrb[0].mxu0
    %v3692 = vadd.f32 0.0, %v3691
    %v3693 = vpop.f32.mrb[0].mxu0
    %v3694 = vpop.f32.mrb[0].mxu0
    %v3695 = vadd.f32 0.0, %v3694
    %v3696 = vpop.f32.mrb[0].mxu0
    %3697 = vmatprep.mubr.bf16.mxu0 0
    %3698 = vmatmul.mubr.bf16.gmra.mrb[0].mxu0 %v3545
    %v3699 = vpop.f32.mrb[0].mxu0
    %v3700 = vadd.f32 0.0, %v3699
    %v3701 = vpop.f32.mrb[0].mxu0
    %v3702 = vpop.f32.mrb[0].mxu0
    %v3703 = vadd.f32 0.0, %v3702
    %v3704 = vpop.f32.mrb[0].mxu0
    %3705 = vmatprep.mubr.bf16.mxu0 0
    %3706 = vmatmul.mubr.bf16.gmra.mrb[0].mxu0 %v3548
    %v3707 = vpop.f32.mrb[0].mxu0
    %v3708 = vadd.f32 0.0, %v3707
    %v3709 = vpop.f32.mrb[0].mxu0
    %v3710 = vpop.f32.mrb[0].mxu0
    %v3711 = vadd.f32 0.0, %v3710
    %v3712 = vpop.f32.mrb[0].mxu0
    %3713 = vmatprep.mubr.bf16.mxu0 0
    %3714 = vmatmul.mubr.bf16.gmra.mrb[0].mxu0 %v3551
    %v3715 = vpop.f32.mrb[0].mxu0
    %v3716 = vadd.f32 0.0, %v3715
    %v3717 = vpop.f32.mrb[0].mxu0
    %v3718 = vpop.f32.mrb[0].mxu0
    %v3719 = vadd.f32 0.0, %v3718
    %v3720 = vpop.f32.mrb[0].mxu0
    %3721 = vmatprep.mubr.bf16.mxu0 0
    %3722 = vmatmul.mubr.bf16.gmra.mrb[0].mxu0 %v3554
    %v3723 = vpop.f32.mrb[0].mxu0
    %v3724 = vadd.f32 0.0, %v3723
    %v3725 = vpop.f32.mrb[0].mxu0
    %v3726 = vpop.f32.mrb[0].mxu0
    %v3727 = vadd.f32 0.0, %v3726
    %v3728 = vpop.f32.mrb[0].mxu0
    %3729 = vmatprep.mubr.bf16.mxu0 0
    %3730 = vmatmul.mubr.bf16.gmra.mrb[0].mxu0 %v3557
    %v3731 = vpop.f32.mrb[0].mxu0
    %v3732 = vadd.f32 0.0, %v3731
    %v3733 = vpop.f32.mrb[0].mxu0
    %v3734 = vpop.f32.mrb[0].mxu0
    %v3735 = vadd.f32 0.0, %v3734
    %v3736 = vpop.f32.mrb[0].mxu0
    %3737 = vmatprep.mubr.bf16.mxu0 0
    %3738 = vmatmul.mubr.bf16.gmra.mrb[0].mxu0 %v3560
    %v3739 = vpop.f32.mrb[0].mxu0
    %v3740 = vadd.f32 0.0, %v3739
    %v3741 = vpop.f32.mrb[0].mxu0
    %v3742 = vpop.f32.mrb[0].mxu0
    %v3743 = vadd.f32 0.0, %v3742
    %v3744 = vpop.f32.mrb[0].mxu0
    %3745 = vmatprep.mubr.bf16.mxu0 0
    %3746 = vmatmul.mubr.bf16.gmra.mrb[0].mxu0 %v3563
    %v3747 = vpop.f32.mrb[0].mxu0
    %v3748 = vadd.f32 0.0, %v3747
    %v3749 = vpop.f32.mrb[0].mxu0
    %v3750 = vpop.f32.mrb[0].mxu0
    %v3751 = vadd.f32 0.0, %v3750
    %v3752 = vpop.f32.mrb[0].mxu0
    %3753 = vmatprep.mubr.bf16.mxu0 0
    %3754 = vmatmul.mubr.bf16.gmra.mrb[0].mxu0 %v3566
    %v3755 = vpop.f32.mrb[0].mxu0
    %v3756 = vadd.f32 0.0, %v3755
    %v3757 = vpop.f32.mrb[0].mxu0
    %v3758 = vpop.f32.mrb[0].mxu0
    %v3759 = vadd.f32 0.0, %v3758
    %v3760 = vpop.f32.mrb[0].mxu0
    %3761 = vmatprep.mubr.bf16.mxu0 0
    %3762 = vmatmul.mubr.bf16.gmra.mrb[0].mxu0 %v3569
    %v3763 = vpop.f32.mrb[0].mxu0
    %v3764 = vadd.f32 0.0, %v3763
    %v3765 = vpop.f32.mrb[0].mxu0
    %v3766 = vpop.f32.mrb[0].mxu0
    %v3767 = vadd.f32 0.0, %v3766
    %v3768 = vpop.f32.mrb[0].mxu0
    %3769 = vmatprep.mubr.bf16.mxu0 0
    %3770 = vmatmul.mubr.bf16.gmra.mrb[0].mxu0 %v3572
    %v3771 = vpop.f32.mrb[0].mxu0
    %v3772 = vadd.f32 0.0, %v3771
    %v3773 = vpop.f32.mrb[0].mxu0
    %v3774 = vpop.f32.mrb[0].mxu0
    %v3775 = vadd.f32 0.0, %v3774
    %v3776 = vpop.f32.mrb[0].mxu0
    %3777 = vmatprep.mubr.bf16.mxu0 0
    %3778 = vmatmul.mubr.bf16.gmra.mrb[0].mxu0 %v3575
    %v3779 = vpop.f32.mrb[0].mxu0
    %v3780 = vadd.f32 0.0, %v3779
    %v3781 = vpop.f32.mrb[0].mxu0
    %v3782 = vpop.f32.mrb[0].mxu0
    %v3783 = vadd.f32 0.0, %v3782
    %v3784 = vpop.f32.mrb[0].mxu0
    %3785 = vmatprep.mubr.bf16.mxu0 0
    %3786 = vmatmul.mubr.bf16.gmra.mrb[0].mxu0 %v3578
    %v3787 = vpop.f32.mrb[0].mxu0
    %v3788 = vadd.f32 0.0, %v3787
    %v3789 = vpop.f32.mrb[0].mxu0
    %v3790 = vpop.f32.mrb[0].mxu0
    %v3791 = vadd.f32 0.0, %v3790
    %v3792 = vpop.f32.mrb[0].mxu0
    %3793 = vmatprep.mubr.bf16.mxu0 0
    %3794 = vmatmul.mubr.bf16.gmra.mrb[0].mxu0 %v3581
    %v3795 = vpop.f32.mrb[0].mxu0
    %v3796 = vadd.f32 0.0, %v3795
    %v3797 = vpop.f32.mrb[0].mxu0
    %v3798 = vpop.f32.mrb[0].mxu0
    %v3799 = vadd.f32 0.0, %v3798
    %v3800 = vpop.f32.mrb[0].mxu0
    %3801 = vmatprep.mubr.bf16.mxu0 0
    %3802 = vmatmul.mubr.bf16.gmra.mrb[0].mxu0 %v3584
    %v3803 = vpop.f32.mrb[0].mxu0
    %v3804 = vadd.f32 0.0, %v3803
    %v3805 = vpop.f32.mrb[0].mxu0
    %v3806 = vpop.f32.mrb[0].mxu0
    %v3807 = vadd.f32 0.0, %v3806
    %v3808 = vpop.f32.mrb[0].mxu0
    %3809 = vmatprep.mubr.bf16.mxu0 0
    %3810 = vmatmul.mubr.bf16.gmra.mrb[0].mxu0 %v3587
    %v3811 = vpop.f32.mrb[0].mxu0
    %v3812 = vadd.f32 0.0, %v3811
    %v3813 = vpop.f32.mrb[0].mxu0
    %v3814 = vpop.f32.mrb[0].mxu0
    %v3815 = vadd.f32 0.0, %v3814
    %v3816 = vpop.f32.mrb[0].mxu0
    %3817 = vmatprep.mubr.bf16.mxu0 0
    %3818 = vmatmul.mubr.bf16.gmra.mrb[0].mxu0 %v3590
    %v3819 = vpop.f32.mrb[0].mxu0
    %v3820 = vadd.f32 0.0, %v3819
    %v3821 = vpop.f32.mrb[0].mxu0
    %v3822 = vpop.f32.mrb[0].mxu0
    %v3823 = vadd.f32 0.0, %v3822
    %v3824 = vpop.f32.mrb[0].mxu0
    %3825 = vmatprep.mubr.bf16.mxu0 0
    %3826 = vmatmul.mubr.bf16.gmra.mrb[0].mxu0 %v3593
    %v3827 = vpop.f32.mrb[0].mxu0
    %v3828 = vadd.f32 0.0, %v3827
    %v3829 = vpop.f32.mrb[0].mxu0
    %v3830 = vpop.f32.mrb[0].mxu0
    %v3831 = vadd.f32 0.0, %v3830
    %v3832 = vpop.f32.mrb[0].mxu0
    %3833 = vmatprep.mubr.bf16.mxu0 0
    %3834 = vmatmul.mubr.bf16.gmra.mrb[0].mxu0 %v3596
    %v3835 = vpop.f32.mrb[0].mxu0
    %v3836 = vadd.f32 0.0, %v3835
    %v3837 = vpop.f32.mrb[0].mxu0
    %v3838 = vpop.f32.mrb[0].mxu0
    %v3839 = vadd.f32 0.0, %v3838
    %v3840 = vpop.f32.mrb[0].mxu0
    %3841 = vmatprep.mubr.bf16.mxu0 0
    %3842 = vmatmul.mubr.bf16.gmra.mrb[0].mxu0 %v3599
    %v3843 = vpop.f32.mrb[0].mxu0
    %v3844 = vadd.f32 0.0, %v3843
    %v3845 = vpop.f32.mrb[0].mxu0
    %v3846 = vpop.f32.mrb[0].mxu0
    %v3847 = vadd.f32 0.0, %v3846
    %v3848 = vpop.f32.mrb[0].mxu0
    %3849 = vmatprep.mubr.bf16.mxu0 0
    %3850 = vmatmul.mubr.bf16.gmra.mrb[0].mxu0 %v3602
    %v3851 = vpop.f32.mrb[0].mxu0
    %v3852 = vadd.f32 0.0, %v3851
    %v3853 = vpop.f32.mrb[0].mxu0
    %v3854 = vpop.f32.mrb[0].mxu0
    %v3855 = vadd.f32 0.0, %v3854
    %v3856 = vpop.f32.mrb[0].mxu0
    %3857 = vmatprep.mubr.bf16.mxu0 0
    %3858 = vmatmul.mubr.bf16.gmra.mrb[0].mxu0 %v3605
    %v3859 = vpop.f32.mrb[0].mxu0
    %v3860 = vadd.f32 0.0, %v3859
    %v3861 = vpop.f32.mrb[0].mxu0
    %v3862 = vpop.f32.mrb[0].mxu0
    %v3863 = vadd.f32 0.0, %v3862
    %v3864 = vpop.f32.mrb[0].mxu0
    %3865 = vmatprep.mubr.bf16.mxu0 0
    %3866 = vmatmul.mubr.bf16.gmra.mrb[0].mxu0 %v3608
    %v3867 = vpop.f32.mrb[0].mxu0
    %v3868 = vadd.f32 0.0, %v3867
    %v3869 = vpop.f32.mrb[0].mxu0
    %v3870 = vpop.f32.mrb[0].mxu0
    %v3871 = vadd.f32 0.0, %v3870
    %v3872 = vpop.f32.mrb[0].mxu0
    %3873 = vmatprep.mubr.bf16.mxu0 0
    %3874 = vmatmul.mubr.bf16.gmra.mrb[0].mxu0 %v3611
    %v3875 = vpop.f32.mrb[0].mxu0
    %v3876 = vadd.f32 0.0, %v3875
    %v3877 = vpop.f32.mrb[0].mxu0
    %v3878 = vpop.f32.mrb[0].mxu0
    %v3879 = vadd.f32 0.0, %v3878
    %v3880 = vpop.f32.mrb[0].mxu0
    %3881 = vmatprep.mubr.bf16.mxu0 0
    %3882 = vmatmul.mubr.bf16.gmra.mrb[0].mxu0 %v3614
    %v3883 = vpop.f32.mrb[0].mxu0
    %v3884 = vadd.f32 0.0, %v3883
    %v3885 = vpop.f32.mrb[0].mxu0
    %v3886 = vpop.f32.mrb[0].mxu0
    %v3887 = vadd.f32 0.0, %v3886
    %v3888 = vpop.f32.mrb[0].mxu0
    %3889 = vmatprep.mubr.bf16.mxu0 0
    %3890 = vmatmul.mubr.bf16.gmra.mrb[0].mxu0 %v3617
    %v3891 = vpop.f32.mrb[0].mxu0
    %v3892 = vadd.f32 0.0, %v3891
    %v3893 = vpop.f32.mrb[0].mxu0
    %v3894 = vpop.f32.mrb[0].mxu0
    %v3895 = vadd.f32 0.0, %v3894
    %v3896 = vpop.f32.mrb[0].mxu0
    %3897 = vmatprep.mubr.bf16.mxu0 0
    %3898 = vmatmul.mubr.bf16.gmra.mrb[0].mxu0 %v3620
    %v3899 = vpop.f32.mrb[0].mxu0
    %v3900 = vadd.f32 0.0, %v3899
    %v3901 = vpop.f32.mrb[0].mxu0
    %v3902 = vpop.f32.mrb[0].mxu0
    %v3903 = vadd.f32 0.0, %v3902
    %v3904 = vpop.f32.mrb[0].mxu0
    %3905 = vmatprep.mubr.bf16.mxu0 0
    %3906 = vmatmul.mubr.bf16.gmra.mrb[0].mxu0 %v3623
    %v3907 = vpop.f32.mrb[0].mxu0
    %v3908 = vadd.f32 0.0, %v3907
    %v3909 = vpop.f32.mrb[0].mxu0
    %v3910 = vpop.f32.mrb[0].mxu0
    %v3911 = vadd.f32 0.0, %v3910
    %v3912 = vpop.f32.mrb[0].mxu0
    %3913 = vdwg.mxu0
    %v3914 = vadd.f32 %v2847, %v3660
    %v3915 = vadd.f32 %v2850, %v3663
    %v3916 = vadd.f32 %v2855, %v3668
    %v3917 = vadd.f32 %v2858, %v3671
    %v3918 = vadd.f32 %v2863, %v3676
    %v3919 = vadd.f32 %v2866, %v3679
    %v3920 = vadd.f32 %v2871, %v3684
    %v3921 = vadd.f32 %v2874, %v3687
    %v3922 = vadd.f32 %v2879, %v3692
    %v3923 = vadd.f32 %v2882, %v3695
    %v3924 = vadd.f32 %v2887, %v3700
    %v3925 = vadd.f32 %v2890, %v3703
    %v3926 = vadd.f32 %v2895, %v3708
    %v3927 = vadd.f32 %v2898, %v3711
    %v3928 = vadd.f32 %v2903, %v3716
    %v3929 = vadd.f32 %v2906, %v3719
    %v3930 = vadd.f32 %v2911, %v3724
    %v3931 = vadd.f32 %v2914, %v3727
    %v3932 = vadd.f32 %v2919, %v3732
    %v3933 = vadd.f32 %v2922, %v3735
    %v3934 = vadd.f32 %v2927, %v3740
    %v3935 = vadd.f32 %v2930, %v3743
    %v3936 = vadd.f32 %v2935, %v3748
    %v3937 = vadd.f32 %v2938, %v3751
    %v3938 = vadd.f32 %v2943, %v3756
    %v3939 = vadd.f32 %v2946, %v3759
    %v3940 = vadd.f32 %v2951, %v3764
    %v3941 = vadd.f32 %v2954, %v3767
    %v3942 = vadd.f32 %v2959, %v3772
    %v3943 = vadd.f32 %v2962, %v3775
    %v3944 = vadd.f32 %v2967, %v3780
    %v3945 = vadd.f32 %v2970, %v3783
    %v3946 = vadd.f32 %v2975, %v3788
    %v3947 = vadd.f32 %v2978, %v3791
    %v3948 = vadd.f32 %v2983, %v3796
    %v3949 = vadd.f32 %v2986, %v3799
    %v3950 = vadd.f32 %v2991, %v3804
    %v3951 = vadd.f32 %v2994, %v3807
    %v3952 = vadd.f32 %v2999, %v3812
    %v3953 = vadd.f32 %v3002, %v3815
    %v3954 = vadd.f32 %v3007, %v3820
    %v3955 = vadd.f32 %v3010, %v3823
    %v3956 = vadd.f32 %v3015, %v3828
    %v3957 = vadd.f32 %v3018, %v3831
    %v3958 = vadd.f32 %v3023, %v3836
    %v3959 = vadd.f32 %v3026, %v3839
    %v3960 = vadd.f32 %v3031, %v3844
    %v3961 = vadd.f32 %v3034, %v3847
    %v3962 = vadd.f32 %v3039, %v3852
    %v3963 = vadd.f32 %v3042, %v3855
    %v3964 = vadd.f32 %v3047, %v3860
    %v3965 = vadd.f32 %v3050, %v3863
    %v3966 = vadd.f32 %v3055, %v3868
    %v3967 = vadd.f32 %v3058, %v3871
    %v3968 = vadd.f32 %v3063, %v3876
    %v3969 = vadd.f32 %v3066, %v3879
    %v3970 = vadd.f32 %v3071, %v3884
    %v3971 = vadd.f32 %v3074, %v3887
    %v3972 = vadd.f32 %v3079, %v3892
    %v3973 = vadd.f32 %v3082, %v3895
    %v3974 = vadd.f32 %v3087, %v3900
    %v3975 = vadd.f32 %v3090, %v3903
    %v3976 = vadd.f32 %v3095, %v3908
    %v3977 = vadd.f32 %v3098, %v3911
    %s3978 = scalar_lea.vmem [#allocation2], 12
    %v3979 = vld [vmem:[%s3978] sm:$0xf]
    %v3980 = vld [vmem:[%s3978 + $0x4] sm:$0xf]
    %v3981 = vld [vmem:[%s3978 + $0xc] sm:$0xf]
    %v3982 = vld [vmem:[%s3978 + $0x10] sm:$0xf]
    %v3983 = vld [vmem:[%s3978 + $0x18] sm:$0xf]
    %v3984 = vld [vmem:[%s3978 + $0x1c] sm:$0xf]
    %v3985 = vld [vmem:[%s3978 + $0x24] sm:$0xf]
    %v3986 = vld [vmem:[%s3978 + $0x28] sm:$0xf]
    %v3987 = vld [vmem:[%s3978 + $0x30] sm:$0xf]
    %v3988 = vld [vmem:[%s3978 + $0x34] sm:$0xf]
    %v3989 = vld [vmem:[%s3978 + $0x3c] sm:$0xf]
    %v3990 = vld [vmem:[%s3978 + $0x40] sm:$0xf]
    %v3991 = vld [vmem:[%s3978 + $0x48] sm:$0xf]
    %v3992 = vld [vmem:[%s3978 + $0x4c] sm:$0xf]
    %v3993 = vld [vmem:[%s3978 + $0x54] sm:$0xf]
    %v3994 = vld [vmem:[%s3978 + $0x58] sm:$0xf]
    %v3995 = vld [vmem:[%s3978 + $0x60] sm:$0xf]
    %v3996 = vld [vmem:[%s3978 + $0x64] sm:$0xf]
    %v3997 = vld [vmem:[%s3978 + $0x6c] sm:$0xf]
    %v3998 = vld [vmem:[%s3978 + $0x70] sm:$0xf]
    %v3999 = vld [vmem:[%s3978 + $0x78] sm:$0xf]
    %v4000 = vld [vmem:[%s3978 + $0x7c] sm:$0xf]
    %v4001 = vld [vmem:[%s3978 + $0x84] sm:$0xf]
    %v4002 = vld [vmem:[%s3978 + $0x88] sm:$0xf]
    %v4003 = vld [vmem:[%s3978 + $0x90] sm:$0xf]
    %v4004 = vld [vmem:[%s3978 + $0x94] sm:$0xf]
    %v4005 = vld [vmem:[%s3978 + $0x9c] sm:$0xf]
    %v4006 = vld [vmem:[%s3978 + $0xa0] sm:$0xf]
    %v4007 = vld [vmem:[%s3978 + $0xa8] sm:$0xf]
    %v4008 = vld [vmem:[%s3978 + $0xac] sm:$0xf]
    %v4009 = vld [vmem:[%s3978 + $0xb4] sm:$0xf]
    %v4010 = vld [vmem:[%s3978 + $0xb8] sm:$0xf]
    %v4011 = vld [vmem:[%s3978 + $0xd8] sm:$0xf]
    %v4012 = vld [vmem:[%s3978 + $0xdc] sm:$0xf]
    %v4013 = vld [vmem:[%s3978 + $0xe4] sm:$0xf]
    %v4014 = vld [vmem:[%s3978 + $0xe8] sm:$0xf]
    %v4015 = vld [vmem:[%s3978 + $0xf0] sm:$0xf]
    %v4016 = vld [vmem:[%s3978 + $0xf4] sm:$0xf]
    %v4017 = vld [vmem:[%s3978 + $0xfc] sm:$0xf]
    %v4018 = vld [vmem:[%s3978 + $0x100] sm:$0xf]
    %v4019 = vld [vmem:[%s3978 + $0x108] sm:$0xf]
    %v4020 = vld [vmem:[%s3978 + $0x10c] sm:$0xf]
    %v4021 = vld [vmem:[%s3978 + $0x114] sm:$0xf]
    %v4022 = vld [vmem:[%s3978 + $0x118] sm:$0xf]
    %v4023 = vld [vmem:[%s3978 + $0x120] sm:$0xf]
    %v4024 = vld [vmem:[%s3978 + $0x124] sm:$0xf]
    %v4025 = vld [vmem:[%s3978 + $0x12c] sm:$0xf]
    %v4026 = vld [vmem:[%s3978 + $0x130] sm:$0xf]
    %v4027 = vld [vmem:[%s3978 + $0x138] sm:$0xf]
    %v4028 = vld [vmem:[%s3978 + $0x13c] sm:$0xf]
    %v4029 = vld [vmem:[%s3978 + $0x144] sm:$0xf]
    %v4030 = vld [vmem:[%s3978 + $0x148] sm:$0xf]
    %v4031 = vld [vmem:[%s3978 + $0x150] sm:$0xf]
    %v4032 = vld [vmem:[%s3978 + $0x154] sm:$0xf]
    %v4033 = vld [vmem:[%s3978 + $0x15c] sm:$0xf]
    %v4034 = vld [vmem:[%s3978 + $0x160] sm:$0xf]
    %v4035 = vld [vmem:[%s3978 + $0x168] sm:$0xf]
    %v4036 = vld [vmem:[%s3978 + $0x16c] sm:$0xf]
    %v4037 = vld [vmem:[%s3978 + $0x174] sm:$0xf]
    %v4038 = vld [vmem:[%s3978 + $0x178] sm:$0xf]
    %v4039 = vld [vmem:[%s3978 + $0x180] sm:$0xf]
    %v4040 = vld [vmem:[%s3978 + $0x184] sm:$0xf]
    %v4041 = vld [vmem:[%s3978 + $0x18c] sm:$0xf]
    %v4042 = vld [vmem:[%s3978 + $0x190] sm:$0xf]
    %s4043 = scalar_lea.vmem [#allocation6], 24
    %v4044 = vld [vmem:[%s4043] sm:$0xf]
    %v4045 = vld [vmem:[%s4043 + $0x4] sm:$0xf]
    %v4110 = vunpack.c.l.b16 %v3979
    %v4111 = vunpack.c.l.b16 %v3980
    %v4112 = vunpack.c.l.b16 %v3981
    %v4113 = vunpack.c.l.b16 %v3982
    %v4114 = vunpack.c.l.b16 %v3983
    %v4115 = vunpack.c.l.b16 %v3984
    %v4116 = vunpack.c.l.b16 %v3985
    %v4117 = vunpack.c.l.b16 %v3986
    %v4118 = vunpack.c.l.b16 %v3987
    %v4119 = vunpack.c.l.b16 %v3988
    %v4120 = vunpack.c.l.b16 %v3989
    %v4121 = vunpack.c.l.b16 %v3990
    %v4122 = vunpack.c.l.b16 %v3991
    %v4123 = vunpack.c.l.b16 %v3992
    %v4124 = vunpack.c.l.b16 %v3993
    %v4125 = vunpack.c.l.b16 %v3994
    %v4126 = vunpack.c.l.b16 %v3995
    %v4127 = vunpack.c.l.b16 %v3996
    %v4128 = vunpack.c.l.b16 %v3997
    %v4129 = vunpack.c.l.b16 %v3998
    %v4130 = vunpack.c.l.b16 %v3999
    %v4131 = vunpack.c.l.b16 %v4000
    %v4132 = vunpack.c.l.b16 %v4001
    %v4133 = vunpack.c.l.b16 %v4002
    %v4134 = vunpack.c.l.b16 %v4003
    %v4135 = vunpack.c.l.b16 %v4004
    %v4136 = vunpack.c.l.b16 %v4005
    %v4137 = vunpack.c.l.b16 %v4006
    %v4138 = vunpack.c.l.b16 %v4007
    %v4139 = vunpack.c.l.b16 %v4008
    %v4140 = vunpack.c.l.b16 %v4009
    %v4141 = vunpack.c.l.b16 %v4010
    %v4142 = vunpack.c.l.b16 %v4011
    %v4143 = vunpack.c.l.b16 %v4012
    %v4144 = vunpack.c.l.b16 %v4013
    %v4145 = vunpack.c.l.b16 %v4014
    %v4146 = vunpack.c.l.b16 %v4015
    %v4147 = vunpack.c.l.b16 %v4016
    %v4148 = vunpack.c.l.b16 %v4017
    %v4149 = vunpack.c.l.b16 %v4018
    %v4150 = vunpack.c.l.b16 %v4019
    %v4151 = vunpack.c.l.b16 %v4020
    %v4152 = vunpack.c.l.b16 %v4021
    %v4153 = vunpack.c.l.b16 %v4022
    %v4154 = vunpack.c.l.b16 %v4023
    %v4155 = vunpack.c.l.b16 %v4024
    %v4156 = vunpack.c.l.b16 %v4025
    %v4157 = vunpack.c.l.b16 %v4026
    %v4158 = vunpack.c.l.b16 %v4027
    %v4159 = vunpack.c.l.b16 %v4028
    %v4160 = vunpack.c.l.b16 %v4029
    %v4161 = vunpack.c.l.b16 %v4030
    %v4162 = vunpack.c.l.b16 %v4031
    %v4163 = vunpack.c.l.b16 %v4032
    %v4164 = vunpack.c.l.b16 %v4033
    %v4165 = vunpack.c.l.b16 %v4034
    %v4166 = vunpack.c.l.b16 %v4035
    %v4167 = vunpack.c.l.b16 %v4036
    %v4168 = vunpack.c.l.b16 %v4037
    %v4169 = vunpack.c.l.b16 %v4038
    %v4170 = vunpack.c.l.b16 %v4039
    %v4171 = vunpack.c.l.b16 %v4040
    %v4172 = vunpack.c.l.b16 %v4041
    %v4173 = vunpack.c.l.b16 %v4042
    %v4174 = vpack.c.b16 %v4111, %v4110
    %v4175 = vpack.c.b16 %v4113, %v4112
    %v4176 = vpack.c.b16 %v4115, %v4114
    %v4177 = vpack.c.b16 %v4117, %v4116
    %v4178 = vpack.c.b16 %v4119, %v4118
    %v4179 = vpack.c.b16 %v4121, %v4120
    %v4180 = vpack.c.b16 %v4123, %v4122
    %v4181 = vpack.c.b16 %v4125, %v4124
    %v4182 = vpack.c.b16 %v4127, %v4126
    %v4183 = vpack.c.b16 %v4129, %v4128
    %v4184 = vpack.c.b16 %v4131, %v4130
    %v4185 = vpack.c.b16 %v4133, %v4132
    %v4186 = vpack.c.b16 %v4135, %v4134
    %v4187 = vpack.c.b16 %v4137, %v4136
    %v4188 = vpack.c.b16 %v4139, %v4138
    %v4189 = vpack.c.b16 %v4141, %v4140
    %v4190 = vpack.c.b16 %v4143, %v4142
    %v4191 = vpack.c.b16 %v4145, %v4144
    %v4192 = vpack.c.b16 %v4147, %v4146
    %v4193 = vpack.c.b16 %v4149, %v4148
    %v4194 = vpack.c.b16 %v4151, %v4150
    %v4195 = vpack.c.b16 %v4153, %v4152
    %v4196 = vpack.c.b16 %v4155, %v4154
    %v4197 = vpack.c.b16 %v4157, %v4156
    %v4198 = vpack.c.b16 %v4159, %v4158
    %v4199 = vpack.c.b16 %v4161, %v4160
    %v4200 = vpack.c.b16 %v4163, %v4162
    %v4201 = vpack.c.b16 %v4165, %v4164
    %v4202 = vpack.c.b16 %v4167, %v4166
    %v4203 = vpack.c.b16 %v4169, %v4168
    %v4204 = vpack.c.b16 %v4171, %v4170
    %v4205 = vpack.c.b16 %v4173, %v4172
    %v4208 = vunpack.c.l.b16 %v4044
    %v4209 = vunpack.c.l.b16 %v4045
    %v4210 = vpack.c.b16 %v4209, %v4208
    %v4213 = vsel %vm2164, %v4174, 0
    %v4216 = vsel %vm2164, %v4175, 0
    %v4219 = vsel %vm2164, %v4176, 0
    %v4222 = vsel %vm2164, %v4177, 0
    %v4225 = vsel %vm2164, %v4178, 0
    %v4228 = vsel %vm2164, %v4179, 0
    %v4231 = vsel %vm2164, %v4180, 0
    %v4234 = vsel %vm2164, %v4181, 0
    %v4237 = vsel %vm2164, %v4182, 0
    %v4240 = vsel %vm2164, %v4183, 0
    %v4243 = vsel %vm2164, %v4184, 0
    %v4246 = vsel %vm2164, %v4185, 0
    %v4249 = vsel %vm2164, %v4186, 0
    %v4252 = vsel %vm2164, %v4187, 0
    %v4255 = vsel %vm2164, %v4188, 0
    %v4258 = vsel %vm2164, %v4189, 0
    %v4261 = vsel %vm2164, %v4190, 0
    %v4264 = vsel %vm2164, %v4191, 0
    %v4267 = vsel %vm2164, %v4192, 0
    %v4270 = vsel %vm2164, %v4193, 0
    %v4273 = vsel %vm2164, %v4194, 0
    %v4276 = vsel %vm2164, %v4195, 0
    %v4279 = vsel %vm2164, %v4196, 0
    %v4282 = vsel %vm2164, %v4197, 0
    %v4285 = vsel %vm2164, %v4198, 0
    %v4288 = vsel %vm2164, %v4199, 0
    %v4291 = vsel %vm2164, %v4200, 0
    %v4294 = vsel %vm2164, %v4201, 0
    %v4297 = vsel %vm2164, %v4202, 0
    %v4300 = vsel %vm2164, %v4203, 0
    %v4303 = vsel %vm2164, %v4204, 0
    %v4306 = vsel %vm2164, %v4205, 0
    %4308 = vmatprep.subr.bf16.mxu0 0
    %4309 = vmatpush1.bf16.msra.mxu0 %v4210
    %4310 = vmatprep.subr.bf16.mxu0 0
    %4311 = vmatpush1.bf16.msra.mxu0 0
    %4312 = vmatprep.subr.bf16.mxu0 0
    %4313 = vmatpush1.bf16.msra.mxu0 0
    %4314 = vmatprep.subr.bf16.mxu0 0
    %4315 = vmatpush1.bf16.msra.mxu0 0
    %4316 = vmatprep.subr.bf16.mxu0 0
    %4317 = vmatpush1.bf16.msra.mxu0 0
    %4318 = vmatprep.subr.bf16.mxu0 0
    %4319 = vmatpush1.bf16.msra.mxu0 0
    %4320 = vmatprep.subr.bf16.mxu0 0
    %4321 = vmatpush1.bf16.msra.mxu0 0
    %4322 = vmatprep.subr.bf16.mxu0 0
    %4323 = vmatpush1.bf16.msra.mxu0 0
    %4324 = vmatprep.subr.bf16.mxu0 0
    %4325 = vmatpush1.bf16.msra.mxu0 0
    %4326 = vmatprep.subr.bf16.mxu0 0
    %4327 = vmatpush1.bf16.msra.mxu0 0
    %4328 = vmatprep.subr.bf16.mxu0 0
    %4329 = vmatpush1.bf16.msra.mxu0 0
    %4330 = vmatprep.subr.bf16.mxu0 0
    %4331 = vmatpush1.bf16.msra.mxu0 0
    %4332 = vmatprep.subr.bf16.mxu0 0
    %4333 = vmatpush1.bf16.msra.mxu0 0
    %4334 = vmatprep.subr.bf16.mxu0 0
    %4335 = vmatpush1.bf16.msra.mxu0 0
    %4336 = vmatprep.subr.bf16.mxu0 0
    %4337 = vmatpush1.bf16.msra.mxu0 0
    %4338 = vmatprep.subr.bf16.mxu0 0
    %4339 = vmatpush1.bf16.msra.mxu0 0
    %4340 = vmatprep.mubr.bf16.mxu0 0
    %4341 = vmatmul.mubr.bf16.gmra.mrb[0].mxu0 %v4213
    %v4342 = vpop.f32.mrb[0].mxu0
    %v4343 = vadd.f32 0.0, %v4342
    %v4344 = vpop.f32.mrb[0].mxu0
    %v4345 = vpop.f32.mrb[0].mxu0
    %v4346 = vadd.f32 0.0, %v4345
    %v4347 = vpop.f32.mrb[0].mxu0
    %4348 = vmatprep.mubr.bf16.mxu0 0
    %4349 = vmatmul.mubr.bf16.gmra.mrb[0].mxu0 %v4216
    %v4350 = vpop.f32.mrb[0].mxu0
    %v4351 = vadd.f32 0.0, %v4350
    %v4352 = vpop.f32.mrb[0].mxu0
    %v4353 = vpop.f32.mrb[0].mxu0
    %v4354 = vadd.f32 0.0, %v4353
    %v4355 = vpop.f32.mrb[0].mxu0
    %4356 = vmatprep.mubr.bf16.mxu0 0
    %4357 = vmatmul.mubr.bf16.gmra.mrb[0].mxu0 %v4219
    %v4358 = vpop.f32.mrb[0].mxu0
    %v4359 = vadd.f32 0.0, %v4358
    %v4360 = vpop.f32.mrb[0].mxu0
    %v4361 = vpop.f32.mrb[0].mxu0
    %v4362 = vadd.f32 0.0, %v4361
    %v4363 = vpop.f32.mrb[0].mxu0
    %4364 = vmatprep.mubr.bf16.mxu0 0
    %4365 = vmatmul.mubr.bf16.gmra.mrb[0].mxu0 %v4222
    %v4366 = vpop.f32.mrb[0].mxu0
    %v4367 = vadd.f32 0.0, %v4366
    %v4368 = vpop.f32.mrb[0].mxu0
    %v4369 = vpop.f32.mrb[0].mxu0
    %v4370 = vadd.f32 0.0, %v4369
    %v4371 = vpop.f32.mrb[0].mxu0
    %4372 = vmatprep.mubr.bf16.mxu0 0
    %4373 = vmatmul.mubr.bf16.gmra.mrb[0].mxu0 %v4225
    %v4374 = vpop.f32.mrb[0].mxu0
    %v4375 = vadd.f32 0.0, %v4374
    %v4376 = vpop.f32.mrb[0].mxu0
    %v4377 = vpop.f32.mrb[0].mxu0
    %v4378 = vadd.f32 0.0, %v4377
    %v4379 = vpop.f32.mrb[0].mxu0
    %4380 = vmatprep.mubr.bf16.mxu0 0
    %4381 = vmatmul.mubr.bf16.gmra.mrb[0].mxu0 %v4228
    %v4382 = vpop.f32.mrb[0].mxu0
    %v4383 = vadd.f32 0.0, %v4382
    %v4384 = vpop.f32.mrb[0].mxu0
    %v4385 = vpop.f32.mrb[0].mxu0
    %v4386 = vadd.f32 0.0, %v4385
    %v4387 = vpop.f32.mrb[0].mxu0
    %4388 = vmatprep.mubr.bf16.mxu0 0
    %4389 = vmatmul.mubr.bf16.gmra.mrb[0].mxu0 %v4231
    %v4390 = vpop.f32.mrb[0].mxu0
    %v4391 = vadd.f32 0.0, %v4390
    %v4392 = vpop.f32.mrb[0].mxu0
    %v4393 = vpop.f32.mrb[0].mxu0
    %v4394 = vadd.f32 0.0, %v4393
    %v4395 = vpop.f32.mrb[0].mxu0
    %4396 = vmatprep.mubr.bf16.mxu0 0
    %4397 = vmatmul.mubr.bf16.gmra.mrb[0].mxu0 %v4234
    %v4398 = vpop.f32.mrb[0].mxu0
    %v4399 = vadd.f32 0.0, %v4398
    %v4400 = vpop.f32.mrb[0].mxu0
    %v4401 = vpop.f32.mrb[0].mxu0
    %v4402 = vadd.f32 0.0, %v4401
    %v4403 = vpop.f32.mrb[0].mxu0
    %4404 = vmatprep.mubr.bf16.mxu0 0
    %4405 = vmatmul.mubr.bf16.gmra.mrb[0].mxu0 %v4237
    %v4406 = vpop.f32.mrb[0].mxu0
    %v4407 = vadd.f32 0.0, %v4406
    %v4408 = vpop.f32.mrb[0].mxu0
    %v4409 = vpop.f32.mrb[0].mxu0
    %v4410 = vadd.f32 0.0, %v4409
    %v4411 = vpop.f32.mrb[0].mxu0
    %4412 = vmatprep.mubr.bf16.mxu0 0
    %4413 = vmatmul.mubr.bf16.gmra.mrb[0].mxu0 %v4240
    %v4414 = vpop.f32.mrb[0].mxu0
    %v4415 = vadd.f32 0.0, %v4414
    %v4416 = vpop.f32.mrb[0].mxu0
    %v4417 = vpop.f32.mrb[0].mxu0
    %v4418 = vadd.f32 0.0, %v4417
    %v4419 = vpop.f32.mrb[0].mxu0
    %4420 = vmatprep.mubr.bf16.mxu0 0
    %4421 = vmatmul.mubr.bf16.gmra.mrb[0].mxu0 %v4243
    %v4422 = vpop.f32.mrb[0].mxu0
    %v4423 = vadd.f32 0.0, %v4422
    %v4424 = vpop.f32.mrb[0].mxu0
    %v4425 = vpop.f32.mrb[0].mxu0
    %v4426 = vadd.f32 0.0, %v4425
    %v4427 = vpop.f32.mrb[0].mxu0
    %4428 = vmatprep.mubr.bf16.mxu0 0
    %4429 = vmatmul.mubr.bf16.gmra.mrb[0].mxu0 %v4246
    %v4430 = vpop.f32.mrb[0].mxu0
    %v4431 = vadd.f32 0.0, %v4430
    %v4432 = vpop.f32.mrb[0].mxu0
    %v4433 = vpop.f32.mrb[0].mxu0
    %v4434 = vadd.f32 0.0, %v4433
    %v4435 = vpop.f32.mrb[0].mxu0
    %4436 = vmatprep.mubr.bf16.mxu0 0
    %4437 = vmatmul.mubr.bf16.gmra.mrb[0].mxu0 %v4249
    %v4438 = vpop.f32.mrb[0].mxu0
    %v4439 = vadd.f32 0.0, %v4438
    %v4440 = vpop.f32.mrb[0].mxu0
    %v4441 = vpop.f32.mrb[0].mxu0
    %v4442 = vadd.f32 0.0, %v4441
    %v4443 = vpop.f32.mrb[0].mxu0
    %4444 = vmatprep.mubr.bf16.mxu0 0
    %4445 = vmatmul.mubr.bf16.gmra.mrb[0].mxu0 %v4252
    %v4446 = vpop.f32.mrb[0].mxu0
    %v4447 = vadd.f32 0.0, %v4446
    %v4448 = vpop.f32.mrb[0].mxu0
    %v4449 = vpop.f32.mrb[0].mxu0
    %v4450 = vadd.f32 0.0, %v4449
    %v4451 = vpop.f32.mrb[0].mxu0
    %4452 = vmatprep.mubr.bf16.mxu0 0
    %4453 = vmatmul.mubr.bf16.gmra.mrb[0].mxu0 %v4255
    %v4454 = vpop.f32.mrb[0].mxu0
    %v4455 = vadd.f32 0.0, %v4454
    %v4456 = vpop.f32.mrb[0].mxu0
    %v4457 = vpop.f32.mrb[0].mxu0
    %v4458 = vadd.f32 0.0, %v4457
    %v4459 = vpop.f32.mrb[0].mxu0
    %4460 = vmatprep.mubr.bf16.mxu0 0
    %4461 = vmatmul.mubr.bf16.gmra.mrb[0].mxu0 %v4258
    %v4462 = vpop.f32.mrb[0].mxu0
    %v4463 = vadd.f32 0.0, %v4462
    %v4464 = vpop.f32.mrb[0].mxu0
    %v4465 = vpop.f32.mrb[0].mxu0
    %v4466 = vadd.f32 0.0, %v4465
    %v4467 = vpop.f32.mrb[0].mxu0
    %4468 = vmatprep.mubr.bf16.mxu0 0
    %4469 = vmatmul.mubr.bf16.gmra.mrb[0].mxu0 %v4261
    %v4470 = vpop.f32.mrb[0].mxu0
    %v4471 = vadd.f32 0.0, %v4470
    %v4472 = vpop.f32.mrb[0].mxu0
    %v4473 = vpop.f32.mrb[0].mxu0
    %v4474 = vadd.f32 0.0, %v4473
    %v4475 = vpop.f32.mrb[0].mxu0
    %4476 = vmatprep.mubr.bf16.mxu0 0
    %4477 = vmatmul.mubr.bf16.gmra.mrb[0].mxu0 %v4264
    %v4478 = vpop.f32.mrb[0].mxu0
    %v4479 = vadd.f32 0.0, %v4478
    %v4480 = vpop.f32.mrb[0].mxu0
    %v4481 = vpop.f32.mrb[0].mxu0
    %v4482 = vadd.f32 0.0, %v4481
    %v4483 = vpop.f32.mrb[0].mxu0
    %4484 = vmatprep.mubr.bf16.mxu0 0
    %4485 = vmatmul.mubr.bf16.gmra.mrb[0].mxu0 %v4267
    %v4486 = vpop.f32.mrb[0].mxu0
    %v4487 = vadd.f32 0.0, %v4486
    %v4488 = vpop.f32.mrb[0].mxu0
    %v4489 = vpop.f32.mrb[0].mxu0
    %v4490 = vadd.f32 0.0, %v4489
    %v4491 = vpop.f32.mrb[0].mxu0
    %4492 = vmatprep.mubr.bf16.mxu0 0
    %4493 = vmatmul.mubr.bf16.gmra.mrb[0].mxu0 %v4270
    %v4494 = vpop.f32.mrb[0].mxu0
    %v4495 = vadd.f32 0.0, %v4494
    %v4496 = vpop.f32.mrb[0].mxu0
    %v4497 = vpop.f32.mrb[0].mxu0
    %v4498 = vadd.f32 0.0, %v4497
    %v4499 = vpop.f32.mrb[0].mxu0
    %4500 = vmatprep.mubr.bf16.mxu0 0
    %4501 = vmatmul.mubr.bf16.gmra.mrb[0].mxu0 %v4273
    %v4502 = vpop.f32.mrb[0].mxu0
    %v4503 = vadd.f32 0.0, %v4502
    %v4504 = vpop.f32.mrb[0].mxu0
    %v4505 = vpop.f32.mrb[0].mxu0
    %v4506 = vadd.f32 0.0, %v4505
    %v4507 = vpop.f32.mrb[0].mxu0
    %4508 = vmatprep.mubr.bf16.mxu0 0
    %4509 = vmatmul.mubr.bf16.gmra.mrb[0].mxu0 %v4276
    %v4510 = vpop.f32.mrb[0].mxu0
    %v4511 = vadd.f32 0.0, %v4510
    %v4512 = vpop.f32.mrb[0].mxu0
    %v4513 = vpop.f32.mrb[0].mxu0
    %v4514 = vadd.f32 0.0, %v4513
    %v4515 = vpop.f32.mrb[0].mxu0
    %4516 = vmatprep.mubr.bf16.mxu0 0
    %4517 = vmatmul.mubr.bf16.gmra.mrb[0].mxu0 %v4279
    %v4518 = vpop.f32.mrb[0].mxu0
    %v4519 = vadd.f32 0.0, %v4518
    %v4520 = vpop.f32.mrb[0].mxu0
    %v4521 = vpop.f32.mrb[0].mxu0
    %v4522 = vadd.f32 0.0, %v4521
    %v4523 = vpop.f32.mrb[0].mxu0
    %4524 = vmatprep.mubr.bf16.mxu0 0
    %4525 = vmatmul.mubr.bf16.gmra.mrb[0].mxu0 %v4282
    %v4526 = vpop.f32.mrb[0].mxu0
    %v4527 = vadd.f32 0.0, %v4526
    %v4528 = vpop.f32.mrb[0].mxu0
    %v4529 = vpop.f32.mrb[0].mxu0
    %v4530 = vadd.f32 0.0, %v4529
    %v4531 = vpop.f32.mrb[0].mxu0
    %4532 = vmatprep.mubr.bf16.mxu0 0
    %4533 = vmatmul.mubr.bf16.gmra.mrb[0].mxu0 %v4285
    %v4534 = vpop.f32.mrb[0].mxu0
    %v4535 = vadd.f32 0.0, %v4534
    %v4536 = vpop.f32.mrb[0].mxu0
    %v4537 = vpop.f32.mrb[0].mxu0
    %v4538 = vadd.f32 0.0, %v4537
    %v4539 = vpop.f32.mrb[0].mxu0
    %4540 = vmatprep.mubr.bf16.mxu0 0
    %4541 = vmatmul.mubr.bf16.gmra.mrb[0].mxu0 %v4288
    %v4542 = vpop.f32.mrb[0].mxu0
    %v4543 = vadd.f32 0.0, %v4542
    %v4544 = vpop.f32.mrb[0].mxu0
    %v4545 = vpop.f32.mrb[0].mxu0
    %v4546 = vadd.f32 0.0, %v4545
    %v4547 = vpop.f32.mrb[0].mxu0
    %4548 = vmatprep.mubr.bf16.mxu0 0
    %4549 = vmatmul.mubr.bf16.gmra.mrb[0].mxu0 %v4291
    %v4550 = vpop.f32.mrb[0].mxu0
    %v4551 = vadd.f32 0.0, %v4550
    %v4552 = vpop.f32.mrb[0].mxu0
    %v4553 = vpop.f32.mrb[0].mxu0
    %v4554 = vadd.f32 0.0, %v4553
    %v4555 = vpop.f32.mrb[0].mxu0
    %4556 = vmatprep.mubr.bf16.mxu0 0
    %4557 = vmatmul.mubr.bf16.gmra.mrb[0].mxu0 %v4294
    %v4558 = vpop.f32.mrb[0].mxu0
    %v4559 = vadd.f32 0.0, %v4558
    %v4560 = vpop.f32.mrb[0].mxu0
    %v4561 = vpop.f32.mrb[0].mxu0
    %v4562 = vadd.f32 0.0, %v4561
    %v4563 = vpop.f32.mrb[0].mxu0
    %4564 = vmatprep.mubr.bf16.mxu0 0
    %4565 = vmatmul.mubr.bf16.gmra.mrb[0].mxu0 %v4297
    %v4566 = vpop.f32.mrb[0].mxu0
    %v4567 = vadd.f32 0.0, %v4566
    %v4568 = vpop.f32.mrb[0].mxu0
    %v4569 = vpop.f32.mrb[0].mxu0
    %v4570 = vadd.f32 0.0, %v4569
    %v4571 = vpop.f32.mrb[0].mxu0
    %4572 = vmatprep.mubr.bf16.mxu0 0
    %4573 = vmatmul.mubr.bf16.gmra.mrb[0].mxu0 %v4300
    %v4574 = vpop.f32.mrb[0].mxu0
    %v4575 = vadd.f32 0.0, %v4574
    %v4576 = vpop.f32.mrb[0].mxu0
    %v4577 = vpop.f32.mrb[0].mxu0
    %v4578 = vadd.f32 0.0, %v4577
    %v4579 = vpop.f32.mrb[0].mxu0
    %4580 = vmatprep.mubr.bf16.mxu0 0
    %4581 = vmatmul.mubr.bf16.gmra.mrb[0].mxu0 %v4303
    %v4582 = vpop.f32.mrb[0].mxu0
    %v4583 = vadd.f32 0.0, %v4582
    %v4584 = vpop.f32.mrb[0].mxu0
    %v4585 = vpop.f32.mrb[0].mxu0
    %v4586 = vadd.f32 0.0, %v4585
    %v4587 = vpop.f32.mrb[0].mxu0
    %4588 = vmatprep.mubr.bf16.mxu0 0
    %4589 = vmatmul.mubr.bf16.gmra.mrb[0].mxu0 %v4306
    %v4590 = vpop.f32.mrb[0].mxu0
    %v4591 = vadd.f32 0.0, %v4590
    %v4592 = vpop.f32.mrb[0].mxu0
    %v4593 = vpop.f32.mrb[0].mxu0
    %v4594 = vadd.f32 0.0, %v4593
    %v4595 = vpop.f32.mrb[0].mxu0
    %4596 = vdwg.mxu0
    %v4597 = vadd.f32 %v3914, %v4343
    %v4598 = vadd.f32 %v3915, %v4346
    %v4599 = vadd.f32 %v3916, %v4351
    %v4600 = vadd.f32 %v3917, %v4354
    %v4601 = vadd.f32 %v3918, %v4359
    %v4602 = vadd.f32 %v3919, %v4362
    %v4603 = vadd.f32 %v3920, %v4367
    %v4604 = vadd.f32 %v3921, %v4370
    %v4605 = vadd.f32 %v3922, %v4375
    %v4606 = vadd.f32 %v3923, %v4378
    %v4607 = vadd.f32 %v3924, %v4383
    %v4608 = vadd.f32 %v3925, %v4386
    %v4609 = vadd.f32 %v3926, %v4391
    %v4610 = vadd.f32 %v3927, %v4394
    %v4611 = vadd.f32 %v3928, %v4399
    %v4612 = vadd.f32 %v3929, %v4402
    %v4613 = vadd.f32 %v3930, %v4407
    %v4614 = vadd.f32 %v3931, %v4410
    %v4615 = vadd.f32 %v3932, %v4415
    %v4616 = vadd.f32 %v3933, %v4418
    %v4617 = vadd.f32 %v3934, %v4423
    %v4618 = vadd.f32 %v3935, %v4426
    %v4619 = vadd.f32 %v3936, %v4431
    %v4620 = vadd.f32 %v3937, %v4434
    %v4621 = vadd.f32 %v3938, %v4439
    %v4622 = vadd.f32 %v3939, %v4442
    %v4623 = vadd.f32 %v3940, %v4447
    %v4624 = vadd.f32 %v3941, %v4450
    %v4625 = vadd.f32 %v3942, %v4455
    %v4626 = vadd.f32 %v3943, %v4458
    %v4627 = vadd.f32 %v3944, %v4463
    %v4628 = vadd.f32 %v3945, %v4466
    %v4629 = vadd.f32 %v3946, %v4471
    %v4630 = vadd.f32 %v3947, %v4474
    %v4631 = vadd.f32 %v3948, %v4479
    %v4632 = vadd.f32 %v3949, %v4482
    %v4633 = vadd.f32 %v3950, %v4487
    %v4634 = vadd.f32 %v3951, %v4490
    %v4635 = vadd.f32 %v3952, %v4495
    %v4636 = vadd.f32 %v3953, %v4498
    %v4637 = vadd.f32 %v3954, %v4503
    %v4638 = vadd.f32 %v3955, %v4506
    %v4639 = vadd.f32 %v3956, %v4511
    %v4640 = vadd.f32 %v3957, %v4514
    %v4641 = vadd.f32 %v3958, %v4519
    %v4642 = vadd.f32 %v3959, %v4522
    %v4643 = vadd.f32 %v3960, %v4527
    %v4644 = vadd.f32 %v3961, %v4530
    %v4645 = vadd.f32 %v3962, %v4535
    %v4646 = vadd.f32 %v3963, %v4538
    %v4647 = vadd.f32 %v3964, %v4543
    %v4648 = vadd.f32 %v3965, %v4546
    %v4649 = vadd.f32 %v3966, %v4551
    %v4650 = vadd.f32 %v3967, %v4554
    %v4651 = vadd.f32 %v3968, %v4559
    %v4652 = vadd.f32 %v3969, %v4562
    %v4653 = vadd.f32 %v3970, %v4567
    %v4654 = vadd.f32 %v3971, %v4570
    %v4655 = vadd.f32 %v3972, %v4575
    %v4656 = vadd.f32 %v3973, %v4578
    %v4657 = vadd.f32 %v3974, %v4583
    %v4658 = vadd.f32 %v3975, %v4586
    %v4659 = vadd.f32 %v3976, %v4591
    %v4660 = vadd.f32 %v3977, %v4594
    %v4661 = vld [vmem:[%s3978] sm:$0xf]
    %v4662 = vld [vmem:[%s3978 + $0x4] sm:$0xf]
    %v4663 = vld [vmem:[%s3978 + $0x8] sm:$0x1]
    %v4664 = vld [vmem:[%s3978 + $0xc] sm:$0xf]
    %v4665 = vld [vmem:[%s3978 + $0x10] sm:$0xf]
    %v4666 = vld [vmem:[%s3978 + $0x14] sm:$0x1]
    %v4667 = vld [vmem:[%s3978 + $0x18] sm:$0xf]
    %v4668 = vld [vmem:[%s3978 + $0x1c] sm:$0xf]
    %v4669 = vld [vmem:[%s3978 + $0x20] sm:$0x1]
    %v4670 = vld [vmem:[%s3978 + $0x24] sm:$0xf]
    %v4671 = vld [vmem:[%s3978 + $0x28] sm:$0xf]
    %v4672 = vld [vmem:[%s3978 + $0x2c] sm:$0x1]
    %v4673 = vld [vmem:[%s3978 + $0x30] sm:$0xf]
    %v4674 = vld [vmem:[%s3978 + $0x34] sm:$0xf]
    %v4675 = vld [vmem:[%s3978 + $0x38] sm:$0x1]
    %v4676 = vld [vmem:[%s3978 + $0x3c] sm:$0xf]
    %v4677 = vld [vmem:[%s3978 + $0x40] sm:$0xf]
    %v4678 = vld [vmem:[%s3978 + $0x44] sm:$0x1]
    %v4679 = vld [vmem:[%s3978 + $0x48] sm:$0xf]
    %v4680 = vld [vmem:[%s3978 + $0x4c] sm:$0xf]
    %v4681 = vld [vmem:[%s3978 + $0x50] sm:$0x1]
    %v4682 = vld [vmem:[%s3978 + $0x54] sm:$0xf]
    %v4683 = vld [vmem:[%s3978 + $0x58] sm:$0xf]
    %v4684 = vld [vmem:[%s3978 + $0x5c] sm:$0x1]
    %v4685 = vld [vmem:[%s3978 + $0x60] sm:$0xf]
    %v4686 = vld [vmem:[%s3978 + $0x64] sm:$0xf]
    %v4687 = vld [vmem:[%s3978 + $0x68] sm:$0x1]
    %v4688 = vld [vmem:[%s3978 + $0x6c] sm:$0xf]
    %v4689 = vld [vmem:[%s3978 + $0x70] sm:$0xf]
    %v4690 = vld [vmem:[%s3978 + $0x74] sm:$0x1]
    %v4691 = vld [vmem:[%s3978 + $0x78] sm:$0xf]
    %v4692 = vld [vmem:[%s3978 + $0x7c] sm:$0xf]
    %v4693 = vld [vmem:[%s3978 + $0x80] sm:$0x1]
    %v4694 = vld [vmem:[%s3978 + $0x84] sm:$0xf]
    %v4695 = vld [vmem:[%s3978 + $0x88] sm:$0xf]
    %v4696 = vld [vmem:[%s3978 + $0x8c] sm:$0x1]
    %v4697 = vld [vmem:[%s3978 + $0x90] sm:$0xf]
    %v4698 = vld [vmem:[%s3978 + $0x94] sm:$0xf]
    %v4699 = vld [vmem:[%s3978 + $0x98] sm:$0x1]
    %v4700 = vld [vmem:[%s3978 + $0x9c] sm:$0xf]
    %v4701 = vld [vmem:[%s3978 + $0xa0] sm:$0xf]
    %v4702 = vld [vmem:[%s3978 + $0xa4] sm:$0x1]
    %v4703 = vld [vmem:[%s3978 + $0xa8] sm:$0xf]
    %v4704 = vld [vmem:[%s3978 + $0xac] sm:$0xf]
    %v4705 = vld [vmem:[%s3978 + $0xb0] sm:$0x1]
    %v4706 = vld [vmem:[%s3978 + $0xb4] sm:$0xf]
    %v4707 = vld [vmem:[%s3978 + $0xb8] sm:$0xf]
    %v4708 = vld [vmem:[%s3978 + $0xbc] sm:$0x1]
    %v4709 = vld [vmem:[%s3978 + $0xd8] sm:$0xf]
    %v4710 = vld [vmem:[%s3978 + $0xdc] sm:$0xf]
    %v4711 = vld [vmem:[%s3978 + $0xe0] sm:$0x1]
    %v4712 = vld [vmem:[%s3978 + $0xe4] sm:$0xf]
    %v4713 = vld [vmem:[%s3978 + $0xe8] sm:$0xf]
    %v4714 = vld [vmem:[%s3978 + $0xec] sm:$0x1]
    %v4715 = vld [vmem:[%s3978 + $0xf0] sm:$0xf]
    %v4716 = vld [vmem:[%s3978 + $0xf4] sm:$0xf]
    %v4717 = vld [vmem:[%s3978 + $0xf8] sm:$0x1]
    %v4718 = vld [vmem:[%s3978 + $0xfc] sm:$0xf]
    %v4719 = vld [vmem:[%s3978 + $0x100] sm:$0xf]
    %v4720 = vld [vmem:[%s3978 + $0x104] sm:$0x1]
    %v4721 = vld [vmem:[%s3978 + $0x108] sm:$0xf]
    %v4722 = vld [vmem:[%s3978 + $0x10c] sm:$0xf]
    %v4723 = vld [vmem:[%s3978 + $0x110] sm:$0x1]
    %v4724 = vld [vmem:[%s3978 + $0x114] sm:$0xf]
    %v4725 = vld [vmem:[%s3978 + $0x118] sm:$0xf]
    %v4726 = vld [vmem:[%s3978 + $0x11c] sm:$0x1]
    %v4727 = vld [vmem:[%s3978 + $0x120] sm:$0xf]
    %v4728 = vld [vmem:[%s3978 + $0x124] sm:$0xf]
    %v4729 = vld [vmem:[%s3978 + $0x128] sm:$0x1]
    %v4730 = vld [vmem:[%s3978 + $0x12c] sm:$0xf]
    %v4731 = vld [vmem:[%s3978 + $0x130] sm:$0xf]
    %v4732 = vld [vmem:[%s3978 + $0x134] sm:$0x1]
    %v4733 = vld [vmem:[%s3978 + $0x138] sm:$0xf]
    %v4734 = vld [vmem:[%s3978 + $0x13c] sm:$0xf]
    %v4735 = vld [vmem:[%s3978 + $0x140] sm:$0x1]
    %v4736 = vld [vmem:[%s3978 + $0x144] sm:$0xf]
    %v4737 = vld [vmem:[%s3978 + $0x148] sm:$0xf]
    %v4738 = vld [vmem:[%s3978 + $0x14c] sm:$0x1]
    %v4739 = vld [vmem:[%s3978 + $0x150] sm:$0xf]
    %v4740 = vld [vmem:[%s3978 + $0x154] sm:$0xf]
    %v4741 = vld [vmem:[%s3978 + $0x158] sm:$0x1]
    %v4742 = vld [vmem:[%s3978 + $0x15c] sm:$0xf]
    %v4743 = vld [vmem:[%s3978 + $0x160] sm:$0xf]
    %v4744 = vld [vmem:[%s3978 + $0x164] sm:$0x1]
    %v4745 = vld [vmem:[%s3978 + $0x168] sm:$0xf]
    %v4746 = vld [vmem:[%s3978 + $0x16c] sm:$0xf]
    %v4747 = vld [vmem:[%s3978 + $0x170] sm:$0x1]
    %v4748 = vld [vmem:[%s3978 + $0x174] sm:$0xf]
    %v4749 = vld [vmem:[%s3978 + $0x178] sm:$0xf]
    %v4750 = vld [vmem:[%s3978 + $0x17c] sm:$0x1]
    %v4751 = vld [vmem:[%s3978 + $0x180] sm:$0xf]
    %v4752 = vld [vmem:[%s3978 + $0x184] sm:$0xf]
    %v4753 = vld [vmem:[%s3978 + $0x188] sm:$0x1]
    %v4754 = vld [vmem:[%s3978 + $0x18c] sm:$0xf]
    %v4755 = vld [vmem:[%s3978 + $0x190] sm:$0xf]
    %v4756 = vld [vmem:[%s3978 + $0x194] sm:$0x1]
    %v4758 = vshrl.u32 %v4661, 16
    %v4760 = vrot.slane %v4758, 4
    %v4761 = vshll.u32 %v4661, 16
    %v4763 = vrot.slane %v4761, 5
    %v4764 = vor.u32 %v4760, %v4763
    %v4765 = vrot.slane %v4764, 4
    %v4767 = vshll.u32 %v4662, 16
    %v4769 = vrot.slane %v4767, 5
    %v4770 = vsel %vm1290, %v4765, %v4769
    %v4771 = vshrl.u32 %v4662, 16
    %v4773 = vrot.slane %v4771, 4
    %v4774 = vor.u32 %v4773, %v4769
    %v4775 = vrot.slane %v4774, 4
    %v4777 = vshll.u32 %v4663, 16
    %v4779 = vrot.slane %v4777, 5
    %v4780 = vsel %vm1290, %v4775, %v4779
    %v4782 = vshrl.u32 %v4664, 16
    %v4784 = vrot.slane %v4782, 4
    %v4785 = vshll.u32 %v4664, 16
    %v4787 = vrot.slane %v4785, 5
    %v4788 = vor.u32 %v4784, %v4787
    %v4789 = vrot.slane %v4788, 4
    %v4791 = vshll.u32 %v4665, 16
    %v4793 = vrot.slane %v4791, 5
    %v4794 = vsel %vm1290, %v4789, %v4793
    %v4795 = vshrl.u32 %v4665, 16
    %v4797 = vrot.slane %v4795, 4
    %v4798 = vor.u32 %v4797, %v4793
    %v4799 = vrot.slane %v4798, 4
    %v4801 = vshll.u32 %v4666, 16
    %v4803 = vrot.slane %v4801, 5
    %v4804 = vsel %vm1290, %v4799, %v4803
    %v4806 = vshrl.u32 %v4667, 16
    %v4808 = vrot.slane %v4806, 4
    %v4809 = vshll.u32 %v4667, 16
    %v4811 = vrot.slane %v4809, 5
    %v4812 = vor.u32 %v4808, %v4811
    %v4813 = vrot.slane %v4812, 4
    %v4815 = vshll.u32 %v4668, 16
    %v4817 = vrot.slane %v4815, 5
    %v4818 = vsel %vm1290, %v4813, %v4817
    %v4819 = vshrl.u32 %v4668, 16
    %v4821 = vrot.slane %v4819, 4
    %v4822 = vor.u32 %v4821, %v4817
    %v4823 = vrot.slane %v4822, 4
    %v4825 = vshll.u32 %v4669, 16
    %v4827 = vrot.slane %v4825, 5
    %v4828 = vsel %vm1290, %v4823, %v4827
    %v4830 = vshrl.u32 %v4670, 16
    %v4832 = vrot.slane %v4830, 4
    %v4833 = vshll.u32 %v4670, 16
    %v4835 = vrot.slane %v4833, 5
    %v4836 = vor.u32 %v4832, %v4835
    %v4837 = vrot.slane %v4836, 4
    %v4839 = vshll.u32 %v4671, 16
    %v4841 = vrot.slane %v4839, 5
    %v4842 = vsel %vm1290, %v4837, %v4841
    %v4843 = vshrl.u32 %v4671, 16
    %v4845 = vrot.slane %v4843, 4
    %v4846 = vor.u32 %v4845, %v4841
    %v4847 = vrot.slane %v4846, 4
    %v4849 = vshll.u32 %v4672, 16
    %v4851 = vrot.slane %v4849, 5
    %v4852 = vsel %vm1290, %v4847, %v4851
    %v4854 = vshrl.u32 %v4673, 16
    %v4856 = vrot.slane %v4854, 4
    %v4857 = vshll.u32 %v4673, 16
    %v4859 = vrot.slane %v4857, 5
    %v4860 = vor.u32 %v4856, %v4859
    %v4861 = vrot.slane %v4860, 4
    %v4863 = vshll.u32 %v4674, 16
    %v4865 = vrot.slane %v4863, 5
    %v4866 = vsel %vm1290, %v4861, %v4865
    %v4867 = vshrl.u32 %v4674, 16
    %v4869 = vrot.slane %v4867, 4
    %v4870 = vor.u32 %v4869, %v4865
    %v4871 = vrot.slane %v4870, 4
    %v4873 = vshll.u32 %v4675, 16
    %v4875 = vrot.slane %v4873, 5
    %v4876 = vsel %vm1290, %v4871, %v4875
    %v4878 = vshrl.u32 %v4676, 16
    %v4880 = vrot.slane %v4878, 4
    %v4881 = vshll.u32 %v4676, 16
    %v4883 = vrot.slane %v4881, 5
    %v4884 = vor.u32 %v4880, %v4883
    %v4885 = vrot.slane %v4884, 4
    %v4887 = vshll.u32 %v4677, 16
    %v4889 = vrot.slane %v4887, 5
    %v4890 = vsel %vm1290, %v4885, %v4889
    %v4891 = vshrl.u32 %v4677, 16
    %v4893 = vrot.slane %v4891, 4
    %v4894 = vor.u32 %v4893, %v4889
    %v4895 = vrot.slane %v4894, 4
    %v4897 = vshll.u32 %v4678, 16
    %v4899 = vrot.slane %v4897, 5
    %v4900 = vsel %vm1290, %v4895, %v4899
    %v4902 = vshrl.u32 %v4679, 16
    %v4904 = vrot.slane %v4902, 4
    %v4905 = vshll.u32 %v4679, 16
    %v4907 = vrot.slane %v4905, 5
    %v4908 = vor.u32 %v4904, %v4907
    %v4909 = vrot.slane %v4908, 4
    %v4911 = vshll.u32 %v4680, 16
    %v4913 = vrot.slane %v4911, 5
    %v4914 = vsel %vm1290, %v4909, %v4913
    %v4915 = vshrl.u32 %v4680, 16
    %v4917 = vrot.slane %v4915, 4
    %v4918 = vor.u32 %v4917, %v4913
    %v4919 = vrot.slane %v4918, 4
    %v4921 = vshll.u32 %v4681, 16
    %v4923 = vrot.slane %v4921, 5
    %v4924 = vsel %vm1290, %v4919, %v4923
    %v4926 = vshrl.u32 %v4682, 16
    %v4928 = vrot.slane %v4926, 4
    %v4929 = vshll.u32 %v4682, 16
    %v4931 = vrot.slane %v4929, 5
    %v4932 = vor.u32 %v4928, %v4931
    %v4933 = vrot.slane %v4932, 4
    %v4935 = vshll.u32 %v4683, 16
    %v4937 = vrot.slane %v4935, 5
    %v4938 = vsel %vm1290, %v4933, %v4937
    %v4939 = vshrl.u32 %v4683, 16
    %v4941 = vrot.slane %v4939, 4
    %v4942 = vor.u32 %v4941, %v4937
    %v4943 = vrot.slane %v4942, 4
    %v4945 = vshll.u32 %v4684, 16
    %v4947 = vrot.slane %v4945, 5
    %v4948 = vsel %vm1290, %v4943, %v4947
    %v4950 = vshrl.u32 %v4685, 16
    %v4952 = vrot.slane %v4950, 4
    %v4953 = vshll.u32 %v4685, 16
    %v4955 = vrot.slane %v4953, 5
    %v4956 = vor.u32 %v4952, %v4955
    %v4957 = vrot.slane %v4956, 4
    %v4959 = vshll.u32 %v4686, 16
    %v4961 = vrot.slane %v4959, 5
    %v4962 = vsel %vm1290, %v4957, %v4961
    %v4963 = vshrl.u32 %v4686, 16
    %v4965 = vrot.slane %v4963, 4
    %v4966 = vor.u32 %v4965, %v4961
    %v4967 = vrot.slane %v4966, 4
    %v4969 = vshll.u32 %v4687, 16
    %v4971 = vrot.slane %v4969, 5
    %v4972 = vsel %vm1290, %v4967, %v4971
    %v4974 = vshrl.u32 %v4688, 16
    %v4976 = vrot.slane %v4974, 4
    %v4977 = vshll.u32 %v4688, 16
    %v4979 = vrot.slane %v4977, 5
    %v4980 = vor.u32 %v4976, %v4979
    %v4981 = vrot.slane %v4980, 4
    %v4983 = vshll.u32 %v4689, 16
    %v4985 = vrot.slane %v4983, 5
    %v4986 = vsel %vm1290, %v4981, %v4985
    %v4987 = vshrl.u32 %v4689, 16
    %v4989 = vrot.slane %v4987, 4
    %v4990 = vor.u32 %v4989, %v4985
    %v4991 = vrot.slane %v4990, 4
    %v4993 = vshll.u32 %v4690, 16
    %v4995 = vrot.slane %v4993, 5
    %v4996 = vsel %vm1290, %v4991, %v4995
    %v4998 = vshrl.u32 %v4691, 16
    %v5000 = vrot.slane %v4998, 4
    %v5001 = vshll.u32 %v4691, 16
    %v5003 = vrot.slane %v5001, 5
    %v5004 = vor.u32 %v5000, %v5003
    %v5005 = vrot.slane %v5004, 4
    %v5007 = vshll.u32 %v4692, 16
    %v5009 = vrot.slane %v5007, 5
    %v5010 = vsel %vm1290, %v5005, %v5009
    %v5011 = vshrl.u32 %v4692, 16
    %v5013 = vrot.slane %v5011, 4
    %v5014 = vor.u32 %v5013, %v5009
    %v5015 = vrot.slane %v5014, 4
    %v5017 = vshll.u32 %v4693, 16
    %v5019 = vrot.slane %v5017, 5
    %v5020 = vsel %vm1290, %v5015, %v5019
    %v5022 = vshrl.u32 %v4694, 16
    %v5024 = vrot.slane %v5022, 4
    %v5025 = vshll.u32 %v4694, 16
    %v5027 = vrot.slane %v5025, 5
    %v5028 = vor.u32 %v5024, %v5027
    %v5029 = vrot.slane %v5028, 4
    %v5031 = vshll.u32 %v4695, 16
    %v5033 = vrot.slane %v5031, 5
    %v5034 = vsel %vm1290, %v5029, %v5033
    %v5035 = vshrl.u32 %v4695, 16
    %v5037 = vrot.slane %v5035, 4
    %v5038 = vor.u32 %v5037, %v5033
    %v5039 = vrot.slane %v5038, 4
    %v5041 = vshll.u32 %v4696, 16
    %v5043 = vrot.slane %v5041, 5
    %v5044 = vsel %vm1290, %v5039, %v5043
    %v5046 = vshrl.u32 %v4697, 16
    %v5048 = vrot.slane %v5046, 4
    %v5049 = vshll.u32 %v4697, 16
    %v5051 = vrot.slane %v5049, 5
    %v5052 = vor.u32 %v5048, %v5051
    %v5053 = vrot.slane %v5052, 4
    %v5055 = vshll.u32 %v4698, 16
    %v5057 = vrot.slane %v5055, 5
    %v5058 = vsel %vm1290, %v5053, %v5057
    %v5059 = vshrl.u32 %v4698, 16
    %v5061 = vrot.slane %v5059, 4
    %v5062 = vor.u32 %v5061, %v5057
    %v5063 = vrot.slane %v5062, 4
    %v5065 = vshll.u32 %v4699, 16
    %v5067 = vrot.slane %v5065, 5
    %v5068 = vsel %vm1290, %v5063, %v5067
    %v5070 = vshrl.u32 %v4700, 16
    %v5072 = vrot.slane %v5070, 4
    %v5073 = vshll.u32 %v4700, 16
    %v5075 = vrot.slane %v5073, 5
    %v5076 = vor.u32 %v5072, %v5075
    %v5077 = vrot.slane %v5076, 4
    %v5079 = vshll.u32 %v4701, 16
    %v5081 = vrot.slane %v5079, 5
    %v5082 = vsel %vm1290, %v5077, %v5081
    %v5083 = vshrl.u32 %v4701, 16
    %v5085 = vrot.slane %v5083, 4
    %v5086 = vor.u32 %v5085, %v5081
    %v5087 = vrot.slane %v5086, 4
    %v5089 = vshll.u32 %v4702, 16
    %v5091 = vrot.slane %v5089, 5
    %v5092 = vsel %vm1290, %v5087, %v5091
    %v5094 = vshrl.u32 %v4703, 16
    %v5096 = vrot.slane %v5094, 4
    %v5097 = vshll.u32 %v4703, 16
    %v5099 = vrot.slane %v5097, 5
    %v5100 = vor.u32 %v5096, %v5099
    %v5101 = vrot.slane %v5100, 4
    %v5103 = vshll.u32 %v4704, 16
    %v5105 = vrot.slane %v5103, 5
    %v5106 = vsel %vm1290, %v5101, %v5105
    %v5107 = vshrl.u32 %v4704, 16
    %v5109 = vrot.slane %v5107, 4
    %v5110 = vor.u32 %v5109, %v5105
    %v5111 = vrot.slane %v5110, 4
    %v5113 = vshll.u32 %v4705, 16
    %v5115 = vrot.slane %v5113, 5
    %v5116 = vsel %vm1290, %v5111, %v5115
    %v5118 = vshrl.u32 %v4706, 16
    %v5120 = vrot.slane %v5118, 4
    %v5121 = vshll.u32 %v4706, 16
    %v5123 = vrot.slane %v5121, 5
    %v5124 = vor.u32 %v5120, %v5123
    %v5125 = vrot.slane %v5124, 4
    %v5127 = vshll.u32 %v4707, 16
    %v5129 = vrot.slane %v5127, 5
    %v5130 = vsel %vm1290, %v5125, %v5129
    %v5131 = vshrl.u32 %v4707, 16
    %v5133 = vrot.slane %v5131, 4
    %v5134 = vor.u32 %v5133, %v5129
    %v5135 = vrot.slane %v5134, 4
    %v5137 = vshll.u32 %v4708, 16
    %v5139 = vrot.slane %v5137, 5
    %v5140 = vsel %vm1290, %v5135, %v5139
    %v5142 = vshrl.u32 %v4709, 16
    %v5144 = vrot.slane %v5142, 4
    %v5145 = vshll.u32 %v4709, 16
    %v5147 = vrot.slane %v5145, 5
    %v5148 = vor.u32 %v5144, %v5147
    %v5149 = vrot.slane %v5148, 4
    %v5151 = vshll.u32 %v4710, 16
    %v5153 = vrot.slane %v5151, 5
    %v5154 = vsel %vm1290, %v5149, %v5153
    %v5155 = vshrl.u32 %v4710, 16
    %v5157 = vrot.slane %v5155, 4
    %v5158 = vor.u32 %v5157, %v5153
    %v5159 = vrot.slane %v5158, 4
    %v5161 = vshll.u32 %v4711, 16
    %v5163 = vrot.slane %v5161, 5
    %v5164 = vsel %vm1290, %v5159, %v5163
    %v5166 = vshrl.u32 %v4712, 16
    %v5168 = vrot.slane %v5166, 4
    %v5169 = vshll.u32 %v4712, 16
    %v5171 = vrot.slane %v5169, 5
    %v5172 = vor.u32 %v5168, %v5171
    %v5173 = vrot.slane %v5172, 4
    %v5175 = vshll.u32 %v4713, 16
    %v5177 = vrot.slane %v5175, 5
    %v5178 = vsel %vm1290, %v5173, %v5177
    %v5179 = vshrl.u32 %v4713, 16
    %v5181 = vrot.slane %v5179, 4
    %v5182 = vor.u32 %v5181, %v5177
    %v5183 = vrot.slane %v5182, 4
    %v5185 = vshll.u32 %v4714, 16
    %v5187 = vrot.slane %v5185, 5
    %v5188 = vsel %vm1290, %v5183, %v5187
    %v5190 = vshrl.u32 %v4715, 16
    %v5192 = vrot.slane %v5190, 4
    %v5193 = vshll.u32 %v4715, 16
    %v5195 = vrot.slane %v5193, 5
    %v5196 = vor.u32 %v5192, %v5195
    %v5197 = vrot.slane %v5196, 4
    %v5199 = vshll.u32 %v4716, 16
    %v5201 = vrot.slane %v5199, 5
    %v5202 = vsel %vm1290, %v5197, %v5201
    %v5203 = vshrl.u32 %v4716, 16
    %v5205 = vrot.slane %v5203, 4
    %v5206 = vor.u32 %v5205, %v5201
    %v5207 = vrot.slane %v5206, 4
    %v5209 = vshll.u32 %v4717, 16
    %v5211 = vrot.slane %v5209, 5
    %v5212 = vsel %vm1290, %v5207, %v5211
    %v5214 = vshrl.u32 %v4718, 16
    %v5216 = vrot.slane %v5214, 4
    %v5217 = vshll.u32 %v4718, 16
    %v5219 = vrot.slane %v5217, 5
    %v5220 = vor.u32 %v5216, %v5219
    %v5221 = vrot.slane %v5220, 4
    %v5223 = vshll.u32 %v4719, 16
    %v5225 = vrot.slane %v5223, 5
    %v5226 = vsel %vm1290, %v5221, %v5225
    %v5227 = vshrl.u32 %v4719, 16
    %v5229 = vrot.slane %v5227, 4
    %v5230 = vor.u32 %v5229, %v5225
    %v5231 = vrot.slane %v5230, 4
    %v5233 = vshll.u32 %v4720, 16
    %v5235 = vrot.slane %v5233, 5
    %v5236 = vsel %vm1290, %v5231, %v5235
    %v5238 = vshrl.u32 %v4721, 16
    %v5240 = vrot.slane %v5238, 4
    %v5241 = vshll.u32 %v4721, 16
    %v5243 = vrot.slane %v5241, 5
    %v5244 = vor.u32 %v5240, %v5243
    %v5245 = vrot.slane %v5244, 4
    %v5247 = vshll.u32 %v4722, 16
    %v5249 = vrot.slane %v5247, 5
    %v5250 = vsel %vm1290, %v5245, %v5249
    %v5251 = vshrl.u32 %v4722, 16
    %v5253 = vrot.slane %v5251, 4
    %v5254 = vor.u32 %v5253, %v5249
    %v5255 = vrot.slane %v5254, 4
    %v5257 = vshll.u32 %v4723, 16
    %v5259 = vrot.slane %v5257, 5
    %v5260 = vsel %vm1290, %v5255, %v5259
    %v5262 = vshrl.u32 %v4724, 16
    %v5264 = vrot.slane %v5262, 4
    %v5265 = vshll.u32 %v4724, 16
    %v5267 = vrot.slane %v5265, 5
    %v5268 = vor.u32 %v5264, %v5267
    %v5269 = vrot.slane %v5268, 4
    %v5271 = vshll.u32 %v4725, 16
    %v5273 = vrot.slane %v5271, 5
    %v5274 = vsel %vm1290, %v5269, %v5273
    %v5275 = vshrl.u32 %v4725, 16
    %v5277 = vrot.slane %v5275, 4
    %v5278 = vor.u32 %v5277, %v5273
    %v5279 = vrot.slane %v5278, 4
    %v5281 = vshll.u32 %v4726, 16
    %v5283 = vrot.slane %v5281, 5
    %v5284 = vsel %vm1290, %v5279, %v5283
    %v5286 = vshrl.u32 %v4727, 16
    %v5288 = vrot.slane %v5286, 4
    %v5289 = vshll.u32 %v4727, 16
    %v5291 = vrot.slane %v5289, 5
    %v5292 = vor.u32 %v5288, %v5291
    %v5293 = vrot.slane %v5292, 4
    %v5295 = vshll.u32 %v4728, 16
    %v5297 = vrot.slane %v5295, 5
    %v5298 = vsel %vm1290, %v5293, %v5297
    %v5299 = vshrl.u32 %v4728, 16
    %v5301 = vrot.slane %v5299, 4
    %v5302 = vor.u32 %v5301, %v5297
    %v5303 = vrot.slane %v5302, 4
    %v5305 = vshll.u32 %v4729, 16
    %v5307 = vrot.slane %v5305, 5
    %v5308 = vsel %vm1290, %v5303, %v5307
    %v5310 = vshrl.u32 %v4730, 16
    %v5312 = vrot.slane %v5310, 4
    %v5313 = vshll.u32 %v4730, 16
    %v5315 = vrot.slane %v5313, 5
    %v5316 = vor.u32 %v5312, %v5315
    %v5317 = vrot.slane %v5316, 4
    %v5319 = vshll.u32 %v4731, 16
    %v5321 = vrot.slane %v5319, 5
    %v5322 = vsel %vm1290, %v5317, %v5321
    %v5323 = vshrl.u32 %v4731, 16
    %v5325 = vrot.slane %v5323, 4
    %v5326 = vor.u32 %v5325, %v5321
    %v5327 = vrot.slane %v5326, 4
    %v5329 = vshll.u32 %v4732, 16
    %v5331 = vrot.slane %v5329, 5
    %v5332 = vsel %vm1290, %v5327, %v5331
    %v5334 = vshrl.u32 %v4733, 16
    %v5336 = vrot.slane %v5334, 4
    %v5337 = vshll.u32 %v4733, 16
    %v5339 = vrot.slane %v5337, 5
    %v5340 = vor.u32 %v5336, %v5339
    %v5341 = vrot.slane %v5340, 4
    %v5343 = vshll.u32 %v4734, 16
    %v5345 = vrot.slane %v5343, 5
    %v5346 = vsel %vm1290, %v5341, %v5345
    %v5347 = vshrl.u32 %v4734, 16
    %v5349 = vrot.slane %v5347, 4
    %v5350 = vor.u32 %v5349, %v5345
    %v5351 = vrot.slane %v5350, 4
    %v5353 = vshll.u32 %v4735, 16
    %v5355 = vrot.slane %v5353, 5
    %v5356 = vsel %vm1290, %v5351, %v5355
    %v5358 = vshrl.u32 %v4736, 16
    %v5360 = vrot.slane %v5358, 4
    %v5361 = vshll.u32 %v4736, 16
    %v5363 = vrot.slane %v5361, 5
    %v5364 = vor.u32 %v5360, %v5363
    %v5365 = vrot.slane %v5364, 4
    %v5367 = vshll.u32 %v4737, 16
    %v5369 = vrot.slane %v5367, 5
    %v5370 = vsel %vm1290, %v5365, %v5369
    %v5371 = vshrl.u32 %v4737, 16
    %v5373 = vrot.slane %v5371, 4
    %v5374 = vor.u32 %v5373, %v5369
    %v5375 = vrot.slane %v5374, 4
    %v5377 = vshll.u32 %v4738, 16
    %v5379 = vrot.slane %v5377, 5
    %v5380 = vsel %vm1290, %v5375, %v5379
    %v5382 = vshrl.u32 %v4739, 16
    %v5384 = vrot.slane %v5382, 4
    %v5385 = vshll.u32 %v4739, 16
    %v5387 = vrot.slane %v5385, 5
    %v5388 = vor.u32 %v5384, %v5387
    %v5389 = vrot.slane %v5388, 4
    %v5391 = vshll.u32 %v4740, 16
    %v5393 = vrot.slane %v5391, 5
    %v5394 = vsel %vm1290, %v5389, %v5393
    %v5395 = vshrl.u32 %v4740, 16
    %v5397 = vrot.slane %v5395, 4
    %v5398 = vor.u32 %v5397, %v5393
    %v5399 = vrot.slane %v5398, 4
    %v5401 = vshll.u32 %v4741, 16
    %v5403 = vrot.slane %v5401, 5
    %v5404 = vsel %vm1290, %v5399, %v5403
    %v5406 = vshrl.u32 %v4742, 16
    %v5408 = vrot.slane %v5406, 4
    %v5409 = vshll.u32 %v4742, 16
    %v5411 = vrot.slane %v5409, 5
    %v5412 = vor.u32 %v5408, %v5411
    %v5413 = vrot.slane %v5412, 4
    %v5415 = vshll.u32 %v4743, 16
    %v5417 = vrot.slane %v5415, 5
    %v5418 = vsel %vm1290, %v5413, %v5417
    %v5419 = vshrl.u32 %v4743, 16
    %v5421 = vrot.slane %v5419, 4
    %v5422 = vor.u32 %v5421, %v5417
    %v5423 = vrot.slane %v5422, 4
    %v5425 = vshll.u32 %v4744, 16
    %v5427 = vrot.slane %v5425, 5
    %v5428 = vsel %vm1290, %v5423, %v5427
    %v5430 = vshrl.u32 %v4745, 16
    %v5432 = vrot.slane %v5430, 4
    %v5433 = vshll.u32 %v4745, 16
    %v5435 = vrot.slane %v5433, 5
    %v5436 = vor.u32 %v5432, %v5435
    %v5437 = vrot.slane %v5436, 4
    %v5439 = vshll.u32 %v4746, 16
    %v5441 = vrot.slane %v5439, 5
    %v5442 = vsel %vm1290, %v5437, %v5441
    %v5443 = vshrl.u32 %v4746, 16
    %v5445 = vrot.slane %v5443, 4
    %v5446 = vor.u32 %v5445, %v5441
    %v5447 = vrot.slane %v5446, 4
    %v5449 = vshll.u32 %v4747, 16
    %v5451 = vrot.slane %v5449, 5
    %v5452 = vsel %vm1290, %v5447, %v5451
    %v5454 = vshrl.u32 %v4748, 16
    %v5456 = vrot.slane %v5454, 4
    %v5457 = vshll.u32 %v4748, 16
    %v5459 = vrot.slane %v5457, 5
    %v5460 = vor.u32 %v5456, %v5459
    %v5461 = vrot.slane %v5460, 4
    %v5463 = vshll.u32 %v4749, 16
    %v5465 = vrot.slane %v5463, 5
    %v5466 = vsel %vm1290, %v5461, %v5465
    %v5467 = vshrl.u32 %v4749, 16
    %v5469 = vrot.slane %v5467, 4
    %v5470 = vor.u32 %v5469, %v5465
    %v5471 = vrot.slane %v5470, 4
    %v5473 = vshll.u32 %v4750, 16
    %v5475 = vrot.slane %v5473, 5
    %v5476 = vsel %vm1290, %v5471, %v5475
    %v5478 = vshrl.u32 %v4751, 16
    %v5480 = vrot.slane %v5478, 4
    %v5481 = vshll.u32 %v4751, 16
    %v5483 = vrot.slane %v5481, 5
    %v5484 = vor.u32 %v5480, %v5483
    %v5485 = vrot.slane %v5484, 4
    %v5487 = vshll.u32 %v4752, 16
    %v5489 = vrot.slane %v5487, 5
    %v5490 = vsel %vm1290, %v5485, %v5489
    %v5491 = vshrl.u32 %v4752, 16
    %v5493 = vrot.slane %v5491, 4
    %v5494 = vor.u32 %v5493, %v5489
    %v5495 = vrot.slane %v5494, 4
    %v5497 = vshll.u32 %v4753, 16
    %v5499 = vrot.slane %v5497, 5
    %v5500 = vsel %vm1290, %v5495, %v5499
    %v5502 = vshrl.u32 %v4754, 16
    %v5504 = vrot.slane %v5502, 4
    %v5505 = vshll.u32 %v4754, 16
    %v5507 = vrot.slane %v5505, 5
    %v5508 = vor.u32 %v5504, %v5507
    %v5509 = vrot.slane %v5508, 4
    %v5511 = vshll.u32 %v4755, 16
    %v5513 = vrot.slane %v5511, 5
    %v5514 = vsel %vm1290, %v5509, %v5513
    %v5515 = vshrl.u32 %v4755, 16
    %v5517 = vrot.slane %v5515, 4
    %v5518 = vor.u32 %v5517, %v5513
    %v5519 = vrot.slane %v5518, 4
    %v5521 = vshll.u32 %v4756, 16
    %v5523 = vrot.slane %v5521, 5
    %v5524 = vsel %vm1290, %v5519, %v5523
    %s5525 = scalar_lea.vmem [#allocation6], 32
    %v5526 = vld [vmem:[%s5525] sm:$0xf]
    %v5527 = vld [vmem:[%s5525 + $0x4] sm:$0xf]
    %v5528 = vunpack.c.l.b16 %v4770
    %v5529 = vunpack.c.l.b16 %v4780
    %v5530 = vunpack.c.l.b16 %v4794
    %v5531 = vunpack.c.l.b16 %v4804
    %v5532 = vunpack.c.l.b16 %v4818
    %v5533 = vunpack.c.l.b16 %v4828
    %v5534 = vunpack.c.l.b16 %v4842
    %v5535 = vunpack.c.l.b16 %v4852
    %v5536 = vunpack.c.l.b16 %v4866
    %v5537 = vunpack.c.l.b16 %v4876
    %v5538 = vunpack.c.l.b16 %v4890
    %v5539 = vunpack.c.l.b16 %v4900
    %v5540 = vunpack.c.l.b16 %v4914
    %v5541 = vunpack.c.l.b16 %v4924
    %v5542 = vunpack.c.l.b16 %v4938
    %v5543 = vunpack.c.l.b16 %v4948
    %v5544 = vunpack.c.l.b16 %v4962
    %v5545 = vunpack.c.l.b16 %v4972
    %v5546 = vunpack.c.l.b16 %v4986
    %v5547 = vunpack.c.l.b16 %v4996
    %v5548 = vunpack.c.l.b16 %v5010
    %v5549 = vunpack.c.l.b16 %v5020
    %v5550 = vunpack.c.l.b16 %v5034
    %v5551 = vunpack.c.l.b16 %v5044
    %v5552 = vunpack.c.l.b16 %v5058
    %v5553 = vunpack.c.l.b16 %v5068
    %v5554 = vunpack.c.l.b16 %v5082
    %v5555 = vunpack.c.l.b16 %v5092
    %v5556 = vunpack.c.l.b16 %v5106
    %v5557 = vunpack.c.l.b16 %v5116
    %v5558 = vunpack.c.l.b16 %v5130
    %v5559 = vunpack.c.l.b16 %v5140
    %v5560 = vunpack.c.l.b16 %v5154
    %v5561 = vunpack.c.l.b16 %v5164
    %v5562 = vunpack.c.l.b16 %v5178
    %v5563 = vunpack.c.l.b16 %v5188
    %v5564 = vunpack.c.l.b16 %v5202
    %v5565 = vunpack.c.l.b16 %v5212
    %v5566 = vunpack.c.l.b16 %v5226
    %v5567 = vunpack.c.l.b16 %v5236
    %v5568 = vunpack.c.l.b16 %v5250
    %v5569 = vunpack.c.l.b16 %v5260
    %v5570 = vunpack.c.l.b16 %v5274
    %v5571 = vunpack.c.l.b16 %v5284
    %v5572 = vunpack.c.l.b16 %v5298
    %v5573 = vunpack.c.l.b16 %v5308
    %v5574 = vunpack.c.l.b16 %v5322
    %v5575 = vunpack.c.l.b16 %v5332
    %v5576 = vunpack.c.l.b16 %v5346
    %v5577 = vunpack.c.l.b16 %v5356
    %v5578 = vunpack.c.l.b16 %v5370
    %v5579 = vunpack.c.l.b16 %v5380
    %v5580 = vunpack.c.l.b16 %v5394
    %v5581 = vunpack.c.l.b16 %v5404
    %v5582 = vunpack.c.l.b16 %v5418
    %v5583 = vunpack.c.l.b16 %v5428
    %v5584 = vunpack.c.l.b16 %v5442
    %v5585 = vunpack.c.l.b16 %v5452
    %v5586 = vunpack.c.l.b16 %v5466
    %v5587 = vunpack.c.l.b16 %v5476
    %v5588 = vunpack.c.l.b16 %v5490
    %v5589 = vunpack.c.l.b16 %v5500
    %v5590 = vunpack.c.l.b16 %v5514
    %v5591 = vunpack.c.l.b16 %v5524
    %v5592 = vpack.c.b16 %v5529, %v5528
    %v5593 = vpack.c.b16 %v5531, %v5530
    %v5594 = vpack.c.b16 %v5533, %v5532
    %v5595 = vpack.c.b16 %v5535, %v5534
    %v5596 = vpack.c.b16 %v5537, %v5536
    %v5597 = vpack.c.b16 %v5539, %v5538
    %v5598 = vpack.c.b16 %v5541, %v5540
    %v5599 = vpack.c.b16 %v5543, %v5542
    %v5600 = vpack.c.b16 %v5545, %v5544
    %v5601 = vpack.c.b16 %v5547, %v5546
    %v5602 = vpack.c.b16 %v5549, %v5548
    %v5603 = vpack.c.b16 %v5551, %v5550
    %v5604 = vpack.c.b16 %v5553, %v5552
    %v5605 = vpack.c.b16 %v5555, %v5554
    %v5606 = vpack.c.b16 %v5557, %v5556
    %v5607 = vpack.c.b16 %v5559, %v5558
    %v5608 = vpack.c.b16 %v5561, %v5560
    %v5609 = vpack.c.b16 %v5563, %v5562
    %v5610 = vpack.c.b16 %v5565, %v5564
    %v5611 = vpack.c.b16 %v5567, %v5566
    %v5612 = vpack.c.b16 %v5569, %v5568
    %v5613 = vpack.c.b16 %v5571, %v5570
    %v5614 = vpack.c.b16 %v5573, %v5572
    %v5615 = vpack.c.b16 %v5575, %v5574
    %v5616 = vpack.c.b16 %v5577, %v5576
    %v5617 = vpack.c.b16 %v5579, %v5578
    %v5618 = vpack.c.b16 %v5581, %v5580
    %v5619 = vpack.c.b16 %v5583, %v5582
    %v5620 = vpack.c.b16 %v5585, %v5584
    %v5621 = vpack.c.b16 %v5587, %v5586
    %v5622 = vpack.c.b16 %v5589, %v5588
    %v5623 = vpack.c.b16 %v5591, %v5590
    %v5626 = vunpack.c.l.b16 %v5526
    %v5627 = vunpack.c.l.b16 %v5527
    %v5628 = vpack.c.b16 %v5627, %v5626
    %v5631 = vsel %vm2164, %v5592, 0
    %v5634 = vsel %vm2164, %v5593, 0
    %v5637 = vsel %vm2164, %v5594, 0
    %v5640 = vsel %vm2164, %v5595, 0
    %v5643 = vsel %vm2164, %v5596, 0
    %v5646 = vsel %vm2164, %v5597, 0
    %v5649 = vsel %vm2164, %v5598, 0
    %v5652 = vsel %vm2164, %v5599, 0
    %v5655 = vsel %vm2164, %v5600, 0
    %v5658 = vsel %vm2164, %v5601, 0
    %v5661 = vsel %vm2164, %v5602, 0
    %v5664 = vsel %vm2164, %v5603, 0
    %v5667 = vsel %vm2164, %v5604, 0
    %v5670 = vsel %vm2164, %v5605, 0
    %v5673 = vsel %vm2164, %v5606, 0
    %v5676 = vsel %vm2164, %v5607, 0
    %v5679 = vsel %vm2164, %v5608, 0
    %v5682 = vsel %vm2164, %v5609, 0
    %v5685 = vsel %vm2164, %v5610, 0
    %v5688 = vsel %vm2164, %v5611, 0
    %v5691 = vsel %vm2164, %v5612, 0
    %v5694 = vsel %vm2164, %v5613, 0
    %v5697 = vsel %vm2164, %v5614, 0
    %v5700 = vsel %vm2164, %v5615, 0
    %v5703 = vsel %vm2164, %v5616, 0
    %v5706 = vsel %vm2164, %v5617, 0
    %v5709 = vsel %vm2164, %v5618, 0
    %v5712 = vsel %vm2164, %v5619, 0
    %v5715 = vsel %vm2164, %v5620, 0
    %v5718 = vsel %vm2164, %v5621, 0
    %v5721 = vsel %vm2164, %v5622, 0
    %v5724 = vsel %vm2164, %v5623, 0
    %5726 = vmatprep.subr.bf16.mxu0 0
    %5727 = vmatpush1.bf16.msra.mxu0 %v5628
    %5728 = vmatprep.subr.bf16.mxu0 0
    %5729 = vmatpush1.bf16.msra.mxu0 0
    %5730 = vmatprep.subr.bf16.mxu0 0
    %5731 = vmatpush1.bf16.msra.mxu0 0
    %5732 = vmatprep.subr.bf16.mxu0 0
    %5733 = vmatpush1.bf16.msra.mxu0 0
    %5734 = vmatprep.subr.bf16.mxu0 0
    %5735 = vmatpush1.bf16.msra.mxu0 0
    %5736 = vmatprep.subr.bf16.mxu0 0
    %5737 = vmatpush1.bf16.msra.mxu0 0
    %5738 = vmatprep.subr.bf16.mxu0 0
    %5739 = vmatpush1.bf16.msra.mxu0 0
    %5740 = vmatprep.subr.bf16.mxu0 0
    %5741 = vmatpush1.bf16.msra.mxu0 0
    %5742 = vmatprep.subr.bf16.mxu0 0
    %5743 = vmatpush1.bf16.msra.mxu0 0
    %5744 = vmatprep.subr.bf16.mxu0 0
    %5745 = vmatpush1.bf16.msra.mxu0 0
    %5746 = vmatprep.subr.bf16.mxu0 0
    %5747 = vmatpush1.bf16.msra.mxu0 0
    %5748 = vmatprep.subr.bf16.mxu0 0
    %5749 = vmatpush1.bf16.msra.mxu0 0
    %5750 = vmatprep.subr.bf16.mxu0 0
    %5751 = vmatpush1.bf16.msra.mxu0 0
    %5752 = vmatprep.subr.bf16.mxu0 0
    %5753 = vmatpush1.bf16.msra.mxu0 0
    %5754 = vmatprep.subr.bf16.mxu0 0
    %5755 = vmatpush1.bf16.msra.mxu0 0
    %5756 = vmatprep.subr.bf16.mxu0 0
    %5757 = vmatpush1.bf16.msra.mxu0 0
    %5758 = vmatprep.mubr.bf16.mxu0 0
    %5759 = vmatmul.mubr.bf16.gmra.mrb[0].mxu0 %v5631
    %v5760 = vpop.f32.mrb[0].mxu0
    %v5761 = vadd.f32 0.0, %v5760
    %v5762 = vpop.f32.mrb[0].mxu0
    %v5763 = vpop.f32.mrb[0].mxu0
    %v5764 = vadd.f32 0.0, %v5763
    %v5765 = vpop.f32.mrb[0].mxu0
    %5766 = vmatprep.mubr.bf16.mxu0 0
    %5767 = vmatmul.mubr.bf16.gmra.mrb[0].mxu0 %v5634
    %v5768 = vpop.f32.mrb[0].mxu0
    %v5769 = vadd.f32 0.0, %v5768
    %v5770 = vpop.f32.mrb[0].mxu0
    %v5771 = vpop.f32.mrb[0].mxu0
    %v5772 = vadd.f32 0.0, %v5771
    %v5773 = vpop.f32.mrb[0].mxu0
    %5774 = vmatprep.mubr.bf16.mxu0 0
    %5775 = vmatmul.mubr.bf16.gmra.mrb[0].mxu0 %v5637
    %v5776 = vpop.f32.mrb[0].mxu0
    %v5777 = vadd.f32 0.0, %v5776
    %v5778 = vpop.f32.mrb[0].mxu0
    %v5779 = vpop.f32.mrb[0].mxu0
    %v5780 = vadd.f32 0.0, %v5779
    %v5781 = vpop.f32.mrb[0].mxu0
    %5782 = vmatprep.mubr.bf16.mxu0 0
    %5783 = vmatmul.mubr.bf16.gmra.mrb[0].mxu0 %v5640
    %v5784 = vpop.f32.mrb[0].mxu0
    %v5785 = vadd.f32 0.0, %v5784
    %v5786 = vpop.f32.mrb[0].mxu0
    %v5787 = vpop.f32.mrb[0].mxu0
    %v5788 = vadd.f32 0.0, %v5787
    %v5789 = vpop.f32.mrb[0].mxu0
    %5790 = vmatprep.mubr.bf16.mxu0 0
    %5791 = vmatmul.mubr.bf16.gmra.mrb[0].mxu0 %v5643
    %v5792 = vpop.f32.mrb[0].mxu0
    %v5793 = vadd.f32 0.0, %v5792
    %v5794 = vpop.f32.mrb[0].mxu0
    %v5795 = vpop.f32.mrb[0].mxu0
    %v5796 = vadd.f32 0.0, %v5795
    %v5797 = vpop.f32.mrb[0].mxu0
    %5798 = vmatprep.mubr.bf16.mxu0 0
    %5799 = vmatmul.mubr.bf16.gmra.mrb[0].mxu0 %v5646
    %v5800 = vpop.f32.mrb[0].mxu0
    %v5801 = vadd.f32 0.0, %v5800
    %v5802 = vpop.f32.mrb[0].mxu0
    %v5803 = vpop.f32.mrb[0].mxu0
    %v5804 = vadd.f32 0.0, %v5803
    %v5805 = vpop.f32.mrb[0].mxu0
    %5806 = vmatprep.mubr.bf16.mxu0 0
    %5807 = vmatmul.mubr.bf16.gmra.mrb[0].mxu0 %v5649
    %v5808 = vpop.f32.mrb[0].mxu0
    %v5809 = vadd.f32 0.0, %v5808
    %v5810 = vpop.f32.mrb[0].mxu0
    %v5811 = vpop.f32.mrb[0].mxu0
    %v5812 = vadd.f32 0.0, %v5811
    %v5813 = vpop.f32.mrb[0].mxu0
    %5814 = vmatprep.mubr.bf16.mxu0 0
    %5815 = vmatmul.mubr.bf16.gmra.mrb[0].mxu0 %v5652
    %v5816 = vpop.f32.mrb[0].mxu0
    %v5817 = vadd.f32 0.0, %v5816
    %v5818 = vpop.f32.mrb[0].mxu0
    %v5819 = vpop.f32.mrb[0].mxu0
    %v5820 = vadd.f32 0.0, %v5819
    %v5821 = vpop.f32.mrb[0].mxu0
    %5822 = vmatprep.mubr.bf16.mxu0 0
    %5823 = vmatmul.mubr.bf16.gmra.mrb[0].mxu0 %v5655
    %v5824 = vpop.f32.mrb[0].mxu0
    %v5825 = vadd.f32 0.0, %v5824
    %v5826 = vpop.f32.mrb[0].mxu0
    %v5827 = vpop.f32.mrb[0].mxu0
    %v5828 = vadd.f32 0.0, %v5827
    %v5829 = vpop.f32.mrb[0].mxu0
    %5830 = vmatprep.mubr.bf16.mxu0 0
    %5831 = vmatmul.mubr.bf16.gmra.mrb[0].mxu0 %v5658
    %v5832 = vpop.f32.mrb[0].mxu0
    %v5833 = vadd.f32 0.0, %v5832
    %v5834 = vpop.f32.mrb[0].mxu0
    %v5835 = vpop.f32.mrb[0].mxu0
    %v5836 = vadd.f32 0.0, %v5835
    %v5837 = vpop.f32.mrb[0].mxu0
    %5838 = vmatprep.mubr.bf16.mxu0 0
    %5839 = vmatmul.mubr.bf16.gmra.mrb[0].mxu0 %v5661
    %v5840 = vpop.f32.mrb[0].mxu0
    %v5841 = vadd.f32 0.0, %v5840
    %v5842 = vpop.f32.mrb[0].mxu0
    %v5843 = vpop.f32.mrb[0].mxu0
    %v5844 = vadd.f32 0.0, %v5843
    %v5845 = vpop.f32.mrb[0].mxu0
    %5846 = vmatprep.mubr.bf16.mxu0 0
    %5847 = vmatmul.mubr.bf16.gmra.mrb[0].mxu0 %v5664
    %v5848 = vpop.f32.mrb[0].mxu0
    %v5849 = vadd.f32 0.0, %v5848
    %v5850 = vpop.f32.mrb[0].mxu0
    %v5851 = vpop.f32.mrb[0].mxu0
    %v5852 = vadd.f32 0.0, %v5851
    %v5853 = vpop.f32.mrb[0].mxu0
    %5854 = vmatprep.mubr.bf16.mxu0 0
    %5855 = vmatmul.mubr.bf16.gmra.mrb[0].mxu0 %v5667
    %v5856 = vpop.f32.mrb[0].mxu0
    %v5857 = vadd.f32 0.0, %v5856
    %v5858 = vpop.f32.mrb[0].mxu0
    %v5859 = vpop.f32.mrb[0].mxu0
    %v5860 = vadd.f32 0.0, %v5859
    %v5861 = vpop.f32.mrb[0].mxu0
    %5862 = vmatprep.mubr.bf16.mxu0 0
    %5863 = vmatmul.mubr.bf16.gmra.mrb[0].mxu0 %v5670
    %v5864 = vpop.f32.mrb[0].mxu0
    %v5865 = vadd.f32 0.0, %v5864
    %v5866 = vpop.f32.mrb[0].mxu0
    %v5867 = vpop.f32.mrb[0].mxu0
    %v5868 = vadd.f32 0.0, %v5867
    %v5869 = vpop.f32.mrb[0].mxu0
    %5870 = vmatprep.mubr.bf16.mxu0 0
    %5871 = vmatmul.mubr.bf16.gmra.mrb[0].mxu0 %v5673
    %v5872 = vpop.f32.mrb[0].mxu0
    %v5873 = vadd.f32 0.0, %v5872
    %v5874 = vpop.f32.mrb[0].mxu0
    %v5875 = vpop.f32.mrb[0].mxu0
    %v5876 = vadd.f32 0.0, %v5875
    %v5877 = vpop.f32.mrb[0].mxu0
    %5878 = vmatprep.mubr.bf16.mxu0 0
    %5879 = vmatmul.mubr.bf16.gmra.mrb[0].mxu0 %v5676
    %v5880 = vpop.f32.mrb[0].mxu0
    %v5881 = vadd.f32 0.0, %v5880
    %v5882 = vpop.f32.mrb[0].mxu0
    %v5883 = vpop.f32.mrb[0].mxu0
    %v5884 = vadd.f32 0.0, %v5883
    %v5885 = vpop.f32.mrb[0].mxu0
    %5886 = vmatprep.mubr.bf16.mxu0 0
    %5887 = vmatmul.mubr.bf16.gmra.mrb[0].mxu0 %v5679
    %v5888 = vpop.f32.mrb[0].mxu0
    %v5889 = vadd.f32 0.0, %v5888
    %v5890 = vpop.f32.mrb[0].mxu0
    %v5891 = vpop.f32.mrb[0].mxu0
    %v5892 = vadd.f32 0.0, %v5891
    %v5893 = vpop.f32.mrb[0].mxu0
    %5894 = vmatprep.mubr.bf16.mxu0 0
    %5895 = vmatmul.mubr.bf16.gmra.mrb[0].mxu0 %v5682
    %v5896 = vpop.f32.mrb[0].mxu0
    %v5897 = vadd.f32 0.0, %v5896
    %v5898 = vpop.f32.mrb[0].mxu0
    %v5899 = vpop.f32.mrb[0].mxu0
    %v5900 = vadd.f32 0.0, %v5899
    %v5901 = vpop.f32.mrb[0].mxu0
    %5902 = vmatprep.mubr.bf16.mxu0 0
    %5903 = vmatmul.mubr.bf16.gmra.mrb[0].mxu0 %v5685
    %v5904 = vpop.f32.mrb[0].mxu0
    %v5905 = vadd.f32 0.0, %v5904
    %v5906 = vpop.f32.mrb[0].mxu0
    %v5907 = vpop.f32.mrb[0].mxu0
    %v5908 = vadd.f32 0.0, %v5907
    %v5909 = vpop.f32.mrb[0].mxu0
    %5910 = vmatprep.mubr.bf16.mxu0 0
    %5911 = vmatmul.mubr.bf16.gmra.mrb[0].mxu0 %v5688
    %v5912 = vpop.f32.mrb[0].mxu0
    %v5913 = vadd.f32 0.0, %v5912
    %v5914 = vpop.f32.mrb[0].mxu0
    %v5915 = vpop.f32.mrb[0].mxu0
    %v5916 = vadd.f32 0.0, %v5915
    %v5917 = vpop.f32.mrb[0].mxu0
    %5918 = vmatprep.mubr.bf16.mxu0 0
    %5919 = vmatmul.mubr.bf16.gmra.mrb[0].mxu0 %v5691
    %v5920 = vpop.f32.mrb[0].mxu0
    %v5921 = vadd.f32 0.0, %v5920
    %v5922 = vpop.f32.mrb[0].mxu0
    %v5923 = vpop.f32.mrb[0].mxu0
    %v5924 = vadd.f32 0.0, %v5923
    %v5925 = vpop.f32.mrb[0].mxu0
    %5926 = vmatprep.mubr.bf16.mxu0 0
    %5927 = vmatmul.mubr.bf16.gmra.mrb[0].mxu0 %v5694
    %v5928 = vpop.f32.mrb[0].mxu0
    %v5929 = vadd.f32 0.0, %v5928
    %v5930 = vpop.f32.mrb[0].mxu0
    %v5931 = vpop.f32.mrb[0].mxu0
    %v5932 = vadd.f32 0.0, %v5931
    %v5933 = vpop.f32.mrb[0].mxu0
    %5934 = vmatprep.mubr.bf16.mxu0 0
    %5935 = vmatmul.mubr.bf16.gmra.mrb[0].mxu0 %v5697
    %v5936 = vpop.f32.mrb[0].mxu0
    %v5937 = vadd.f32 0.0, %v5936
    %v5938 = vpop.f32.mrb[0].mxu0
    %v5939 = vpop.f32.mrb[0].mxu0
    %v5940 = vadd.f32 0.0, %v5939
    %v5941 = vpop.f32.mrb[0].mxu0
    %5942 = vmatprep.mubr.bf16.mxu0 0
    %5943 = vmatmul.mubr.bf16.gmra.mrb[0].mxu0 %v5700
    %v5944 = vpop.f32.mrb[0].mxu0
    %v5945 = vadd.f32 0.0, %v5944
    %v5946 = vpop.f32.mrb[0].mxu0
    %v5947 = vpop.f32.mrb[0].mxu0
    %v5948 = vadd.f32 0.0, %v5947
    %v5949 = vpop.f32.mrb[0].mxu0
    %5950 = vmatprep.mubr.bf16.mxu0 0
    %5951 = vmatmul.mubr.bf16.gmra.mrb[0].mxu0 %v5703
    %v5952 = vpop.f32.mrb[0].mxu0
    %v5953 = vadd.f32 0.0, %v5952
    %v5954 = vpop.f32.mrb[0].mxu0
    %v5955 = vpop.f32.mrb[0].mxu0
    %v5956 = vadd.f32 0.0, %v5955
    %v5957 = vpop.f32.mrb[0].mxu0
    %5958 = vmatprep.mubr.bf16.mxu0 0
    %5959 = vmatmul.mubr.bf16.gmra.mrb[0].mxu0 %v5706
    %v5960 = vpop.f32.mrb[0].mxu0
    %v5961 = vadd.f32 0.0, %v5960
    %v5962 = vpop.f32.mrb[0].mxu0
    %v5963 = vpop.f32.mrb[0].mxu0
    %v5964 = vadd.f32 0.0, %v5963
    %v5965 = vpop.f32.mrb[0].mxu0
    %5966 = vmatprep.mubr.bf16.mxu0 0
    %5967 = vmatmul.mubr.bf16.gmra.mrb[0].mxu0 %v5709
    %v5968 = vpop.f32.mrb[0].mxu0
    %v5969 = vadd.f32 0.0, %v5968
    %v5970 = vpop.f32.mrb[0].mxu0
    %v5971 = vpop.f32.mrb[0].mxu0
    %v5972 = vadd.f32 0.0, %v5971
    %v5973 = vpop.f32.mrb[0].mxu0
    %5974 = vmatprep.mubr.bf16.mxu0 0
    %5975 = vmatmul.mubr.bf16.gmra.mrb[0].mxu0 %v5712
    %v5976 = vpop.f32.mrb[0].mxu0
    %v5977 = vadd.f32 0.0, %v5976
    %v5978 = vpop.f32.mrb[0].mxu0
    %v5979 = vpop.f32.mrb[0].mxu0
    %v5980 = vadd.f32 0.0, %v5979
    %v5981 = vpop.f32.mrb[0].mxu0
    %5982 = vmatprep.mubr.bf16.mxu0 0
    %5983 = vmatmul.mubr.bf16.gmra.mrb[0].mxu0 %v5715
    %v5984 = vpop.f32.mrb[0].mxu0
    %v5985 = vadd.f32 0.0, %v5984
    %v5986 = vpop.f32.mrb[0].mxu0
    %v5987 = vpop.f32.mrb[0].mxu0
    %v5988 = vadd.f32 0.0, %v5987
    %v5989 = vpop.f32.mrb[0].mxu0
    %5990 = vmatprep.mubr.bf16.mxu0 0
    %5991 = vmatmul.mubr.bf16.gmra.mrb[0].mxu0 %v5718
    %v5992 = vpop.f32.mrb[0].mxu0
    %v5993 = vadd.f32 0.0, %v5992
    %v5994 = vpop.f32.mrb[0].mxu0
    %v5995 = vpop.f32.mrb[0].mxu0
    %v5996 = vadd.f32 0.0, %v5995
    %v5997 = vpop.f32.mrb[0].mxu0
    %5998 = vmatprep.mubr.bf16.mxu0 0
    %5999 = vmatmul.mubr.bf16.gmra.mrb[0].mxu0 %v5721
    %v6000 = vpop.f32.mrb[0].mxu0
    %v6001 = vadd.f32 0.0, %v6000
    %v6002 = vpop.f32.mrb[0].mxu0
    %v6003 = vpop.f32.mrb[0].mxu0
    %v6004 = vadd.f32 0.0, %v6003
    %v6005 = vpop.f32.mrb[0].mxu0
    %6006 = vmatprep.mubr.bf16.mxu0 0
    %6007 = vmatmul.mubr.bf16.gmra.mrb[0].mxu0 %v5724
    %v6008 = vpop.f32.mrb[0].mxu0
    %v6009 = vadd.f32 0.0, %v6008
    %v6010 = vpop.f32.mrb[0].mxu0
    %v6011 = vpop.f32.mrb[0].mxu0
    %v6012 = vadd.f32 0.0, %v6011
    %v6013 = vpop.f32.mrb[0].mxu0
    %6014 = vdwg.mxu0
    %v6015 = vadd.f32 %v4597, %v5761
    %v6016 = vadd.f32 %v4598, %v5764
    %v6017 = vadd.f32 %v4599, %v5769
    %v6018 = vadd.f32 %v4600, %v5772
    %v6019 = vadd.f32 %v4601, %v5777
    %v6020 = vadd.f32 %v4602, %v5780
    %v6021 = vadd.f32 %v4603, %v5785
    %v6022 = vadd.f32 %v4604, %v5788
    %v6023 = vadd.f32 %v4605, %v5793
    %v6024 = vadd.f32 %v4606, %v5796
    %v6025 = vadd.f32 %v4607, %v5801
    %v6026 = vadd.f32 %v4608, %v5804
    %v6027 = vadd.f32 %v4609, %v5809
    %v6028 = vadd.f32 %v4610, %v5812
    %v6029 = vadd.f32 %v4611, %v5817
    %v6030 = vadd.f32 %v4612, %v5820
    %v6031 = vadd.f32 %v4613, %v5825
    %v6032 = vadd.f32 %v4614, %v5828
    %v6033 = vadd.f32 %v4615, %v5833
    %v6034 = vadd.f32 %v4616, %v5836
    %v6035 = vadd.f32 %v4617, %v5841
    %v6036 = vadd.f32 %v4618, %v5844
    %v6037 = vadd.f32 %v4619, %v5849
    %v6038 = vadd.f32 %v4620, %v5852
    %v6039 = vadd.f32 %v4621, %v5857
    %v6040 = vadd.f32 %v4622, %v5860
    %v6041 = vadd.f32 %v4623, %v5865
    %v6042 = vadd.f32 %v4624, %v5868
    %v6043 = vadd.f32 %v4625, %v5873
    %v6044 = vadd.f32 %v4626, %v5876
    %v6045 = vadd.f32 %v4627, %v5881
    %v6046 = vadd.f32 %v4628, %v5884
    %v6047 = vadd.f32 %v4629, %v5889
    %v6048 = vadd.f32 %v4630, %v5892
    %v6049 = vadd.f32 %v4631, %v5897
    %v6050 = vadd.f32 %v4632, %v5900
    %v6051 = vadd.f32 %v4633, %v5905
    %v6052 = vadd.f32 %v4634, %v5908
    %v6053 = vadd.f32 %v4635, %v5913
    %v6054 = vadd.f32 %v4636, %v5916
    %v6055 = vadd.f32 %v4637, %v5921
    %v6056 = vadd.f32 %v4638, %v5924
    %v6057 = vadd.f32 %v4639, %v5929
    %v6058 = vadd.f32 %v4640, %v5932
    %v6059 = vadd.f32 %v4641, %v5937
    %v6060 = vadd.f32 %v4642, %v5940
    %v6061 = vadd.f32 %v4643, %v5945
    %v6062 = vadd.f32 %v4644, %v5948
    %v6063 = vadd.f32 %v4645, %v5953
    %v6064 = vadd.f32 %v4646, %v5956
    %v6065 = vadd.f32 %v4647, %v5961
    %v6066 = vadd.f32 %v4648, %v5964
    %v6067 = vadd.f32 %v4649, %v5969
    %v6068 = vadd.f32 %v4650, %v5972
    %v6069 = vadd.f32 %v4651, %v5977
    %v6070 = vadd.f32 %v4652, %v5980
    %v6071 = vadd.f32 %v4653, %v5985
    %v6072 = vadd.f32 %v4654, %v5988
    %v6073 = vadd.f32 %v4655, %v5993
    %v6074 = vadd.f32 %v4656, %v5996
    %v6075 = vadd.f32 %v4657, %v6001
    %v6076 = vadd.f32 %v4658, %v6004
    %v6077 = vadd.f32 %v4659, %v6009
    %v6078 = vadd.f32 %v4660, %v6012
    %v6079 = vld [vmem:[%s3978] sm:$0xe]
    %v6080 = vld [vmem:[%s3978 + $0xc] sm:$0xe]
    %v6081 = vld [vmem:[%s3978 + $0x18] sm:$0xe]
    %v6082 = vld [vmem:[%s3978 + $0x24] sm:$0xe]
    %v6083 = vld [vmem:[%s3978 + $0x30] sm:$0xe]
    %v6084 = vld [vmem:[%s3978 + $0x3c] sm:$0xe]
    %v6085 = vld [vmem:[%s3978 + $0x48] sm:$0xe]
    %v6086 = vld [vmem:[%s3978 + $0x54] sm:$0xe]
    %v6087 = vld [vmem:[%s3978 + $0x60] sm:$0xe]
    %v6088 = vld [vmem:[%s3978 + $0x6c] sm:$0xe]
    %v6089 = vld [vmem:[%s3978 + $0x78] sm:$0xe]
    %v6090 = vld [vmem:[%s3978 + $0x84] sm:$0xe]
    %v6091 = vld [vmem:[%s3978 + $0x90] sm:$0xe]
    %v6092 = vld [vmem:[%s3978 + $0x9c] sm:$0xe]
    %v6093 = vld [vmem:[%s3978 + $0xa8] sm:$0xe]
    %v6094 = vld [vmem:[%s3978 + $0xb4] sm:$0xe]
    %v6095 = vld [vmem:[%s3978 + $0xd8] sm:$0xe]
    %v6096 = vld [vmem:[%s3978 + $0xe4] sm:$0xe]
    %v6097 = vld [vmem:[%s3978 + $0xf0] sm:$0xe]
    %v6098 = vld [vmem:[%s3978 + $0xfc] sm:$0xe]
    %v6099 = vld [vmem:[%s3978 + $0x108] sm:$0xe]
    %v6100 = vld [vmem:[%s3978 + $0x114] sm:$0xe]
    %v6101 = vld [vmem:[%s3978 + $0x120] sm:$0xe]
    %v6102 = vld [vmem:[%s3978 + $0x12c] sm:$0xe]
    %v6103 = vld [vmem:[%s3978 + $0x138] sm:$0xe]
    %v6104 = vld [vmem:[%s3978 + $0x144] sm:$0xe]
    %v6105 = vld [vmem:[%s3978 + $0x150] sm:$0xe]
    %v6106 = vld [vmem:[%s3978 + $0x15c] sm:$0xe]
    %v6107 = vld [vmem:[%s3978 + $0x168] sm:$0xe]
    %v6108 = vld [vmem:[%s3978 + $0x174] sm:$0xe]
    %v6109 = vld [vmem:[%s3978 + $0x180] sm:$0xe]
    %v6110 = vld [vmem:[%s3978 + $0x18c] sm:$0xe]
    %v6207 = vrot.slane %v6079, 5
    %v6208 = vrot.slane %v6207, 4
    %v6209 = vrot.slane %v4662, 5
    %v6210 = vsel %vm3199, %v6208, %v6209
    %v6211 = vrot.slane %v6209, 4
    %v6212 = vrot.slane %v4663, 5
    %v6213 = vsel %vm3199, %v6211, %v6212
    %v6214 = vrot.slane %v6080, 5
    %v6215 = vrot.slane %v6214, 4
    %v6216 = vrot.slane %v4665, 5
    %v6217 = vsel %vm3199, %v6215, %v6216
    %v6218 = vrot.slane %v6216, 4
    %v6219 = vrot.slane %v4666, 5
    %v6220 = vsel %vm3199, %v6218, %v6219
    %v6221 = vrot.slane %v6081, 5
    %v6222 = vrot.slane %v6221, 4
    %v6223 = vrot.slane %v4668, 5
    %v6224 = vsel %vm3199, %v6222, %v6223
    %v6225 = vrot.slane %v6223, 4
    %v6226 = vrot.slane %v4669, 5
    %v6227 = vsel %vm3199, %v6225, %v6226
    %v6228 = vrot.slane %v6082, 5
    %v6229 = vrot.slane %v6228, 4
    %v6230 = vrot.slane %v4671, 5
    %v6231 = vsel %vm3199, %v6229, %v6230
    %v6232 = vrot.slane %v6230, 4
    %v6233 = vrot.slane %v4672, 5
    %v6234 = vsel %vm3199, %v6232, %v6233
    %v6235 = vrot.slane %v6083, 5
    %v6236 = vrot.slane %v6235, 4
    %v6237 = vrot.slane %v4674, 5
    %v6238 = vsel %vm3199, %v6236, %v6237
    %v6239 = vrot.slane %v6237, 4
    %v6240 = vrot.slane %v4675, 5
    %v6241 = vsel %vm3199, %v6239, %v6240
    %v6242 = vrot.slane %v6084, 5
    %v6243 = vrot.slane %v6242, 4
    %v6244 = vrot.slane %v4677, 5
    %v6245 = vsel %vm3199, %v6243, %v6244
    %v6246 = vrot.slane %v6244, 4
    %v6247 = vrot.slane %v4678, 5
    %v6248 = vsel %vm3199, %v6246, %v6247
    %v6249 = vrot.slane %v6085, 5
    %v6250 = vrot.slane %v6249, 4
    %v6251 = vrot.slane %v4680, 5
    %v6252 = vsel %vm3199, %v6250, %v6251
    %v6253 = vrot.slane %v6251, 4
    %v6254 = vrot.slane %v4681, 5
    %v6255 = vsel %vm3199, %v6253, %v6254
    %v6256 = vrot.slane %v6086, 5
    %v6257 = vrot.slane %v6256, 4
    %v6258 = vrot.slane %v4683, 5
    %v6259 = vsel %vm3199, %v6257, %v6258
    %v6260 = vrot.slane %v6258, 4
    %v6261 = vrot.slane %v4684, 5
    %v6262 = vsel %vm3199, %v6260, %v6261
    %v6263 = vrot.slane %v6087, 5
    %v6264 = vrot.slane %v6263, 4
    %v6265 = vrot.slane %v4686, 5
    %v6266 = vsel %vm3199, %v6264, %v6265
    %v6267 = vrot.slane %v6265, 4
    %v6268 = vrot.slane %v4687, 5
    %v6269 = vsel %vm3199, %v6267, %v6268
    %v6270 = vrot.slane %v6088, 5
    %v6271 = vrot.slane %v6270, 4
    %v6272 = vrot.slane %v4689, 5
    %v6273 = vsel %vm3199, %v6271, %v6272
    %v6274 = vrot.slane %v6272, 4
    %v6275 = vrot.slane %v4690, 5
    %v6276 = vsel %vm3199, %v6274, %v6275
    %v6277 = vrot.slane %v6089, 5
    %v6278 = vrot.slane %v6277, 4
    %v6279 = vrot.slane %v4692, 5
    %v6280 = vsel %vm3199, %v6278, %v6279
    %v6281 = vrot.slane %v6279, 4
    %v6282 = vrot.slane %v4693, 5
    %v6283 = vsel %vm3199, %v6281, %v6282
    %v6284 = vrot.slane %v6090, 5
    %v6285 = vrot.slane %v6284, 4
    %v6286 = vrot.slane %v4695, 5
    %v6287 = vsel %vm3199, %v6285, %v6286
    %v6288 = vrot.slane %v6286, 4
    %v6289 = vrot.slane %v4696, 5
    %v6290 = vsel %vm3199, %v6288, %v6289
    %v6291 = vrot.slane %v6091, 5
    %v6292 = vrot.slane %v6291, 4
    %v6293 = vrot.slane %v4698, 5
    %v6294 = vsel %vm3199, %v6292, %v6293
    %v6295 = vrot.slane %v6293, 4
    %v6296 = vrot.slane %v4699, 5
    %v6297 = vsel %vm3199, %v6295, %v6296
    %v6298 = vrot.slane %v6092, 5
    %v6299 = vrot.slane %v6298, 4
    %v6300 = vrot.slane %v4701, 5
    %v6301 = vsel %vm3199, %v6299, %v6300
    %v6302 = vrot.slane %v6300, 4
    %v6303 = vrot.slane %v4702, 5
    %v6304 = vsel %vm3199, %v6302, %v6303
    %v6305 = vrot.slane %v6093, 5
    %v6306 = vrot.slane %v6305, 4
    %v6307 = vrot.slane %v4704, 5
    %v6308 = vsel %vm3199, %v6306, %v6307
    %v6309 = vrot.slane %v6307, 4
    %v6310 = vrot.slane %v4705, 5
    %v6311 = vsel %vm3199, %v6309, %v6310
    %v6312 = vrot.slane %v6094, 5
    %v6313 = vrot.slane %v6312, 4
    %v6314 = vrot.slane %v4707, 5
    %v6315 = vsel %vm3199, %v6313, %v6314
    %v6316 = vrot.slane %v6314, 4
    %v6317 = vrot.slane %v4708, 5
    %v6318 = vsel %vm3199, %v6316, %v6317
    %v6319 = vrot.slane %v6095, 5
    %v6320 = vrot.slane %v6319, 4
    %v6321 = vrot.slane %v4710, 5
    %v6322 = vsel %vm3199, %v6320, %v6321
    %v6323 = vrot.slane %v6321, 4
    %v6324 = vrot.slane %v4711, 5
    %v6325 = vsel %vm3199, %v6323, %v6324
    %v6326 = vrot.slane %v6096, 5
    %v6327 = vrot.slane %v6326, 4
    %v6328 = vrot.slane %v4713, 5
    %v6329 = vsel %vm3199, %v6327, %v6328
    %v6330 = vrot.slane %v6328, 4
    %v6331 = vrot.slane %v4714, 5
    %v6332 = vsel %vm3199, %v6330, %v6331
    %v6333 = vrot.slane %v6097, 5
    %v6334 = vrot.slane %v6333, 4
    %v6335 = vrot.slane %v4716, 5
    %v6336 = vsel %vm3199, %v6334, %v6335
    %v6337 = vrot.slane %v6335, 4
    %v6338 = vrot.slane %v4717, 5
    %v6339 = vsel %vm3199, %v6337, %v6338
    %v6340 = vrot.slane %v6098, 5
    %v6341 = vrot.slane %v6340, 4
    %v6342 = vrot.slane %v4719, 5
    %v6343 = vsel %vm3199, %v6341, %v6342
    %v6344 = vrot.slane %v6342, 4
    %v6345 = vrot.slane %v4720, 5
    %v6346 = vsel %vm3199, %v6344, %v6345
    %v6347 = vrot.slane %v6099, 5
    %v6348 = vrot.slane %v6347, 4
    %v6349 = vrot.slane %v4722, 5
    %v6350 = vsel %vm3199, %v6348, %v6349
    %v6351 = vrot.slane %v6349, 4
    %v6352 = vrot.slane %v4723, 5
    %v6353 = vsel %vm3199, %v6351, %v6352
    %v6354 = vrot.slane %v6100, 5
    %v6355 = vrot.slane %v6354, 4
    %v6356 = vrot.slane %v4725, 5
    %v6357 = vsel %vm3199, %v6355, %v6356
    %v6358 = vrot.slane %v6356, 4
    %v6359 = vrot.slane %v4726, 5
    %v6360 = vsel %vm3199, %v6358, %v6359
    %v6361 = vrot.slane %v6101, 5
    %v6362 = vrot.slane %v6361, 4
    %v6363 = vrot.slane %v4728, 5
    %v6364 = vsel %vm3199, %v6362, %v6363
    %v6365 = vrot.slane %v6363, 4
    %v6366 = vrot.slane %v4729, 5
    %v6367 = vsel %vm3199, %v6365, %v6366
    %v6368 = vrot.slane %v6102, 5
    %v6369 = vrot.slane %v6368, 4
    %v6370 = vrot.slane %v4731, 5
    %v6371 = vsel %vm3199, %v6369, %v6370
    %v6372 = vrot.slane %v6370, 4
    %v6373 = vrot.slane %v4732, 5
    %v6374 = vsel %vm3199, %v6372, %v6373
    %v6375 = vrot.slane %v6103, 5
    %v6376 = vrot.slane %v6375, 4
    %v6377 = vrot.slane %v4734, 5
    %v6378 = vsel %vm3199, %v6376, %v6377
    %v6379 = vrot.slane %v6377, 4
    %v6380 = vrot.slane %v4735, 5
    %v6381 = vsel %vm3199, %v6379, %v6380
    %v6382 = vrot.slane %v6104, 5
    %v6383 = vrot.slane %v6382, 4
    %v6384 = vrot.slane %v4737, 5
    %v6385 = vsel %vm3199, %v6383, %v6384
    %v6386 = vrot.slane %v6384, 4
    %v6387 = vrot.slane %v4738, 5
    %v6388 = vsel %vm3199, %v6386, %v6387
    %v6389 = vrot.slane %v6105, 5
    %v6390 = vrot.slane %v6389, 4
    %v6391 = vrot.slane %v4740, 5
    %v6392 = vsel %vm3199, %v6390, %v6391
    %v6393 = vrot.slane %v6391, 4
    %v6394 = vrot.slane %v4741, 5
    %v6395 = vsel %vm3199, %v6393, %v6394
    %v6396 = vrot.slane %v6106, 5
    %v6397 = vrot.slane %v6396, 4
    %v6398 = vrot.slane %v4743, 5
    %v6399 = vsel %vm3199, %v6397, %v6398
    %v6400 = vrot.slane %v6398, 4
    %v6401 = vrot.slane %v4744, 5
    %v6402 = vsel %vm3199, %v6400, %v6401
    %v6403 = vrot.slane %v6107, 5
    %v6404 = vrot.slane %v6403, 4
    %v6405 = vrot.slane %v4746, 5
    %v6406 = vsel %vm3199, %v6404, %v6405
    %v6407 = vrot.slane %v6405, 4
    %v6408 = vrot.slane %v4747, 5
    %v6409 = vsel %vm3199, %v6407, %v6408
    %v6410 = vrot.slane %v6108, 5
    %v6411 = vrot.slane %v6410, 4
    %v6412 = vrot.slane %v4749, 5
    %v6413 = vsel %vm3199, %v6411, %v6412
    %v6414 = vrot.slane %v6412, 4
    %v6415 = vrot.slane %v4750, 5
    %v6416 = vsel %vm3199, %v6414, %v6415
    %v6417 = vrot.slane %v6109, 5
    %v6418 = vrot.slane %v6417, 4
    %v6419 = vrot.slane %v4752, 5
    %v6420 = vsel %vm3199, %v6418, %v6419
    %v6421 = vrot.slane %v6419, 4
    %v6422 = vrot.slane %v4753, 5
    %v6423 = vsel %vm3199, %v6421, %v6422
    %v6424 = vrot.slane %v6110, 5
    %v6425 = vrot.slane %v6424, 4
    %v6426 = vrot.slane %v4755, 5
    %v6427 = vsel %vm3199, %v6425, %v6426
    %v6428 = vrot.slane %v6426, 4
    %v6429 = vrot.slane %v4756, 5
    %v6430 = vsel %vm3199, %v6428, %v6429
    %s6431 = scalar_lea.vmem [#allocation6], 40
    %v6432 = vld [vmem:[%s6431] sm:$0xf]
    %v6433 = vld [vmem:[%s6431 + $0x4] sm:$0xf]
    %v6434 = vunpack.c.l.b16 %v6210
    %v6435 = vunpack.c.l.b16 %v6213
    %v6436 = vunpack.c.l.b16 %v6217
    %v6437 = vunpack.c.l.b16 %v6220
    %v6438 = vunpack.c.l.b16 %v6224
    %v6439 = vunpack.c.l.b16 %v6227
    %v6440 = vunpack.c.l.b16 %v6231
    %v6441 = vunpack.c.l.b16 %v6234
    %v6442 = vunpack.c.l.b16 %v6238
    %v6443 = vunpack.c.l.b16 %v6241
    %v6444 = vunpack.c.l.b16 %v6245
    %v6445 = vunpack.c.l.b16 %v6248
    %v6446 = vunpack.c.l.b16 %v6252
    %v6447 = vunpack.c.l.b16 %v6255
    %v6448 = vunpack.c.l.b16 %v6259
    %v6449 = vunpack.c.l.b16 %v6262
    %v6450 = vunpack.c.l.b16 %v6266
    %v6451 = vunpack.c.l.b16 %v6269
    %v6452 = vunpack.c.l.b16 %v6273
    %v6453 = vunpack.c.l.b16 %v6276
    %v6454 = vunpack.c.l.b16 %v6280
    %v6455 = vunpack.c.l.b16 %v6283
    %v6456 = vunpack.c.l.b16 %v6287
    %v6457 = vunpack.c.l.b16 %v6290
    %v6458 = vunpack.c.l.b16 %v6294
    %v6459 = vunpack.c.l.b16 %v6297
    %v6460 = vunpack.c.l.b16 %v6301
    %v6461 = vunpack.c.l.b16 %v6304
    %v6462 = vunpack.c.l.b16 %v6308
    %v6463 = vunpack.c.l.b16 %v6311
    %v6464 = vunpack.c.l.b16 %v6315
    %v6465 = vunpack.c.l.b16 %v6318
    %v6466 = vunpack.c.l.b16 %v6322
    %v6467 = vunpack.c.l.b16 %v6325
    %v6468 = vunpack.c.l.b16 %v6329
    %v6469 = vunpack.c.l.b16 %v6332
    %v6470 = vunpack.c.l.b16 %v6336
    %v6471 = vunpack.c.l.b16 %v6339
    %v6472 = vunpack.c.l.b16 %v6343
    %v6473 = vunpack.c.l.b16 %v6346
    %v6474 = vunpack.c.l.b16 %v6350
    %v6475 = vunpack.c.l.b16 %v6353
    %v6476 = vunpack.c.l.b16 %v6357
    %v6477 = vunpack.c.l.b16 %v6360
    %v6478 = vunpack.c.l.b16 %v6364
    %v6479 = vunpack.c.l.b16 %v6367
    %v6480 = vunpack.c.l.b16 %v6371
    %v6481 = vunpack.c.l.b16 %v6374
    %v6482 = vunpack.c.l.b16 %v6378
    %v6483 = vunpack.c.l.b16 %v6381
    %v6484 = vunpack.c.l.b16 %v6385
    %v6485 = vunpack.c.l.b16 %v6388
    %v6486 = vunpack.c.l.b16 %v6392
    %v6487 = vunpack.c.l.b16 %v6395
    %v6488 = vunpack.c.l.b16 %v6399
    %v6489 = vunpack.c.l.b16 %v6402
    %v6490 = vunpack.c.l.b16 %v6406
    %v6491 = vunpack.c.l.b16 %v6409
    %v6492 = vunpack.c.l.b16 %v6413
    %v6493 = vunpack.c.l.b16 %v6416
    %v6494 = vunpack.c.l.b16 %v6420
    %v6495 = vunpack.c.l.b16 %v6423
    %v6496 = vunpack.c.l.b16 %v6427
    %v6497 = vunpack.c.l.b16 %v6430
    %v6498 = vpack.c.b16 %v6435, %v6434
    %v6499 = vpack.c.b16 %v6437, %v6436
    %v6500 = vpack.c.b16 %v6439, %v6438
    %v6501 = vpack.c.b16 %v6441, %v6440
    %v6502 = vpack.c.b16 %v6443, %v6442
    %v6503 = vpack.c.b16 %v6445, %v6444
    %v6504 = vpack.c.b16 %v6447, %v6446
    %v6505 = vpack.c.b16 %v6449, %v6448
    %v6506 = vpack.c.b16 %v6451, %v6450
    %v6507 = vpack.c.b16 %v6453, %v6452
    %v6508 = vpack.c.b16 %v6455, %v6454
    %v6509 = vpack.c.b16 %v6457, %v6456
    %v6510 = vpack.c.b16 %v6459, %v6458
    %v6511 = vpack.c.b16 %v6461, %v6460
    %v6512 = vpack.c.b16 %v6463, %v6462
    %v6513 = vpack.c.b16 %v6465, %v6464
    %v6514 = vpack.c.b16 %v6467, %v6466
    %v6515 = vpack.c.b16 %v6469, %v6468
    %v6516 = vpack.c.b16 %v6471, %v6470
    %v6517 = vpack.c.b16 %v6473, %v6472
    %v6518 = vpack.c.b16 %v6475, %v6474
    %v6519 = vpack.c.b16 %v6477, %v6476
    %v6520 = vpack.c.b16 %v6479, %v6478
    %v6521 = vpack.c.b16 %v6481, %v6480
    %v6522 = vpack.c.b16 %v6483, %v6482
    %v6523 = vpack.c.b16 %v6485, %v6484
    %v6524 = vpack.c.b16 %v6487, %v6486
    %v6525 = vpack.c.b16 %v6489, %v6488
    %v6526 = vpack.c.b16 %v6491, %v6490
    %v6527 = vpack.c.b16 %v6493, %v6492
    %v6528 = vpack.c.b16 %v6495, %v6494
    %v6529 = vpack.c.b16 %v6497, %v6496
    %v6532 = vunpack.c.l.b16 %v6432
    %v6533 = vunpack.c.l.b16 %v6433
    %v6534 = vpack.c.b16 %v6533, %v6532
    %v6537 = vsel %vm2164, %v6498, 0
    %v6540 = vsel %vm2164, %v6499, 0
    %v6543 = vsel %vm2164, %v6500, 0
    %v6546 = vsel %vm2164, %v6501, 0
    %v6549 = vsel %vm2164, %v6502, 0
    %v6552 = vsel %vm2164, %v6503, 0
    %v6555 = vsel %vm2164, %v6504, 0
    %v6558 = vsel %vm2164, %v6505, 0
    %v6561 = vsel %vm2164, %v6506, 0
    %v6564 = vsel %vm2164, %v6507, 0
    %v6567 = vsel %vm2164, %v6508, 0
    %v6570 = vsel %vm2164, %v6509, 0
    %v6573 = vsel %vm2164, %v6510, 0
    %v6576 = vsel %vm2164, %v6511, 0
    %v6579 = vsel %vm2164, %v6512, 0
    %v6582 = vsel %vm2164, %v6513, 0
    %v6585 = vsel %vm2164, %v6514, 0
    %v6588 = vsel %vm2164, %v6515, 0
    %v6591 = vsel %vm2164, %v6516, 0
    %v6594 = vsel %vm2164, %v6517, 0
    %v6597 = vsel %vm2164, %v6518, 0
    %v6600 = vsel %vm2164, %v6519, 0
    %v6603 = vsel %vm2164, %v6520, 0
    %v6606 = vsel %vm2164, %v6521, 0
    %v6609 = vsel %vm2164, %v6522, 0
    %v6612 = vsel %vm2164, %v6523, 0
    %v6615 = vsel %vm2164, %v6524, 0
    %v6618 = vsel %vm2164, %v6525, 0
    %v6621 = vsel %vm2164, %v6526, 0
    %v6624 = vsel %vm2164, %v6527, 0
    %v6627 = vsel %vm2164, %v6528, 0
    %v6630 = vsel %vm2164, %v6529, 0
    %6632 = vmatprep.subr.bf16.mxu0 0
    %6633 = vmatpush1.bf16.msra.mxu0 %v6534
    %6634 = vmatprep.subr.bf16.mxu0 0
    %6635 = vmatpush1.bf16.msra.mxu0 0
    %6636 = vmatprep.subr.bf16.mxu0 0
    %6637 = vmatpush1.bf16.msra.mxu0 0
    %6638 = vmatprep.subr.bf16.mxu0 0
    %6639 = vmatpush1.bf16.msra.mxu0 0
    %6640 = vmatprep.subr.bf16.mxu0 0
    %6641 = vmatpush1.bf16.msra.mxu0 0
    %6642 = vmatprep.subr.bf16.mxu0 0
    %6643 = vmatpush1.bf16.msra.mxu0 0
    %6644 = vmatprep.subr.bf16.mxu0 0
    %6645 = vmatpush1.bf16.msra.mxu0 0
    %6646 = vmatprep.subr.bf16.mxu0 0
    %6647 = vmatpush1.bf16.msra.mxu0 0
    %6648 = vmatprep.subr.bf16.mxu0 0
    %6649 = vmatpush1.bf16.msra.mxu0 0
    %6650 = vmatprep.subr.bf16.mxu0 0
    %6651 = vmatpush1.bf16.msra.mxu0 0
    %6652 = vmatprep.subr.bf16.mxu0 0
    %6653 = vmatpush1.bf16.msra.mxu0 0
    %6654 = vmatprep.subr.bf16.mxu0 0
    %6655 = vmatpush1.bf16.msra.mxu0 0
    %6656 = vmatprep.subr.bf16.mxu0 0
    %6657 = vmatpush1.bf16.msra.mxu0 0
    %6658 = vmatprep.subr.bf16.mxu0 0
    %6659 = vmatpush1.bf16.msra.mxu0 0
    %6660 = vmatprep.subr.bf16.mxu0 0
    %6661 = vmatpush1.bf16.msra.mxu0 0
    %6662 = vmatprep.subr.bf16.mxu0 0
    %6663 = vmatpush1.bf16.msra.mxu0 0
    %6664 = vmatprep.mubr.bf16.mxu0 0
    %6665 = vmatmul.mubr.bf16.gmra.mrb[0].mxu0 %v6537
    %v6666 = vpop.f32.mrb[0].mxu0
    %v6667 = vadd.f32 0.0, %v6666
    %v6668 = vpop.f32.mrb[0].mxu0
    %v6669 = vpop.f32.mrb[0].mxu0
    %v6670 = vadd.f32 0.0, %v6669
    %v6671 = vpop.f32.mrb[0].mxu0
    %6672 = vmatprep.mubr.bf16.mxu0 0
    %6673 = vmatmul.mubr.bf16.gmra.mrb[0].mxu0 %v6540
    %v6674 = vpop.f32.mrb[0].mxu0
    %v6675 = vadd.f32 0.0, %v6674
    %v6676 = vpop.f32.mrb[0].mxu0
    %v6677 = vpop.f32.mrb[0].mxu0
    %v6678 = vadd.f32 0.0, %v6677
    %v6679 = vpop.f32.mrb[0].mxu0
    %6680 = vmatprep.mubr.bf16.mxu0 0
    %6681 = vmatmul.mubr.bf16.gmra.mrb[0].mxu0 %v6543
    %v6682 = vpop.f32.mrb[0].mxu0
    %v6683 = vadd.f32 0.0, %v6682
    %v6684 = vpop.f32.mrb[0].mxu0
    %v6685 = vpop.f32.mrb[0].mxu0
    %v6686 = vadd.f32 0.0, %v6685
    %v6687 = vpop.f32.mrb[0].mxu0
    %6688 = vmatprep.mubr.bf16.mxu0 0
    %6689 = vmatmul.mubr.bf16.gmra.mrb[0].mxu0 %v6546
    %v6690 = vpop.f32.mrb[0].mxu0
    %v6691 = vadd.f32 0.0, %v6690
    %v6692 = vpop.f32.mrb[0].mxu0
    %v6693 = vpop.f32.mrb[0].mxu0
    %v6694 = vadd.f32 0.0, %v6693
    %v6695 = vpop.f32.mrb[0].mxu0
    %6696 = vmatprep.mubr.bf16.mxu0 0
    %6697 = vmatmul.mubr.bf16.gmra.mrb[0].mxu0 %v6549
    %v6698 = vpop.f32.mrb[0].mxu0
    %v6699 = vadd.f32 0.0, %v6698
    %v6700 = vpop.f32.mrb[0].mxu0
    %v6701 = vpop.f32.mrb[0].mxu0
    %v6702 = vadd.f32 0.0, %v6701
    %v6703 = vpop.f32.mrb[0].mxu0
    %6704 = vmatprep.mubr.bf16.mxu0 0
    %6705 = vmatmul.mubr.bf16.gmra.mrb[0].mxu0 %v6552
    %v6706 = vpop.f32.mrb[0].mxu0
    %v6707 = vadd.f32 0.0, %v6706
    %v6708 = vpop.f32.mrb[0].mxu0
    %v6709 = vpop.f32.mrb[0].mxu0
    %v6710 = vadd.f32 0.0, %v6709
    %v6711 = vpop.f32.mrb[0].mxu0
    %6712 = vmatprep.mubr.bf16.mxu0 0
    %6713 = vmatmul.mubr.bf16.gmra.mrb[0].mxu0 %v6555
    %v6714 = vpop.f32.mrb[0].mxu0
    %v6715 = vadd.f32 0.0, %v6714
    %v6716 = vpop.f32.mrb[0].mxu0
    %v6717 = vpop.f32.mrb[0].mxu0
    %v6718 = vadd.f32 0.0, %v6717
    %v6719 = vpop.f32.mrb[0].mxu0
    %6720 = vmatprep.mubr.bf16.mxu0 0
    %6721 = vmatmul.mubr.bf16.gmra.mrb[0].mxu0 %v6558
    %v6722 = vpop.f32.mrb[0].mxu0
    %v6723 = vadd.f32 0.0, %v6722
    %v6724 = vpop.f32.mrb[0].mxu0
    %v6725 = vpop.f32.mrb[0].mxu0
    %v6726 = vadd.f32 0.0, %v6725
    %v6727 = vpop.f32.mrb[0].mxu0
    %6728 = vmatprep.mubr.bf16.mxu0 0
    %6729 = vmatmul.mubr.bf16.gmra.mrb[0].mxu0 %v6561
    %v6730 = vpop.f32.mrb[0].mxu0
    %v6731 = vadd.f32 0.0, %v6730
    %v6732 = vpop.f32.mrb[0].mxu0
    %v6733 = vpop.f32.mrb[0].mxu0
    %v6734 = vadd.f32 0.0, %v6733
    %v6735 = vpop.f32.mrb[0].mxu0
    %6736 = vmatprep.mubr.bf16.mxu0 0
    %6737 = vmatmul.mubr.bf16.gmra.mrb[0].mxu0 %v6564
    %v6738 = vpop.f32.mrb[0].mxu0
    %v6739 = vadd.f32 0.0, %v6738
    %v6740 = vpop.f32.mrb[0].mxu0
    %v6741 = vpop.f32.mrb[0].mxu0
    %v6742 = vadd.f32 0.0, %v6741
    %v6743 = vpop.f32.mrb[0].mxu0
    %6744 = vmatprep.mubr.bf16.mxu0 0
    %6745 = vmatmul.mubr.bf16.gmra.mrb[0].mxu0 %v6567
    %v6746 = vpop.f32.mrb[0].mxu0
    %v6747 = vadd.f32 0.0, %v6746
    %v6748 = vpop.f32.mrb[0].mxu0
    %v6749 = vpop.f32.mrb[0].mxu0
    %v6750 = vadd.f32 0.0, %v6749
    %v6751 = vpop.f32.mrb[0].mxu0
    %6752 = vmatprep.mubr.bf16.mxu0 0
    %6753 = vmatmul.mubr.bf16.gmra.mrb[0].mxu0 %v6570
    %v6754 = vpop.f32.mrb[0].mxu0
    %v6755 = vadd.f32 0.0, %v6754
    %v6756 = vpop.f32.mrb[0].mxu0
    %v6757 = vpop.f32.mrb[0].mxu0
    %v6758 = vadd.f32 0.0, %v6757
    %v6759 = vpop.f32.mrb[0].mxu0
    %6760 = vmatprep.mubr.bf16.mxu0 0
    %6761 = vmatmul.mubr.bf16.gmra.mrb[0].mxu0 %v6573
    %v6762 = vpop.f32.mrb[0].mxu0
    %v6763 = vadd.f32 0.0, %v6762
    %v6764 = vpop.f32.mrb[0].mxu0
    %v6765 = vpop.f32.mrb[0].mxu0
    %v6766 = vadd.f32 0.0, %v6765
    %v6767 = vpop.f32.mrb[0].mxu0
    %6768 = vmatprep.mubr.bf16.mxu0 0
    %6769 = vmatmul.mubr.bf16.gmra.mrb[0].mxu0 %v6576
    %v6770 = vpop.f32.mrb[0].mxu0
    %v6771 = vadd.f32 0.0, %v6770
    %v6772 = vpop.f32.mrb[0].mxu0
    %v6773 = vpop.f32.mrb[0].mxu0
    %v6774 = vadd.f32 0.0, %v6773
    %v6775 = vpop.f32.mrb[0].mxu0
    %6776 = vmatprep.mubr.bf16.mxu0 0
    %6777 = vmatmul.mubr.bf16.gmra.mrb[0].mxu0 %v6579
    %v6778 = vpop.f32.mrb[0].mxu0
    %v6779 = vadd.f32 0.0, %v6778
    %v6780 = vpop.f32.mrb[0].mxu0
    %v6781 = vpop.f32.mrb[0].mxu0
    %v6782 = vadd.f32 0.0, %v6781
    %v6783 = vpop.f32.mrb[0].mxu0
    %6784 = vmatprep.mubr.bf16.mxu0 0
    %6785 = vmatmul.mubr.bf16.gmra.mrb[0].mxu0 %v6582
    %v6786 = vpop.f32.mrb[0].mxu0
    %v6787 = vadd.f32 0.0, %v6786
    %v6788 = vpop.f32.mrb[0].mxu0
    %v6789 = vpop.f32.mrb[0].mxu0
    %v6790 = vadd.f32 0.0, %v6789
    %v6791 = vpop.f32.mrb[0].mxu0
    %6792 = vmatprep.mubr.bf16.mxu0 0
    %6793 = vmatmul.mubr.bf16.gmra.mrb[0].mxu0 %v6585
    %v6794 = vpop.f32.mrb[0].mxu0
    %v6795 = vadd.f32 0.0, %v6794
    %v6796 = vpop.f32.mrb[0].mxu0
    %v6797 = vpop.f32.mrb[0].mxu0
    %v6798 = vadd.f32 0.0, %v6797
    %v6799 = vpop.f32.mrb[0].mxu0
    %6800 = vmatprep.mubr.bf16.mxu0 0
    %6801 = vmatmul.mubr.bf16.gmra.mrb[0].mxu0 %v6588
    %v6802 = vpop.f32.mrb[0].mxu0
    %v6803 = vadd.f32 0.0, %v6802
    %v6804 = vpop.f32.mrb[0].mxu0
    %v6805 = vpop.f32.mrb[0].mxu0
    %v6806 = vadd.f32 0.0, %v6805
    %v6807 = vpop.f32.mrb[0].mxu0
    %6808 = vmatprep.mubr.bf16.mxu0 0
    %6809 = vmatmul.mubr.bf16.gmra.mrb[0].mxu0 %v6591
    %v6810 = vpop.f32.mrb[0].mxu0
    %v6811 = vadd.f32 0.0, %v6810
    %v6812 = vpop.f32.mrb[0].mxu0
    %v6813 = vpop.f32.mrb[0].mxu0
    %v6814 = vadd.f32 0.0, %v6813
    %v6815 = vpop.f32.mrb[0].mxu0
    %6816 = vmatprep.mubr.bf16.mxu0 0
    %6817 = vmatmul.mubr.bf16.gmra.mrb[0].mxu0 %v6594
    %v6818 = vpop.f32.mrb[0].mxu0
    %v6819 = vadd.f32 0.0, %v6818
    %v6820 = vpop.f32.mrb[0].mxu0
    %v6821 = vpop.f32.mrb[0].mxu0
    %v6822 = vadd.f32 0.0, %v6821
    %v6823 = vpop.f32.mrb[0].mxu0
    %6824 = vmatprep.mubr.bf16.mxu0 0
    %6825 = vmatmul.mubr.bf16.gmra.mrb[0].mxu0 %v6597
    %v6826 = vpop.f32.mrb[0].mxu0
    %v6827 = vadd.f32 0.0, %v6826
    %v6828 = vpop.f32.mrb[0].mxu0
    %v6829 = vpop.f32.mrb[0].mxu0
    %v6830 = vadd.f32 0.0, %v6829
    %v6831 = vpop.f32.mrb[0].mxu0
    %6832 = vmatprep.mubr.bf16.mxu0 0
    %6833 = vmatmul.mubr.bf16.gmra.mrb[0].mxu0 %v6600
    %v6834 = vpop.f32.mrb[0].mxu0
    %v6835 = vadd.f32 0.0, %v6834
    %v6836 = vpop.f32.mrb[0].mxu0
    %v6837 = vpop.f32.mrb[0].mxu0
    %v6838 = vadd.f32 0.0, %v6837
    %v6839 = vpop.f32.mrb[0].mxu0
    %6840 = vmatprep.mubr.bf16.mxu0 0
    %6841 = vmatmul.mubr.bf16.gmra.mrb[0].mxu0 %v6603
    %v6842 = vpop.f32.mrb[0].mxu0
    %v6843 = vadd.f32 0.0, %v6842
    %v6844 = vpop.f32.mrb[0].mxu0
    %v6845 = vpop.f32.mrb[0].mxu0
    %v6846 = vadd.f32 0.0, %v6845
    %v6847 = vpop.f32.mrb[0].mxu0
    %6848 = vmatprep.mubr.bf16.mxu0 0
    %6849 = vmatmul.mubr.bf16.gmra.mrb[0].mxu0 %v6606
    %v6850 = vpop.f32.mrb[0].mxu0
    %v6851 = vadd.f32 0.0, %v6850
    %v6852 = vpop.f32.mrb[0].mxu0
    %v6853 = vpop.f32.mrb[0].mxu0
    %v6854 = vadd.f32 0.0, %v6853
    %v6855 = vpop.f32.mrb[0].mxu0
    %6856 = vmatprep.mubr.bf16.mxu0 0
    %6857 = vmatmul.mubr.bf16.gmra.mrb[0].mxu0 %v6609
    %v6858 = vpop.f32.mrb[0].mxu0
    %v6859 = vadd.f32 0.0, %v6858
    %v6860 = vpop.f32.mrb[0].mxu0
    %v6861 = vpop.f32.mrb[0].mxu0
    %v6862 = vadd.f32 0.0, %v6861
    %v6863 = vpop.f32.mrb[0].mxu0
    %6864 = vmatprep.mubr.bf16.mxu0 0
    %6865 = vmatmul.mubr.bf16.gmra.mrb[0].mxu0 %v6612
    %v6866 = vpop.f32.mrb[0].mxu0
    %v6867 = vadd.f32 0.0, %v6866
    %v6868 = vpop.f32.mrb[0].mxu0
    %v6869 = vpop.f32.mrb[0].mxu0
    %v6870 = vadd.f32 0.0, %v6869
    %v6871 = vpop.f32.mrb[0].mxu0
    %6872 = vmatprep.mubr.bf16.mxu0 0
    %6873 = vmatmul.mubr.bf16.gmra.mrb[0].mxu0 %v6615
    %v6874 = vpop.f32.mrb[0].mxu0
    %v6875 = vadd.f32 0.0, %v6874
    %v6876 = vpop.f32.mrb[0].mxu0
    %v6877 = vpop.f32.mrb[0].mxu0
    %v6878 = vadd.f32 0.0, %v6877
    %v6879 = vpop.f32.mrb[0].mxu0
    %6880 = vmatprep.mubr.bf16.mxu0 0
    %6881 = vmatmul.mubr.bf16.gmra.mrb[0].mxu0 %v6618
    %v6882 = vpop.f32.mrb[0].mxu0
    %v6883 = vadd.f32 0.0, %v6882
    %v6884 = vpop.f32.mrb[0].mxu0
    %v6885 = vpop.f32.mrb[0].mxu0
    %v6886 = vadd.f32 0.0, %v6885
    %v6887 = vpop.f32.mrb[0].mxu0
    %6888 = vmatprep.mubr.bf16.mxu0 0
    %6889 = vmatmul.mubr.bf16.gmra.mrb[0].mxu0 %v6621
    %v6890 = vpop.f32.mrb[0].mxu0
    %v6891 = vadd.f32 0.0, %v6890
    %v6892 = vpop.f32.mrb[0].mxu0
    %v6893 = vpop.f32.mrb[0].mxu0
    %v6894 = vadd.f32 0.0, %v6893
    %v6895 = vpop.f32.mrb[0].mxu0
    %6896 = vmatprep.mubr.bf16.mxu0 0
    %6897 = vmatmul.mubr.bf16.gmra.mrb[0].mxu0 %v6624
    %v6898 = vpop.f32.mrb[0].mxu0
    %v6899 = vadd.f32 0.0, %v6898
    %v6900 = vpop.f32.mrb[0].mxu0
    %v6901 = vpop.f32.mrb[0].mxu0
    %v6902 = vadd.f32 0.0, %v6901
    %v6903 = vpop.f32.mrb[0].mxu0
    %6904 = vmatprep.mubr.bf16.mxu0 0
    %6905 = vmatmul.mubr.bf16.gmra.mrb[0].mxu0 %v6627
    %v6906 = vpop.f32.mrb[0].mxu0
    %v6907 = vadd.f32 0.0, %v6906
    %v6908 = vpop.f32.mrb[0].mxu0
    %v6909 = vpop.f32.mrb[0].mxu0
    %v6910 = vadd.f32 0.0, %v6909
    %v6911 = vpop.f32.mrb[0].mxu0
    %6912 = vmatprep.mubr.bf16.mxu0 0
    %6913 = vmatmul.mubr.bf16.gmra.mrb[0].mxu0 %v6630
    %v6914 = vpop.f32.mrb[0].mxu0
    %v6915 = vadd.f32 0.0, %v6914
    %v6916 = vpop.f32.mrb[0].mxu0
    %v6917 = vpop.f32.mrb[0].mxu0
    %v6918 = vadd.f32 0.0, %v6917
    %v6919 = vpop.f32.mrb[0].mxu0
    %6920 = vdwg.mxu0
    %v6921 = vadd.f32 %v6015, %v6667
    %v6922 = vadd.f32 %v6016, %v6670
    %v6923 = vadd.f32 %v6017, %v6675
    %v6924 = vadd.f32 %v6018, %v6678
    %v6925 = vadd.f32 %v6019, %v6683
    %v6926 = vadd.f32 %v6020, %v6686
    %v6927 = vadd.f32 %v6021, %v6691
    %v6928 = vadd.f32 %v6022, %v6694
    %v6929 = vadd.f32 %v6023, %v6699
    %v6930 = vadd.f32 %v6024, %v6702
    %v6931 = vadd.f32 %v6025, %v6707
    %v6932 = vadd.f32 %v6026, %v6710
    %v6933 = vadd.f32 %v6027, %v6715
    %v6934 = vadd.f32 %v6028, %v6718
    %v6935 = vadd.f32 %v6029, %v6723
    %v6936 = vadd.f32 %v6030, %v6726
    %v6937 = vadd.f32 %v6031, %v6731
    %v6938 = vadd.f32 %v6032, %v6734
    %v6939 = vadd.f32 %v6033, %v6739
    %v6940 = vadd.f32 %v6034, %v6742
    %v6941 = vadd.f32 %v6035, %v6747
    %v6942 = vadd.f32 %v6036, %v6750
    %v6943 = vadd.f32 %v6037, %v6755
    %v6944 = vadd.f32 %v6038, %v6758
    %v6945 = vadd.f32 %v6039, %v6763
    %v6946 = vadd.f32 %v6040, %v6766
    %v6947 = vadd.f32 %v6041, %v6771
    %v6948 = vadd.f32 %v6042, %v6774
    %v6949 = vadd.f32 %v6043, %v6779
    %v6950 = vadd.f32 %v6044, %v6782
    %v6951 = vadd.f32 %v6045, %v6787
    %v6952 = vadd.f32 %v6046, %v6790
    %v6953 = vadd.f32 %v6047, %v6795
    %v6954 = vadd.f32 %v6048, %v6798
    %v6955 = vadd.f32 %v6049, %v6803
    %v6956 = vadd.f32 %v6050, %v6806
    %v6957 = vadd.f32 %v6051, %v6811
    %v6958 = vadd.f32 %v6052, %v6814
    %v6959 = vadd.f32 %v6053, %v6819
    %v6960 = vadd.f32 %v6054, %v6822
    %v6961 = vadd.f32 %v6055, %v6827
    %v6962 = vadd.f32 %v6056, %v6830
    %v6963 = vadd.f32 %v6057, %v6835
    %v6964 = vadd.f32 %v6058, %v6838
    %v6965 = vadd.f32 %v6059, %v6843
    %v6966 = vadd.f32 %v6060, %v6846
    %v6967 = vadd.f32 %v6061, %v6851
    %v6968 = vadd.f32 %v6062, %v6854
    %v6969 = vadd.f32 %v6063, %v6859
    %v6970 = vadd.f32 %v6064, %v6862
    %v6971 = vadd.f32 %v6065, %v6867
    %v6972 = vadd.f32 %v6066, %v6870
    %v6973 = vadd.f32 %v6067, %v6875
    %v6974 = vadd.f32 %v6068, %v6878
    %v6975 = vadd.f32 %v6069, %v6883
    %v6976 = vadd.f32 %v6070, %v6886
    %v6977 = vadd.f32 %v6071, %v6891
    %v6978 = vadd.f32 %v6072, %v6894
    %v6979 = vadd.f32 %v6073, %v6899
    %v6980 = vadd.f32 %v6074, %v6902
    %v6981 = vadd.f32 %v6075, %v6907
    %v6982 = vadd.f32 %v6076, %v6910
    %v6983 = vadd.f32 %v6077, %v6915
    %v6984 = vadd.f32 %v6078, %v6918
    %s6985 = scalar_lea.vmem [#allocation2], 24
    %v6986 = vld [vmem:[%s6985] sm:$0xf]
    %v6987 = vld [vmem:[%s6985 + $0x4] sm:$0xf]
    %v6988 = vld [vmem:[%s6985 + $0xc] sm:$0xf]
    %v6989 = vld [vmem:[%s6985 + $0x10] sm:$0xf]
    %v6990 = vld [vmem:[%s6985 + $0x18] sm:$0xf]
    %v6991 = vld [vmem:[%s6985 + $0x1c] sm:$0xf]
    %v6992 = vld [vmem:[%s6985 + $0x24] sm:$0xf]
    %v6993 = vld [vmem:[%s6985 + $0x28] sm:$0xf]
    %v6994 = vld [vmem:[%s6985 + $0x30] sm:$0xf]
    %v6995 = vld [vmem:[%s6985 + $0x34] sm:$0xf]
    %v6996 = vld [vmem:[%s6985 + $0x3c] sm:$0xf]
    %v6997 = vld [vmem:[%s6985 + $0x40] sm:$0xf]
    %v6998 = vld [vmem:[%s6985 + $0x48] sm:$0xf]
    %v6999 = vld [vmem:[%s6985 + $0x4c] sm:$0xf]
    %v7000 = vld [vmem:[%s6985 + $0x54] sm:$0xf]
    %v7001 = vld [vmem:[%s6985 + $0x58] sm:$0xf]
    %v7002 = vld [vmem:[%s6985 + $0x60] sm:$0xf]
    %v7003 = vld [vmem:[%s6985 + $0x64] sm:$0xf]
    %v7004 = vld [vmem:[%s6985 + $0x6c] sm:$0xf]
    %v7005 = vld [vmem:[%s6985 + $0x70] sm:$0xf]
    %v7006 = vld [vmem:[%s6985 + $0x78] sm:$0xf]
    %v7007 = vld [vmem:[%s6985 + $0x7c] sm:$0xf]
    %v7008 = vld [vmem:[%s6985 + $0x84] sm:$0xf]
    %v7009 = vld [vmem:[%s6985 + $0x88] sm:$0xf]
    %v7010 = vld [vmem:[%s6985 + $0x90] sm:$0xf]
    %v7011 = vld [vmem:[%s6985 + $0x94] sm:$0xf]
    %v7012 = vld [vmem:[%s6985 + $0x9c] sm:$0xf]
    %v7013 = vld [vmem:[%s6985 + $0xa0] sm:$0xf]
    %v7014 = vld [vmem:[%s6985 + $0xa8] sm:$0xf]
    %v7015 = vld [vmem:[%s6985 + $0xac] sm:$0xf]
    %v7016 = vld [vmem:[%s6985 + $0xb4] sm:$0xf]
    %v7017 = vld [vmem:[%s6985 + $0xb8] sm:$0xf]
    %v7018 = vld [vmem:[%s6985 + $0xd8] sm:$0xf]
    %v7019 = vld [vmem:[%s6985 + $0xdc] sm:$0xf]
    %v7020 = vld [vmem:[%s6985 + $0xe4] sm:$0xf]
    %v7021 = vld [vmem:[%s6985 + $0xe8] sm:$0xf]
    %v7022 = vld [vmem:[%s6985 + $0xf0] sm:$0xf]
    %v7023 = vld [vmem:[%s6985 + $0xf4] sm:$0xf]
    %v7024 = vld [vmem:[%s6985 + $0xfc] sm:$0xf]
    %v7025 = vld [vmem:[%s6985 + $0x100] sm:$0xf]
    %v7026 = vld [vmem:[%s6985 + $0x108] sm:$0xf]
    %v7027 = vld [vmem:[%s6985 + $0x10c] sm:$0xf]
    %v7028 = vld [vmem:[%s6985 + $0x114] sm:$0xf]
    %v7029 = vld [vmem:[%s6985 + $0x118] sm:$0xf]
    %v7030 = vld [vmem:[%s6985 + $0x120] sm:$0xf]
    %v7031 = vld [vmem:[%s6985 + $0x124] sm:$0xf]
    %v7032 = vld [vmem:[%s6985 + $0x12c] sm:$0xf]
    %v7033 = vld [vmem:[%s6985 + $0x130] sm:$0xf]
    %v7034 = vld [vmem:[%s6985 + $0x138] sm:$0xf]
    %v7035 = vld [vmem:[%s6985 + $0x13c] sm:$0xf]
    %v7036 = vld [vmem:[%s6985 + $0x144] sm:$0xf]
    %v7037 = vld [vmem:[%s6985 + $0x148] sm:$0xf]
    %v7038 = vld [vmem:[%s6985 + $0x150] sm:$0xf]
    %v7039 = vld [vmem:[%s6985 + $0x154] sm:$0xf]
    %v7040 = vld [vmem:[%s6985 + $0x15c] sm:$0xf]
    %v7041 = vld [vmem:[%s6985 + $0x160] sm:$0xf]
    %v7042 = vld [vmem:[%s6985 + $0x168] sm:$0xf]
    %v7043 = vld [vmem:[%s6985 + $0x16c] sm:$0xf]
    %v7044 = vld [vmem:[%s6985 + $0x174] sm:$0xf]
    %v7045 = vld [vmem:[%s6985 + $0x178] sm:$0xf]
    %v7046 = vld [vmem:[%s6985 + $0x180] sm:$0xf]
    %v7047 = vld [vmem:[%s6985 + $0x184] sm:$0xf]
    %v7048 = vld [vmem:[%s6985 + $0x18c] sm:$0xf]
    %v7049 = vld [vmem:[%s6985 + $0x190] sm:$0xf]
    %s7050 = scalar_lea.vmem [#allocation6], 48
    %v7051 = vld [vmem:[%s7050] sm:$0xf]
    %v7052 = vld [vmem:[%s7050 + $0x4] sm:$0xf]
    %v7117 = vunpack.c.l.b16 %v6986
    %v7118 = vunpack.c.l.b16 %v6987
    %v7119 = vunpack.c.l.b16 %v6988
    %v7120 = vunpack.c.l.b16 %v6989
    %v7121 = vunpack.c.l.b16 %v6990
    %v7122 = vunpack.c.l.b16 %v6991
    %v7123 = vunpack.c.l.b16 %v6992
    %v7124 = vunpack.c.l.b16 %v6993
    %v7125 = vunpack.c.l.b16 %v6994
    %v7126 = vunpack.c.l.b16 %v6995
    %v7127 = vunpack.c.l.b16 %v6996
    %v7128 = vunpack.c.l.b16 %v6997
    %v7129 = vunpack.c.l.b16 %v6998
    %v7130 = vunpack.c.l.b16 %v6999
    %v7131 = vunpack.c.l.b16 %v7000
    %v7132 = vunpack.c.l.b16 %v7001
    %v7133 = vunpack.c.l.b16 %v7002
    %v7134 = vunpack.c.l.b16 %v7003
    %v7135 = vunpack.c.l.b16 %v7004
    %v7136 = vunpack.c.l.b16 %v7005
    %v7137 = vunpack.c.l.b16 %v7006
    %v7138 = vunpack.c.l.b16 %v7007
    %v7139 = vunpack.c.l.b16 %v7008
    %v7140 = vunpack.c.l.b16 %v7009
    %v7141 = vunpack.c.l.b16 %v7010
    %v7142 = vunpack.c.l.b16 %v7011
    %v7143 = vunpack.c.l.b16 %v7012
    %v7144 = vunpack.c.l.b16 %v7013
    %v7145 = vunpack.c.l.b16 %v7014
    %v7146 = vunpack.c.l.b16 %v7015
    %v7147 = vunpack.c.l.b16 %v7016
    %v7148 = vunpack.c.l.b16 %v7017
    %v7149 = vunpack.c.l.b16 %v7018
    %v7150 = vunpack.c.l.b16 %v7019
    %v7151 = vunpack.c.l.b16 %v7020
    %v7152 = vunpack.c.l.b16 %v7021
    %v7153 = vunpack.c.l.b16 %v7022
    %v7154 = vunpack.c.l.b16 %v7023
    %v7155 = vunpack.c.l.b16 %v7024
    %v7156 = vunpack.c.l.b16 %v7025
    %v7157 = vunpack.c.l.b16 %v7026
    %v7158 = vunpack.c.l.b16 %v7027
    %v7159 = vunpack.c.l.b16 %v7028
    %v7160 = vunpack.c.l.b16 %v7029
    %v7161 = vunpack.c.l.b16 %v7030
    %v7162 = vunpack.c.l.b16 %v7031
    %v7163 = vunpack.c.l.b16 %v7032
    %v7164 = vunpack.c.l.b16 %v7033
    %v7165 = vunpack.c.l.b16 %v7034
    %v7166 = vunpack.c.l.b16 %v7035
    %v7167 = vunpack.c.l.b16 %v7036
    %v7168 = vunpack.c.l.b16 %v7037
    %v7169 = vunpack.c.l.b16 %v7038
    %v7170 = vunpack.c.l.b16 %v7039
    %v7171 = vunpack.c.l.b16 %v7040
    %v7172 = vunpack.c.l.b16 %v7041
    %v7173 = vunpack.c.l.b16 %v7042
    %v7174 = vunpack.c.l.b16 %v7043
    %v7175 = vunpack.c.l.b16 %v7044
    %v7176 = vunpack.c.l.b16 %v7045
    %v7177 = vunpack.c.l.b16 %v7046
    %v7178 = vunpack.c.l.b16 %v7047
    %v7179 = vunpack.c.l.b16 %v7048
    %v7180 = vunpack.c.l.b16 %v7049
    %v7181 = vpack.c.b16 %v7118, %v7117
    %v7182 = vpack.c.b16 %v7120, %v7119
    %v7183 = vpack.c.b16 %v7122, %v7121
    %v7184 = vpack.c.b16 %v7124, %v7123
    %v7185 = vpack.c.b16 %v7126, %v7125
    %v7186 = vpack.c.b16 %v7128, %v7127
    %v7187 = vpack.c.b16 %v7130, %v7129
    %v7188 = vpack.c.b16 %v7132, %v7131
    %v7189 = vpack.c.b16 %v7134, %v7133
    %v7190 = vpack.c.b16 %v7136, %v7135
    %v7191 = vpack.c.b16 %v7138, %v7137
    %v7192 = vpack.c.b16 %v7140, %v7139
    %v7193 = vpack.c.b16 %v7142, %v7141
    %v7194 = vpack.c.b16 %v7144, %v7143
    %v7195 = vpack.c.b16 %v7146, %v7145
    %v7196 = vpack.c.b16 %v7148, %v7147
    %v7197 = vpack.c.b16 %v7150, %v7149
    %v7198 = vpack.c.b16 %v7152, %v7151
    %v7199 = vpack.c.b16 %v7154, %v7153
    %v7200 = vpack.c.b16 %v7156, %v7155
    %v7201 = vpack.c.b16 %v7158, %v7157
    %v7202 = vpack.c.b16 %v7160, %v7159
    %v7203 = vpack.c.b16 %v7162, %v7161
    %v7204 = vpack.c.b16 %v7164, %v7163
    %v7205 = vpack.c.b16 %v7166, %v7165
    %v7206 = vpack.c.b16 %v7168, %v7167
    %v7207 = vpack.c.b16 %v7170, %v7169
    %v7208 = vpack.c.b16 %v7172, %v7171
    %v7209 = vpack.c.b16 %v7174, %v7173
    %v7210 = vpack.c.b16 %v7176, %v7175
    %v7211 = vpack.c.b16 %v7178, %v7177
    %v7212 = vpack.c.b16 %v7180, %v7179
    %v7215 = vunpack.c.l.b16 %v7051
    %v7216 = vunpack.c.l.b16 %v7052
    %v7217 = vpack.c.b16 %v7216, %v7215
    %v7220 = vsel %vm2164, %v7181, 0
    %v7223 = vsel %vm2164, %v7182, 0
    %v7226 = vsel %vm2164, %v7183, 0
    %v7229 = vsel %vm2164, %v7184, 0
    %v7232 = vsel %vm2164, %v7185, 0
    %v7235 = vsel %vm2164, %v7186, 0
    %v7238 = vsel %vm2164, %v7187, 0
    %v7241 = vsel %vm2164, %v7188, 0
    %v7244 = vsel %vm2164, %v7189, 0
    %v7247 = vsel %vm2164, %v7190, 0
    %v7250 = vsel %vm2164, %v7191, 0
    %v7253 = vsel %vm2164, %v7192, 0
    %v7256 = vsel %vm2164, %v7193, 0
    %v7259 = vsel %vm2164, %v7194, 0
    %v7262 = vsel %vm2164, %v7195, 0
    %v7265 = vsel %vm2164, %v7196, 0
    %v7268 = vsel %vm2164, %v7197, 0
    %v7271 = vsel %vm2164, %v7198, 0
    %v7274 = vsel %vm2164, %v7199, 0
    %v7277 = vsel %vm2164, %v7200, 0
    %v7280 = vsel %vm2164, %v7201, 0
    %v7283 = vsel %vm2164, %v7202, 0
    %v7286 = vsel %vm2164, %v7203, 0
    %v7289 = vsel %vm2164, %v7204, 0
    %v7292 = vsel %vm2164, %v7205, 0
    %v7295 = vsel %vm2164, %v7206, 0
    %v7298 = vsel %vm2164, %v7207, 0
    %v7301 = vsel %vm2164, %v7208, 0
    %v7304 = vsel %vm2164, %v7209, 0
    %v7307 = vsel %vm2164, %v7210, 0
    %v7310 = vsel %vm2164, %v7211, 0
    %v7313 = vsel %vm2164, %v7212, 0
    %7315 = vmatprep.subr.bf16.mxu0 0
    %7316 = vmatpush1.bf16.msra.mxu0 %v7217
    %7317 = vmatprep.subr.bf16.mxu0 0
    %7318 = vmatpush1.bf16.msra.mxu0 0
    %7319 = vmatprep.subr.bf16.mxu0 0
    %7320 = vmatpush1.bf16.msra.mxu0 0
    %7321 = vmatprep.subr.bf16.mxu0 0
    %7322 = vmatpush1.bf16.msra.mxu0 0
    %7323 = vmatprep.subr.bf16.mxu0 0
    %7324 = vmatpush1.bf16.msra.mxu0 0
    %7325 = vmatprep.subr.bf16.mxu0 0
    %7326 = vmatpush1.bf16.msra.mxu0 0
    %7327 = vmatprep.subr.bf16.mxu0 0
    %7328 = vmatpush1.bf16.msra.mxu0 0
    %7329 = vmatprep.subr.bf16.mxu0 0
    %7330 = vmatpush1.bf16.msra.mxu0 0
    %7331 = vmatprep.subr.bf16.mxu0 0
    %7332 = vmatpush1.bf16.msra.mxu0 0
    %7333 = vmatprep.subr.bf16.mxu0 0
    %7334 = vmatpush1.bf16.msra.mxu0 0
    %7335 = vmatprep.subr.bf16.mxu0 0
    %7336 = vmatpush1.bf16.msra.mxu0 0
    %7337 = vmatprep.subr.bf16.mxu0 0
    %7338 = vmatpush1.bf16.msra.mxu0 0
    %7339 = vmatprep.subr.bf16.mxu0 0
    %7340 = vmatpush1.bf16.msra.mxu0 0
    %7341 = vmatprep.subr.bf16.mxu0 0
    %7342 = vmatpush1.bf16.msra.mxu0 0
    %7343 = vmatprep.subr.bf16.mxu0 0
    %7344 = vmatpush1.bf16.msra.mxu0 0
    %7345 = vmatprep.subr.bf16.mxu0 0
    %7346 = vmatpush1.bf16.msra.mxu0 0
    %7347 = vmatprep.mubr.bf16.mxu0 0
    %7348 = vmatmul.mubr.bf16.gmra.mrb[0].mxu0 %v7220
    %v7349 = vpop.f32.mrb[0].mxu0
    %v7350 = vadd.f32 0.0, %v7349
    %v7351 = vpop.f32.mrb[0].mxu0
    %v7352 = vpop.f32.mrb[0].mxu0
    %v7353 = vadd.f32 0.0, %v7352
    %v7354 = vpop.f32.mrb[0].mxu0
    %7355 = vmatprep.mubr.bf16.mxu0 0
    %7356 = vmatmul.mubr.bf16.gmra.mrb[0].mxu0 %v7223
    %v7357 = vpop.f32.mrb[0].mxu0
    %v7358 = vadd.f32 0.0, %v7357
    %v7359 = vpop.f32.mrb[0].mxu0
    %v7360 = vpop.f32.mrb[0].mxu0
    %v7361 = vadd.f32 0.0, %v7360
    %v7362 = vpop.f32.mrb[0].mxu0
    %7363 = vmatprep.mubr.bf16.mxu0 0
    %7364 = vmatmul.mubr.bf16.gmra.mrb[0].mxu0 %v7226
    %v7365 = vpop.f32.mrb[0].mxu0
    %v7366 = vadd.f32 0.0, %v7365
    %v7367 = vpop.f32.mrb[0].mxu0
    %v7368 = vpop.f32.mrb[0].mxu0
    %v7369 = vadd.f32 0.0, %v7368
    %v7370 = vpop.f32.mrb[0].mxu0
    %7371 = vmatprep.mubr.bf16.mxu0 0
    %7372 = vmatmul.mubr.bf16.gmra.mrb[0].mxu0 %v7229
    %v7373 = vpop.f32.mrb[0].mxu0
    %v7374 = vadd.f32 0.0, %v7373
    %v7375 = vpop.f32.mrb[0].mxu0
    %v7376 = vpop.f32.mrb[0].mxu0
    %v7377 = vadd.f32 0.0, %v7376
    %v7378 = vpop.f32.mrb[0].mxu0
    %7379 = vmatprep.mubr.bf16.mxu0 0
    %7380 = vmatmul.mubr.bf16.gmra.mrb[0].mxu0 %v7232
    %v7381 = vpop.f32.mrb[0].mxu0
    %v7382 = vadd.f32 0.0, %v7381
    %v7383 = vpop.f32.mrb[0].mxu0
    %v7384 = vpop.f32.mrb[0].mxu0
    %v7385 = vadd.f32 0.0, %v7384
    %v7386 = vpop.f32.mrb[0].mxu0
    %7387 = vmatprep.mubr.bf16.mxu0 0
    %7388 = vmatmul.mubr.bf16.gmra.mrb[0].mxu0 %v7235
    %v7389 = vpop.f32.mrb[0].mxu0
    %v7390 = vadd.f32 0.0, %v7389
    %v7391 = vpop.f32.mrb[0].mxu0
    %v7392 = vpop.f32.mrb[0].mxu0
    %v7393 = vadd.f32 0.0, %v7392
    %v7394 = vpop.f32.mrb[0].mxu0
    %7395 = vmatprep.mubr.bf16.mxu0 0
    %7396 = vmatmul.mubr.bf16.gmra.mrb[0].mxu0 %v7238
    %v7397 = vpop.f32.mrb[0].mxu0
    %v7398 = vadd.f32 0.0, %v7397
    %v7399 = vpop.f32.mrb[0].mxu0
    %v7400 = vpop.f32.mrb[0].mxu0
    %v7401 = vadd.f32 0.0, %v7400
    %v7402 = vpop.f32.mrb[0].mxu0
    %7403 = vmatprep.mubr.bf16.mxu0 0
    %7404 = vmatmul.mubr.bf16.gmra.mrb[0].mxu0 %v7241
    %v7405 = vpop.f32.mrb[0].mxu0
    %v7406 = vadd.f32 0.0, %v7405
    %v7407 = vpop.f32.mrb[0].mxu0
    %v7408 = vpop.f32.mrb[0].mxu0
    %v7409 = vadd.f32 0.0, %v7408
    %v7410 = vpop.f32.mrb[0].mxu0
    %7411 = vmatprep.mubr.bf16.mxu0 0
    %7412 = vmatmul.mubr.bf16.gmra.mrb[0].mxu0 %v7244
    %v7413 = vpop.f32.mrb[0].mxu0
    %v7414 = vadd.f32 0.0, %v7413
    %v7415 = vpop.f32.mrb[0].mxu0
    %v7416 = vpop.f32.mrb[0].mxu0
    %v7417 = vadd.f32 0.0, %v7416
    %v7418 = vpop.f32.mrb[0].mxu0
    %7419 = vmatprep.mubr.bf16.mxu0 0
    %7420 = vmatmul.mubr.bf16.gmra.mrb[0].mxu0 %v7247
    %v7421 = vpop.f32.mrb[0].mxu0
    %v7422 = vadd.f32 0.0, %v7421
    %v7423 = vpop.f32.mrb[0].mxu0
    %v7424 = vpop.f32.mrb[0].mxu0
    %v7425 = vadd.f32 0.0, %v7424
    %v7426 = vpop.f32.mrb[0].mxu0
    %7427 = vmatprep.mubr.bf16.mxu0 0
    %7428 = vmatmul.mubr.bf16.gmra.mrb[0].mxu0 %v7250
    %v7429 = vpop.f32.mrb[0].mxu0
    %v7430 = vadd.f32 0.0, %v7429
    %v7431 = vpop.f32.mrb[0].mxu0
    %v7432 = vpop.f32.mrb[0].mxu0
    %v7433 = vadd.f32 0.0, %v7432
    %v7434 = vpop.f32.mrb[0].mxu0
    %7435 = vmatprep.mubr.bf16.mxu0 0
    %7436 = vmatmul.mubr.bf16.gmra.mrb[0].mxu0 %v7253
    %v7437 = vpop.f32.mrb[0].mxu0
    %v7438 = vadd.f32 0.0, %v7437
    %v7439 = vpop.f32.mrb[0].mxu0
    %v7440 = vpop.f32.mrb[0].mxu0
    %v7441 = vadd.f32 0.0, %v7440
    %v7442 = vpop.f32.mrb[0].mxu0
    %7443 = vmatprep.mubr.bf16.mxu0 0
    %7444 = vmatmul.mubr.bf16.gmra.mrb[0].mxu0 %v7256
    %v7445 = vpop.f32.mrb[0].mxu0
    %v7446 = vadd.f32 0.0, %v7445
    %v7447 = vpop.f32.mrb[0].mxu0
    %v7448 = vpop.f32.mrb[0].mxu0
    %v7449 = vadd.f32 0.0, %v7448
    %v7450 = vpop.f32.mrb[0].mxu0
    %7451 = vmatprep.mubr.bf16.mxu0 0
    %7452 = vmatmul.mubr.bf16.gmra.mrb[0].mxu0 %v7259
    %v7453 = vpop.f32.mrb[0].mxu0
    %v7454 = vadd.f32 0.0, %v7453
    %v7455 = vpop.f32.mrb[0].mxu0
    %v7456 = vpop.f32.mrb[0].mxu0
    %v7457 = vadd.f32 0.0, %v7456
    %v7458 = vpop.f32.mrb[0].mxu0
    %7459 = vmatprep.mubr.bf16.mxu0 0
    %7460 = vmatmul.mubr.bf16.gmra.mrb[0].mxu0 %v7262
    %v7461 = vpop.f32.mrb[0].mxu0
    %v7462 = vadd.f32 0.0, %v7461
    %v7463 = vpop.f32.mrb[0].mxu0
    %v7464 = vpop.f32.mrb[0].mxu0
    %v7465 = vadd.f32 0.0, %v7464
    %v7466 = vpop.f32.mrb[0].mxu0
    %7467 = vmatprep.mubr.bf16.mxu0 0
    %7468 = vmatmul.mubr.bf16.gmra.mrb[0].mxu0 %v7265
    %v7469 = vpop.f32.mrb[0].mxu0
    %v7470 = vadd.f32 0.0, %v7469
    %v7471 = vpop.f32.mrb[0].mxu0
    %v7472 = vpop.f32.mrb[0].mxu0
    %v7473 = vadd.f32 0.0, %v7472
    %v7474 = vpop.f32.mrb[0].mxu0
    %7475 = vmatprep.mubr.bf16.mxu0 0
    %7476 = vmatmul.mubr.bf16.gmra.mrb[0].mxu0 %v7268
    %v7477 = vpop.f32.mrb[0].mxu0
    %v7478 = vadd.f32 0.0, %v7477
    %v7479 = vpop.f32.mrb[0].mxu0
    %v7480 = vpop.f32.mrb[0].mxu0
    %v7481 = vadd.f32 0.0, %v7480
    %v7482 = vpop.f32.mrb[0].mxu0
    %7483 = vmatprep.mubr.bf16.mxu0 0
    %7484 = vmatmul.mubr.bf16.gmra.mrb[0].mxu0 %v7271
    %v7485 = vpop.f32.mrb[0].mxu0
    %v7486 = vadd.f32 0.0, %v7485
    %v7487 = vpop.f32.mrb[0].mxu0
    %v7488 = vpop.f32.mrb[0].mxu0
    %v7489 = vadd.f32 0.0, %v7488
    %v7490 = vpop.f32.mrb[0].mxu0
    %7491 = vmatprep.mubr.bf16.mxu0 0
    %7492 = vmatmul.mubr.bf16.gmra.mrb[0].mxu0 %v7274
    %v7493 = vpop.f32.mrb[0].mxu0
    %v7494 = vadd.f32 0.0, %v7493
    %v7495 = vpop.f32.mrb[0].mxu0
    %v7496 = vpop.f32.mrb[0].mxu0
    %v7497 = vadd.f32 0.0, %v7496
    %v7498 = vpop.f32.mrb[0].mxu0
    %7499 = vmatprep.mubr.bf16.mxu0 0
    %7500 = vmatmul.mubr.bf16.gmra.mrb[0].mxu0 %v7277
    %v7501 = vpop.f32.mrb[0].mxu0
    %v7502 = vadd.f32 0.0, %v7501
    %v7503 = vpop.f32.mrb[0].mxu0
    %v7504 = vpop.f32.mrb[0].mxu0
    %v7505 = vadd.f32 0.0, %v7504
    %v7506 = vpop.f32.mrb[0].mxu0
    %7507 = vmatprep.mubr.bf16.mxu0 0
    %7508 = vmatmul.mubr.bf16.gmra.mrb[0].mxu0 %v7280
    %v7509 = vpop.f32.mrb[0].mxu0
    %v7510 = vadd.f32 0.0, %v7509
    %v7511 = vpop.f32.mrb[0].mxu0
    %v7512 = vpop.f32.mrb[0].mxu0
    %v7513 = vadd.f32 0.0, %v7512
    %v7514 = vpop.f32.mrb[0].mxu0
    %7515 = vmatprep.mubr.bf16.mxu0 0
    %7516 = vmatmul.mubr.bf16.gmra.mrb[0].mxu0 %v7283
    %v7517 = vpop.f32.mrb[0].mxu0
    %v7518 = vadd.f32 0.0, %v7517
    %v7519 = vpop.f32.mrb[0].mxu0
    %v7520 = vpop.f32.mrb[0].mxu0
    %v7521 = vadd.f32 0.0, %v7520
    %v7522 = vpop.f32.mrb[0].mxu0
    %7523 = vmatprep.mubr.bf16.mxu0 0
    %7524 = vmatmul.mubr.bf16.gmra.mrb[0].mxu0 %v7286
    %v7525 = vpop.f32.mrb[0].mxu0
    %v7526 = vadd.f32 0.0, %v7525
    %v7527 = vpop.f32.mrb[0].mxu0
    %v7528 = vpop.f32.mrb[0].mxu0
    %v7529 = vadd.f32 0.0, %v7528
    %v7530 = vpop.f32.mrb[0].mxu0
    %7531 = vmatprep.mubr.bf16.mxu0 0
    %7532 = vmatmul.mubr.bf16.gmra.mrb[0].mxu0 %v7289
    %v7533 = vpop.f32.mrb[0].mxu0
    %v7534 = vadd.f32 0.0, %v7533
    %v7535 = vpop.f32.mrb[0].mxu0
    %v7536 = vpop.f32.mrb[0].mxu0
    %v7537 = vadd.f32 0.0, %v7536
    %v7538 = vpop.f32.mrb[0].mxu0
    %7539 = vmatprep.mubr.bf16.mxu0 0
    %7540 = vmatmul.mubr.bf16.gmra.mrb[0].mxu0 %v7292
    %v7541 = vpop.f32.mrb[0].mxu0
    %v7542 = vadd.f32 0.0, %v7541
    %v7543 = vpop.f32.mrb[0].mxu0
    %v7544 = vpop.f32.mrb[0].mxu0
    %v7545 = vadd.f32 0.0, %v7544
    %v7546 = vpop.f32.mrb[0].mxu0
    %7547 = vmatprep.mubr.bf16.mxu0 0
    %7548 = vmatmul.mubr.bf16.gmra.mrb[0].mxu0 %v7295
    %v7549 = vpop.f32.mrb[0].mxu0
    %v7550 = vadd.f32 0.0, %v7549
    %v7551 = vpop.f32.mrb[0].mxu0
    %v7552 = vpop.f32.mrb[0].mxu0
    %v7553 = vadd.f32 0.0, %v7552
    %v7554 = vpop.f32.mrb[0].mxu0
    %7555 = vmatprep.mubr.bf16.mxu0 0
    %7556 = vmatmul.mubr.bf16.gmra.mrb[0].mxu0 %v7298
    %v7557 = vpop.f32.mrb[0].mxu0
    %v7558 = vadd.f32 0.0, %v7557
    %v7559 = vpop.f32.mrb[0].mxu0
    %v7560 = vpop.f32.mrb[0].mxu0
    %v7561 = vadd.f32 0.0, %v7560
    %v7562 = vpop.f32.mrb[0].mxu0
    %7563 = vmatprep.mubr.bf16.mxu0 0
    %7564 = vmatmul.mubr.bf16.gmra.mrb[0].mxu0 %v7301
    %v7565 = vpop.f32.mrb[0].mxu0
    %v7566 = vadd.f32 0.0, %v7565
    %v7567 = vpop.f32.mrb[0].mxu0
    %v7568 = vpop.f32.mrb[0].mxu0
    %v7569 = vadd.f32 0.0, %v7568
    %v7570 = vpop.f32.mrb[0].mxu0
    %7571 = vmatprep.mubr.bf16.mxu0 0
    %7572 = vmatmul.mubr.bf16.gmra.mrb[0].mxu0 %v7304
    %v7573 = vpop.f32.mrb[0].mxu0
    %v7574 = vadd.f32 0.0, %v7573
    %v7575 = vpop.f32.mrb[0].mxu0
    %v7576 = vpop.f32.mrb[0].mxu0
    %v7577 = vadd.f32 0.0, %v7576
    %v7578 = vpop.f32.mrb[0].mxu0
    %7579 = vmatprep.mubr.bf16.mxu0 0
    %7580 = vmatmul.mubr.bf16.gmra.mrb[0].mxu0 %v7307
    %v7581 = vpop.f32.mrb[0].mxu0
    %v7582 = vadd.f32 0.0, %v7581
    %v7583 = vpop.f32.mrb[0].mxu0
    %v7584 = vpop.f32.mrb[0].mxu0
    %v7585 = vadd.f32 0.0, %v7584
    %v7586 = vpop.f32.mrb[0].mxu0
    %7587 = vmatprep.mubr.bf16.mxu0 0
    %7588 = vmatmul.mubr.bf16.gmra.mrb[0].mxu0 %v7310
    %v7589 = vpop.f32.mrb[0].mxu0
    %v7590 = vadd.f32 0.0, %v7589
    %v7591 = vpop.f32.mrb[0].mxu0
    %v7592 = vpop.f32.mrb[0].mxu0
    %v7593 = vadd.f32 0.0, %v7592
    %v7594 = vpop.f32.mrb[0].mxu0
    %7595 = vmatprep.mubr.bf16.mxu0 0
    %7596 = vmatmul.mubr.bf16.gmra.mrb[0].mxu0 %v7313
    %v7597 = vpop.f32.mrb[0].mxu0
    %v7598 = vadd.f32 0.0, %v7597
    %v7599 = vpop.f32.mrb[0].mxu0
    %v7600 = vpop.f32.mrb[0].mxu0
    %v7601 = vadd.f32 0.0, %v7600
    %v7602 = vpop.f32.mrb[0].mxu0
    %7603 = vdwg.mxu0
    %v7604 = vadd.f32 %v6921, %v7350
    %v7605 = vadd.f32 %v6922, %v7353
    %v7606 = vadd.f32 %v6923, %v7358
    %v7607 = vadd.f32 %v6924, %v7361
    %v7608 = vadd.f32 %v6925, %v7366
    %v7609 = vadd.f32 %v6926, %v7369
    %v7610 = vadd.f32 %v6927, %v7374
    %v7611 = vadd.f32 %v6928, %v7377
    %v7612 = vadd.f32 %v6929, %v7382
    %v7613 = vadd.f32 %v6930, %v7385
    %v7614 = vadd.f32 %v6931, %v7390
    %v7615 = vadd.f32 %v6932, %v7393
    %v7616 = vadd.f32 %v6933, %v7398
    %v7617 = vadd.f32 %v6934, %v7401
    %v7618 = vadd.f32 %v6935, %v7406
    %v7619 = vadd.f32 %v6936, %v7409
    %v7620 = vadd.f32 %v6937, %v7414
    %v7621 = vadd.f32 %v6938, %v7417
    %v7622 = vadd.f32 %v6939, %v7422
    %v7623 = vadd.f32 %v6940, %v7425
    %v7624 = vadd.f32 %v6941, %v7430
    %v7625 = vadd.f32 %v6942, %v7433
    %v7626 = vadd.f32 %v6943, %v7438
    %v7627 = vadd.f32 %v6944, %v7441
    %v7628 = vadd.f32 %v6945, %v7446
    %v7629 = vadd.f32 %v6946, %v7449
    %v7630 = vadd.f32 %v6947, %v7454
    %v7631 = vadd.f32 %v6948, %v7457
    %v7632 = vadd.f32 %v6949, %v7462
    %v7633 = vadd.f32 %v6950, %v7465
    %v7634 = vadd.f32 %v6951, %v7470
    %v7635 = vadd.f32 %v6952, %v7473
    %v7636 = vadd.f32 %v6953, %v7478
    %v7637 = vadd.f32 %v6954, %v7481
    %v7638 = vadd.f32 %v6955, %v7486
    %v7639 = vadd.f32 %v6956, %v7489
    %v7640 = vadd.f32 %v6957, %v7494
    %v7641 = vadd.f32 %v6958, %v7497
    %v7642 = vadd.f32 %v6959, %v7502
    %v7643 = vadd.f32 %v6960, %v7505
    %v7644 = vadd.f32 %v6961, %v7510
    %v7645 = vadd.f32 %v6962, %v7513
    %v7646 = vadd.f32 %v6963, %v7518
    %v7647 = vadd.f32 %v6964, %v7521
    %v7648 = vadd.f32 %v6965, %v7526
    %v7649 = vadd.f32 %v6966, %v7529
    %v7650 = vadd.f32 %v6967, %v7534
    %v7651 = vadd.f32 %v6968, %v7537
    %v7652 = vadd.f32 %v6969, %v7542
    %v7653 = vadd.f32 %v6970, %v7545
    %v7654 = vadd.f32 %v6971, %v7550
    %v7655 = vadd.f32 %v6972, %v7553
    %v7656 = vadd.f32 %v6973, %v7558
    %v7657 = vadd.f32 %v6974, %v7561
    %v7658 = vadd.f32 %v6975, %v7566
    %v7659 = vadd.f32 %v6976, %v7569
    %v7660 = vadd.f32 %v6977, %v7574
    %v7661 = vadd.f32 %v6978, %v7577
    %v7662 = vadd.f32 %v6979, %v7582
    %v7663 = vadd.f32 %v6980, %v7585
    %v7664 = vadd.f32 %v6981, %v7590
    %v7665 = vadd.f32 %v6982, %v7593
    %v7666 = vadd.f32 %v6983, %v7598
    %v7667 = vadd.f32 %v6984, %v7601
    %v7668 = vld [vmem:[%s6985] sm:$0xf]
    %v7669 = vld [vmem:[%s6985 + $0x4] sm:$0xf]
    %v7670 = vld [vmem:[%s6985 + $0x8] sm:$0x1]
    %v7671 = vld [vmem:[%s6985 + $0xc] sm:$0xf]
    %v7672 = vld [vmem:[%s6985 + $0x10] sm:$0xf]
    %v7673 = vld [vmem:[%s6985 + $0x14] sm:$0x1]
    %v7674 = vld [vmem:[%s6985 + $0x18] sm:$0xf]
    %v7675 = vld [vmem:[%s6985 + $0x1c] sm:$0xf]
    %v7676 = vld [vmem:[%s6985 + $0x20] sm:$0x1]
    %v7677 = vld [vmem:[%s6985 + $0x24] sm:$0xf]
    %v7678 = vld [vmem:[%s6985 + $0x28] sm:$0xf]
    %v7679 = vld [vmem:[%s6985 + $0x2c] sm:$0x1]
    %v7680 = vld [vmem:[%s6985 + $0x30] sm:$0xf]
    %v7681 = vld [vmem:[%s6985 + $0x34] sm:$0xf]
    %v7682 = vld [vmem:[%s6985 + $0x38] sm:$0x1]
    %v7683 = vld [vmem:[%s6985 + $0x3c] sm:$0xf]
    %v7684 = vld [vmem:[%s6985 + $0x40] sm:$0xf]
    %v7685 = vld [vmem:[%s6985 + $0x44] sm:$0x1]
    %v7686 = vld [vmem:[%s6985 + $0x48] sm:$0xf]
    %v7687 = vld [vmem:[%s6985 + $0x4c] sm:$0xf]
    %v7688 = vld [vmem:[%s6985 + $0x50] sm:$0x1]
    %v7689 = vld [vmem:[%s6985 + $0x54] sm:$0xf]
    %v7690 = vld [vmem:[%s6985 + $0x58] sm:$0xf]
    %v7691 = vld [vmem:[%s6985 + $0x5c] sm:$0x1]
    %v7692 = vld [vmem:[%s6985 + $0x60] sm:$0xf]
    %v7693 = vld [vmem:[%s6985 + $0x64] sm:$0xf]
    %v7694 = vld [vmem:[%s6985 + $0x68] sm:$0x1]
    %v7695 = vld [vmem:[%s6985 + $0x6c] sm:$0xf]
    %v7696 = vld [vmem:[%s6985 + $0x70] sm:$0xf]
    %v7697 = vld [vmem:[%s6985 + $0x74] sm:$0x1]
    %v7698 = vld [vmem:[%s6985 + $0x78] sm:$0xf]
    %v7699 = vld [vmem:[%s6985 + $0x7c] sm:$0xf]
    %v7700 = vld [vmem:[%s6985 + $0x80] sm:$0x1]
    %v7701 = vld [vmem:[%s6985 + $0x84] sm:$0xf]
    %v7702 = vld [vmem:[%s6985 + $0x88] sm:$0xf]
    %v7703 = vld [vmem:[%s6985 + $0x8c] sm:$0x1]
    %v7704 = vld [vmem:[%s6985 + $0x90] sm:$0xf]
    %v7705 = vld [vmem:[%s6985 + $0x94] sm:$0xf]
    %v7706 = vld [vmem:[%s6985 + $0x98] sm:$0x1]
    %v7707 = vld [vmem:[%s6985 + $0x9c] sm:$0xf]
    %v7708 = vld [vmem:[%s6985 + $0xa0] sm:$0xf]
    %v7709 = vld [vmem:[%s6985 + $0xa4] sm:$0x1]
    %v7710 = vld [vmem:[%s6985 + $0xa8] sm:$0xf]
    %v7711 = vld [vmem:[%s6985 + $0xac] sm:$0xf]
    %v7712 = vld [vmem:[%s6985 + $0xb0] sm:$0x1]
    %v7713 = vld [vmem:[%s6985 + $0xb4] sm:$0xf]
    %v7714 = vld [vmem:[%s6985 + $0xb8] sm:$0xf]
    %v7715 = vld [vmem:[%s6985 + $0xbc] sm:$0x1]
    %v7716 = vld [vmem:[%s6985 + $0xd8] sm:$0xf]
    %v7717 = vld [vmem:[%s6985 + $0xdc] sm:$0xf]
    %v7718 = vld [vmem:[%s6985 + $0xe0] sm:$0x1]
    %v7719 = vld [vmem:[%s6985 + $0xe4] sm:$0xf]
    %v7720 = vld [vmem:[%s6985 + $0xe8] sm:$0xf]
    %v7721 = vld [vmem:[%s6985 + $0xec] sm:$0x1]
    %v7722 = vld [vmem:[%s6985 + $0xf0] sm:$0xf]
    %v7723 = vld [vmem:[%s6985 + $0xf4] sm:$0xf]
    %v7724 = vld [vmem:[%s6985 + $0xf8] sm:$0x1]
    %v7725 = vld [vmem:[%s6985 + $0xfc] sm:$0xf]
    %v7726 = vld [vmem:[%s6985 + $0x100] sm:$0xf]
    %v7727 = vld [vmem:[%s6985 + $0x104] sm:$0x1]
    %v7728 = vld [vmem:[%s6985 + $0x108] sm:$0xf]
    %v7729 = vld [vmem:[%s6985 + $0x10c] sm:$0xf]
    %v7730 = vld [vmem:[%s6985 + $0x110] sm:$0x1]
    %v7731 = vld [vmem:[%s6985 + $0x114] sm:$0xf]
    %v7732 = vld [vmem:[%s6985 + $0x118] sm:$0xf]
    %v7733 = vld [vmem:[%s6985 + $0x11c] sm:$0x1]
    %v7734 = vld [vmem:[%s6985 + $0x120] sm:$0xf]
    %v7735 = vld [vmem:[%s6985 + $0x124] sm:$0xf]
    %v7736 = vld [vmem:[%s6985 + $0x128] sm:$0x1]
    %v7737 = vld [vmem:[%s6985 + $0x12c] sm:$0xf]
    %v7738 = vld [vmem:[%s6985 + $0x130] sm:$0xf]
    %v7739 = vld [vmem:[%s6985 + $0x134] sm:$0x1]
    %v7740 = vld [vmem:[%s6985 + $0x138] sm:$0xf]
    %v7741 = vld [vmem:[%s6985 + $0x13c] sm:$0xf]
    %v7742 = vld [vmem:[%s6985 + $0x140] sm:$0x1]
    %v7743 = vld [vmem:[%s6985 + $0x144] sm:$0xf]
    %v7744 = vld [vmem:[%s6985 + $0x148] sm:$0xf]
    %v7745 = vld [vmem:[%s6985 + $0x14c] sm:$0x1]
    %v7746 = vld [vmem:[%s6985 + $0x150] sm:$0xf]
    %v7747 = vld [vmem:[%s6985 + $0x154] sm:$0xf]
    %v7748 = vld [vmem:[%s6985 + $0x158] sm:$0x1]
    %v7749 = vld [vmem:[%s6985 + $0x15c] sm:$0xf]
    %v7750 = vld [vmem:[%s6985 + $0x160] sm:$0xf]
    %v7751 = vld [vmem:[%s6985 + $0x164] sm:$0x1]
    %v7752 = vld [vmem:[%s6985 + $0x168] sm:$0xf]
    %v7753 = vld [vmem:[%s6985 + $0x16c] sm:$0xf]
    %v7754 = vld [vmem:[%s6985 + $0x170] sm:$0x1]
    %v7755 = vld [vmem:[%s6985 + $0x174] sm:$0xf]
    %v7756 = vld [vmem:[%s6985 + $0x178] sm:$0xf]
    %v7757 = vld [vmem:[%s6985 + $0x17c] sm:$0x1]
    %v7758 = vld [vmem:[%s6985 + $0x180] sm:$0xf]
    %v7759 = vld [vmem:[%s6985 + $0x184] sm:$0xf]
    %v7760 = vld [vmem:[%s6985 + $0x188] sm:$0x1]
    %v7761 = vld [vmem:[%s6985 + $0x18c] sm:$0xf]
    %v7762 = vld [vmem:[%s6985 + $0x190] sm:$0xf]
    %v7763 = vld [vmem:[%s6985 + $0x194] sm:$0x1]
    %v7765 = vshrl.u32 %v7668, 16
    %v7767 = vrot.slane %v7765, 4
    %v7768 = vshll.u32 %v7668, 16
    %v7770 = vrot.slane %v7768, 5
    %v7771 = vor.u32 %v7767, %v7770
    %v7772 = vrot.slane %v7771, 4
    %v7774 = vshll.u32 %v7669, 16
    %v7776 = vrot.slane %v7774, 5
    %v7777 = vsel %vm1290, %v7772, %v7776
    %v7778 = vshrl.u32 %v7669, 16
    %v7780 = vrot.slane %v7778, 4
    %v7781 = vor.u32 %v7780, %v7776
    %v7782 = vrot.slane %v7781, 4
    %v7784 = vshll.u32 %v7670, 16
    %v7786 = vrot.slane %v7784, 5
    %v7787 = vsel %vm1290, %v7782, %v7786
    %v7789 = vshrl.u32 %v7671, 16
    %v7791 = vrot.slane %v7789, 4
    %v7792 = vshll.u32 %v7671, 16
    %v7794 = vrot.slane %v7792, 5
    %v7795 = vor.u32 %v7791, %v7794
    %v7796 = vrot.slane %v7795, 4
    %v7798 = vshll.u32 %v7672, 16
    %v7800 = vrot.slane %v7798, 5
    %v7801 = vsel %vm1290, %v7796, %v7800
    %v7802 = vshrl.u32 %v7672, 16
    %v7804 = vrot.slane %v7802, 4
    %v7805 = vor.u32 %v7804, %v7800
    %v7806 = vrot.slane %v7805, 4
    %v7808 = vshll.u32 %v7673, 16
    %v7810 = vrot.slane %v7808, 5
    %v7811 = vsel %vm1290, %v7806, %v7810
    %v7813 = vshrl.u32 %v7674, 16
    %v7815 = vrot.slane %v7813, 4
    %v7816 = vshll.u32 %v7674, 16
    %v7818 = vrot.slane %v7816, 5
    %v7819 = vor.u32 %v7815, %v7818
    %v7820 = vrot.slane %v7819, 4
    %v7822 = vshll.u32 %v7675, 16
    %v7824 = vrot.slane %v7822, 5
    %v7825 = vsel %vm1290, %v7820, %v7824
    %v7826 = vshrl.u32 %v7675, 16
    %v7828 = vrot.slane %v7826, 4
    %v7829 = vor.u32 %v7828, %v7824
    %v7830 = vrot.slane %v7829, 4
    %v7832 = vshll.u32 %v7676, 16
    %v7834 = vrot.slane %v7832, 5
    %v7835 = vsel %vm1290, %v7830, %v7834
    %v7837 = vshrl.u32 %v7677, 16
    %v7839 = vrot.slane %v7837, 4
    %v7840 = vshll.u32 %v7677, 16
    %v7842 = vrot.slane %v7840, 5
    %v7843 = vor.u32 %v7839, %v7842
    %v7844 = vrot.slane %v7843, 4
    %v7846 = vshll.u32 %v7678, 16
    %v7848 = vrot.slane %v7846, 5
    %v7849 = vsel %vm1290, %v7844, %v7848
    %v7850 = vshrl.u32 %v7678, 16
    %v7852 = vrot.slane %v7850, 4
    %v7853 = vor.u32 %v7852, %v7848
    %v7854 = vrot.slane %v7853, 4
    %v7856 = vshll.u32 %v7679, 16
    %v7858 = vrot.slane %v7856, 5
    %v7859 = vsel %vm1290, %v7854, %v7858
    %v7861 = vshrl.u32 %v7680, 16
    %v7863 = vrot.slane %v7861, 4
    %v7864 = vshll.u32 %v7680, 16
    %v7866 = vrot.slane %v7864, 5
    %v7867 = vor.u32 %v7863, %v7866
    %v7868 = vrot.slane %v7867, 4
    %v7870 = vshll.u32 %v7681, 16
    %v7872 = vrot.slane %v7870, 5
    %v7873 = vsel %vm1290, %v7868, %v7872
    %v7874 = vshrl.u32 %v7681, 16
    %v7876 = vrot.slane %v7874, 4
    %v7877 = vor.u32 %v7876, %v7872
    %v7878 = vrot.slane %v7877, 4
    %v7880 = vshll.u32 %v7682, 16
    %v7882 = vrot.slane %v7880, 5
    %v7883 = vsel %vm1290, %v7878, %v7882
    %v7885 = vshrl.u32 %v7683, 16
    %v7887 = vrot.slane %v7885, 4
    %v7888 = vshll.u32 %v7683, 16
    %v7890 = vrot.slane %v7888, 5
    %v7891 = vor.u32 %v7887, %v7890
    %v7892 = vrot.slane %v7891, 4
    %v7894 = vshll.u32 %v7684, 16
    %v7896 = vrot.slane %v7894, 5
    %v7897 = vsel %vm1290, %v7892, %v7896
    %v7898 = vshrl.u32 %v7684, 16
    %v7900 = vrot.slane %v7898, 4
    %v7901 = vor.u32 %v7900, %v7896
    %v7902 = vrot.slane %v7901, 4
    %v7904 = vshll.u32 %v7685, 16
    %v7906 = vrot.slane %v7904, 5
    %v7907 = vsel %vm1290, %v7902, %v7906
    %v7909 = vshrl.u32 %v7686, 16
    %v7911 = vrot.slane %v7909, 4
    %v7912 = vshll.u32 %v7686, 16
    %v7914 = vrot.slane %v7912, 5
    %v7915 = vor.u32 %v7911, %v7914
    %v7916 = vrot.slane %v7915, 4
    %v7918 = vshll.u32 %v7687, 16
    %v7920 = vrot.slane %v7918, 5
    %v7921 = vsel %vm1290, %v7916, %v7920
    %v7922 = vshrl.u32 %v7687, 16
    %v7924 = vrot.slane %v7922, 4
    %v7925 = vor.u32 %v7924, %v7920
    %v7926 = vrot.slane %v7925, 4
    %v7928 = vshll.u32 %v7688, 16
    %v7930 = vrot.slane %v7928, 5
    %v7931 = vsel %vm1290, %v7926, %v7930
    %v7933 = vshrl.u32 %v7689, 16
    %v7935 = vrot.slane %v7933, 4
    %v7936 = vshll.u32 %v7689, 16
    %v7938 = vrot.slane %v7936, 5
    %v7939 = vor.u32 %v7935, %v7938
    %v7940 = vrot.slane %v7939, 4
    %v7942 = vshll.u32 %v7690, 16
    %v7944 = vrot.slane %v7942, 5
    %v7945 = vsel %vm1290, %v7940, %v7944
    %v7946 = vshrl.u32 %v7690, 16
    %v7948 = vrot.slane %v7946, 4
    %v7949 = vor.u32 %v7948, %v7944
    %v7950 = vrot.slane %v7949, 4
    %v7952 = vshll.u32 %v7691, 16
    %v7954 = vrot.slane %v7952, 5
    %v7955 = vsel %vm1290, %v7950, %v7954
    %v7957 = vshrl.u32 %v7692, 16
    %v7959 = vrot.slane %v7957, 4
    %v7960 = vshll.u32 %v7692, 16
    %v7962 = vrot.slane %v7960, 5
    %v7963 = vor.u32 %v7959, %v7962
    %v7964 = vrot.slane %v7963, 4
    %v7966 = vshll.u32 %v7693, 16
    %v7968 = vrot.slane %v7966, 5
    %v7969 = vsel %vm1290, %v7964, %v7968
    %v7970 = vshrl.u32 %v7693, 16
    %v7972 = vrot.slane %v7970, 4
    %v7973 = vor.u32 %v7972, %v7968
    %v7974 = vrot.slane %v7973, 4
    %v7976 = vshll.u32 %v7694, 16
    %v7978 = vrot.slane %v7976, 5
    %v7979 = vsel %vm1290, %v7974, %v7978
    %v7981 = vshrl.u32 %v7695, 16
    %v7983 = vrot.slane %v7981, 4
    %v7984 = vshll.u32 %v7695, 16
    %v7986 = vrot.slane %v7984, 5
    %v7987 = vor.u32 %v7983, %v7986
    %v7988 = vrot.slane %v7987, 4
    %v7990 = vshll.u32 %v7696, 16
    %v7992 = vrot.slane %v7990, 5
    %v7993 = vsel %vm1290, %v7988, %v7992
    %v7994 = vshrl.u32 %v7696, 16
    %v7996 = vrot.slane %v7994, 4
    %v7997 = vor.u32 %v7996, %v7992
    %v7998 = vrot.slane %v7997, 4
    %v8000 = vshll.u32 %v7697, 16
    %v8002 = vrot.slane %v8000, 5
    %v8003 = vsel %vm1290, %v7998, %v8002
    %v8005 = vshrl.u32 %v7698, 16
    %v8007 = vrot.slane %v8005, 4
    %v8008 = vshll.u32 %v7698, 16
    %v8010 = vrot.slane %v8008, 5
    %v8011 = vor.u32 %v8007, %v8010
    %v8012 = vrot.slane %v8011, 4
    %v8014 = vshll.u32 %v7699, 16
    %v8016 = vrot.slane %v8014, 5
    %v8017 = vsel %vm1290, %v8012, %v8016
    %v8018 = vshrl.u32 %v7699, 16
    %v8020 = vrot.slane %v8018, 4
    %v8021 = vor.u32 %v8020, %v8016
    %v8022 = vrot.slane %v8021, 4
    %v8024 = vshll.u32 %v7700, 16
    %v8026 = vrot.slane %v8024, 5
    %v8027 = vsel %vm1290, %v8022, %v8026
    %v8029 = vshrl.u32 %v7701, 16
    %v8031 = vrot.slane %v8029, 4
    %v8032 = vshll.u32 %v7701, 16
    %v8034 = vrot.slane %v8032, 5
    %v8035 = vor.u32 %v8031, %v8034
    %v8036 = vrot.slane %v8035, 4
    %v8038 = vshll.u32 %v7702, 16
    %v8040 = vrot.slane %v8038, 5
    %v8041 = vsel %vm1290, %v8036, %v8040
    %v8042 = vshrl.u32 %v7702, 16
    %v8044 = vrot.slane %v8042, 4
    %v8045 = vor.u32 %v8044, %v8040
    %v8046 = vrot.slane %v8045, 4
    %v8048 = vshll.u32 %v7703, 16
    %v8050 = vrot.slane %v8048, 5
    %v8051 = vsel %vm1290, %v8046, %v8050
    %v8053 = vshrl.u32 %v7704, 16
    %v8055 = vrot.slane %v8053, 4
    %v8056 = vshll.u32 %v7704, 16
    %v8058 = vrot.slane %v8056, 5
    %v8059 = vor.u32 %v8055, %v8058
    %v8060 = vrot.slane %v8059, 4
    %v8062 = vshll.u32 %v7705, 16
    %v8064 = vrot.slane %v8062, 5
    %v8065 = vsel %vm1290, %v8060, %v8064
    %v8066 = vshrl.u32 %v7705, 16
    %v8068 = vrot.slane %v8066, 4
    %v8069 = vor.u32 %v8068, %v8064
    %v8070 = vrot.slane %v8069, 4
    %v8072 = vshll.u32 %v7706, 16
    %v8074 = vrot.slane %v8072, 5
    %v8075 = vsel %vm1290, %v8070, %v8074
    %v8077 = vshrl.u32 %v7707, 16
    %v8079 = vrot.slane %v8077, 4
    %v8080 = vshll.u32 %v7707, 16
    %v8082 = vrot.slane %v8080, 5
    %v8083 = vor.u32 %v8079, %v8082
    %v8084 = vrot.slane %v8083, 4
    %v8086 = vshll.u32 %v7708, 16
    %v8088 = vrot.slane %v8086, 5
    %v8089 = vsel %vm1290, %v8084, %v8088
    %v8090 = vshrl.u32 %v7708, 16
    %v8092 = vrot.slane %v8090, 4
    %v8093 = vor.u32 %v8092, %v8088
    %v8094 = vrot.slane %v8093, 4
    %v8096 = vshll.u32 %v7709, 16
    %v8098 = vrot.slane %v8096, 5
    %v8099 = vsel %vm1290, %v8094, %v8098
    %v8101 = vshrl.u32 %v7710, 16
    %v8103 = vrot.slane %v8101, 4
    %v8104 = vshll.u32 %v7710, 16
    %v8106 = vrot.slane %v8104, 5
    %v8107 = vor.u32 %v8103, %v8106
    %v8108 = vrot.slane %v8107, 4
    %v8110 = vshll.u32 %v7711, 16
    %v8112 = vrot.slane %v8110, 5
    %v8113 = vsel %vm1290, %v8108, %v8112
    %v8114 = vshrl.u32 %v7711, 16
    %v8116 = vrot.slane %v8114, 4
    %v8117 = vor.u32 %v8116, %v8112
    %v8118 = vrot.slane %v8117, 4
    %v8120 = vshll.u32 %v7712, 16
    %v8122 = vrot.slane %v8120, 5
    %v8123 = vsel %vm1290, %v8118, %v8122
    %v8125 = vshrl.u32 %v7713, 16
    %v8127 = vrot.slane %v8125, 4
    %v8128 = vshll.u32 %v7713, 16
    %v8130 = vrot.slane %v8128, 5
    %v8131 = vor.u32 %v8127, %v8130
    %v8132 = vrot.slane %v8131, 4
    %v8134 = vshll.u32 %v7714, 16
    %v8136 = vrot.slane %v8134, 5
    %v8137 = vsel %vm1290, %v8132, %v8136
    %v8138 = vshrl.u32 %v7714, 16
    %v8140 = vrot.slane %v8138, 4
    %v8141 = vor.u32 %v8140, %v8136
    %v8142 = vrot.slane %v8141, 4
    %v8144 = vshll.u32 %v7715, 16
    %v8146 = vrot.slane %v8144, 5
    %v8147 = vsel %vm1290, %v8142, %v8146
    %v8149 = vshrl.u32 %v7716, 16
    %v8151 = vrot.slane %v8149, 4
    %v8152 = vshll.u32 %v7716, 16
    %v8154 = vrot.slane %v8152, 5
    %v8155 = vor.u32 %v8151, %v8154
    %v8156 = vrot.slane %v8155, 4
    %v8158 = vshll.u32 %v7717, 16
    %v8160 = vrot.slane %v8158, 5
    %v8161 = vsel %vm1290, %v8156, %v8160
    %v8162 = vshrl.u32 %v7717, 16
    %v8164 = vrot.slane %v8162, 4
    %v8165 = vor.u32 %v8164, %v8160
    %v8166 = vrot.slane %v8165, 4
    %v8168 = vshll.u32 %v7718, 16
    %v8170 = vrot.slane %v8168, 5
    %v8171 = vsel %vm1290, %v8166, %v8170
    %v8173 = vshrl.u32 %v7719, 16
    %v8175 = vrot.slane %v8173, 4
    %v8176 = vshll.u32 %v7719, 16
    %v8178 = vrot.slane %v8176, 5
    %v8179 = vor.u32 %v8175, %v8178
    %v8180 = vrot.slane %v8179, 4
    %v8182 = vshll.u32 %v7720, 16
    %v8184 = vrot.slane %v8182, 5
    %v8185 = vsel %vm1290, %v8180, %v8184
    %v8186 = vshrl.u32 %v7720, 16
    %v8188 = vrot.slane %v8186, 4
    %v8189 = vor.u32 %v8188, %v8184
    %v8190 = vrot.slane %v8189, 4
    %v8192 = vshll.u32 %v7721, 16
    %v8194 = vrot.slane %v8192, 5
    %v8195 = vsel %vm1290, %v8190, %v8194
    %v8197 = vshrl.u32 %v7722, 16
    %v8199 = vrot.slane %v8197, 4
    %v8200 = vshll.u32 %v7722, 16
    %v8202 = vrot.slane %v8200, 5
    %v8203 = vor.u32 %v8199, %v8202
    %v8204 = vrot.slane %v8203, 4
    %v8206 = vshll.u32 %v7723, 16
    %v8208 = vrot.slane %v8206, 5
    %v8209 = vsel %vm1290, %v8204, %v8208
    %v8210 = vshrl.u32 %v7723, 16
    %v8212 = vrot.slane %v8210, 4
    %v8213 = vor.u32 %v8212, %v8208
    %v8214 = vrot.slane %v8213, 4
    %v8216 = vshll.u32 %v7724, 16
    %v8218 = vrot.slane %v8216, 5
    %v8219 = vsel %vm1290, %v8214, %v8218
    %v8221 = vshrl.u32 %v7725, 16
    %v8223 = vrot.slane %v8221, 4
    %v8224 = vshll.u32 %v7725, 16
    %v8226 = vrot.slane %v8224, 5
    %v8227 = vor.u32 %v8223, %v8226
    %v8228 = vrot.slane %v8227, 4
    %v8230 = vshll.u32 %v7726, 16
    %v8232 = vrot.slane %v8230, 5
    %v8233 = vsel %vm1290, %v8228, %v8232
    %v8234 = vshrl.u32 %v7726, 16
    %v8236 = vrot.slane %v8234, 4
    %v8237 = vor.u32 %v8236, %v8232
    %v8238 = vrot.slane %v8237, 4
    %v8240 = vshll.u32 %v7727, 16
    %v8242 = vrot.slane %v8240, 5
    %v8243 = vsel %vm1290, %v8238, %v8242
    %v8245 = vshrl.u32 %v7728, 16
    %v8247 = vrot.slane %v8245, 4
    %v8248 = vshll.u32 %v7728, 16
    %v8250 = vrot.slane %v8248, 5
    %v8251 = vor.u32 %v8247, %v8250
    %v8252 = vrot.slane %v8251, 4
    %v8254 = vshll.u32 %v7729, 16
    %v8256 = vrot.slane %v8254, 5
    %v8257 = vsel %vm1290, %v8252, %v8256
    %v8258 = vshrl.u32 %v7729, 16
    %v8260 = vrot.slane %v8258, 4
    %v8261 = vor.u32 %v8260, %v8256
    %v8262 = vrot.slane %v8261, 4
    %v8264 = vshll.u32 %v7730, 16
    %v8266 = vrot.slane %v8264, 5
    %v8267 = vsel %vm1290, %v8262, %v8266
    %v8269 = vshrl.u32 %v7731, 16
    %v8271 = vrot.slane %v8269, 4
    %v8272 = vshll.u32 %v7731, 16
    %v8274 = vrot.slane %v8272, 5
    %v8275 = vor.u32 %v8271, %v8274
    %v8276 = vrot.slane %v8275, 4
    %v8278 = vshll.u32 %v7732, 16
    %v8280 = vrot.slane %v8278, 5
    %v8281 = vsel %vm1290, %v8276, %v8280
    %v8282 = vshrl.u32 %v7732, 16
    %v8284 = vrot.slane %v8282, 4
    %v8285 = vor.u32 %v8284, %v8280
    %v8286 = vrot.slane %v8285, 4
    %v8288 = vshll.u32 %v7733, 16
    %v8290 = vrot.slane %v8288, 5
    %v8291 = vsel %vm1290, %v8286, %v8290
    %v8293 = vshrl.u32 %v7734, 16
    %v8295 = vrot.slane %v8293, 4
    %v8296 = vshll.u32 %v7734, 16
    %v8298 = vrot.slane %v8296, 5
    %v8299 = vor.u32 %v8295, %v8298
    %v8300 = vrot.slane %v8299, 4
    %v8302 = vshll.u32 %v7735, 16
    %v8304 = vrot.slane %v8302, 5
    %v8305 = vsel %vm1290, %v8300, %v8304
    %v8306 = vshrl.u32 %v7735, 16
    %v8308 = vrot.slane %v8306, 4
    %v8309 = vor.u32 %v8308, %v8304
    %v8310 = vrot.slane %v8309, 4
    %v8312 = vshll.u32 %v7736, 16
    %v8314 = vrot.slane %v8312, 5
    %v8315 = vsel %vm1290, %v8310, %v8314
    %v8317 = vshrl.u32 %v7737, 16
    %v8319 = vrot.slane %v8317, 4
    %v8320 = vshll.u32 %v7737, 16
    %v8322 = vrot.slane %v8320, 5
    %v8323 = vor.u32 %v8319, %v8322
    %v8324 = vrot.slane %v8323, 4
    %v8326 = vshll.u32 %v7738, 16
    %v8328 = vrot.slane %v8326, 5
    %v8329 = vsel %vm1290, %v8324, %v8328
    %v8330 = vshrl.u32 %v7738, 16
    %v8332 = vrot.slane %v8330, 4
    %v8333 = vor.u32 %v8332, %v8328
    %v8334 = vrot.slane %v8333, 4
    %v8336 = vshll.u32 %v7739, 16
    %v8338 = vrot.slane %v8336, 5
    %v8339 = vsel %vm1290, %v8334, %v8338
    %v8341 = vshrl.u32 %v7740, 16
    %v8343 = vrot.slane %v8341, 4
    %v8344 = vshll.u32 %v7740, 16
    %v8346 = vrot.slane %v8344, 5
    %v8347 = vor.u32 %v8343, %v8346
    %v8348 = vrot.slane %v8347, 4
    %v8350 = vshll.u32 %v7741, 16
    %v8352 = vrot.slane %v8350, 5
    %v8353 = vsel %vm1290, %v8348, %v8352
    %v8354 = vshrl.u32 %v7741, 16
    %v8356 = vrot.slane %v8354, 4
    %v8357 = vor.u32 %v8356, %v8352
    %v8358 = vrot.slane %v8357, 4
    %v8360 = vshll.u32 %v7742, 16
    %v8362 = vrot.slane %v8360, 5
    %v8363 = vsel %vm1290, %v8358, %v8362
    %v8365 = vshrl.u32 %v7743, 16
    %v8367 = vrot.slane %v8365, 4
    %v8368 = vshll.u32 %v7743, 16
    %v8370 = vrot.slane %v8368, 5
    %v8371 = vor.u32 %v8367, %v8370
    %v8372 = vrot.slane %v8371, 4
    %v8374 = vshll.u32 %v7744, 16
    %v8376 = vrot.slane %v8374, 5
    %v8377 = vsel %vm1290, %v8372, %v8376
    %v8378 = vshrl.u32 %v7744, 16
    %v8380 = vrot.slane %v8378, 4
    %v8381 = vor.u32 %v8380, %v8376
    %v8382 = vrot.slane %v8381, 4
    %v8384 = vshll.u32 %v7745, 16
    %v8386 = vrot.slane %v8384, 5
    %v8387 = vsel %vm1290, %v8382, %v8386
    %v8389 = vshrl.u32 %v7746, 16
    %v8391 = vrot.slane %v8389, 4
    %v8392 = vshll.u32 %v7746, 16
    %v8394 = vrot.slane %v8392, 5
    %v8395 = vor.u32 %v8391, %v8394
    %v8396 = vrot.slane %v8395, 4
    %v8398 = vshll.u32 %v7747, 16
    %v8400 = vrot.slane %v8398, 5
    %v8401 = vsel %vm1290, %v8396, %v8400
    %v8402 = vshrl.u32 %v7747, 16
    %v8404 = vrot.slane %v8402, 4
    %v8405 = vor.u32 %v8404, %v8400
    %v8406 = vrot.slane %v8405, 4
    %v8408 = vshll.u32 %v7748, 16
    %v8410 = vrot.slane %v8408, 5
    %v8411 = vsel %vm1290, %v8406, %v8410
    %v8413 = vshrl.u32 %v7749, 16
    %v8415 = vrot.slane %v8413, 4
    %v8416 = vshll.u32 %v7749, 16
    %v8418 = vrot.slane %v8416, 5
    %v8419 = vor.u32 %v8415, %v8418
    %v8420 = vrot.slane %v8419, 4
    %v8422 = vshll.u32 %v7750, 16
    %v8424 = vrot.slane %v8422, 5
    %v8425 = vsel %vm1290, %v8420, %v8424
    %v8426 = vshrl.u32 %v7750, 16
    %v8428 = vrot.slane %v8426, 4
    %v8429 = vor.u32 %v8428, %v8424
    %v8430 = vrot.slane %v8429, 4
    %v8432 = vshll.u32 %v7751, 16
    %v8434 = vrot.slane %v8432, 5
    %v8435 = vsel %vm1290, %v8430, %v8434
    %v8437 = vshrl.u32 %v7752, 16
    %v8439 = vrot.slane %v8437, 4
    %v8440 = vshll.u32 %v7752, 16
    %v8442 = vrot.slane %v8440, 5
    %v8443 = vor.u32 %v8439, %v8442
    %v8444 = vrot.slane %v8443, 4
    %v8446 = vshll.u32 %v7753, 16
    %v8448 = vrot.slane %v8446, 5
    %v8449 = vsel %vm1290, %v8444, %v8448
    %v8450 = vshrl.u32 %v7753, 16
    %v8452 = vrot.slane %v8450, 4
    %v8453 = vor.u32 %v8452, %v8448
    %v8454 = vrot.slane %v8453, 4
    %v8456 = vshll.u32 %v7754, 16
    %v8458 = vrot.slane %v8456, 5
    %v8459 = vsel %vm1290, %v8454, %v8458
    %v8461 = vshrl.u32 %v7755, 16
    %v8463 = vrot.slane %v8461, 4
    %v8464 = vshll.u32 %v7755, 16
    %v8466 = vrot.slane %v8464, 5
    %v8467 = vor.u32 %v8463, %v8466
    %v8468 = vrot.slane %v8467, 4
    %v8470 = vshll.u32 %v7756, 16
    %v8472 = vrot.slane %v8470, 5
    %v8473 = vsel %vm1290, %v8468, %v8472
    %v8474 = vshrl.u32 %v7756, 16
    %v8476 = vrot.slane %v8474, 4
    %v8477 = vor.u32 %v8476, %v8472
    %v8478 = vrot.slane %v8477, 4
    %v8480 = vshll.u32 %v7757, 16
    %v8482 = vrot.slane %v8480, 5
    %v8483 = vsel %vm1290, %v8478, %v8482
    %v8485 = vshrl.u32 %v7758, 16
    %v8487 = vrot.slane %v8485, 4
    %v8488 = vshll.u32 %v7758, 16
    %v8490 = vrot.slane %v8488, 5
    %v8491 = vor.u32 %v8487, %v8490
    %v8492 = vrot.slane %v8491, 4
    %v8494 = vshll.u32 %v7759, 16
    %v8496 = vrot.slane %v8494, 5
    %v8497 = vsel %vm1290, %v8492, %v8496
    %v8498 = vshrl.u32 %v7759, 16
    %v8500 = vrot.slane %v8498, 4
    %v8501 = vor.u32 %v8500, %v8496
    %v8502 = vrot.slane %v8501, 4
    %v8504 = vshll.u32 %v7760, 16
    %v8506 = vrot.slane %v8504, 5
    %v8507 = vsel %vm1290, %v8502, %v8506
    %v8509 = vshrl.u32 %v7761, 16
    %v8511 = vrot.slane %v8509, 4
    %v8512 = vshll.u32 %v7761, 16
    %v8514 = vrot.slane %v8512, 5
    %v8515 = vor.u32 %v8511, %v8514
    %v8516 = vrot.slane %v8515, 4
    %v8518 = vshll.u32 %v7762, 16
    %v8520 = vrot.slane %v8518, 5
    %v8521 = vsel %vm1290, %v8516, %v8520
    %v8522 = vshrl.u32 %v7762, 16
    %v8524 = vrot.slane %v8522, 4
    %v8525 = vor.u32 %v8524, %v8520
    %v8526 = vrot.slane %v8525, 4
    %v8528 = vshll.u32 %v7763, 16
    %v8530 = vrot.slane %v8528, 5
    %v8531 = vsel %vm1290, %v8526, %v8530
    %s8532 = scalar_lea.vmem [#allocation6], 56
    %v8533 = vld [vmem:[%s8532] sm:$0xf]
    %v8534 = vld [vmem:[%s8532 + $0x4] sm:$0xf]
    %v8535 = vunpack.c.l.b16 %v7777
    %v8536 = vunpack.c.l.b16 %v7787
    %v8537 = vunpack.c.l.b16 %v7801
    %v8538 = vunpack.c.l.b16 %v7811
    %v8539 = vunpack.c.l.b16 %v7825
    %v8540 = vunpack.c.l.b16 %v7835
    %v8541 = vunpack.c.l.b16 %v7849
    %v8542 = vunpack.c.l.b16 %v7859
    %v8543 = vunpack.c.l.b16 %v7873
    %v8544 = vunpack.c.l.b16 %v7883
    %v8545 = vunpack.c.l.b16 %v7897
    %v8546 = vunpack.c.l.b16 %v7907
    %v8547 = vunpack.c.l.b16 %v7921
    %v8548 = vunpack.c.l.b16 %v7931
    %v8549 = vunpack.c.l.b16 %v7945
    %v8550 = vunpack.c.l.b16 %v7955
    %v8551 = vunpack.c.l.b16 %v7969
    %v8552 = vunpack.c.l.b16 %v7979
    %v8553 = vunpack.c.l.b16 %v7993
    %v8554 = vunpack.c.l.b16 %v8003
    %v8555 = vunpack.c.l.b16 %v8017
    %v8556 = vunpack.c.l.b16 %v8027
    %v8557 = vunpack.c.l.b16 %v8041
    %v8558 = vunpack.c.l.b16 %v8051
    %v8559 = vunpack.c.l.b16 %v8065
    %v8560 = vunpack.c.l.b16 %v8075
    %v8561 = vunpack.c.l.b16 %v8089
    %v8562 = vunpack.c.l.b16 %v8099
    %v8563 = vunpack.c.l.b16 %v8113
    %v8564 = vunpack.c.l.b16 %v8123
    %v8565 = vunpack.c.l.b16 %v8137
    %v8566 = vunpack.c.l.b16 %v8147
    %v8567 = vunpack.c.l.b16 %v8161
    %v8568 = vunpack.c.l.b16 %v8171
    %v8569 = vunpack.c.l.b16 %v8185
    %v8570 = vunpack.c.l.b16 %v8195
    %v8571 = vunpack.c.l.b16 %v8209
    %v8572 = vunpack.c.l.b16 %v8219
    %v8573 = vunpack.c.l.b16 %v8233
    %v8574 = vunpack.c.l.b16 %v8243
    %v8575 = vunpack.c.l.b16 %v8257
    %v8576 = vunpack.c.l.b16 %v8267
    %v8577 = vunpack.c.l.b16 %v8281
    %v8578 = vunpack.c.l.b16 %v8291
    %v8579 = vunpack.c.l.b16 %v8305
    %v8580 = vunpack.c.l.b16 %v8315
    %v8581 = vunpack.c.l.b16 %v8329
    %v8582 = vunpack.c.l.b16 %v8339
    %v8583 = vunpack.c.l.b16 %v8353
    %v8584 = vunpack.c.l.b16 %v8363
    %v8585 = vunpack.c.l.b16 %v8377
    %v8586 = vunpack.c.l.b16 %v8387
    %v8587 = vunpack.c.l.b16 %v8401
    %v8588 = vunpack.c.l.b16 %v8411
    %v8589 = vunpack.c.l.b16 %v8425
    %v8590 = vunpack.c.l.b16 %v8435
    %v8591 = vunpack.c.l.b16 %v8449
    %v8592 = vunpack.c.l.b16 %v8459
    %v8593 = vunpack.c.l.b16 %v8473
    %v8594 = vunpack.c.l.b16 %v8483
    %v8595 = vunpack.c.l.b16 %v8497
    %v8596 = vunpack.c.l.b16 %v8507
    %v8597 = vunpack.c.l.b16 %v8521
    %v8598 = vunpack.c.l.b16 %v8531
    %v8599 = vpack.c.b16 %v8536, %v8535
    %v8600 = vpack.c.b16 %v8538, %v8537
    %v8601 = vpack.c.b16 %v8540, %v8539
    %v8602 = vpack.c.b16 %v8542, %v8541
    %v8603 = vpack.c.b16 %v8544, %v8543
    %v8604 = vpack.c.b16 %v8546, %v8545
    %v8605 = vpack.c.b16 %v8548, %v8547
    %v8606 = vpack.c.b16 %v8550, %v8549
    %v8607 = vpack.c.b16 %v8552, %v8551
    %v8608 = vpack.c.b16 %v8554, %v8553
    %v8609 = vpack.c.b16 %v8556, %v8555
    %v8610 = vpack.c.b16 %v8558, %v8557
    %v8611 = vpack.c.b16 %v8560, %v8559
    %v8612 = vpack.c.b16 %v8562, %v8561
    %v8613 = vpack.c.b16 %v8564, %v8563
    %v8614 = vpack.c.b16 %v8566, %v8565
    %v8615 = vpack.c.b16 %v8568, %v8567
    %v8616 = vpack.c.b16 %v8570, %v8569
    %v8617 = vpack.c.b16 %v8572, %v8571
    %v8618 = vpack.c.b16 %v8574, %v8573
    %v8619 = vpack.c.b16 %v8576, %v8575
    %v8620 = vpack.c.b16 %v8578, %v8577
    %v8621 = vpack.c.b16 %v8580, %v8579
    %v8622 = vpack.c.b16 %v8582, %v8581
    %v8623 = vpack.c.b16 %v8584, %v8583
    %v8624 = vpack.c.b16 %v8586, %v8585
    %v8625 = vpack.c.b16 %v8588, %v8587
    %v8626 = vpack.c.b16 %v8590, %v8589
    %v8627 = vpack.c.b16 %v8592, %v8591
    %v8628 = vpack.c.b16 %v8594, %v8593
    %v8629 = vpack.c.b16 %v8596, %v8595
    %v8630 = vpack.c.b16 %v8598, %v8597
    %v8633 = vunpack.c.l.b16 %v8533
    %v8634 = vunpack.c.l.b16 %v8534
    %v8635 = vpack.c.b16 %v8634, %v8633
    %v8638 = vsel %vm2164, %v8599, 0
    %v8641 = vsel %vm2164, %v8600, 0
    %v8644 = vsel %vm2164, %v8601, 0
    %v8647 = vsel %vm2164, %v8602, 0
    %v8650 = vsel %vm2164, %v8603, 0
    %v8653 = vsel %vm2164, %v8604, 0
    %v8656 = vsel %vm2164, %v8605, 0
    %v8659 = vsel %vm2164, %v8606, 0
    %v8662 = vsel %vm2164, %v8607, 0
    %v8665 = vsel %vm2164, %v8608, 0
    %v8668 = vsel %vm2164, %v8609, 0
    %v8671 = vsel %vm2164, %v8610, 0
    %v8674 = vsel %vm2164, %v8611, 0
    %v8677 = vsel %vm2164, %v8612, 0
    %v8680 = vsel %vm2164, %v8613, 0
    %v8683 = vsel %vm2164, %v8614, 0
    %v8686 = vsel %vm2164, %v8615, 0
    %v8689 = vsel %vm2164, %v8616, 0
    %v8692 = vsel %vm2164, %v8617, 0
    %v8695 = vsel %vm2164, %v8618, 0
    %v8698 = vsel %vm2164, %v8619, 0
    %v8701 = vsel %vm2164, %v8620, 0
    %v8704 = vsel %vm2164, %v8621, 0
    %v8707 = vsel %vm2164, %v8622, 0
    %v8710 = vsel %vm2164, %v8623, 0
    %v8713 = vsel %vm2164, %v8624, 0
    %v8716 = vsel %vm2164, %v8625, 0
    %v8719 = vsel %vm2164, %v8626, 0
    %v8722 = vsel %vm2164, %v8627, 0
    %v8725 = vsel %vm2164, %v8628, 0
    %v8728 = vsel %vm2164, %v8629, 0
    %v8731 = vsel %vm2164, %v8630, 0
    %8733 = vmatprep.subr.bf16.mxu0 0
    %8734 = vmatpush1.bf16.msra.mxu0 %v8635
    %8735 = vmatprep.subr.bf16.mxu0 0
    %8736 = vmatpush1.bf16.msra.mxu0 0
    %8737 = vmatprep.subr.bf16.mxu0 0
    %8738 = vmatpush1.bf16.msra.mxu0 0
    %8739 = vmatprep.subr.bf16.mxu0 0
    %8740 = vmatpush1.bf16.msra.mxu0 0
    %8741 = vmatprep.subr.bf16.mxu0 0
    %8742 = vmatpush1.bf16.msra.mxu0 0
    %8743 = vmatprep.subr.bf16.mxu0 0
    %8744 = vmatpush1.bf16.msra.mxu0 0
    %8745 = vmatprep.subr.bf16.mxu0 0
    %8746 = vmatpush1.bf16.msra.mxu0 0
    %8747 = vmatprep.subr.bf16.mxu0 0
    %8748 = vmatpush1.bf16.msra.mxu0 0
    %8749 = vmatprep.subr.bf16.mxu0 0
    %8750 = vmatpush1.bf16.msra.mxu0 0
    %8751 = vmatprep.subr.bf16.mxu0 0
    %8752 = vmatpush1.bf16.msra.mxu0 0
    %8753 = vmatprep.subr.bf16.mxu0 0
    %8754 = vmatpush1.bf16.msra.mxu0 0
    %8755 = vmatprep.subr.bf16.mxu0 0
    %8756 = vmatpush1.bf16.msra.mxu0 0
    %8757 = vmatprep.subr.bf16.mxu0 0
    %8758 = vmatpush1.bf16.msra.mxu0 0
    %8759 = vmatprep.subr.bf16.mxu0 0
    %8760 = vmatpush1.bf16.msra.mxu0 0
    %8761 = vmatprep.subr.bf16.mxu0 0
    %8762 = vmatpush1.bf16.msra.mxu0 0
    %8763 = vmatprep.subr.bf16.mxu0 0
    %8764 = vmatpush1.bf16.msra.mxu0 0
    %8765 = vmatprep.mubr.bf16.mxu0 0
    %8766 = vmatmul.mubr.bf16.gmra.mrb[0].mxu0 %v8638
    %v8767 = vpop.f32.mrb[0].mxu0
    %v8768 = vadd.f32 0.0, %v8767
    %v8769 = vpop.f32.mrb[0].mxu0
    %v8770 = vpop.f32.mrb[0].mxu0
    %v8771 = vadd.f32 0.0, %v8770
    %v8772 = vpop.f32.mrb[0].mxu0
    %8773 = vmatprep.mubr.bf16.mxu0 0
    %8774 = vmatmul.mubr.bf16.gmra.mrb[0].mxu0 %v8641
    %v8775 = vpop.f32.mrb[0].mxu0
    %v8776 = vadd.f32 0.0, %v8775
    %v8777 = vpop.f32.mrb[0].mxu0
    %v8778 = vpop.f32.mrb[0].mxu0
    %v8779 = vadd.f32 0.0, %v8778
    %v8780 = vpop.f32.mrb[0].mxu0
    %8781 = vmatprep.mubr.bf16.mxu0 0
    %8782 = vmatmul.mubr.bf16.gmra.mrb[0].mxu0 %v8644
    %v8783 = vpop.f32.mrb[0].mxu0
    %v8784 = vadd.f32 0.0, %v8783
    %v8785 = vpop.f32.mrb[0].mxu0
    %v8786 = vpop.f32.mrb[0].mxu0
    %v8787 = vadd.f32 0.0, %v8786
    %v8788 = vpop.f32.mrb[0].mxu0
    %8789 = vmatprep.mubr.bf16.mxu0 0
    %8790 = vmatmul.mubr.bf16.gmra.mrb[0].mxu0 %v8647
    %v8791 = vpop.f32.mrb[0].mxu0
    %v8792 = vadd.f32 0.0, %v8791
    %v8793 = vpop.f32.mrb[0].mxu0
    %v8794 = vpop.f32.mrb[0].mxu0
    %v8795 = vadd.f32 0.0, %v8794
    %v8796 = vpop.f32.mrb[0].mxu0
    %8797 = vmatprep.mubr.bf16.mxu0 0
    %8798 = vmatmul.mubr.bf16.gmra.mrb[0].mxu0 %v8650
    %v8799 = vpop.f32.mrb[0].mxu0
    %v8800 = vadd.f32 0.0, %v8799
    %v8801 = vpop.f32.mrb[0].mxu0
    %v8802 = vpop.f32.mrb[0].mxu0
    %v8803 = vadd.f32 0.0, %v8802
    %v8804 = vpop.f32.mrb[0].mxu0
    %8805 = vmatprep.mubr.bf16.mxu0 0
    %8806 = vmatmul.mubr.bf16.gmra.mrb[0].mxu0 %v8653
    %v8807 = vpop.f32.mrb[0].mxu0
    %v8808 = vadd.f32 0.0, %v8807
    %v8809 = vpop.f32.mrb[0].mxu0
    %v8810 = vpop.f32.mrb[0].mxu0
    %v8811 = vadd.f32 0.0, %v8810
    %v8812 = vpop.f32.mrb[0].mxu0
    %8813 = vmatprep.mubr.bf16.mxu0 0
    %8814 = vmatmul.mubr.bf16.gmra.mrb[0].mxu0 %v8656
    %v8815 = vpop.f32.mrb[0].mxu0
    %v8816 = vadd.f32 0.0, %v8815
    %v8817 = vpop.f32.mrb[0].mxu0
    %v8818 = vpop.f32.mrb[0].mxu0
    %v8819 = vadd.f32 0.0, %v8818
    %v8820 = vpop.f32.mrb[0].mxu0
    %8821 = vmatprep.mubr.bf16.mxu0 0
    %8822 = vmatmul.mubr.bf16.gmra.mrb[0].mxu0 %v8659
    %v8823 = vpop.f32.mrb[0].mxu0
    %v8824 = vadd.f32 0.0, %v8823
    %v8825 = vpop.f32.mrb[0].mxu0
    %v8826 = vpop.f32.mrb[0].mxu0
    %v8827 = vadd.f32 0.0, %v8826
    %v8828 = vpop.f32.mrb[0].mxu0
    %8829 = vmatprep.mubr.bf16.mxu0 0
    %8830 = vmatmul.mubr.bf16.gmra.mrb[0].mxu0 %v8662
    %v8831 = vpop.f32.mrb[0].mxu0
    %v8832 = vadd.f32 0.0, %v8831
    %v8833 = vpop.f32.mrb[0].mxu0
    %v8834 = vpop.f32.mrb[0].mxu0
    %v8835 = vadd.f32 0.0, %v8834
    %v8836 = vpop.f32.mrb[0].mxu0
    %8837 = vmatprep.mubr.bf16.mxu0 0
    %8838 = vmatmul.mubr.bf16.gmra.mrb[0].mxu0 %v8665
    %v8839 = vpop.f32.mrb[0].mxu0
    %v8840 = vadd.f32 0.0, %v8839
    %v8841 = vpop.f32.mrb[0].mxu0
    %v8842 = vpop.f32.mrb[0].mxu0
    %v8843 = vadd.f32 0.0, %v8842
    %v8844 = vpop.f32.mrb[0].mxu0
    %8845 = vmatprep.mubr.bf16.mxu0 0
    %8846 = vmatmul.mubr.bf16.gmra.mrb[0].mxu0 %v8668
    %v8847 = vpop.f32.mrb[0].mxu0
    %v8848 = vadd.f32 0.0, %v8847
    %v8849 = vpop.f32.mrb[0].mxu0
    %v8850 = vpop.f32.mrb[0].mxu0
    %v8851 = vadd.f32 0.0, %v8850
    %v8852 = vpop.f32.mrb[0].mxu0
    %8853 = vmatprep.mubr.bf16.mxu0 0
    %8854 = vmatmul.mubr.bf16.gmra.mrb[0].mxu0 %v8671
    %v8855 = vpop.f32.mrb[0].mxu0
    %v8856 = vadd.f32 0.0, %v8855
    %v8857 = vpop.f32.mrb[0].mxu0
    %v8858 = vpop.f32.mrb[0].mxu0
    %v8859 = vadd.f32 0.0, %v8858
    %v8860 = vpop.f32.mrb[0].mxu0
    %8861 = vmatprep.mubr.bf16.mxu0 0
    %8862 = vmatmul.mubr.bf16.gmra.mrb[0].mxu0 %v8674
    %v8863 = vpop.f32.mrb[0].mxu0
    %v8864 = vadd.f32 0.0, %v8863
    %v8865 = vpop.f32.mrb[0].mxu0
    %v8866 = vpop.f32.mrb[0].mxu0
    %v8867 = vadd.f32 0.0, %v8866
    %v8868 = vpop.f32.mrb[0].mxu0
    %8869 = vmatprep.mubr.bf16.mxu0 0
    %8870 = vmatmul.mubr.bf16.gmra.mrb[0].mxu0 %v8677
    %v8871 = vpop.f32.mrb[0].mxu0
    %v8872 = vadd.f32 0.0, %v8871
    %v8873 = vpop.f32.mrb[0].mxu0
    %v8874 = vpop.f32.mrb[0].mxu0
    %v8875 = vadd.f32 0.0, %v8874
    %v8876 = vpop.f32.mrb[0].mxu0
    %8877 = vmatprep.mubr.bf16.mxu0 0
    %8878 = vmatmul.mubr.bf16.gmra.mrb[0].mxu0 %v8680
    %v8879 = vpop.f32.mrb[0].mxu0
    %v8880 = vadd.f32 0.0, %v8879
    %v8881 = vpop.f32.mrb[0].mxu0
    %v8882 = vpop.f32.mrb[0].mxu0
    %v8883 = vadd.f32 0.0, %v8882
    %v8884 = vpop.f32.mrb[0].mxu0
    %8885 = vmatprep.mubr.bf16.mxu0 0
    %8886 = vmatmul.mubr.bf16.gmra.mrb[0].mxu0 %v8683
    %v8887 = vpop.f32.mrb[0].mxu0
    %v8888 = vadd.f32 0.0, %v8887
    %v8889 = vpop.f32.mrb[0].mxu0
    %v8890 = vpop.f32.mrb[0].mxu0
    %v8891 = vadd.f32 0.0, %v8890
    %v8892 = vpop.f32.mrb[0].mxu0
    %8893 = vmatprep.mubr.bf16.mxu0 0
    %8894 = vmatmul.mubr.bf16.gmra.mrb[0].mxu0 %v8686
    %v8895 = vpop.f32.mrb[0].mxu0
    %v8896 = vadd.f32 0.0, %v8895
    %v8897 = vpop.f32.mrb[0].mxu0
    %v8898 = vpop.f32.mrb[0].mxu0
    %v8899 = vadd.f32 0.0, %v8898
    %v8900 = vpop.f32.mrb[0].mxu0
    %8901 = vmatprep.mubr.bf16.mxu0 0
    %8902 = vmatmul.mubr.bf16.gmra.mrb[0].mxu0 %v8689
    %v8903 = vpop.f32.mrb[0].mxu0
    %v8904 = vadd.f32 0.0, %v8903
    %v8905 = vpop.f32.mrb[0].mxu0
    %v8906 = vpop.f32.mrb[0].mxu0
    %v8907 = vadd.f32 0.0, %v8906
    %v8908 = vpop.f32.mrb[0].mxu0
    %8909 = vmatprep.mubr.bf16.mxu0 0
    %8910 = vmatmul.mubr.bf16.gmra.mrb[0].mxu0 %v8692
    %v8911 = vpop.f32.mrb[0].mxu0
    %v8912 = vadd.f32 0.0, %v8911
    %v8913 = vpop.f32.mrb[0].mxu0
    %v8914 = vpop.f32.mrb[0].mxu0
    %v8915 = vadd.f32 0.0, %v8914
    %v8916 = vpop.f32.mrb[0].mxu0
    %8917 = vmatprep.mubr.bf16.mxu0 0
    %8918 = vmatmul.mubr.bf16.gmra.mrb[0].mxu0 %v8695
    %v8919 = vpop.f32.mrb[0].mxu0
    %v8920 = vadd.f32 0.0, %v8919
    %v8921 = vpop.f32.mrb[0].mxu0
    %v8922 = vpop.f32.mrb[0].mxu0
    %v8923 = vadd.f32 0.0, %v8922
    %v8924 = vpop.f32.mrb[0].mxu0
    %8925 = vmatprep.mubr.bf16.mxu0 0
    %8926 = vmatmul.mubr.bf16.gmra.mrb[0].mxu0 %v8698
    %v8927 = vpop.f32.mrb[0].mxu0
    %v8928 = vadd.f32 0.0, %v8927
    %v8929 = vpop.f32.mrb[0].mxu0
    %v8930 = vpop.f32.mrb[0].mxu0
    %v8931 = vadd.f32 0.0, %v8930
    %v8932 = vpop.f32.mrb[0].mxu0
    %8933 = vmatprep.mubr.bf16.mxu0 0
    %8934 = vmatmul.mubr.bf16.gmra.mrb[0].mxu0 %v8701
    %v8935 = vpop.f32.mrb[0].mxu0
    %v8936 = vadd.f32 0.0, %v8935
    %v8937 = vpop.f32.mrb[0].mxu0
    %v8938 = vpop.f32.mrb[0].mxu0
    %v8939 = vadd.f32 0.0, %v8938
    %v8940 = vpop.f32.mrb[0].mxu0
    %8941 = vmatprep.mubr.bf16.mxu0 0
    %8942 = vmatmul.mubr.bf16.gmra.mrb[0].mxu0 %v8704
    %v8943 = vpop.f32.mrb[0].mxu0
    %v8944 = vadd.f32 0.0, %v8943
    %v8945 = vpop.f32.mrb[0].mxu0
    %v8946 = vpop.f32.mrb[0].mxu0
    %v8947 = vadd.f32 0.0, %v8946
    %v8948 = vpop.f32.mrb[0].mxu0
    %8949 = vmatprep.mubr.bf16.mxu0 0
    %8950 = vmatmul.mubr.bf16.gmra.mrb[0].mxu0 %v8707
    %v8951 = vpop.f32.mrb[0].mxu0
    %v8952 = vadd.f32 0.0, %v8951
    %v8953 = vpop.f32.mrb[0].mxu0
    %v8954 = vpop.f32.mrb[0].mxu0
    %v8955 = vadd.f32 0.0, %v8954
    %v8956 = vpop.f32.mrb[0].mxu0
    %8957 = vmatprep.mubr.bf16.mxu0 0
    %8958 = vmatmul.mubr.bf16.gmra.mrb[0].mxu0 %v8710
    %v8959 = vpop.f32.mrb[0].mxu0
    %v8960 = vadd.f32 0.0, %v8959
    %v8961 = vpop.f32.mrb[0].mxu0
    %v8962 = vpop.f32.mrb[0].mxu0
    %v8963 = vadd.f32 0.0, %v8962
    %v8964 = vpop.f32.mrb[0].mxu0
    %8965 = vmatprep.mubr.bf16.mxu0 0
    %8966 = vmatmul.mubr.bf16.gmra.mrb[0].mxu0 %v8713
    %v8967 = vpop.f32.mrb[0].mxu0
    %v8968 = vadd.f32 0.0, %v8967
    %v8969 = vpop.f32.mrb[0].mxu0
    %v8970 = vpop.f32.mrb[0].mxu0
    %v8971 = vadd.f32 0.0, %v8970
    %v8972 = vpop.f32.mrb[0].mxu0
    %8973 = vmatprep.mubr.bf16.mxu0 0
    %8974 = vmatmul.mubr.bf16.gmra.mrb[0].mxu0 %v8716
    %v8975 = vpop.f32.mrb[0].mxu0
    %v8976 = vadd.f32 0.0, %v8975
    %v8977 = vpop.f32.mrb[0].mxu0
    %v8978 = vpop.f32.mrb[0].mxu0
    %v8979 = vadd.f32 0.0, %v8978
    %v8980 = vpop.f32.mrb[0].mxu0
    %8981 = vmatprep.mubr.bf16.mxu0 0
    %8982 = vmatmul.mubr.bf16.gmra.mrb[0].mxu0 %v8719
    %v8983 = vpop.f32.mrb[0].mxu0
    %v8984 = vadd.f32 0.0, %v8983
    %v8985 = vpop.f32.mrb[0].mxu0
    %v8986 = vpop.f32.mrb[0].mxu0
    %v8987 = vadd.f32 0.0, %v8986
    %v8988 = vpop.f32.mrb[0].mxu0
    %8989 = vmatprep.mubr.bf16.mxu0 0
    %8990 = vmatmul.mubr.bf16.gmra.mrb[0].mxu0 %v8722
    %v8991 = vpop.f32.mrb[0].mxu0
    %v8992 = vadd.f32 0.0, %v8991
    %v8993 = vpop.f32.mrb[0].mxu0
    %v8994 = vpop.f32.mrb[0].mxu0
    %v8995 = vadd.f32 0.0, %v8994
    %v8996 = vpop.f32.mrb[0].mxu0
    %8997 = vmatprep.mubr.bf16.mxu0 0
    %8998 = vmatmul.mubr.bf16.gmra.mrb[0].mxu0 %v8725
    %v8999 = vpop.f32.mrb[0].mxu0
    %v9000 = vadd.f32 0.0, %v8999
    %v9001 = vpop.f32.mrb[0].mxu0
    %v9002 = vpop.f32.mrb[0].mxu0
    %v9003 = vadd.f32 0.0, %v9002
    %v9004 = vpop.f32.mrb[0].mxu0
    %9005 = vmatprep.mubr.bf16.mxu0 0
    %9006 = vmatmul.mubr.bf16.gmra.mrb[0].mxu0 %v8728
    %v9007 = vpop.f32.mrb[0].mxu0
    %v9008 = vadd.f32 0.0, %v9007
    %v9009 = vpop.f32.mrb[0].mxu0
    %v9010 = vpop.f32.mrb[0].mxu0
    %v9011 = vadd.f32 0.0, %v9010
    %v9012 = vpop.f32.mrb[0].mxu0
    %9013 = vmatprep.mubr.bf16.mxu0 0
    %9014 = vmatmul.mubr.bf16.gmra.mrb[0].mxu0 %v8731
    %v9015 = vpop.f32.mrb[0].mxu0
    %v9016 = vadd.f32 0.0, %v9015
    %v9017 = vpop.f32.mrb[0].mxu0
    %v9018 = vpop.f32.mrb[0].mxu0
    %v9019 = vadd.f32 0.0, %v9018
    %v9020 = vpop.f32.mrb[0].mxu0
    %9021 = vdwg.mxu0
    %v9022 = vadd.f32 %v7604, %v8768
    %v9023 = vadd.f32 %v7605, %v8771
    %v9024 = vadd.f32 %v7606, %v8776
    %v9025 = vadd.f32 %v7607, %v8779
    %v9026 = vadd.f32 %v7608, %v8784
    %v9027 = vadd.f32 %v7609, %v8787
    %v9028 = vadd.f32 %v7610, %v8792
    %v9029 = vadd.f32 %v7611, %v8795
    %v9030 = vadd.f32 %v7612, %v8800
    %v9031 = vadd.f32 %v7613, %v8803
    %v9032 = vadd.f32 %v7614, %v8808
    %v9033 = vadd.f32 %v7615, %v8811
    %v9034 = vadd.f32 %v7616, %v8816
    %v9035 = vadd.f32 %v7617, %v8819
    %v9036 = vadd.f32 %v7618, %v8824
    %v9037 = vadd.f32 %v7619, %v8827
    %v9038 = vadd.f32 %v7620, %v8832
    %v9039 = vadd.f32 %v7621, %v8835
    %v9040 = vadd.f32 %v7622, %v8840
    %v9041 = vadd.f32 %v7623, %v8843
    %v9042 = vadd.f32 %v7624, %v8848
    %v9043 = vadd.f32 %v7625, %v8851
    %v9044 = vadd.f32 %v7626, %v8856
    %v9045 = vadd.f32 %v7627, %v8859
    %v9046 = vadd.f32 %v7628, %v8864
    %v9047 = vadd.f32 %v7629, %v8867
    %v9048 = vadd.f32 %v7630, %v8872
    %v9049 = vadd.f32 %v7631, %v8875
    %v9050 = vadd.f32 %v7632, %v8880
    %v9051 = vadd.f32 %v7633, %v8883
    %v9052 = vadd.f32 %v7634, %v8888
    %v9053 = vadd.f32 %v7635, %v8891
    %v9054 = vadd.f32 %v7636, %v8896
    %v9055 = vadd.f32 %v7637, %v8899
    %v9056 = vadd.f32 %v7638, %v8904
    %v9057 = vadd.f32 %v7639, %v8907
    %v9058 = vadd.f32 %v7640, %v8912
    %v9059 = vadd.f32 %v7641, %v8915
    %v9060 = vadd.f32 %v7642, %v8920
    %v9061 = vadd.f32 %v7643, %v8923
    %v9062 = vadd.f32 %v7644, %v8928
    %v9063 = vadd.f32 %v7645, %v8931
    %v9064 = vadd.f32 %v7646, %v8936
    %v9065 = vadd.f32 %v7647, %v8939
    %v9066 = vadd.f32 %v7648, %v8944
    %v9067 = vadd.f32 %v7649, %v8947
    %v9068 = vadd.f32 %v7650, %v8952
    %v9069 = vadd.f32 %v7651, %v8955
    %v9070 = vadd.f32 %v7652, %v8960
    %v9071 = vadd.f32 %v7653, %v8963
    %v9072 = vadd.f32 %v7654, %v8968
    %v9073 = vadd.f32 %v7655, %v8971
    %v9074 = vadd.f32 %v7656, %v8976
    %v9075 = vadd.f32 %v7657, %v8979
    %v9076 = vadd.f32 %v7658, %v8984
    %v9077 = vadd.f32 %v7659, %v8987
    %v9078 = vadd.f32 %v7660, %v8992
    %v9079 = vadd.f32 %v7661, %v8995
    %v9080 = vadd.f32 %v7662, %v9000
    %v9081 = vadd.f32 %v7663, %v9003
    %v9082 = vadd.f32 %v7664, %v9008
    %v9083 = vadd.f32 %v7665, %v9011
    %v9084 = vadd.f32 %v7666, %v9016
    %v9085 = vadd.f32 %v7667, %v9019
    %v9086 = vld [vmem:[%s6985] sm:$0xe]
    %v9087 = vld [vmem:[%s6985 + $0xc] sm:$0xe]
    %v9088 = vld [vmem:[%s6985 + $0x18] sm:$0xe]
    %v9089 = vld [vmem:[%s6985 + $0x24] sm:$0xe]
    %v9090 = vld [vmem:[%s6985 + $0x30] sm:$0xe]
    %v9091 = vld [vmem:[%s6985 + $0x3c] sm:$0xe]
    %v9092 = vld [vmem:[%s6985 + $0x48] sm:$0xe]
    %v9093 = vld [vmem:[%s6985 + $0x54] sm:$0xe]
    %v9094 = vld [vmem:[%s6985 + $0x60] sm:$0xe]
    %v9095 = vld [vmem:[%s6985 + $0x6c] sm:$0xe]
    %v9096 = vld [vmem:[%s6985 + $0x78] sm:$0xe]
    %v9097 = vld [vmem:[%s6985 + $0x84] sm:$0xe]
    %v9098 = vld [vmem:[%s6985 + $0x90] sm:$0xe]
    %v9099 = vld [vmem:[%s6985 + $0x9c] sm:$0xe]
    %v9100 = vld [vmem:[%s6985 + $0xa8] sm:$0xe]
    %v9101 = vld [vmem:[%s6985 + $0xb4] sm:$0xe]
    %v9102 = vld [vmem:[%s6985 + $0xd8] sm:$0xe]
    %v9103 = vld [vmem:[%s6985 + $0xe4] sm:$0xe]
    %v9104 = vld [vmem:[%s6985 + $0xf0] sm:$0xe]
    %v9105 = vld [vmem:[%s6985 + $0xfc] sm:$0xe]
    %v9106 = vld [vmem:[%s6985 + $0x108] sm:$0xe]
    %v9107 = vld [vmem:[%s6985 + $0x114] sm:$0xe]
    %v9108 = vld [vmem:[%s6985 + $0x120] sm:$0xe]
    %v9109 = vld [vmem:[%s6985 + $0x12c] sm:$0xe]
    %v9110 = vld [vmem:[%s6985 + $0x138] sm:$0xe]
    %v9111 = vld [vmem:[%s6985 + $0x144] sm:$0xe]
    %v9112 = vld [vmem:[%s6985 + $0x150] sm:$0xe]
    %v9113 = vld [vmem:[%s6985 + $0x15c] sm:$0xe]
    %v9114 = vld [vmem:[%s6985 + $0x168] sm:$0xe]
    %v9115 = vld [vmem:[%s6985 + $0x174] sm:$0xe]
    %v9116 = vld [vmem:[%s6985 + $0x180] sm:$0xe]
    %v9117 = vld [vmem:[%s6985 + $0x18c] sm:$0xe]
    %v9214 = vrot.slane %v9086, 5
    %v9215 = vrot.slane %v9214, 4
    %v9216 = vrot.slane %v7669, 5
    %v9217 = vsel %vm3199, %v9215, %v9216
    %v9218 = vrot.slane %v9216, 4
    %v9219 = vrot.slane %v7670, 5
    %v9220 = vsel %vm3199, %v9218, %v9219
    %v9221 = vrot.slane %v9087, 5
    %v9222 = vrot.slane %v9221, 4
    %v9223 = vrot.slane %v7672, 5
    %v9224 = vsel %vm3199, %v9222, %v9223
    %v9225 = vrot.slane %v9223, 4
    %v9226 = vrot.slane %v7673, 5
    %v9227 = vsel %vm3199, %v9225, %v9226
    %v9228 = vrot.slane %v9088, 5
    %v9229 = vrot.slane %v9228, 4
    %v9230 = vrot.slane %v7675, 5
    %v9231 = vsel %vm3199, %v9229, %v9230
    %v9232 = vrot.slane %v9230, 4
    %v9233 = vrot.slane %v7676, 5
    %v9234 = vsel %vm3199, %v9232, %v9233
    %v9235 = vrot.slane %v9089, 5
    %v9236 = vrot.slane %v9235, 4
    %v9237 = vrot.slane %v7678, 5
    %v9238 = vsel %vm3199, %v9236, %v9237
    %v9239 = vrot.slane %v9237, 4
    %v9240 = vrot.slane %v7679, 5
    %v9241 = vsel %vm3199, %v9239, %v9240
    %v9242 = vrot.slane %v9090, 5
    %v9243 = vrot.slane %v9242, 4
    %v9244 = vrot.slane %v7681, 5
    %v9245 = vsel %vm3199, %v9243, %v9244
    %v9246 = vrot.slane %v9244, 4
    %v9247 = vrot.slane %v7682, 5
    %v9248 = vsel %vm3199, %v9246, %v9247
    %v9249 = vrot.slane %v9091, 5
    %v9250 = vrot.slane %v9249, 4
    %v9251 = vrot.slane %v7684, 5
    %v9252 = vsel %vm3199, %v9250, %v9251
    %v9253 = vrot.slane %v9251, 4
    %v9254 = vrot.slane %v7685, 5
    %v9255 = vsel %vm3199, %v9253, %v9254
    %v9256 = vrot.slane %v9092, 5
    %v9257 = vrot.slane %v9256, 4
    %v9258 = vrot.slane %v7687, 5
    %v9259 = vsel %vm3199, %v9257, %v9258
    %v9260 = vrot.slane %v9258, 4
    %v9261 = vrot.slane %v7688, 5
    %v9262 = vsel %vm3199, %v9260, %v9261
    %v9263 = vrot.slane %v9093, 5
    %v9264 = vrot.slane %v9263, 4
    %v9265 = vrot.slane %v7690, 5
    %v9266 = vsel %vm3199, %v9264, %v9265
    %v9267 = vrot.slane %v9265, 4
    %v9268 = vrot.slane %v7691, 5
    %v9269 = vsel %vm3199, %v9267, %v9268
    %v9270 = vrot.slane %v9094, 5
    %v9271 = vrot.slane %v9270, 4
    %v9272 = vrot.slane %v7693, 5
    %v9273 = vsel %vm3199, %v9271, %v9272
    %v9274 = vrot.slane %v9272, 4
    %v9275 = vrot.slane %v7694, 5
    %v9276 = vsel %vm3199, %v9274, %v9275
    %v9277 = vrot.slane %v9095, 5
    %v9278 = vrot.slane %v9277, 4
    %v9279 = vrot.slane %v7696, 5
    %v9280 = vsel %vm3199, %v9278, %v9279
    %v9281 = vrot.slane %v9279, 4
    %v9282 = vrot.slane %v7697, 5
    %v9283 = vsel %vm3199, %v9281, %v9282
    %v9284 = vrot.slane %v9096, 5
    %v9285 = vrot.slane %v9284, 4
    %v9286 = vrot.slane %v7699, 5
    %v9287 = vsel %vm3199, %v9285, %v9286
    %v9288 = vrot.slane %v9286, 4
    %v9289 = vrot.slane %v7700, 5
    %v9290 = vsel %vm3199, %v9288, %v9289
    %v9291 = vrot.slane %v9097, 5
    %v9292 = vrot.slane %v9291, 4
    %v9293 = vrot.slane %v7702, 5
    %v9294 = vsel %vm3199, %v9292, %v9293
    %v9295 = vrot.slane %v9293, 4
    %v9296 = vrot.slane %v7703, 5
    %v9297 = vsel %vm3199, %v9295, %v9296
    %v9298 = vrot.slane %v9098, 5
    %v9299 = vrot.slane %v9298, 4
    %v9300 = vrot.slane %v7705, 5
    %v9301 = vsel %vm3199, %v9299, %v9300
    %v9302 = vrot.slane %v9300, 4
    %v9303 = vrot.slane %v7706, 5
    %v9304 = vsel %vm3199, %v9302, %v9303
    %v9305 = vrot.slane %v9099, 5
    %v9306 = vrot.slane %v9305, 4
    %v9307 = vrot.slane %v7708, 5
    %v9308 = vsel %vm3199, %v9306, %v9307
    %v9309 = vrot.slane %v9307, 4
    %v9310 = vrot.slane %v7709, 5
    %v9311 = vsel %vm3199, %v9309, %v9310
    %v9312 = vrot.slane %v9100, 5
    %v9313 = vrot.slane %v9312, 4
    %v9314 = vrot.slane %v7711, 5
    %v9315 = vsel %vm3199, %v9313, %v9314
    %v9316 = vrot.slane %v9314, 4
    %v9317 = vrot.slane %v7712, 5
    %v9318 = vsel %vm3199, %v9316, %v9317
    %v9319 = vrot.slane %v9101, 5
    %v9320 = vrot.slane %v9319, 4
    %v9321 = vrot.slane %v7714, 5
    %v9322 = vsel %vm3199, %v9320, %v9321
    %v9323 = vrot.slane %v9321, 4
    %v9324 = vrot.slane %v7715, 5
    %v9325 = vsel %vm3199, %v9323, %v9324
    %v9326 = vrot.slane %v9102, 5
    %v9327 = vrot.slane %v9326, 4
    %v9328 = vrot.slane %v7717, 5
    %v9329 = vsel %vm3199, %v9327, %v9328
    %v9330 = vrot.slane %v9328, 4
    %v9331 = vrot.slane %v7718, 5
    %v9332 = vsel %vm3199, %v9330, %v9331
    %v9333 = vrot.slane %v9103, 5
    %v9334 = vrot.slane %v9333, 4
    %v9335 = vrot.slane %v7720, 5
    %v9336 = vsel %vm3199, %v9334, %v9335
    %v9337 = vrot.slane %v9335, 4
    %v9338 = vrot.slane %v7721, 5
    %v9339 = vsel %vm3199, %v9337, %v9338
    %v9340 = vrot.slane %v9104, 5
    %v9341 = vrot.slane %v9340, 4
    %v9342 = vrot.slane %v7723, 5
    %v9343 = vsel %vm3199, %v9341, %v9342
    %v9344 = vrot.slane %v9342, 4
    %v9345 = vrot.slane %v7724, 5
    %v9346 = vsel %vm3199, %v9344, %v9345
    %v9347 = vrot.slane %v9105, 5
    %v9348 = vrot.slane %v9347, 4
    %v9349 = vrot.slane %v7726, 5
    %v9350 = vsel %vm3199, %v9348, %v9349
    %v9351 = vrot.slane %v9349, 4
    %v9352 = vrot.slane %v7727, 5
    %v9353 = vsel %vm3199, %v9351, %v9352
    %v9354 = vrot.slane %v9106, 5
    %v9355 = vrot.slane %v9354, 4
    %v9356 = vrot.slane %v7729, 5
    %v9357 = vsel %vm3199, %v9355, %v9356
    %v9358 = vrot.slane %v9356, 4
    %v9359 = vrot.slane %v7730, 5
    %v9360 = vsel %vm3199, %v9358, %v9359
    %v9361 = vrot.slane %v9107, 5
    %v9362 = vrot.slane %v9361, 4
    %v9363 = vrot.slane %v7732, 5
    %v9364 = vsel %vm3199, %v9362, %v9363
    %v9365 = vrot.slane %v9363, 4
    %v9366 = vrot.slane %v7733, 5
    %v9367 = vsel %vm3199, %v9365, %v9366
    %v9368 = vrot.slane %v9108, 5
    %v9369 = vrot.slane %v9368, 4
    %v9370 = vrot.slane %v7735, 5
    %v9371 = vsel %vm3199, %v9369, %v9370
    %v9372 = vrot.slane %v9370, 4
    %v9373 = vrot.slane %v7736, 5
    %v9374 = vsel %vm3199, %v9372, %v9373
    %v9375 = vrot.slane %v9109, 5
    %v9376 = vrot.slane %v9375, 4
    %v9377 = vrot.slane %v7738, 5
    %v9378 = vsel %vm3199, %v9376, %v9377
    %v9379 = vrot.slane %v9377, 4
    %v9380 = vrot.slane %v7739, 5
    %v9381 = vsel %vm3199, %v9379, %v9380
    %v9382 = vrot.slane %v9110, 5
    %v9383 = vrot.slane %v9382, 4
    %v9384 = vrot.slane %v7741, 5
    %v9385 = vsel %vm3199, %v9383, %v9384
    %v9386 = vrot.slane %v9384, 4
    %v9387 = vrot.slane %v7742, 5
    %v9388 = vsel %vm3199, %v9386, %v9387
    %v9389 = vrot.slane %v9111, 5
    %v9390 = vrot.slane %v9389, 4
    %v9391 = vrot.slane %v7744, 5
    %v9392 = vsel %vm3199, %v9390, %v9391
    %v9393 = vrot.slane %v9391, 4
    %v9394 = vrot.slane %v7745, 5
    %v9395 = vsel %vm3199, %v9393, %v9394
    %v9396 = vrot.slane %v9112, 5
    %v9397 = vrot.slane %v9396, 4
    %v9398 = vrot.slane %v7747, 5
    %v9399 = vsel %vm3199, %v9397, %v9398
    %v9400 = vrot.slane %v9398, 4
    %v9401 = vrot.slane %v7748, 5
    %v9402 = vsel %vm3199, %v9400, %v9401
    %v9403 = vrot.slane %v9113, 5
    %v9404 = vrot.slane %v9403, 4
    %v9405 = vrot.slane %v7750, 5
    %v9406 = vsel %vm3199, %v9404, %v9405
    %v9407 = vrot.slane %v9405, 4
    %v9408 = vrot.slane %v7751, 5
    %v9409 = vsel %vm3199, %v9407, %v9408
    %v9410 = vrot.slane %v9114, 5
    %v9411 = vrot.slane %v9410, 4
    %v9412 = vrot.slane %v7753, 5
    %v9413 = vsel %vm3199, %v9411, %v9412
    %v9414 = vrot.slane %v9412, 4
    %v9415 = vrot.slane %v7754, 5
    %v9416 = vsel %vm3199, %v9414, %v9415
    %v9417 = vrot.slane %v9115, 5
    %v9418 = vrot.slane %v9417, 4
    %v9419 = vrot.slane %v7756, 5
    %v9420 = vsel %vm3199, %v9418, %v9419
    %v9421 = vrot.slane %v9419, 4
    %v9422 = vrot.slane %v7757, 5
    %v9423 = vsel %vm3199, %v9421, %v9422
    %v9424 = vrot.slane %v9116, 5
    %v9425 = vrot.slane %v9424, 4
    %v9426 = vrot.slane %v7759, 5
    %v9427 = vsel %vm3199, %v9425, %v9426
    %v9428 = vrot.slane %v9426, 4
    %v9429 = vrot.slane %v7760, 5
    %v9430 = vsel %vm3199, %v9428, %v9429
    %v9431 = vrot.slane %v9117, 5
    %v9432 = vrot.slane %v9431, 4
    %v9433 = vrot.slane %v7762, 5
    %v9434 = vsel %vm3199, %v9432, %v9433
    %v9435 = vrot.slane %v9433, 4
    %v9436 = vrot.slane %v7763, 5
    %v9437 = vsel %vm3199, %v9435, %v9436
    %s9438 = scalar_lea.vmem [#allocation6], 64
    %v9439 = vld [vmem:[%s9438] sm:$0xf]
    %v9440 = vld [vmem:[%s9438 + $0x4] sm:$0xf]
    %v9441 = vunpack.c.l.b16 %v9217
    %v9442 = vunpack.c.l.b16 %v9220
    %v9443 = vunpack.c.l.b16 %v9224
    %v9444 = vunpack.c.l.b16 %v9227
    %v9445 = vunpack.c.l.b16 %v9231
    %v9446 = vunpack.c.l.b16 %v9234
    %v9447 = vunpack.c.l.b16 %v9238
    %v9448 = vunpack.c.l.b16 %v9241
    %v9449 = vunpack.c.l.b16 %v9245
    %v9450 = vunpack.c.l.b16 %v9248
    %v9451 = vunpack.c.l.b16 %v9252
    %v9452 = vunpack.c.l.b16 %v9255
    %v9453 = vunpack.c.l.b16 %v9259
    %v9454 = vunpack.c.l.b16 %v9262
    %v9455 = vunpack.c.l.b16 %v9266
    %v9456 = vunpack.c.l.b16 %v9269
    %v9457 = vunpack.c.l.b16 %v9273
    %v9458 = vunpack.c.l.b16 %v9276
    %v9459 = vunpack.c.l.b16 %v9280
    %v9460 = vunpack.c.l.b16 %v9283
    %v9461 = vunpack.c.l.b16 %v9287
    %v9462 = vunpack.c.l.b16 %v9290
    %v9463 = vunpack.c.l.b16 %v9294
    %v9464 = vunpack.c.l.b16 %v9297
    %v9465 = vunpack.c.l.b16 %v9301
    %v9466 = vunpack.c.l.b16 %v9304
    %v9467 = vunpack.c.l.b16 %v9308
    %v9468 = vunpack.c.l.b16 %v9311
    %v9469 = vunpack.c.l.b16 %v9315
    %v9470 = vunpack.c.l.b16 %v9318
    %v9471 = vunpack.c.l.b16 %v9322
    %v9472 = vunpack.c.l.b16 %v9325
    %v9473 = vunpack.c.l.b16 %v9329
    %v9474 = vunpack.c.l.b16 %v9332
    %v9475 = vunpack.c.l.b16 %v9336
    %v9476 = vunpack.c.l.b16 %v9339
    %v9477 = vunpack.c.l.b16 %v9343
    %v9478 = vunpack.c.l.b16 %v9346
    %v9479 = vunpack.c.l.b16 %v9350
    %v9480 = vunpack.c.l.b16 %v9353
    %v9481 = vunpack.c.l.b16 %v9357
    %v9482 = vunpack.c.l.b16 %v9360
    %v9483 = vunpack.c.l.b16 %v9364
    %v9484 = vunpack.c.l.b16 %v9367
    %v9485 = vunpack.c.l.b16 %v9371
    %v9486 = vunpack.c.l.b16 %v9374
    %v9487 = vunpack.c.l.b16 %v9378
    %v9488 = vunpack.c.l.b16 %v9381
    %v9489 = vunpack.c.l.b16 %v9385
    %v9490 = vunpack.c.l.b16 %v9388
    %v9491 = vunpack.c.l.b16 %v9392
    %v9492 = vunpack.c.l.b16 %v9395
    %v9493 = vunpack.c.l.b16 %v9399
    %v9494 = vunpack.c.l.b16 %v9402
    %v9495 = vunpack.c.l.b16 %v9406
    %v9496 = vunpack.c.l.b16 %v9409
    %v9497 = vunpack.c.l.b16 %v9413
    %v9498 = vunpack.c.l.b16 %v9416
    %v9499 = vunpack.c.l.b16 %v9420
    %v9500 = vunpack.c.l.b16 %v9423
    %v9501 = vunpack.c.l.b16 %v9427
    %v9502 = vunpack.c.l.b16 %v9430
    %v9503 = vunpack.c.l.b16 %v9434
    %v9504 = vunpack.c.l.b16 %v9437
    %v9505 = vpack.c.b16 %v9442, %v9441
    %v9506 = vpack.c.b16 %v9444, %v9443
    %v9507 = vpack.c.b16 %v9446, %v9445
    %v9508 = vpack.c.b16 %v9448, %v9447
    %v9509 = vpack.c.b16 %v9450, %v9449
    %v9510 = vpack.c.b16 %v9452, %v9451
    %v9511 = vpack.c.b16 %v9454, %v9453
    %v9512 = vpack.c.b16 %v9456, %v9455
    %v9513 = vpack.c.b16 %v9458, %v9457
    %v9514 = vpack.c.b16 %v9460, %v9459
    %v9515 = vpack.c.b16 %v9462, %v9461
    %v9516 = vpack.c.b16 %v9464, %v9463
    %v9517 = vpack.c.b16 %v9466, %v9465
    %v9518 = vpack.c.b16 %v9468, %v9467
    %v9519 = vpack.c.b16 %v9470, %v9469
    %v9520 = vpack.c.b16 %v9472, %v9471
    %v9521 = vpack.c.b16 %v9474, %v9473
    %v9522 = vpack.c.b16 %v9476, %v9475
    %v9523 = vpack.c.b16 %v9478, %v9477
    %v9524 = vpack.c.b16 %v9480, %v9479
    %v9525 = vpack.c.b16 %v9482, %v9481
    %v9526 = vpack.c.b16 %v9484, %v9483
    %v9527 = vpack.c.b16 %v9486, %v9485
    %v9528 = vpack.c.b16 %v9488, %v9487
    %v9529 = vpack.c.b16 %v9490, %v9489
    %v9530 = vpack.c.b16 %v9492, %v9491
    %v9531 = vpack.c.b16 %v9494, %v9493
    %v9532 = vpack.c.b16 %v9496, %v9495
    %v9533 = vpack.c.b16 %v9498, %v9497
    %v9534 = vpack.c.b16 %v9500, %v9499
    %v9535 = vpack.c.b16 %v9502, %v9501
    %v9536 = vpack.c.b16 %v9504, %v9503
    %v9539 = vunpack.c.l.b16 %v9439
    %v9540 = vunpack.c.l.b16 %v9440
    %v9541 = vpack.c.b16 %v9540, %v9539
    %v9544 = vsel %vm2164, %v9505, 0
    %v9547 = vsel %vm2164, %v9506, 0
    %v9550 = vsel %vm2164, %v9507, 0
    %v9553 = vsel %vm2164, %v9508, 0
    %v9556 = vsel %vm2164, %v9509, 0
    %v9559 = vsel %vm2164, %v9510, 0
    %v9562 = vsel %vm2164, %v9511, 0
    %v9565 = vsel %vm2164, %v9512, 0
    %v9568 = vsel %vm2164, %v9513, 0
    %v9571 = vsel %vm2164, %v9514, 0
    %v9574 = vsel %vm2164, %v9515, 0
    %v9577 = vsel %vm2164, %v9516, 0
    %v9580 = vsel %vm2164, %v9517, 0
    %v9583 = vsel %vm2164, %v9518, 0
    %v9586 = vsel %vm2164, %v9519, 0
    %v9589 = vsel %vm2164, %v9520, 0
    %v9592 = vsel %vm2164, %v9521, 0
    %v9595 = vsel %vm2164, %v9522, 0
    %v9598 = vsel %vm2164, %v9523, 0
    %v9601 = vsel %vm2164, %v9524, 0
    %v9604 = vsel %vm2164, %v9525, 0
    %v9607 = vsel %vm2164, %v9526, 0
    %v9610 = vsel %vm2164, %v9527, 0
    %v9613 = vsel %vm2164, %v9528, 0
    %v9616 = vsel %vm2164, %v9529, 0
    %v9619 = vsel %vm2164, %v9530, 0
    %v9622 = vsel %vm2164, %v9531, 0
    %v9625 = vsel %vm2164, %v9532, 0
    %v9628 = vsel %vm2164, %v9533, 0
    %v9631 = vsel %vm2164, %v9534, 0
    %v9634 = vsel %vm2164, %v9535, 0
    %v9637 = vsel %vm2164, %v9536, 0
    %9639 = vmatprep.subr.bf16.mxu0 0
    %9640 = vmatpush1.bf16.msra.mxu0 %v9541
    %9641 = vmatprep.subr.bf16.mxu0 0
    %9642 = vmatpush1.bf16.msra.mxu0 0
    %9643 = vmatprep.subr.bf16.mxu0 0
    %9644 = vmatpush1.bf16.msra.mxu0 0
    %9645 = vmatprep.subr.bf16.mxu0 0
    %9646 = vmatpush1.bf16.msra.mxu0 0
    %9647 = vmatprep.subr.bf16.mxu0 0
    %9648 = vmatpush1.bf16.msra.mxu0 0
    %9649 = vmatprep.subr.bf16.mxu0 0
    %9650 = vmatpush1.bf16.msra.mxu0 0
    %9651 = vmatprep.subr.bf16.mxu0 0
    %9652 = vmatpush1.bf16.msra.mxu0 0
    %9653 = vmatprep.subr.bf16.mxu0 0
    %9654 = vmatpush1.bf16.msra.mxu0 0
    %9655 = vmatprep.subr.bf16.mxu0 0
    %9656 = vmatpush1.bf16.msra.mxu0 0
    %9657 = vmatprep.subr.bf16.mxu0 0
    %9658 = vmatpush1.bf16.msra.mxu0 0
    %9659 = vmatprep.subr.bf16.mxu0 0
    %9660 = vmatpush1.bf16.msra.mxu0 0
    %9661 = vmatprep.subr.bf16.mxu0 0
    %9662 = vmatpush1.bf16.msra.mxu0 0
    %9663 = vmatprep.subr.bf16.mxu0 0
    %9664 = vmatpush1.bf16.msra.mxu0 0
    %9665 = vmatprep.subr.bf16.mxu0 0
    %9666 = vmatpush1.bf16.msra.mxu0 0
    %9667 = vmatprep.subr.bf16.mxu0 0
    %9668 = vmatpush1.bf16.msra.mxu0 0
    %9669 = vmatprep.subr.bf16.mxu0 0
    %9670 = vmatpush1.bf16.msra.mxu0 0
    %9671 = vmatprep.mubr.bf16.mxu0 0
    %9672 = vmatmul.mubr.bf16.gmra.mrb[0].mxu0 %v9544
    %v9673 = vpop.f32.mrb[0].mxu0
    %v9674 = vadd.f32 0.0, %v9673
    %v9675 = vpop.f32.mrb[0].mxu0
    %v9676 = vpop.f32.mrb[0].mxu0
    %v9677 = vadd.f32 0.0, %v9676
    %v9678 = vpop.f32.mrb[0].mxu0
    %9679 = vmatprep.mubr.bf16.mxu0 0
    %9680 = vmatmul.mubr.bf16.gmra.mrb[0].mxu0 %v9547
    %v9681 = vpop.f32.mrb[0].mxu0
    %v9682 = vadd.f32 0.0, %v9681
    %v9683 = vpop.f32.mrb[0].mxu0
    %v9684 = vpop.f32.mrb[0].mxu0
    %v9685 = vadd.f32 0.0, %v9684
    %v9686 = vpop.f32.mrb[0].mxu0
    %9687 = vmatprep.mubr.bf16.mxu0 0
    %9688 = vmatmul.mubr.bf16.gmra.mrb[0].mxu0 %v9550
    %v9689 = vpop.f32.mrb[0].mxu0
    %v9690 = vadd.f32 0.0, %v9689
    %v9691 = vpop.f32.mrb[0].mxu0
    %v9692 = vpop.f32.mrb[0].mxu0
    %v9693 = vadd.f32 0.0, %v9692
    %v9694 = vpop.f32.mrb[0].mxu0
    %9695 = vmatprep.mubr.bf16.mxu0 0
    %9696 = vmatmul.mubr.bf16.gmra.mrb[0].mxu0 %v9553
    %v9697 = vpop.f32.mrb[0].mxu0
    %v9698 = vadd.f32 0.0, %v9697
    %v9699 = vpop.f32.mrb[0].mxu0
    %v9700 = vpop.f32.mrb[0].mxu0
    %v9701 = vadd.f32 0.0, %v9700
    %v9702 = vpop.f32.mrb[0].mxu0
    %9703 = vmatprep.mubr.bf16.mxu0 0
    %9704 = vmatmul.mubr.bf16.gmra.mrb[0].mxu0 %v9556
    %v9705 = vpop.f32.mrb[0].mxu0
    %v9706 = vadd.f32 0.0, %v9705
    %v9707 = vpop.f32.mrb[0].mxu0
    %v9708 = vpop.f32.mrb[0].mxu0
    %v9709 = vadd.f32 0.0, %v9708
    %v9710 = vpop.f32.mrb[0].mxu0
    %9711 = vmatprep.mubr.bf16.mxu0 0
    %9712 = vmatmul.mubr.bf16.gmra.mrb[0].mxu0 %v9559
    %v9713 = vpop.f32.mrb[0].mxu0
    %v9714 = vadd.f32 0.0, %v9713
    %v9715 = vpop.f32.mrb[0].mxu0
    %v9716 = vpop.f32.mrb[0].mxu0
    %v9717 = vadd.f32 0.0, %v9716
    %v9718 = vpop.f32.mrb[0].mxu0
    %9719 = vmatprep.mubr.bf16.mxu0 0
    %9720 = vmatmul.mubr.bf16.gmra.mrb[0].mxu0 %v9562
    %v9721 = vpop.f32.mrb[0].mxu0
    %v9722 = vadd.f32 0.0, %v9721
    %v9723 = vpop.f32.mrb[0].mxu0
    %v9724 = vpop.f32.mrb[0].mxu0
    %v9725 = vadd.f32 0.0, %v9724
    %v9726 = vpop.f32.mrb[0].mxu0
    %9727 = vmatprep.mubr.bf16.mxu0 0
    %9728 = vmatmul.mubr.bf16.gmra.mrb[0].mxu0 %v9565
    %v9729 = vpop.f32.mrb[0].mxu0
    %v9730 = vadd.f32 0.0, %v9729
    %v9731 = vpop.f32.mrb[0].mxu0
    %v9732 = vpop.f32.mrb[0].mxu0
    %v9733 = vadd.f32 0.0, %v9732
    %v9734 = vpop.f32.mrb[0].mxu0
    %9735 = vmatprep.mubr.bf16.mxu0 0
    %9736 = vmatmul.mubr.bf16.gmra.mrb[0].mxu0 %v9568
    %v9737 = vpop.f32.mrb[0].mxu0
    %v9738 = vadd.f32 0.0, %v9737
    %v9739 = vpop.f32.mrb[0].mxu0
    %v9740 = vpop.f32.mrb[0].mxu0
    %v9741 = vadd.f32 0.0, %v9740
    %v9742 = vpop.f32.mrb[0].mxu0
    %9743 = vmatprep.mubr.bf16.mxu0 0
    %9744 = vmatmul.mubr.bf16.gmra.mrb[0].mxu0 %v9571
    %v9745 = vpop.f32.mrb[0].mxu0
    %v9746 = vadd.f32 0.0, %v9745
    %v9747 = vpop.f32.mrb[0].mxu0
    %v9748 = vpop.f32.mrb[0].mxu0
    %v9749 = vadd.f32 0.0, %v9748
    %v9750 = vpop.f32.mrb[0].mxu0
    %9751 = vmatprep.mubr.bf16.mxu0 0
    %9752 = vmatmul.mubr.bf16.gmra.mrb[0].mxu0 %v9574
    %v9753 = vpop.f32.mrb[0].mxu0
    %v9754 = vadd.f32 0.0, %v9753
    %v9755 = vpop.f32.mrb[0].mxu0
    %v9756 = vpop.f32.mrb[0].mxu0
    %v9757 = vadd.f32 0.0, %v9756
    %v9758 = vpop.f32.mrb[0].mxu0
    %9759 = vmatprep.mubr.bf16.mxu0 0
    %9760 = vmatmul.mubr.bf16.gmra.mrb[0].mxu0 %v9577
    %v9761 = vpop.f32.mrb[0].mxu0
    %v9762 = vadd.f32 0.0, %v9761
    %v9763 = vpop.f32.mrb[0].mxu0
    %v9764 = vpop.f32.mrb[0].mxu0
    %v9765 = vadd.f32 0.0, %v9764
    %v9766 = vpop.f32.mrb[0].mxu0
    %9767 = vmatprep.mubr.bf16.mxu0 0
    %9768 = vmatmul.mubr.bf16.gmra.mrb[0].mxu0 %v9580
    %v9769 = vpop.f32.mrb[0].mxu0
    %v9770 = vadd.f32 0.0, %v9769
    %v9771 = vpop.f32.mrb[0].mxu0
    %v9772 = vpop.f32.mrb[0].mxu0
    %v9773 = vadd.f32 0.0, %v9772
    %v9774 = vpop.f32.mrb[0].mxu0
    %9775 = vmatprep.mubr.bf16.mxu0 0
    %9776 = vmatmul.mubr.bf16.gmra.mrb[0].mxu0 %v9583
    %v9777 = vpop.f32.mrb[0].mxu0
    %v9778 = vadd.f32 0.0, %v9777
    %v9779 = vpop.f32.mrb[0].mxu0
    %v9780 = vpop.f32.mrb[0].mxu0
    %v9781 = vadd.f32 0.0, %v9780
    %v9782 = vpop.f32.mrb[0].mxu0
    %9783 = vmatprep.mubr.bf16.mxu0 0
    %9784 = vmatmul.mubr.bf16.gmra.mrb[0].mxu0 %v9586
    %v9785 = vpop.f32.mrb[0].mxu0
    %v9786 = vadd.f32 0.0, %v9785
    %v9787 = vpop.f32.mrb[0].mxu0
    %v9788 = vpop.f32.mrb[0].mxu0
    %v9789 = vadd.f32 0.0, %v9788
    %v9790 = vpop.f32.mrb[0].mxu0
    %9791 = vmatprep.mubr.bf16.mxu0 0
    %9792 = vmatmul.mubr.bf16.gmra.mrb[0].mxu0 %v9589
    %v9793 = vpop.f32.mrb[0].mxu0
    %v9794 = vadd.f32 0.0, %v9793
    %v9795 = vpop.f32.mrb[0].mxu0
    %v9796 = vpop.f32.mrb[0].mxu0
    %v9797 = vadd.f32 0.0, %v9796
    %v9798 = vpop.f32.mrb[0].mxu0
    %9799 = vmatprep.mubr.bf16.mxu0 0
    %9800 = vmatmul.mubr.bf16.gmra.mrb[0].mxu0 %v9592
    %v9801 = vpop.f32.mrb[0].mxu0
    %v9802 = vadd.f32 0.0, %v9801
    %v9803 = vpop.f32.mrb[0].mxu0
    %v9804 = vpop.f32.mrb[0].mxu0
    %v9805 = vadd.f32 0.0, %v9804
    %v9806 = vpop.f32.mrb[0].mxu0
    %9807 = vmatprep.mubr.bf16.mxu0 0
    %9808 = vmatmul.mubr.bf16.gmra.mrb[0].mxu0 %v9595
    %v9809 = vpop.f32.mrb[0].mxu0
    %v9810 = vadd.f32 0.0, %v9809
    %v9811 = vpop.f32.mrb[0].mxu0
    %v9812 = vpop.f32.mrb[0].mxu0
    %v9813 = vadd.f32 0.0, %v9812
    %v9814 = vpop.f32.mrb[0].mxu0
    %9815 = vmatprep.mubr.bf16.mxu0 0
    %9816 = vmatmul.mubr.bf16.gmra.mrb[0].mxu0 %v9598
    %v9817 = vpop.f32.mrb[0].mxu0
    %v9818 = vadd.f32 0.0, %v9817
    %v9819 = vpop.f32.mrb[0].mxu0
    %v9820 = vpop.f32.mrb[0].mxu0
    %v9821 = vadd.f32 0.0, %v9820
    %v9822 = vpop.f32.mrb[0].mxu0
    %9823 = vmatprep.mubr.bf16.mxu0 0
    %9824 = vmatmul.mubr.bf16.gmra.mrb[0].mxu0 %v9601
    %v9825 = vpop.f32.mrb[0].mxu0
    %v9826 = vadd.f32 0.0, %v9825
    %v9827 = vpop.f32.mrb[0].mxu0
    %v9828 = vpop.f32.mrb[0].mxu0
    %v9829 = vadd.f32 0.0, %v9828
    %v9830 = vpop.f32.mrb[0].mxu0
    %9831 = vmatprep.mubr.bf16.mxu0 0
    %9832 = vmatmul.mubr.bf16.gmra.mrb[0].mxu0 %v9604
    %v9833 = vpop.f32.mrb[0].mxu0
    %v9834 = vadd.f32 0.0, %v9833
    %v9835 = vpop.f32.mrb[0].mxu0
    %v9836 = vpop.f32.mrb[0].mxu0
    %v9837 = vadd.f32 0.0, %v9836
    %v9838 = vpop.f32.mrb[0].mxu0
    %9839 = vmatprep.mubr.bf16.mxu0 0
    %9840 = vmatmul.mubr.bf16.gmra.mrb[0].mxu0 %v9607
    %v9841 = vpop.f32.mrb[0].mxu0
    %v9842 = vadd.f32 0.0, %v9841
    %v9843 = vpop.f32.mrb[0].mxu0
    %v9844 = vpop.f32.mrb[0].mxu0
    %v9845 = vadd.f32 0.0, %v9844
    %v9846 = vpop.f32.mrb[0].mxu0
    %9847 = vmatprep.mubr.bf16.mxu0 0
    %9848 = vmatmul.mubr.bf16.gmra.mrb[0].mxu0 %v9610
    %v9849 = vpop.f32.mrb[0].mxu0
    %v9850 = vadd.f32 0.0, %v9849
    %v9851 = vpop.f32.mrb[0].mxu0
    %v9852 = vpop.f32.mrb[0].mxu0
    %v9853 = vadd.f32 0.0, %v9852
    %v9854 = vpop.f32.mrb[0].mxu0
    %9855 = vmatprep.mubr.bf16.mxu0 0
    %9856 = vmatmul.mubr.bf16.gmra.mrb[0].mxu0 %v9613
    %v9857 = vpop.f32.mrb[0].mxu0
    %v9858 = vadd.f32 0.0, %v9857
    %v9859 = vpop.f32.mrb[0].mxu0
    %v9860 = vpop.f32.mrb[0].mxu0
    %v9861 = vadd.f32 0.0, %v9860
    %v9862 = vpop.f32.mrb[0].mxu0
    %9863 = vmatprep.mubr.bf16.mxu0 0
    %9864 = vmatmul.mubr.bf16.gmra.mrb[0].mxu0 %v9616
    %v9865 = vpop.f32.mrb[0].mxu0
    %v9866 = vadd.f32 0.0, %v9865
    %v9867 = vpop.f32.mrb[0].mxu0
    %v9868 = vpop.f32.mrb[0].mxu0
    %v9869 = vadd.f32 0.0, %v9868
    %v9870 = vpop.f32.mrb[0].mxu0
    %9871 = vmatprep.mubr.bf16.mxu0 0
    %9872 = vmatmul.mubr.bf16.gmra.mrb[0].mxu0 %v9619
    %v9873 = vpop.f32.mrb[0].mxu0
    %v9874 = vadd.f32 0.0, %v9873
    %v9875 = vpop.f32.mrb[0].mxu0
    %v9876 = vpop.f32.mrb[0].mxu0
    %v9877 = vadd.f32 0.0, %v9876
    %v9878 = vpop.f32.mrb[0].mxu0
    %9879 = vmatprep.mubr.bf16.mxu0 0
    %9880 = vmatmul.mubr.bf16.gmra.mrb[0].mxu0 %v9622
    %v9881 = vpop.f32.mrb[0].mxu0
    %v9882 = vadd.f32 0.0, %v9881
    %v9883 = vpop.f32.mrb[0].mxu0
    %v9884 = vpop.f32.mrb[0].mxu0
    %v9885 = vadd.f32 0.0, %v9884
    %v9886 = vpop.f32.mrb[0].mxu0
    %9887 = vmatprep.mubr.bf16.mxu0 0
    %9888 = vmatmul.mubr.bf16.gmra.mrb[0].mxu0 %v9625
    %v9889 = vpop.f32.mrb[0].mxu0
    %v9890 = vadd.f32 0.0, %v9889
    %v9891 = vpop.f32.mrb[0].mxu0
    %v9892 = vpop.f32.mrb[0].mxu0
    %v9893 = vadd.f32 0.0, %v9892
    %v9894 = vpop.f32.mrb[0].mxu0
    %9895 = vmatprep.mubr.bf16.mxu0 0
    %9896 = vmatmul.mubr.bf16.gmra.mrb[0].mxu0 %v9628
    %v9897 = vpop.f32.mrb[0].mxu0
    %v9898 = vadd.f32 0.0, %v9897
    %v9899 = vpop.f32.mrb[0].mxu0
    %v9900 = vpop.f32.mrb[0].mxu0
    %v9901 = vadd.f32 0.0, %v9900
    %v9902 = vpop.f32.mrb[0].mxu0
    %9903 = vmatprep.mubr.bf16.mxu0 0
    %9904 = vmatmul.mubr.bf16.gmra.mrb[0].mxu0 %v9631
    %v9905 = vpop.f32.mrb[0].mxu0
    %v9906 = vadd.f32 0.0, %v9905
    %v9907 = vpop.f32.mrb[0].mxu0
    %v9908 = vpop.f32.mrb[0].mxu0
    %v9909 = vadd.f32 0.0, %v9908
    %v9910 = vpop.f32.mrb[0].mxu0
    %9911 = vmatprep.mubr.bf16.mxu0 0
    %9912 = vmatmul.mubr.bf16.gmra.mrb[0].mxu0 %v9634
    %v9913 = vpop.f32.mrb[0].mxu0
    %v9914 = vadd.f32 0.0, %v9913
    %v9915 = vpop.f32.mrb[0].mxu0
    %v9916 = vpop.f32.mrb[0].mxu0
    %v9917 = vadd.f32 0.0, %v9916
    %v9918 = vpop.f32.mrb[0].mxu0
    %9919 = vmatprep.mubr.bf16.mxu0 0
    %9920 = vmatmul.mubr.bf16.gmra.mrb[0].mxu0 %v9637
    %v9921 = vpop.f32.mrb[0].mxu0
    %v9922 = vadd.f32 0.0, %v9921
    %v9923 = vpop.f32.mrb[0].mxu0
    %v9924 = vpop.f32.mrb[0].mxu0
    %v9925 = vadd.f32 0.0, %v9924
    %v9926 = vpop.f32.mrb[0].mxu0
    %9927 = vdwg.mxu0
    %v9928 = vadd.f32 %v9022, %v9674
    %v9929 = vadd.f32 %v9023, %v9677
    %v9930 = vadd.f32 %v9024, %v9682
    %v9931 = vadd.f32 %v9025, %v9685
    %v9932 = vadd.f32 %v9026, %v9690
    %v9933 = vadd.f32 %v9027, %v9693
    %v9934 = vadd.f32 %v9028, %v9698
    %v9935 = vadd.f32 %v9029, %v9701
    %v9936 = vadd.f32 %v9030, %v9706
    %v9937 = vadd.f32 %v9031, %v9709
    %v9938 = vadd.f32 %v9032, %v9714
    %v9939 = vadd.f32 %v9033, %v9717
    %v9940 = vadd.f32 %v9034, %v9722
    %v9941 = vadd.f32 %v9035, %v9725
    %v9942 = vadd.f32 %v9036, %v9730
    %v9943 = vadd.f32 %v9037, %v9733
    %v9944 = vadd.f32 %v9038, %v9738
    %v9945 = vadd.f32 %v9039, %v9741
    %v9946 = vadd.f32 %v9040, %v9746
    %v9947 = vadd.f32 %v9041, %v9749
    %v9948 = vadd.f32 %v9042, %v9754
    %v9949 = vadd.f32 %v9043, %v9757
    %v9950 = vadd.f32 %v9044, %v9762
    %v9951 = vadd.f32 %v9045, %v9765
    %v9952 = vadd.f32 %v9046, %v9770
    %v9953 = vadd.f32 %v9047, %v9773
    %v9954 = vadd.f32 %v9048, %v9778
    %v9955 = vadd.f32 %v9049, %v9781
    %v9956 = vadd.f32 %v9050, %v9786
    %v9957 = vadd.f32 %v9051, %v9789
    %v9958 = vadd.f32 %v9052, %v9794
    %v9959 = vadd.f32 %v9053, %v9797
    %v9960 = vadd.f32 %v9054, %v9802
    %v9961 = vadd.f32 %v9055, %v9805
    %v9962 = vadd.f32 %v9056, %v9810
    %v9963 = vadd.f32 %v9057, %v9813
    %v9964 = vadd.f32 %v9058, %v9818
    %v9965 = vadd.f32 %v9059, %v9821
    %v9966 = vadd.f32 %v9060, %v9826
    %v9967 = vadd.f32 %v9061, %v9829
    %v9968 = vadd.f32 %v9062, %v9834
    %v9969 = vadd.f32 %v9063, %v9837
    %v9970 = vadd.f32 %v9064, %v9842
    %v9971 = vadd.f32 %v9065, %v9845
    %v9972 = vadd.f32 %v9066, %v9850
    %v9973 = vadd.f32 %v9067, %v9853
    %v9974 = vadd.f32 %v9068, %v9858
    %v9975 = vadd.f32 %v9069, %v9861
    %v9976 = vadd.f32 %v9070, %v9866
    %v9977 = vadd.f32 %v9071, %v9869
    %v9978 = vadd.f32 %v9072, %v9874
    %v9979 = vadd.f32 %v9073, %v9877
    %v9980 = vadd.f32 %v9074, %v9882
    %v9981 = vadd.f32 %v9075, %v9885
    %v9982 = vadd.f32 %v9076, %v9890
    %v9983 = vadd.f32 %v9077, %v9893
    %v9984 = vadd.f32 %v9078, %v9898
    %v9985 = vadd.f32 %v9079, %v9901
    %v9986 = vadd.f32 %v9080, %v9906
    %v9987 = vadd.f32 %v9081, %v9909
    %v9988 = vadd.f32 %v9082, %v9914
    %v9989 = vadd.f32 %v9083, %v9917
    %v9990 = vadd.f32 %v9084, %v9922
    %v9991 = vadd.f32 %v9085, %v9925
    %v9992 = vpack.c.bf16 %v9929, %v9928
    %v9993 = vpack.c.bf16 %v9931, %v9930
    %v9994 = vpack.c.bf16 %v9933, %v9932
    %v9995 = vpack.c.bf16 %v9935, %v9934
    %v9996 = vpack.c.bf16 %v9937, %v9936
    %v9997 = vpack.c.bf16 %v9939, %v9938
    %v9998 = vpack.c.bf16 %v9941, %v9940
    %v9999 = vpack.c.bf16 %v9943, %v9942
    %v10000 = vpack.c.bf16 %v9945, %v9944
    %v10001 = vpack.c.bf16 %v9947, %v9946
    %v10002 = vpack.c.bf16 %v9949, %v9948
    %v10003 = vpack.c.bf16 %v9951, %v9950
    %v10004 = vpack.c.bf16 %v9953, %v9952
    %v10005 = vpack.c.bf16 %v9955, %v9954
    %v10006 = vpack.c.bf16 %v9957, %v9956
    %v10007 = vpack.c.bf16 %v9959, %v9958
    %v10008 = vpack.c.bf16 %v9961, %v9960
    %v10009 = vpack.c.bf16 %v9963, %v9962
    %v10010 = vpack.c.bf16 %v9965, %v9964
    %v10011 = vpack.c.bf16 %v9967, %v9966
    %v10012 = vpack.c.bf16 %v9969, %v9968
    %v10013 = vpack.c.bf16 %v9971, %v9970
    %v10014 = vpack.c.bf16 %v9973, %v9972
    %v10015 = vpack.c.bf16 %v9975, %v9974
    %v10016 = vpack.c.bf16 %v9977, %v9976
    %v10017 = vpack.c.bf16 %v9979, %v9978
    %v10018 = vpack.c.bf16 %v9981, %v9980
    %v10019 = vpack.c.bf16 %v9983, %v9982
    %v10020 = vpack.c.bf16 %v9985, %v9984
    %v10021 = vpack.c.bf16 %v9987, %v9986
    %v10022 = vpack.c.bf16 %v9989, %v9988
    %v10023 = vpack.c.bf16 %v9991, %v9990
    %v10056 = vunpack.c.l.b16 %v9992
    %v10057 = vunpack.c.h.b16 %v9992
    %v10058 = vunpack.c.l.b16 %v9993
    %v10059 = vunpack.c.h.b16 %v9993
    %v10060 = vunpack.c.l.b16 %v9994
    %v10061 = vunpack.c.h.b16 %v9994
    %v10062 = vunpack.c.l.b16 %v9995
    %v10063 = vunpack.c.h.b16 %v9995
    %v10064 = vunpack.c.l.b16 %v9996
    %v10065 = vunpack.c.h.b16 %v9996
    %v10066 = vunpack.c.l.b16 %v9997
    %v10067 = vunpack.c.h.b16 %v9997
    %v10068 = vunpack.c.l.b16 %v9998
    %v10069 = vunpack.c.h.b16 %v9998
    %v10070 = vunpack.c.l.b16 %v9999
    %v10071 = vunpack.c.h.b16 %v9999
    %v10072 = vunpack.c.l.b16 %v10000
    %v10073 = vunpack.c.h.b16 %v10000
    %v10074 = vunpack.c.l.b16 %v10001
    %v10075 = vunpack.c.h.b16 %v10001
    %v10076 = vunpack.c.l.b16 %v10002
    %v10077 = vunpack.c.h.b16 %v10002
    %v10078 = vunpack.c.l.b16 %v10003
    %v10079 = vunpack.c.h.b16 %v10003
    %v10080 = vunpack.c.l.b16 %v10004
    %v10081 = vunpack.c.h.b16 %v10004
    %v10082 = vunpack.c.l.b16 %v10005
    %v10083 = vunpack.c.h.b16 %v10005
    %v10084 = vunpack.c.l.b16 %v10006
    %v10085 = vunpack.c.h.b16 %v10006
    %v10086 = vunpack.c.l.b16 %v10007
    %v10087 = vunpack.c.h.b16 %v10007
    %v10088 = vunpack.c.l.b16 %v10008
    %v10089 = vunpack.c.h.b16 %v10008
    %v10090 = vunpack.c.l.b16 %v10009
    %v10091 = vunpack.c.h.b16 %v10009
    %v10092 = vunpack.c.l.b16 %v10010
    %v10093 = vunpack.c.h.b16 %v10010
    %v10094 = vunpack.c.l.b16 %v10011
    %v10095 = vunpack.c.h.b16 %v10011
    %v10096 = vunpack.c.l.b16 %v10012
    %v10097 = vunpack.c.h.b16 %v10012
    %v10098 = vunpack.c.l.b16 %v10013
    %v10099 = vunpack.c.h.b16 %v10013
    %v10100 = vunpack.c.l.b16 %v10014
    %v10101 = vunpack.c.h.b16 %v10014
    %v10102 = vunpack.c.l.b16 %v10015
    %v10103 = vunpack.c.h.b16 %v10015
    %v10104 = vunpack.c.l.b16 %v10016
    %v10105 = vunpack.c.h.b16 %v10016
    %v10106 = vunpack.c.l.b16 %v10017
    %v10107 = vunpack.c.h.b16 %v10017
    %v10108 = vunpack.c.l.b16 %v10018
    %v10109 = vunpack.c.h.b16 %v10018
    %v10110 = vunpack.c.l.b16 %v10019
    %v10111 = vunpack.c.h.b16 %v10019
    %v10112 = vunpack.c.l.b16 %v10020
    %v10113 = vunpack.c.h.b16 %v10020
    %v10114 = vunpack.c.l.b16 %v10021
    %v10115 = vunpack.c.h.b16 %v10021
    %v10116 = vunpack.c.l.b16 %v10022
    %v10117 = vunpack.c.h.b16 %v10022
    %v10118 = vunpack.c.l.b16 %v10023
    %v10119 = vunpack.c.h.b16 %v10023
    %v10120 = vpack.c.b16 %v10056, %v10056
    %v10121 = vpack.c.b16 %v10057, %v10057
    %v10122 = vpack.c.b16 %v10058, %v10058
    %v10123 = vpack.c.b16 %v10059, %v10059
    %v10124 = vpack.c.b16 %v10060, %v10060
    %v10125 = vpack.c.b16 %v10061, %v10061
    %v10126 = vpack.c.b16 %v10062, %v10062
    %v10127 = vpack.c.b16 %v10063, %v10063
    %v10128 = vpack.c.b16 %v10064, %v10064
    %v10129 = vpack.c.b16 %v10065, %v10065
    %v10130 = vpack.c.b16 %v10066, %v10066
    %v10131 = vpack.c.b16 %v10067, %v10067
    %v10132 = vpack.c.b16 %v10068, %v10068
    %v10133 = vpack.c.b16 %v10069, %v10069
    %v10134 = vpack.c.b16 %v10070, %v10070
    %v10135 = vpack.c.b16 %v10071, %v10071
    %v10136 = vpack.c.b16 %v10072, %v10072
    %v10137 = vpack.c.b16 %v10073, %v10073
    %v10138 = vpack.c.b16 %v10074, %v10074
    %v10139 = vpack.c.b16 %v10075, %v10075
    %v10140 = vpack.c.b16 %v10076, %v10076
    %v10141 = vpack.c.b16 %v10077, %v10077
    %v10142 = vpack.c.b16 %v10078, %v10078
    %v10143 = vpack.c.b16 %v10079, %v10079
    %v10144 = vpack.c.b16 %v10080, %v10080
    %v10145 = vpack.c.b16 %v10081, %v10081
    %v10146 = vpack.c.b16 %v10082, %v10082
    %v10147 = vpack.c.b16 %v10083, %v10083
    %v10148 = vpack.c.b16 %v10084, %v10084
    %v10149 = vpack.c.b16 %v10085, %v10085
    %v10150 = vpack.c.b16 %v10086, %v10086
    %v10151 = vpack.c.b16 %v10087, %v10087
    %v10152 = vpack.c.b16 %v10088, %v10088
    %v10153 = vpack.c.b16 %v10089, %v10089
    %v10154 = vpack.c.b16 %v10090, %v10090
    %v10155 = vpack.c.b16 %v10091, %v10091
    %v10156 = vpack.c.b16 %v10092, %v10092
    %v10157 = vpack.c.b16 %v10093, %v10093
    %v10158 = vpack.c.b16 %v10094, %v10094
    %v10159 = vpack.c.b16 %v10095, %v10095
    %v10160 = vpack.c.b16 %v10096, %v10096
    %v10161 = vpack.c.b16 %v10097, %v10097
    %v10162 = vpack.c.b16 %v10098, %v10098
    %v10163 = vpack.c.b16 %v10099, %v10099
    %v10164 = vpack.c.b16 %v10100, %v10100
    %v10165 = vpack.c.b16 %v10101, %v10101
    %v10166 = vpack.c.b16 %v10102, %v10102
    %v10167 = vpack.c.b16 %v10103, %v10103
    %v10168 = vpack.c.b16 %v10104, %v10104
    %v10169 = vpack.c.b16 %v10105, %v10105
    %v10170 = vpack.c.b16 %v10106, %v10106
    %v10171 = vpack.c.b16 %v10107, %v10107
    %v10172 = vpack.c.b16 %v10108, %v10108
    %v10173 = vpack.c.b16 %v10109, %v10109
    %v10174 = vpack.c.b16 %v10110, %v10110
    %v10175 = vpack.c.b16 %v10111, %v10111
    %v10176 = vpack.c.b16 %v10112, %v10112
    %v10177 = vpack.c.b16 %v10113, %v10113
    %v10178 = vpack.c.b16 %v10114, %v10114
    %v10179 = vpack.c.b16 %v10115, %v10115
    %v10180 = vpack.c.b16 %v10116, %v10116
    %v10181 = vpack.c.b16 %v10117, %v10117
    %v10182 = vpack.c.b16 %v10118, %v10118
    %v10183 = vpack.c.b16 %v10119, %v10119
    %vm10248 = vcmask 125952
    %10249 = vst.msk [vmem:[#allocation8] sm:$0xf] %vm10248, %v10120
    %10250 = vst.msk [vmem:[#allocation8 + $0x4] sm:$0xf] %vm10248, %v10121
    %10251 = vst.msk [vmem:[#allocation8 + $0x8] sm:$0xf] %vm10248, %v10122
    %10252 = vst.msk [vmem:[#allocation8 + $0xc] sm:$0xf] %vm10248, %v10123
    %10253 = vst.msk [vmem:[#allocation8 + $0x10] sm:$0xf] %vm10248, %v10124
    %10254 = vst.msk [vmem:[#allocation8 + $0x14] sm:$0xf] %vm10248, %v10125
    %10255 = vst.msk [vmem:[#allocation8 + $0x18] sm:$0xf] %vm10248, %v10126
    %10256 = vst.msk [vmem:[#allocation8 + $0x1c] sm:$0xf] %vm10248, %v10127
    %10257 = vst.msk [vmem:[#allocation8 + $0x20] sm:$0xf] %vm10248, %v10128
    %10258 = vst.msk [vmem:[#allocation8 + $0x24] sm:$0xf] %vm10248, %v10129
    %10259 = vst.msk [vmem:[#allocation8 + $0x28] sm:$0xf] %vm10248, %v10130
    %10260 = vst.msk [vmem:[#allocation8 + $0x2c] sm:$0xf] %vm10248, %v10131
    %10261 = vst.msk [vmem:[#allocation8 + $0x30] sm:$0xf] %vm10248, %v10132
    %10262 = vst.msk [vmem:[#allocation8 + $0x34] sm:$0xf] %vm10248, %v10133
    %10263 = vst.msk [vmem:[#allocation8 + $0x38] sm:$0xf] %vm10248, %v10134
    %10264 = vst.msk [vmem:[#allocation8 + $0x3c] sm:$0xf] %vm10248, %v10135
    %10265 = vst.msk [vmem:[#allocation8 + $0x40] sm:$0xf] %vm10248, %v10136
    %10266 = vst.msk [vmem:[#allocation8 + $0x44] sm:$0xf] %vm10248, %v10137
    %10267 = vst.msk [vmem:[#allocation8 + $0x48] sm:$0xf] %vm10248, %v10138
    %10268 = vst.msk [vmem:[#allocation8 + $0x4c] sm:$0xf] %vm10248, %v10139
    %10269 = vst.msk [vmem:[#allocation8 + $0x50] sm:$0xf] %vm10248, %v10140
    %10270 = vst.msk [vmem:[#allocation8 + $0x54] sm:$0xf] %vm10248, %v10141
    %10271 = vst.msk [vmem:[#allocation8 + $0x58] sm:$0xf] %vm10248, %v10142
    %10272 = vst.msk [vmem:[#allocation8 + $0x5c] sm:$0xf] %vm10248, %v10143
    %10273 = vst.msk [vmem:[#allocation8 + $0x60] sm:$0xf] %vm10248, %v10144
    %10274 = vst.msk [vmem:[#allocation8 + $0x64] sm:$0xf] %vm10248, %v10145
    %10275 = vst.msk [vmem:[#allocation8 + $0x68] sm:$0xf] %vm10248, %v10146
    %10276 = vst.msk [vmem:[#allocation8 + $0x6c] sm:$0xf] %vm10248, %v10147
    %10277 = vst.msk [vmem:[#allocation8 + $0x70] sm:$0xf] %vm10248, %v10148
    %10278 = vst.msk [vmem:[#allocation8 + $0x74] sm:$0xf] %vm10248, %v10149
    %10279 = vst.msk [vmem:[#allocation8 + $0x78] sm:$0xf] %vm10248, %v10150
    %10280 = vst.msk [vmem:[#allocation8 + $0x7c] sm:$0xf] %vm10248, %v10151
    %10281 = vst.msk [vmem:[#allocation8 + $0x80] sm:$0xf] %vm10248, %v10152
    %10282 = vst.msk [vmem:[#allocation8 + $0x84] sm:$0xf] %vm10248, %v10153
    %10283 = vst.msk [vmem:[#allocation8 + $0x88] sm:$0xf] %vm10248, %v10154
    %10284 = vst.msk [vmem:[#allocation8 + $0x8c] sm:$0xf] %vm10248, %v10155
    %10285 = vst.msk [vmem:[#allocation8 + $0x90] sm:$0xf] %vm10248, %v10156
    %10286 = vst.msk [vmem:[#allocation8 + $0x94] sm:$0xf] %vm10248, %v10157
    %10287 = vst.msk [vmem:[#allocation8 + $0x98] sm:$0xf] %vm10248, %v10158
    %10288 = vst.msk [vmem:[#allocation8 + $0x9c] sm:$0xf] %vm10248, %v10159
    %10289 = vst.msk [vmem:[#allocation8 + $0xa0] sm:$0xf] %vm10248, %v10160
    %10290 = vst.msk [vmem:[#allocation8 + $0xa4] sm:$0xf] %vm10248, %v10161
    %10291 = vst.msk [vmem:[#allocation8 + $0xa8] sm:$0xf] %vm10248, %v10162
    %10292 = vst.msk [vmem:[#allocation8 + $0xac] sm:$0xf] %vm10248, %v10163
    %10293 = vst.msk [vmem:[#allocation8 + $0xb0] sm:$0xf] %vm10248, %v10164
    %10294 = vst.msk [vmem:[#allocation8 + $0xb4] sm:$0xf] %vm10248, %v10165
    %10295 = vst.msk [vmem:[#allocation8 + $0xb8] sm:$0xf] %vm10248, %v10166
    %10296 = vst.msk [vmem:[#allocation8 + $0xbc] sm:$0xf] %vm10248, %v10167
    %10297 = vst.msk [vmem:[#allocation8 + $0xc0] sm:$0xf] %vm10248, %v10168
    %10298 = vst.msk [vmem:[#allocation8 + $0xc4] sm:$0xf] %vm10248, %v10169
    %10299 = vst.msk [vmem:[#allocation8 + $0xc8] sm:$0xf] %vm10248, %v10170
    %10300 = vst.msk [vmem:[#allocation8 + $0xcc] sm:$0xf] %vm10248, %v10171
    %10301 = vst.msk [vmem:[#allocation8 + $0xd0] sm:$0xf] %vm10248, %v10172
    %10302 = vst.msk [vmem:[#allocation8 + $0xd4] sm:$0xf] %vm10248, %v10173
    %10303 = vst.msk [vmem:[#allocation8 + $0xd8] sm:$0xf] %vm10248, %v10174
    %10304 = vst.msk [vmem:[#allocation8 + $0xdc] sm:$0xf] %vm10248, %v10175
    %10305 = vst.msk [vmem:[#allocation8 + $0xe0] sm:$0xf] %vm10248, %v10176
    %10306 = vst.msk [vmem:[#allocation8 + $0xe4] sm:$0xf] %vm10248, %v10177
    %10307 = vst.msk [vmem:[#allocation8 + $0xe8] sm:$0xf] %vm10248, %v10178
    %10308 = vst.msk [vmem:[#allocation8 + $0xec] sm:$0xf] %vm10248, %v10179
    %10309 = vst.msk [vmem:[#allocation8 + $0xf0] sm:$0xf] %vm10248, %v10180
    %10310 = vst.msk [vmem:[#allocation8 + $0xf4] sm:$0xf] %vm10248, %v10181
    %10311 = vst.msk [vmem:[#allocation8 + $0xf8] sm:$0xf] %vm10248, %v10182
    %10312 = vst.msk [vmem:[#allocation8 + $0xfc] sm:$0xf] %vm10248, %v10183
    // Predicated region
    $region22: #{tpu_custom_call.1} parent=1 // pred_check
      _
    $region23: #{tpu_custom_call.1} parent=1 // pred_check_branch
      %10314 = sbr.rel (0) target = $region25
    $region24: #{tpu_custom_call.1} parent=1 // pred_region
      %s10316 = ssub.s32 4096, 4096
      %10317 = vsyncadd [#allocation5], %s10316
      %s10318 = sshll.u32 [#allocation8], 4
      %s10319 = int_to_ptr.vmem [resolvable:$true] %s10318
      %10324 = dma.vmem_to_hbm [thread:$0]  %s10319, 4096, %s2, [#allocation5], 64, 64, 4
    $region25: #{tpu_custom_call.1} parent=1 // pred_fallthru
      _
    // Predicated region
    $region26: #{tpu_custom_call.1} parent=1 // pred_check
      _
    $region27: #{tpu_custom_call.1} parent=1 // pred_check_branch
      %10326 = sbr.rel (0) target = $region29
    $region28: #{tpu_custom_call.1} parent=1 // pred_region
      %10327 = dma.done [#allocation5], 4096
    $region29: #{tpu_custom_call.1} parent=1 // pred_fallthru
      _
    %10328 = vsyncpa [#allocation4], 1
    %10329 = vsyncpa [#allocation7], 1
    %10330 = vsyncpa [#allocation5], 1

</llo_original>
